<compile_context>
chip_gen: v7x
topology: tpu7x:2x2x1
jax: 0.10.0
libtpu: 0.0.40
codegen_flags: <defaults>
</compile_context>

<pallas_src>
import functools

import jax
import jax.numpy as jnp
from jax.experimental import pallas as pl
from jax.experimental.pallas import tpu as pltpu


def _round_up(x, m):
    return ((x + m - 1) // m) * m


# ----------------------------------------------------------------------------
# Fused 3x3 conv (+bias, +ReLU, optional fused global-avg-pool) kernel
# ----------------------------------------------------------------------------
def _fused_conv3x3_kernel(x_ref, w_ref, b_ref, o_ref, *, H, W, Wp,
                          apply_relu, fuse_pool):
    """3x3 'same' conv, stride 1.

    x_ref: (1, Hp*Wp, Cin_p)  f32   zero-padded image, spatially flattened
    w_ref: (9, Cin_p, TCout)  bf16  one (Cin,Cout) slab per tap t = dh*3+dw
    b_ref: (1, TCout)         f32
    o_ref: (1, H*Wp, TCout)   f32   (junk columns w>=W dropped by the caller)
        or (1, 1,    TCout)   f32   per-image channel means when fuse_pool
    """
    HWp = H * Wp
    acc = None
    # All 9 taps unrolled in-kernel: each tap is a contiguous (static-offset)
    # row slice of the flattened padded image -> no im2col materialization.
    for t in range(9):
        dh, dw = divmod(t, 3)
        xt = x_ref[0, pl.ds(dh * Wp + dw, HWp), :].astype(jnp.bfloat16)
        part = jnp.dot(xt, w_ref[t], preferred_element_type=jnp.float32)
        acc = part if acc is None else acc + part
    # Epilogue in f32 (bias hoisted out of the tap loop).
    acc = acc + b_ref[...]
    if apply_relu:
        acc = jnp.maximum(acc, 0.0)
    if fuse_pool:
        # Mask out the junk columns (w >= W) of the Wp-pitched rows, then
        # reduce to per-channel means -> the full feature map never hits HBM.
        col = jax.lax.broadcasted_iota(jnp.int32, (HWp, 1), 0) % Wp
        acc = jnp.where(col < W, acc, 0.0)
        pooled = jnp.sum(acc, axis=0, keepdims=True) * (1.0 / (H * W))
        o_ref[0] = pooled.astype(o_ref.dtype)
    else:
        o_ref[0] = acc.astype(o_ref.dtype)


def fused_conv3x3(x_nhwc, w9, bias, *, apply_relu=True, fuse_pool=False,
                  cout_tile=128):
    """x_nhwc: (N,H,W,Cp) f32; w9: (9,Cp,Coutp) bf16; bias: (Coutp,) f32."""
    N, H, W, Cp = x_nhwc.shape
    t9, Cin_p, Cout_p = w9.shape
    assert t9 == 9 and Cin_p == Cp
    cout_tile = min(cout_tile, Cout_p)
    assert Cout_p % cout_tile == 0

    Wp = _round_up(W + 2, 8)   # sublane-friendly row pitch (junk cols w >= W)
    Hp = H + 3                 # 1 halo row top/bottom + 1 margin row for taps
    HWp = H * Wp

    # JAX glue: spatial zero-pad + flatten (free reshape), no 9x expansion.
    xpad = jnp.pad(x_nhwc.astype(jnp.float32),
                   ((0, 0), (1, Hp - H - 1), (1, Wp - W - 1), (0, 0)))
    xflat = xpad.reshape(N, Hp * Wp, Cp)
    bias2d = bias.reshape(1, Cout_p).astype(jnp.float32)

    n_j = Cout_p // cout_tile
    kern = functools.partial(_fused_conv3x3_kernel, H=H, W=W, Wp=Wp,
                             apply_relu=apply_relu, fuse_pool=fuse_pool)
    if fuse_pool:
        out_shape = jax.ShapeDtypeStruct((N, 1, Cout_p), jnp.float32)
        out_spec = pl.BlockSpec((1, 1, cout_tile), lambda n, j: (n, 0, j))
    else:
        out_shape = jax.ShapeDtypeStruct((N, HWp, Cout_p), jnp.float32)
        out_spec = pl.BlockSpec((1, HWp, cout_tile), lambda n, j: (n, 0, j))

    out = pl.pallas_call(
        kern,
        out_shape=out_shape,
        grid=(N, n_j),
        in_specs=[
            # Same image block for every Cout tile -> fetched once per n.
            pl.BlockSpec((1, Hp * Wp, Cp), lambda n, j: (n, 0, 0)),
            pl.BlockSpec((9, Cin_p, cout_tile), lambda n, j: (0, 0, j)),
            pl.BlockSpec((1, cout_tile), lambda n, j: (0, j)),
        ],
        out_specs=out_spec,
        compiler_params=pltpu.CompilerParams(
            dimension_semantics=("parallel", "parallel")),
    )(xflat, w9, bias2d)

    if fuse_pool:
        return out.reshape(N, Cout_p)                      # (N, Cp) f32
    return out.reshape(N, H, Wp, Cout_p)[:, :, :W, :]      # drop junk columns


# ----------------------------------------------------------------------------
# Tiled matmul + bias kernel (classifier Linear)
# ----------------------------------------------------------------------------
def _matmul_bias_kernel(a_ref, b_ref, bias_ref, o_ref, acc_ref, *, apply_relu):
    k = pl.program_id(2)

    @pl.when(k == 0)
    def _():
        acc_ref[...] = jnp.zeros_like(acc_ref)

    acc_ref[...] += jnp.dot(a_ref[...], b_ref[...],
                            preferred_element_type=jnp.float32)

    @pl.when(k == pl.num_programs(2) - 1)
    def _():
        out = acc_ref[...] + bias_ref[...]   # bias only at finalize
        if apply_relu:
            out = jnp.maximum(out, 0.0)
        o_ref[...] = out.astype(o_ref.dtype)


def pallas_matmul_bias(a, b, bias, *, apply_relu=False, tm=256, tn=128, tk=512,
                       out_dtype=jnp.float32):
    M, K = a.shape
    K2, N = b.shape
    assert K == K2
    tm, tn, tk = min(tm, M), min(tn, N), min(tk, K)
    assert M % tm == 0 and N % tn == 0 and K % tk == 0, "pad to tile multiples"
    bias2d = bias.reshape(1, N).astype(jnp.float32)
    return pl.pallas_call(
        functools.partial(_matmul_bias_kernel, apply_relu=apply_relu),
        out_shape=jax.ShapeDtypeStruct((M, N), out_dtype),
        grid=(M // tm, N // tn, K // tk),
        in_specs=[
            pl.BlockSpec((tm, tk), lambda i, j, k: (i, k)),
            pl.BlockSpec((tk, tn), lambda i, j, k: (k, j)),
            pl.BlockSpec((1, tn), lambda i, j, k: (0, j)),
        ],
        out_specs=pl.BlockSpec((tm, tn), lambda i, j, k: (i, j)),
        scratch_shapes=[pltpu.VMEM((tm, tn), jnp.float32)],
        compiler_params=pltpu.CompilerParams(
            dimension_semantics=("parallel", "parallel", "arbitrary")),
    )(a, b, bias2d)


# ----------------------------------------------------------------------------
# Parameters (synthetic deterministic backbone) + padding to lane-dense shapes
# ----------------------------------------------------------------------------
def init_params(key, in_ch, feat_ch, num_classes):
    k1, k2, k3 = jax.random.split(key, 3)
    return {
        "conv1_w": jax.random.normal(k1, (3, 3, in_ch, feat_ch), jnp.float32) * 0.1,
        "conv1_b": jnp.zeros((feat_ch,), jnp.float32),
        "conv2_w": jax.random.normal(k2, (3, 3, feat_ch, feat_ch), jnp.float32) * 0.05,
        "conv2_b": jnp.zeros((feat_ch,), jnp.float32),
        "fc_w": jax.random.normal(k3, (feat_ch, num_classes), jnp.float32) * 0.1,
        "fc_b": jnp.zeros((num_classes,), jnp.float32),
    }


def pad_params(params, cp, ncp):
    """Zero-pad channel dims to 128 multiples; weights stored bf16 for the MXU."""
    c1, c2 = params["conv1_w"], params["conv2_w"]
    cin, cf = c1.shape[2], c1.shape[3]
    nc = params["fc_w"].shape[1]
    w1 = jnp.pad(c1.reshape(9, cin, cf), ((0, 0), (0, cp - cin), (0, cp - cf)))
    w2 = jnp.pad(c2.reshape(9, cf, cf), ((0, 0), (0, cp - cf), (0, cp - cf)))
    return {
        "conv1_w": w1.astype(jnp.bfloat16),
        "conv1_b": jnp.pad(params["conv1_b"], (0, cp - cf)).astype(jnp.float32),
        "conv2_w": w2.astype(jnp.bfloat16),
        "conv2_b": jnp.pad(params["conv2_b"], (0, cp - cf)).astype(jnp.float32),
        "fc_w": jnp.pad(params["fc_w"],
                        ((0, cp - cf), (0, ncp - nc))).astype(jnp.bfloat16),
        "fc_b": jnp.pad(params["fc_b"], (0, ncp - nc)).astype(jnp.float32),
    }


# ----------------------------------------------------------------------------
# FaceRecog forward
# ----------------------------------------------------------------------------
def face_recog_forward(params, x_nchw):
    in_ch = params["conv1_w"].shape[2]
    feat_ch = params["conv1_w"].shape[3]
    num_classes = params["fc_b"].shape[0]
    CP = _round_up(max(in_ch, feat_ch), 128)    # lane-dense channel padding
    NCP = _round_up(num_classes, 128)
    p = pad_params(params, CP, NCP)

    # NCHW -> NHWC, pad channels to CP (zero channels stay exactly zero).
    x = jnp.transpose(x_nchw, (0, 2, 3, 1)).astype(jnp.float32)
    x = jnp.pad(x, ((0, 0), (0, 0), (0, 0), (0, CP - in_ch)))

    # features: conv-relu, conv-relu + fused global average pool
    x = fused_conv3x3(x, p["conv1_w"], p["conv1_b"], apply_relu=True)
    pooled = fused_conv3x3(x, p["conv2_w"], p["conv2_b"],
                           apply_relu=True, fuse_pool=True)        # (N, CP) f32

    # classifier: Flatten + Linear (tiled matmul, padded to 128-wide output)
    logits_p = pallas_matmul_bias(pooled.astype(jnp.bfloat16),
                                  p["fc_w"], p["fc_b"], apply_relu=False)
    return logits_p[:, :num_classes]


def face_recog_reference(params, x_nchw):
    """Pure-JAX reference mirroring the kernel's dtype strategy (bf16 MXU inputs,
    f32 accumulation / epilogue)."""
    x = jnp.transpose(x_nchw, (0, 2, 3, 1)).astype(jnp.float32)

    def conv3x3(xh, w, b):
        N, H, W, C = xh.shape
        xp = jnp.pad(xh, ((0, 0), (1, 1), (1, 1), (0, 0)))
        wb = w.astype(jnp.bfloat16)
        acc = None
        for dh in range(3):
            for dw in range(3):
                part = jnp.einsum(
                    "nhwc,cd->nhwd",
                    xp[:, dh:dh + H, dw:dw + W, :].astype(jnp.bfloat16),
                    wb[dh, dw],
                    preferred_element_type=jnp.float32)
                acc = part if acc is None else acc + part
        return jnp.maximum(acc + b[None, None, None, :], 0.0)

    h = conv3x3(x, params["conv1_w"], params["conv1_b"])
    h = conv3x3(h, params["conv2_w"], params["conv2_b"])
    pooled = jnp.mean(h, axis=(1, 2))
    return jnp.dot(pooled.astype(jnp.bfloat16),
                   params["fc_w"].astype(jnp.bfloat16),
                   preferred_element_type=jnp.float32) + params["fc_b"][None, :]


if __name__ == "__main__":
    key = jax.random.PRNGKey(0)
    k_x, k_p = jax.random.split(key)

    N, C_in, H, W = 2, 4, 16, 16
    feat_ch, num_classes = 32, 8

    x = jax.random.normal(k_x, (N, C_in, H, W), jnp.float32)   # NCHW input
    params = init_params(k_p, C_in, feat_ch, num_classes)

    fwd = jax.jit(face_recog_forward)
    out = jax.block_until_ready(fwd(params, x))

    ref = face_recog_reference(params, x)
    assert out.shape == (N, num_classes)
    assert jnp.allclose(out, ref, atol=1e-2, rtol=1e-2), (
        "mismatch vs reference, max abs diff = "
        f"{float(jnp.max(jnp.abs(out - ref)))}")

    print("KERNEL_OK")
</pallas_src>

<mosaic_0001>
module attributes {stable_mosaic.version = 11 : i64} {
  func.func @_fused_conv3x3_kernel(%arg0: i32, %arg1: i32, %arg2: memref<1x456x128xf32, #tpu.memory_space<vmem>>, %arg3: memref<9x128x128xbf16, #tpu.memory_space<vmem>>, %arg4: memref<1x128xf32, #tpu.memory_space<vmem>>, %arg5: memref<1x384x128xf32, #tpu.memory_space<vmem>>) attributes {dimension_semantics = [#tpu.dimension_semantics<parallel>, #tpu.dimension_semantics<parallel>], iteration_bounds = array<i64: 2, 1>, scalar_prefetch = 0 : i64, scratch_operands = 0 : i64, tpu.core_type = #tpu.core_type<tc>, window_params = [{transform_indices = @transform_0, window_bounds = array<i64: 1, 456, 128>}, {transform_indices = @transform_1, window_bounds = array<i64: 9, 128, 128>}, {transform_indices = @transform_2, window_bounds = array<i64: 1, 128>}, {transform_indices = @transform_3, window_bounds = array<i64: 1, 384, 128>}]} {
    %c0 = arith.constant 0 : index
    %c0_0 = arith.constant 0 : index
    %c0_1 = arith.constant 0 : index
    %0 = vector.load %arg2[%c0, %c0_0, %c0_1] : memref<1x456x128xf32, #tpu.memory_space<vmem>>, vector<1x384x128xf32>
    %1 = vector.shape_cast %0 : vector<1x384x128xf32> to vector<384x128xf32>
    %2 = arith.truncf %1 : vector<384x128xf32> to vector<384x128xbf16>
    %c0_2 = arith.constant 0 : index
    %c0_3 = arith.constant 0 : index
    %c0_4 = arith.constant 0 : index
    %3 = vector.load %arg3[%c0_2, %c0_3, %c0_4] : memref<9x128x128xbf16, #tpu.memory_space<vmem>>, vector<1x128x128xbf16>
    %4 = vector.shape_cast %3 : vector<1x128x128xbf16> to vector<128x128xbf16>
    %cst = arith.constant dense<0.000000e+00> : vector<384x128xf32>
    %5 = tpu.matmul %2, %4, %cst {dimension_numbers = #tpu.dot_dimension_numbers<[1], [0], [0], [1], [0, 0, 1, 1], [], []>} : vector<384x128xbf16>, vector<128x128xbf16>, vector<384x128xf32> -> vector<384x128xf32>
    %c0_5 = arith.constant 0 : index
    %c1 = arith.constant 1 : index
    %c0_6 = arith.constant 0 : index
    %6 = vector.load %arg2[%c0_5, %c1, %c0_6] : memref<1x456x128xf32, #tpu.memory_space<vmem>>, vector<1x384x128xf32>
    %7 = vector.shape_cast %6 : vector<1x384x128xf32> to vector<384x128xf32>
    %8 = arith.truncf %7 : vector<384x128xf32> to vector<384x128xbf16>
    %c1_7 = arith.constant 1 : index
    %c0_8 = arith.constant 0 : index
    %c0_9 = arith.constant 0 : index
    %9 = vector.load %arg3[%c1_7, %c0_8, %c0_9] : memref<9x128x128xbf16, #tpu.memory_space<vmem>>, vector<1x128x128xbf16>
    %10 = vector.shape_cast %9 : vector<1x128x128xbf16> to vector<128x128xbf16>
    %cst_10 = arith.constant dense<0.000000e+00> : vector<384x128xf32>
    %11 = tpu.matmul %8, %10, %cst_10 {dimension_numbers = #tpu.dot_dimension_numbers<[1], [0], [0], [1], [0, 0, 1, 1], [], []>} : vector<384x128xbf16>, vector<128x128xbf16>, vector<384x128xf32> -> vector<384x128xf32>
    %12 = arith.addf %5, %11 : vector<384x128xf32>
    %c0_11 = arith.constant 0 : index
    %c2 = arith.constant 2 : index
    %c0_12 = arith.constant 0 : index
    %13 = vector.load %arg2[%c0_11, %c2, %c0_12] : memref<1x456x128xf32, #tpu.memory_space<vmem>>, vector<1x384x128xf32>
    %14 = vector.shape_cast %13 : vector<1x384x128xf32> to vector<384x128xf32>
    %15 = arith.truncf %14 : vector<384x128xf32> to vector<384x128xbf16>
    %c2_13 = arith.constant 2 : index
    %c0_14 = arith.constant 0 : index
    %c0_15 = arith.constant 0 : index
    %16 = vector.load %arg3[%c2_13, %c0_14, %c0_15] : memref<9x128x128xbf16, #tpu.memory_space<vmem>>, vector<1x128x128xbf16>
    %17 = vector.shape_cast %16 : vector<1x128x128xbf16> to vector<128x128xbf16>
    %cst_16 = arith.constant dense<0.000000e+00> : vector<384x128xf32>
    %18 = tpu.matmul %15, %17, %cst_16 {dimension_numbers = #tpu.dot_dimension_numbers<[1], [0], [0], [1], [0, 0, 1, 1], [], []>} : vector<384x128xbf16>, vector<128x128xbf16>, vector<384x128xf32> -> vector<384x128xf32>
    %19 = arith.addf %12, %18 : vector<384x128xf32>
    %c0_17 = arith.constant 0 : index
    %c24 = arith.constant 24 : index
    %c0_18 = arith.constant 0 : index
    %20 = vector.load %arg2[%c0_17, %c24, %c0_18] : memref<1x456x128xf32, #tpu.memory_space<vmem>>, vector<1x384x128xf32>
    %21 = vector.shape_cast %20 : vector<1x384x128xf32> to vector<384x128xf32>
    %22 = arith.truncf %21 : vector<384x128xf32> to vector<384x128xbf16>
    %c3 = arith.constant 3 : index
    %c0_19 = arith.constant 0 : index
    %c0_20 = arith.constant 0 : index
    %23 = vector.load %arg3[%c3, %c0_19, %c0_20] : memref<9x128x128xbf16, #tpu.memory_space<vmem>>, vector<1x128x128xbf16>
    %24 = vector.shape_cast %23 : vector<1x128x128xbf16> to vector<128x128xbf16>
    %cst_21 = arith.constant dense<0.000000e+00> : vector<384x128xf32>
    %25 = tpu.matmul %22, %24, %cst_21 {dimension_numbers = #tpu.dot_dimension_numbers<[1], [0], [0], [1], [0, 0, 1, 1], [], []>} : vector<384x128xbf16>, vector<128x128xbf16>, vector<384x128xf32> -> vector<384x128xf32>
    %26 = arith.addf %19, %25 : vector<384x128xf32>
    %c0_22 = arith.constant 0 : index
    %c25 = arith.constant 25 : index
    %c0_23 = arith.constant 0 : index
    %27 = vector.load %arg2[%c0_22, %c25, %c0_23] : memref<1x456x128xf32, #tpu.memory_space<vmem>>, vector<1x384x128xf32>
    %28 = vector.shape_cast %27 : vector<1x384x128xf32> to vector<384x128xf32>
    %29 = arith.truncf %28 : vector<384x128xf32> to vector<384x128xbf16>
    %c4 = arith.constant 4 : index
    %c0_24 = arith.constant 0 : index
    %c0_25 = arith.constant 0 : index
    %30 = vector.load %arg3[%c4, %c0_24, %c0_25] : memref<9x128x128xbf16, #tpu.memory_space<vmem>>, vector<1x128x128xbf16>
    %31 = vector.shape_cast %30 : vector<1x128x128xbf16> to vector<128x128xbf16>
    %cst_26 = arith.constant dense<0.000000e+00> : vector<384x128xf32>
    %32 = tpu.matmul %29, %31, %cst_26 {dimension_numbers = #tpu.dot_dimension_numbers<[1], [0], [0], [1], [0, 0, 1, 1], [], []>} : vector<384x128xbf16>, vector<128x128xbf16>, vector<384x128xf32> -> vector<384x128xf32>
    %33 = arith.addf %26, %32 : vector<384x128xf32>
    %c0_27 = arith.constant 0 : index
    %c26 = arith.constant 26 : index
    %c0_28 = arith.constant 0 : index
    %34 = vector.load %arg2[%c0_27, %c26, %c0_28] : memref<1x456x128xf32, #tpu.memory_space<vmem>>, vector<1x384x128xf32>
    %35 = vector.shape_cast %34 : vector<1x384x128xf32> to vector<384x128xf32>
    %36 = arith.truncf %35 : vector<384x128xf32> to vector<384x128xbf16>
    %c5 = arith.constant 5 : index
    %c0_29 = arith.constant 0 : index
    %c0_30 = arith.constant 0 : index
    %37 = vector.load %arg3[%c5, %c0_29, %c0_30] : memref<9x128x128xbf16, #tpu.memory_space<vmem>>, vector<1x128x128xbf16>
    %38 = vector.shape_cast %37 : vector<1x128x128xbf16> to vector<128x128xbf16>
    %cst_31 = arith.constant dense<0.000000e+00> : vector<384x128xf32>
    %39 = tpu.matmul %36, %38, %cst_31 {dimension_numbers = #tpu.dot_dimension_numbers<[1], [0], [0], [1], [0, 0, 1, 1], [], []>} : vector<384x128xbf16>, vector<128x128xbf16>, vector<384x128xf32> -> vector<384x128xf32>
    %40 = arith.addf %33, %39 : vector<384x128xf32>
    %c0_32 = arith.constant 0 : index
    %c48 = arith.constant 48 : index
    %c0_33 = arith.constant 0 : index
    %41 = vector.load %arg2[%c0_32, %c48, %c0_33] : memref<1x456x128xf32, #tpu.memory_space<vmem>>, vector<1x384x128xf32>
    %42 = vector.shape_cast %41 : vector<1x384x128xf32> to vector<384x128xf32>
    %43 = arith.truncf %42 : vector<384x128xf32> to vector<384x128xbf16>
    %c6 = arith.constant 6 : index
    %c0_34 = arith.constant 0 : index
    %c0_35 = arith.constant 0 : index
    %44 = vector.load %arg3[%c6, %c0_34, %c0_35] : memref<9x128x128xbf16, #tpu.memory_space<vmem>>, vector<1x128x128xbf16>
    %45 = vector.shape_cast %44 : vector<1x128x128xbf16> to vector<128x128xbf16>
    %cst_36 = arith.constant dense<0.000000e+00> : vector<384x128xf32>
    %46 = tpu.matmul %43, %45, %cst_36 {dimension_numbers = #tpu.dot_dimension_numbers<[1], [0], [0], [1], [0, 0, 1, 1], [], []>} : vector<384x128xbf16>, vector<128x128xbf16>, vector<384x128xf32> -> vector<384x128xf32>
    %47 = arith.addf %40, %46 : vector<384x128xf32>
    %c0_37 = arith.constant 0 : index
    %c49 = arith.constant 49 : index
    %c0_38 = arith.constant 0 : index
    %48 = vector.load %arg2[%c0_37, %c49, %c0_38] : memref<1x456x128xf32, #tpu.memory_space<vmem>>, vector<1x384x128xf32>
    %49 = vector.shape_cast %48 : vector<1x384x128xf32> to vector<384x128xf32>
    %50 = arith.truncf %49 : vector<384x128xf32> to vector<384x128xbf16>
    %c7 = arith.constant 7 : index
    %c0_39 = arith.constant 0 : index
    %c0_40 = arith.constant 0 : index
    %51 = vector.load %arg3[%c7, %c0_39, %c0_40] : memref<9x128x128xbf16, #tpu.memory_space<vmem>>, vector<1x128x128xbf16>
    %52 = vector.shape_cast %51 : vector<1x128x128xbf16> to vector<128x128xbf16>
    %cst_41 = arith.constant dense<0.000000e+00> : vector<384x128xf32>
    %53 = tpu.matmul %50, %52, %cst_41 {dimension_numbers = #tpu.dot_dimension_numbers<[1], [0], [0], [1], [0, 0, 1, 1], [], []>} : vector<384x128xbf16>, vector<128x128xbf16>, vector<384x128xf32> -> vector<384x128xf32>
    %54 = arith.addf %47, %53 : vector<384x128xf32>
    %c0_42 = arith.constant 0 : index
    %c50 = arith.constant 50 : index
    %c0_43 = arith.constant 0 : index
    %55 = vector.load %arg2[%c0_42, %c50, %c0_43] : memref<1x456x128xf32, #tpu.memory_space<vmem>>, vector<1x384x128xf32>
    %56 = vector.shape_cast %55 : vector<1x384x128xf32> to vector<384x128xf32>
    %57 = arith.truncf %56 : vector<384x128xf32> to vector<384x128xbf16>
    %c8 = arith.constant 8 : index
    %c0_44 = arith.constant 0 : index
    %c0_45 = arith.constant 0 : index
    %58 = vector.load %arg3[%c8, %c0_44, %c0_45] : memref<9x128x128xbf16, #tpu.memory_space<vmem>>, vector<1x128x128xbf16>
    %59 = vector.shape_cast %58 : vector<1x128x128xbf16> to vector<128x128xbf16>
    %cst_46 = arith.constant dense<0.000000e+00> : vector<384x128xf32>
    %60 = tpu.matmul %57, %59, %cst_46 {dimension_numbers = #tpu.dot_dimension_numbers<[1], [0], [0], [1], [0, 0, 1, 1], [], []>} : vector<384x128xbf16>, vector<128x128xbf16>, vector<384x128xf32> -> vector<384x128xf32>
    %61 = arith.addf %54, %60 : vector<384x128xf32>
    %c0_47 = arith.constant 0 : index
    %c0_48 = arith.constant 0 : index
    %62 = vector.load %arg4[%c0_47, %c0_48] : memref<1x128xf32, #tpu.memory_space<vmem>>, vector<1x128xf32>
    %63 = vector.broadcast %62 : vector<1x128xf32> to vector<384x128xf32>
    %64 = arith.addf %61, %63 : vector<384x128xf32>
    %cst_49 = arith.constant 0.000000e+00 : f32
    %65 = vector.broadcast %cst_49 : f32 to vector<384x128xf32>
    %66 = arith.maximumf %64, %65 : vector<384x128xf32>
    %c0_50 = arith.constant 0 : index
    %c0_51 = arith.constant 0 : index
    %c0_52 = arith.constant 0 : index
    %67 = vector.load %arg5[%c0_50, %c0_51, %c0_52] : memref<1x384x128xf32, #tpu.memory_space<vmem>>, vector<1x384x128xf32>
    %68 = vector.shape_cast %67 : vector<1x384x128xf32> to vector<384x128xf32>
    %69 = vector.shape_cast %66 : vector<384x128xf32> to vector<1x384x128xf32>
    tpu.vector_store %arg5[%c0_50, %c0_51, %c0_52], %69 {strides = array<i32>} : memref<1x384x128xf32, #tpu.memory_space<vmem>>, vector<1x384x128xf32>,
    return
  }
  func.func @transform_0(%arg0: i32, %arg1: i32) -> (i32, i32, i32) {
    %c0_i32 = arith.constant 0 : i32
    %c0_i32_0 = arith.constant 0 : i32
    %c0_i32_1 = arith.constant 0 : i32
    return %arg0, %c0_i32, %c0_i32_0 : i32, i32, i32
  }
  func.func @transform_1(%arg0: i32, %arg1: i32) -> (i32, i32, i32) {
    %c0_i32 = arith.constant 0 : i32
    %c0_i32_0 = arith.constant 0 : i32
    %c0_i32_1 = arith.constant 0 : i32
    return %c0_i32, %c0_i32_0, %arg1 : i32, i32, i32
  }
  func.func @transform_2(%arg0: i32, %arg1: i32) -> (i32, i32) {
    %c0_i32 = arith.constant 0 : i32
    %c0_i32_0 = arith.constant 0 : i32
    return %c0_i32, %arg1 : i32, i32
  }
  func.func @transform_3(%arg0: i32, %arg1: i32) -> (i32, i32, i32) {
    %c0_i32 = arith.constant 0 : i32
    %c0_i32_0 = arith.constant 0 : i32
    return %arg0, %c0_i32, %arg1 : i32, i32, i32
  }
}

module attributes {stable_mosaic.version = 11 : i64} {
  func.func @_fused_conv3x3_kernel(%arg0: i32, %arg1: i32, %arg2: memref<1x456x128xf32, #tpu.memory_space<vmem>>, %arg3: memref<9x128x128xbf16, #tpu.memory_space<vmem>>, %arg4: memref<1x128xf32, #tpu.memory_space<vmem>>, %arg5: memref<1x1x128xf32, #tpu.memory_space<vmem>>) attributes {dimension_semantics = [#tpu.dimension_semantics<parallel>, #tpu.dimension_semantics<parallel>], iteration_bounds = array<i64: 2, 1>, scalar_prefetch = 0 : i64, scratch_operands = 0 : i64, tpu.core_type = #tpu.core_type<tc>, window_params = [{transform_indices = @transform_0, window_bounds = array<i64: 1, 456, 128>}, {transform_indices = @transform_1, window_bounds = array<i64: 9, 128, 128>}, {transform_indices = @transform_2, window_bounds = array<i64: 1, 128>}, {transform_indices = @transform_3, window_bounds = array<i64: 1, 1, 128>}]} {
    %c0 = arith.constant 0 : index
    %c0_0 = arith.constant 0 : index
    %c0_1 = arith.constant 0 : index
    %0 = vector.load %arg2[%c0, %c0_0, %c0_1] : memref<1x456x128xf32, #tpu.memory_space<vmem>>, vector<1x384x128xf32>
    %1 = vector.shape_cast %0 : vector<1x384x128xf32> to vector<384x128xf32>
    %2 = arith.truncf %1 : vector<384x128xf32> to vector<384x128xbf16>
    %c0_2 = arith.constant 0 : index
    %c0_3 = arith.constant 0 : index
    %c0_4 = arith.constant 0 : index
    %3 = vector.load %arg3[%c0_2, %c0_3, %c0_4] : memref<9x128x128xbf16, #tpu.memory_space<vmem>>, vector<1x128x128xbf16>
    %4 = vector.shape_cast %3 : vector<1x128x128xbf16> to vector<128x128xbf16>
    %cst = arith.constant dense<0.000000e+00> : vector<384x128xf32>
    %5 = tpu.matmul %2, %4, %cst {dimension_numbers = #tpu.dot_dimension_numbers<[1], [0], [0], [1], [0, 0, 1, 1], [], []>} : vector<384x128xbf16>, vector<128x128xbf16>, vector<384x128xf32> -> vector<384x128xf32>
    %c0_5 = arith.constant 0 : index
    %c1 = arith.constant 1 : index
    %c0_6 = arith.constant 0 : index
    %6 = vector.load %arg2[%c0_5, %c1, %c0_6] : memref<1x456x128xf32, #tpu.memory_space<vmem>>, vector<1x384x128xf32>
    %7 = vector.shape_cast %6 : vector<1x384x128xf32> to vector<384x128xf32>
    %8 = arith.truncf %7 : vector<384x128xf32> to vector<384x128xbf16>
    %c1_7 = arith.constant 1 : index
    %c0_8 = arith.constant 0 : index
    %c0_9 = arith.constant 0 : index
    %9 = vector.load %arg3[%c1_7, %c0_8, %c0_9] : memref<9x128x128xbf16, #tpu.memory_space<vmem>>, vector<1x128x128xbf16>
    %10 = vector.shape_cast %9 : vector<1x128x128xbf16> to vector<128x128xbf16>
    %cst_10 = arith.constant dense<0.000000e+00> : vector<384x128xf32>
    %11 = tpu.matmul %8, %10, %cst_10 {dimension_numbers = #tpu.dot_dimension_numbers<[1], [0], [0], [1], [0, 0, 1, 1], [], []>} : vector<384x128xbf16>, vector<128x128xbf16>, vector<384x128xf32> -> vector<384x128xf32>
    %12 = arith.addf %5, %11 : vector<384x128xf32>
    %c0_11 = arith.constant 0 : index
    %c2 = arith.constant 2 : index
    %c0_12 = arith.constant 0 : index
    %13 = vector.load %arg2[%c0_11, %c2, %c0_12] : memref<1x456x128xf32, #tpu.memory_space<vmem>>, vector<1x384x128xf32>
    %14 = vector.shape_cast %13 : vector<1x384x128xf32> to vector<384x128xf32>
    %15 = arith.truncf %14 : vector<384x128xf32> to vector<384x128xbf16>
    %c2_13 = arith.constant 2 : index
    %c0_14 = arith.constant 0 : index
    %c0_15 = arith.constant 0 : index
    %16 = vector.load %arg3[%c2_13, %c0_14, %c0_15] : memref<9x128x128xbf16, #tpu.memory_space<vmem>>, vector<1x128x128xbf16>
    %17 = vector.shape_cast %16 : vector<1x128x128xbf16> to vector<128x128xbf16>
    %cst_16 = arith.constant dense<0.000000e+00> : vector<384x128xf32>
    %18 = tpu.matmul %15, %17, %cst_16 {dimension_numbers = #tpu.dot_dimension_numbers<[1], [0], [0], [1], [0, 0, 1, 1], [], []>} : vector<384x128xbf16>, vector<128x128xbf16>, vector<384x128xf32> -> vector<384x128xf32>
    %19 = arith.addf %12, %18 : vector<384x128xf32>
    %c0_17 = arith.constant 0 : index
    %c24 = arith.constant 24 : index
    %c0_18 = arith.constant 0 : index
    %20 = vector.load %arg2[%c0_17, %c24, %c0_18] : memref<1x456x128xf32, #tpu.memory_space<vmem>>, vector<1x384x128xf32>
    %21 = vector.shape_cast %20 : vector<1x384x128xf32> to vector<384x128xf32>
    %22 = arith.truncf %21 : vector<384x128xf32> to vector<384x128xbf16>
    %c3 = arith.constant 3 : index
    %c0_19 = arith.constant 0 : index
    %c0_20 = arith.constant 0 : index
    %23 = vector.load %arg3[%c3, %c0_19, %c0_20] : memref<9x128x128xbf16, #tpu.memory_space<vmem>>, vector<1x128x128xbf16>
    %24 = vector.shape_cast %23 : vector<1x128x128xbf16> to vector<128x128xbf16>
    %cst_21 = arith.constant dense<0.000000e+00> : vector<384x128xf32>
    %25 = tpu.matmul %22, %24, %cst_21 {dimension_numbers = #tpu.dot_dimension_numbers<[1], [0], [0], [1], [0, 0, 1, 1], [], []>} : vector<384x128xbf16>, vector<128x128xbf16>, vector<384x128xf32> -> vector<384x128xf32>
    %26 = arith.addf %19, %25 : vector<384x128xf32>
    %c0_22 = arith.constant 0 : index
    %c25 = arith.constant 25 : index
    %c0_23 = arith.constant 0 : index
    %27 = vector.load %arg2[%c0_22, %c25, %c0_23] : memref<1x456x128xf32, #tpu.memory_space<vmem>>, vector<1x384x128xf32>
    %28 = vector.shape_cast %27 : vector<1x384x128xf32> to vector<384x128xf32>
    %29 = arith.truncf %28 : vector<384x128xf32> to vector<384x128xbf16>
    %c4 = arith.constant 4 : index
    %c0_24 = arith.constant 0 : index
    %c0_25 = arith.constant 0 : index
    %30 = vector.load %arg3[%c4, %c0_24, %c0_25] : memref<9x128x128xbf16, #tpu.memory_space<vmem>>, vector<1x128x128xbf16>
    %31 = vector.shape_cast %30 : vector<1x128x128xbf16> to vector<128x128xbf16>
    %cst_26 = arith.constant dense<0.000000e+00> : vector<384x128xf32>
    %32 = tpu.matmul %29, %31, %cst_26 {dimension_numbers = #tpu.dot_dimension_numbers<[1], [0], [0], [1], [0, 0, 1, 1], [], []>} : vector<384x128xbf16>, vector<128x128xbf16>, vector<384x128xf32> -> vector<384x128xf32>
    %33 = arith.addf %26, %32 : vector<384x128xf32>
    %c0_27 = arith.constant 0 : index
    %c26 = arith.constant 26 : index
    %c0_28 = arith.constant 0 : index
    %34 = vector.load %arg2[%c0_27, %c26, %c0_28] : memref<1x456x128xf32, #tpu.memory_space<vmem>>, vector<1x384x128xf32>
    %35 = vector.shape_cast %34 : vector<1x384x128xf32> to vector<384x128xf32>
    %36 = arith.truncf %35 : vector<384x128xf32> to vector<384x128xbf16>
    %c5 = arith.constant 5 : index
    %c0_29 = arith.constant 0 : index
    %c0_30 = arith.constant 0 : index
    %37 = vector.load %arg3[%c5, %c0_29, %c0_30] : memref<9x128x128xbf16, #tpu.memory_space<vmem>>, vector<1x128x128xbf16>
    %38 = vector.shape_cast %37 : vector<1x128x128xbf16> to vector<128x128xbf16>
    %cst_31 = arith.constant dense<0.000000e+00> : vector<384x128xf32>
    %39 = tpu.matmul %36, %38, %cst_31 {dimension_numbers = #tpu.dot_dimension_numbers<[1], [0], [0], [1], [0, 0, 1, 1], [], []>} : vector<384x128xbf16>, vector<128x128xbf16>, vector<384x128xf32> -> vector<384x128xf32>
    %40 = arith.addf %33, %39 : vector<384x128xf32>
    %c0_32 = arith.constant 0 : index
    %c48 = arith.constant 48 : index
    %c0_33 = arith.constant 0 : index
    %41 = vector.load %arg2[%c0_32, %c48, %c0_33] : memref<1x456x128xf32, #tpu.memory_space<vmem>>, vector<1x384x128xf32>
    %42 = vector.shape_cast %41 : vector<1x384x128xf32> to vector<384x128xf32>
    %43 = arith.truncf %42 : vector<384x128xf32> to vector<384x128xbf16>
    %c6 = arith.constant 6 : index
    %c0_34 = arith.constant 0 : index
    %c0_35 = arith.constant 0 : index
    %44 = vector.load %arg3[%c6, %c0_34, %c0_35] : memref<9x128x128xbf16, #tpu.memory_space<vmem>>, vector<1x128x128xbf16>
    %45 = vector.shape_cast %44 : vector<1x128x128xbf16> to vector<128x128xbf16>
    %cst_36 = arith.constant dense<0.000000e+00> : vector<384x128xf32>
    %46 = tpu.matmul %43, %45, %cst_36 {dimension_numbers = #tpu.dot_dimension_numbers<[1], [0], [0], [1], [0, 0, 1, 1], [], []>} : vector<384x128xbf16>, vector<128x128xbf16>, vector<384x128xf32> -> vector<384x128xf32>
    %47 = arith.addf %40, %46 : vector<384x128xf32>
    %c0_37 = arith.constant 0 : index
    %c49 = arith.constant 49 : index
    %c0_38 = arith.constant 0 : index
    %48 = vector.load %arg2[%c0_37, %c49, %c0_38] : memref<1x456x128xf32, #tpu.memory_space<vmem>>, vector<1x384x128xf32>
    %49 = vector.shape_cast %48 : vector<1x384x128xf32> to vector<384x128xf32>
    %50 = arith.truncf %49 : vector<384x128xf32> to vector<384x128xbf16>
    %c7 = arith.constant 7 : index
    %c0_39 = arith.constant 0 : index
    %c0_40 = arith.constant 0 : index
    %51 = vector.load %arg3[%c7, %c0_39, %c0_40] : memref<9x128x128xbf16, #tpu.memory_space<vmem>>, vector<1x128x128xbf16>
    %52 = vector.shape_cast %51 : vector<1x128x128xbf16> to vector<128x128xbf16>
    %cst_41 = arith.constant dense<0.000000e+00> : vector<384x128xf32>
    %53 = tpu.matmul %50, %52, %cst_41 {dimension_numbers = #tpu.dot_dimension_numbers<[1], [0], [0], [1], [0, 0, 1, 1], [], []>} : vector<384x128xbf16>, vector<128x128xbf16>, vector<384x128xf32> -> vector<384x128xf32>
    %54 = arith.addf %47, %53 : vector<384x128xf32>
    %c0_42 = arith.constant 0 : index
    %c50 = arith.constant 50 : index
    %c0_43 = arith.constant 0 : index
    %55 = vector.load %arg2[%c0_42, %c50, %c0_43] : memref<1x456x128xf32, #tpu.memory_space<vmem>>, vector<1x384x128xf32>
    %56 = vector.shape_cast %55 : vector<1x384x128xf32> to vector<384x128xf32>
    %57 = arith.truncf %56 : vector<384x128xf32> to vector<384x128xbf16>
    %c8 = arith.constant 8 : index
    %c0_44 = arith.constant 0 : index
    %c0_45 = arith.constant 0 : index
    %58 = vector.load %arg3[%c8, %c0_44, %c0_45] : memref<9x128x128xbf16, #tpu.memory_space<vmem>>, vector<1x128x128xbf16>
    %59 = vector.shape_cast %58 : vector<1x128x128xbf16> to vector<128x128xbf16>
    %cst_46 = arith.constant dense<0.000000e+00> : vector<384x128xf32>
    %60 = tpu.matmul %57, %59, %cst_46 {dimension_numbers = #tpu.dot_dimension_numbers<[1], [0], [0], [1], [0, 0, 1, 1], [], []>} : vector<384x128xbf16>, vector<128x128xbf16>, vector<384x128xf32> -> vector<384x128xf32>
    %61 = arith.addf %54, %60 : vector<384x128xf32>
    %c0_47 = arith.constant 0 : index
    %c0_48 = arith.constant 0 : index
    %62 = vector.load %arg4[%c0_47, %c0_48] : memref<1x128xf32, #tpu.memory_space<vmem>>, vector<1x128xf32>
    %63 = vector.broadcast %62 : vector<1x128xf32> to vector<384x128xf32>
    %64 = arith.addf %61, %63 : vector<384x128xf32>
    %cst_49 = arith.constant 0.000000e+00 : f32
    %65 = vector.broadcast %cst_49 : f32 to vector<384x128xf32>
    %66 = arith.maximumf %64, %65 : vector<384x128xf32>
    %67 = tpu.iota {dimensions = array<i32: 0>} : vector<384x1xi32>
    %c24_i32 = arith.constant 24 : i32
    %c0_i32 = arith.constant 0 : i32
    %68 = arith.cmpi eq, %c24_i32, %c0_i32 : i32
    %c1_i32 = arith.constant 1 : i32
    %69 = arith.select %68, %c1_i32, %c24_i32 : i32
    %70 = vector.broadcast %69 : i32 to vector<384x1xi32>
    %71 = arith.remsi %67, %70 : vector<384x1xi32>
    %c0_i32_50 = arith.constant 0 : i32
    %72 = vector.broadcast %c0_i32_50 : i32 to vector<384x1xi32>
    %73 = arith.cmpi ne, %71, %72 : vector<384x1xi32>
    %c0_i32_51 = arith.constant 0 : i32
    %74 = vector.broadcast %c0_i32_51 : i32 to vector<384x1xi32>
    %75 = arith.cmpi slt, %71, %74 : vector<384x1xi32>
    %c0_i32_52 = arith.constant 0 : i32
    %76 = arith.cmpi slt, %69, %c0_i32_52 : i32
    %77 = vector.broadcast %76 : i1 to vector<384x1xi1>
    %78 = vector.broadcast %77 : vector<384x1xi1> to vector<384x1xi1>
    %79 = arith.xori %75, %78 : vector<384x1xi1>
    %80 = arith.andi %79, %73 : vector<384x1xi1>
    %81 = vector.broadcast %69 : i32 to vector<384x1xi32>
    %82 = arith.addi %71, %81 : vector<384x1xi32>
    %83 = arith.select %80, %82, %71 : vector<384x1xi1>, vector<384x1xi32>
    %c16_i32 = arith.constant 16 : i32
    %84 = vector.broadcast %c16_i32 : i32 to vector<384x1xi32>
    %85 = arith.cmpi slt, %83, %84 : vector<384x1xi32>
    %cst_53 = arith.constant 0.000000e+00 : f32
    %86 = vector.shape_cast %85 : vector<384x1xi1> to vector<384x1xi1>
    %87 = vector.broadcast %86 : vector<384x1xi1> to vector<384x128xi1>
    %88 = vector.broadcast %cst_53 : f32 to vector<384x128xf32>
    %89 = arith.select %87, %66, %88 : vector<384x128xi1>, vector<384x128xf32>
    %cst_54 = arith.constant dense<0.000000e+00> : vector<128xf32>
    %90 = vector.multi_reduction <add>, %89, %cst_54 [0] : vector<384x128xf32> to vector<128xf32>
    %91 = vector.shape_cast %90 : vector<128xf32> to vector<1x128xf32>
    %cst_55 = arith.constant 3.906250e-03 : f32
    %92 = vector.broadcast %cst_55 : f32 to vector<1x128xf32>
    %93 = arith.mulf %91, %92 : vector<1x128xf32>
    %c0_56 = arith.constant 0 : index
    %c0_57 = arith.constant 0 : index
    %c0_58 = arith.constant 0 : index
    %94 = vector.load %arg5[%c0_56, %c0_57, %c0_58] : memref<1x1x128xf32, #tpu.memory_space<vmem>>, vector<1x1x128xf32>
    %95 = vector.shape_cast %94 : vector<1x1x128xf32> to vector<1x128xf32>
    %96 = vector.shape_cast %93 : vector<1x128xf32> to vector<1x1x128xf32>
    tpu.vector_store %arg5[%c0_56, %c0_57, %c0_58], %96 {strides = array<i32>} : memref<1x1x128xf32, #tpu.memory_space<vmem>>, vector<1x1x128xf32>,
    return
  }
  func.func @transform_0(%arg0: i32, %arg1: i32) -> (i32, i32, i32) {
    %c0_i32 = arith.constant 0 : i32
    %c0_i32_0 = arith.constant 0 : i32
    %c0_i32_1 = arith.constant 0 : i32
    return %arg0, %c0_i32, %c0_i32_0 : i32, i32, i32
  }
  func.func @transform_1(%arg0: i32, %arg1: i32) -> (i32, i32, i32) {
    %c0_i32 = arith.constant 0 : i32
    %c0_i32_0 = arith.constant 0 : i32
    %c0_i32_1 = arith.constant 0 : i32
    return %c0_i32, %c0_i32_0, %arg1 : i32, i32, i32
  }
  func.func @transform_2(%arg0: i32, %arg1: i32) -> (i32, i32) {
    %c0_i32 = arith.constant 0 : i32
    %c0_i32_0 = arith.constant 0 : i32
    return %c0_i32, %arg1 : i32, i32
  }
  func.func @transform_3(%arg0: i32, %arg1: i32) -> (i32, i32, i32) {
    %c0_i32 = arith.constant 0 : i32
    %c0_i32_0 = arith.constant 0 : i32
    return %arg0, %c0_i32, %arg1 : i32, i32, i32
  }
}

module attributes {stable_mosaic.version = 11 : i64} {
  func.func @_matmul_bias_kernel(%arg0: i32, %arg1: i32, %arg2: i32, %arg3: memref<2x128xbf16, #tpu.memory_space<vmem>>, %arg4: memref<128x128xbf16, #tpu.memory_space<vmem>>, %arg5: memref<1x128xf32, #tpu.memory_space<vmem>>, %arg6: memref<2x128xf32, #tpu.memory_space<vmem>>, %arg7: memref<2x128xf32, #tpu.memory_space<vmem>>) attributes {dimension_semantics = [#tpu.dimension_semantics<parallel>, #tpu.dimension_semantics<parallel>, #tpu.dimension_semantics<arbitrary>], iteration_bounds = array<i64: 1, 1, 1>, scalar_prefetch = 0 : i64, scratch_operands = 1 : i64, tpu.core_type = #tpu.core_type<tc>, window_params = [{transform_indices = @transform_0, window_bounds = array<i64: 2, 128>}, {transform_indices = @transform_1, window_bounds = array<i64: 128, 128>}, {transform_indices = @transform_2, window_bounds = array<i64: 1, 128>}, {transform_indices = @transform_3, window_bounds = array<i64: 2, 128>}]} {
    %c0_i32 = arith.constant 0 : i32
    %0 = arith.cmpi eq, %arg2, %c0_i32 : i32
    %1 = arith.extui %0 : i1 to i32
    %c0_i32_0 = arith.constant 0 : i32
    %2 = arith.cmpi ne, %1, %c0_i32_0 : i32
    scf.if %2 {
      %cst_10 = arith.constant 0.000000e+00 : f32
      %12 = vector.broadcast %cst_10 : f32 to vector<2x128xf32>
      %c0_11 = arith.constant 0 : index
      %c0_12 = arith.constant 0 : index
      %13 = vector.load %arg7[%c0_11, %c0_12] : memref<2x128xf32, #tpu.memory_space<vmem>>, vector<2x128xf32>
      tpu.vector_store %arg7[%c0_11, %c0_12], %12 {strides = array<i32>} : memref<2x128xf32, #tpu.memory_space<vmem>>, vector<2x128xf32>,
    } else {
    }
    %c0 = arith.constant 0 : index
    %c0_1 = arith.constant 0 : index
    %3 = vector.load %arg7[%c0, %c0_1] : memref<2x128xf32, #tpu.memory_space<vmem>>, vector<2x128xf32>
    %c0_2 = arith.constant 0 : index
    %c0_3 = arith.constant 0 : index
    %4 = vector.load %arg3[%c0_2, %c0_3] : memref<2x128xbf16, #tpu.memory_space<vmem>>, vector<2x128xbf16>
    %c0_4 = arith.constant 0 : index
    %c0_5 = arith.constant 0 : index
    %5 = vector.load %arg4[%c0_4, %c0_5] : memref<128x128xbf16, #tpu.memory_space<vmem>>, vector<128x128xbf16>
    %cst = arith.constant dense<0.000000e+00> : vector<2x128xf32>
    %6 = tpu.matmul %4, %5, %cst {dimension_numbers = #tpu.dot_dimension_numbers<[1], [0], [0], [1], [0, 0, 1, 1], [], []>} : vector<2x128xbf16>, vector<128x128xbf16>, vector<2x128xf32> -> vector<2x128xf32>
    %7 = arith.addf %3, %6 : vector<2x128xf32>
    %c0_6 = arith.constant 0 : index
    %c0_7 = arith.constant 0 : index
    %8 = vector.load %arg7[%c0_6, %c0_7] : memref<2x128xf32, #tpu.memory_space<vmem>>, vector<2x128xf32>
    tpu.vector_store %arg7[%c0_6, %c0_7], %7 {strides = array<i32>} : memref<2x128xf32, #tpu.memory_space<vmem>>, vector<2x128xf32>,
    %c0_i32_8 = arith.constant 0 : i32
    %9 = arith.cmpi eq, %arg2, %c0_i32_8 : i32
    %10 = arith.extui %9 : i1 to i32
    %c0_i32_9 = arith.constant 0 : i32
    %11 = arith.cmpi ne, %10, %c0_i32_9 : i32
    scf.if %11 {
      %c0_10 = arith.constant 0 : index
      %c0_11 = arith.constant 0 : index
      %12 = vector.load %arg7[%c0_10, %c0_11] : memref<2x128xf32, #tpu.memory_space<vmem>>, vector<2x128xf32>
      %c0_12 = arith.constant 0 : index
      %c0_13 = arith.constant 0 : index
      %13 = vector.load %arg5[%c0_12, %c0_13] : memref<1x128xf32, #tpu.memory_space<vmem>>, vector<1x128xf32>
      %14 = vector.broadcast %13 : vector<1x128xf32> to vector<2x128xf32>
      %15 = arith.addf %12, %14 : vector<2x128xf32>
      %c0_14 = arith.constant 0 : index
      %c0_15 = arith.constant 0 : index
      %16 = vector.load %arg6[%c0_14, %c0_15] : memref<2x128xf32, #tpu.memory_space<vmem>>, vector<2x128xf32>
      tpu.vector_store %arg6[%c0_14, %c0_15], %15 {strides = array<i32>} : memref<2x128xf32, #tpu.memory_space<vmem>>, vector<2x128xf32>,
    } else {
    }
    return
  }
  func.func @transform_0(%arg0: i32, %arg1: i32, %arg2: i32) -> (i32, i32) {
    %c0_i32 = arith.constant 0 : i32
    return %arg0, %arg2 : i32, i32
  }
  func.func @transform_1(%arg0: i32, %arg1: i32, %arg2: i32) -> (i32, i32) {
    %c0_i32 = arith.constant 0 : i32
    return %arg2, %arg1 : i32, i32
  }
  func.func @transform_2(%arg0: i32, %arg1: i32, %arg2: i32) -> (i32, i32) {
    %c0_i32 = arith.constant 0 : i32
    %c0_i32_0 = arith.constant 0 : i32
    return %c0_i32, %arg1 : i32, i32
  }
  func.func @transform_3(%arg0: i32, %arg1: i32, %arg2: i32) -> (i32, i32) {
    %c0_i32 = arith.constant 0 : i32
    return %arg0, %arg1 : i32, i32
  }
}

</mosaic_0001>

<llo_original>
// kernel: face_recog_forward.5
$region0: #{face_recog_forward.5}
  #allocation0 [shape = 'u32[]', space=smem, size = 0x4, offset = 0x4, fixed_abs, tag = 'smem constant byte address 0x4 - core index']
  #allocation1 [shape = 'u32[144,128]{1,0:T(1,128)}', space=vmem, size = 0x12000, scoped, tag = 'internal scratch']
  #allocation2 [shape = 'f32[2,128]{1,0:T(2,128)}', space=vmem, size = 0x400, scoped, tag = 'scratch operand']
  %s0 = inlined_call_operand.vmem [shape: bf16[2,128], index: 0, kind: input, shape index: {}]
  %s1 = inlined_call_operand.vmem [shape: bf16[128,128], index: 1, kind: input, shape index: {}]
  %s2 = inlined_call_operand.vmem [shape: f32[1,128], index: 2, kind: input, shape index: {}]
  %s3 = inlined_call_operand.hbm [shape: f32[2,128], index: 3, kind: output, shape index: {}]
  %s4 = sld [smem:[#allocation0]]
  $region30: #{face_recog_forward.5} parent=0
    _
  %s6 = ssub.s32 1, %s4
  %s7 = scalar_select 0, %s6, %s4
  $region1: #{face_recog_forward.5} parent=0
    #allocation3 [shape = 'u8[1024]{0}', space=vmem, size = 0x400, scoped, tag = 'output window, operand 0, single buffered']
    #allocation4 [shape = 's32[1]{0}', space=sflag, size = 0x4, scoped, tag = 'scoped memory for face_recog_forward.5']
    %8 = vsyncpa [#allocation4], 0
    // Predicated region
    $region2: #{face_recog_forward.5} parent=1 // pred_check
      _
    $region3: #{face_recog_forward.5} parent=1 // pred_check_branch
      %10 = sbr.rel (0) target = $region5
    $region4: #{face_recog_forward.5} parent=1 // pred_region
      _
    $region5: #{face_recog_forward.5} parent=1 // pred_fallthru
      _
    // Predicated region
    $region6: #{face_recog_forward.5} parent=1 // pred_check
      _
    $region7: #{face_recog_forward.5} parent=1 // pred_check_branch
      %12 = sbr.rel (0) target = $region9
    $region8: #{face_recog_forward.5} parent=1 // pred_region
      _
    $region9: #{face_recog_forward.5} parent=1 // pred_fallthru
      _
    // Predicated region
    $region10: #{face_recog_forward.5} parent=1 // pred_check
      _
    $region11: #{face_recog_forward.5} parent=1 // pred_check_branch
      %14 = sbr.rel (0) target = $region13
    $region12: #{face_recog_forward.5} parent=1 // pred_region
      _
    $region13: #{face_recog_forward.5} parent=1 // pred_fallthru
      _
    %p16 = scmp.eq.s32.totalorder 0, 0
    // Predicated region
    $region14: #{face_recog_forward.5} parent=1 // pred_check
      %p17 = pneg %p16
    $region15: #{face_recog_forward.5} parent=1 // pred_check_branch
      %19 = sbr.rel (%p17) target = $region17
    $region16: #{face_recog_forward.5} parent=1 // pred_region
      %20 = vst [vmem:[#allocation2] sm:$0x3] 0.0
    $region17: #{face_recog_forward.5} parent=1 // pred_fallthru
      _
    %v21 = vld [vmem:[#allocation2] sm:$0x3]
    %v22 = vld [vmem:[%s0] sm:$0x1]
    %v23 = vld [vmem:[%s1] sm:$0xf]
    %v24 = vld [vmem:[%s1 + $0x4] sm:$0xf]
    %v25 = vld [vmem:[%s1 + $0x8] sm:$0xf]
    %v26 = vld [vmem:[%s1 + $0xc] sm:$0xf]
    %v27 = vld [vmem:[%s1 + $0x10] sm:$0xf]
    %v28 = vld [vmem:[%s1 + $0x14] sm:$0xf]
    %v29 = vld [vmem:[%s1 + $0x18] sm:$0xf]
    %v30 = vld [vmem:[%s1 + $0x1c] sm:$0xf]
    %v31 = vld [vmem:[%s1 + $0x20] sm:$0xf]
    %v32 = vld [vmem:[%s1 + $0x24] sm:$0xf]
    %v33 = vld [vmem:[%s1 + $0x28] sm:$0xf]
    %v34 = vld [vmem:[%s1 + $0x2c] sm:$0xf]
    %v35 = vld [vmem:[%s1 + $0x30] sm:$0xf]
    %v36 = vld [vmem:[%s1 + $0x34] sm:$0xf]
    %v37 = vld [vmem:[%s1 + $0x38] sm:$0xf]
    %v38 = vld [vmem:[%s1 + $0x3c] sm:$0xf]
    %v55 = vunpack.c.l.b16 %v23
    %v56 = vunpack.c.l.b16 %v24
    %v57 = vunpack.c.l.b16 %v25
    %v58 = vunpack.c.l.b16 %v26
    %v59 = vunpack.c.l.b16 %v27
    %v60 = vunpack.c.l.b16 %v28
    %v61 = vunpack.c.l.b16 %v29
    %v62 = vunpack.c.l.b16 %v30
    %v63 = vunpack.c.l.b16 %v31
    %v64 = vunpack.c.l.b16 %v32
    %v65 = vunpack.c.l.b16 %v33
    %v66 = vunpack.c.l.b16 %v34
    %v67 = vunpack.c.l.b16 %v35
    %v68 = vunpack.c.l.b16 %v36
    %v69 = vunpack.c.l.b16 %v37
    %v70 = vunpack.c.l.b16 %v38
    %v71 = vpack.c.b16 %v56, %v55
    %v72 = vpack.c.b16 %v58, %v57
    %v73 = vpack.c.b16 %v60, %v59
    %v74 = vpack.c.b16 %v62, %v61
    %v75 = vpack.c.b16 %v64, %v63
    %v76 = vpack.c.b16 %v66, %v65
    %v77 = vpack.c.b16 %v68, %v67
    %v78 = vpack.c.b16 %v70, %v69
    %87 = vmatprep.subr.bf16.mxu0 0
    %88 = vmatpush1.bf16.msra.mxu0 %v71
    %89 = vmatprep.subr.bf16.mxu0 0
    %90 = vmatpush1.bf16.msra.mxu0 %v72
    %91 = vmatprep.subr.bf16.mxu0 0
    %92 = vmatpush1.bf16.msra.mxu0 %v73
    %93 = vmatprep.subr.bf16.mxu0 0
    %94 = vmatpush1.bf16.msra.mxu0 %v74
    %95 = vmatprep.subr.bf16.mxu0 0
    %96 = vmatpush1.bf16.msra.mxu0 %v75
    %97 = vmatprep.subr.bf16.mxu0 0
    %98 = vmatpush1.bf16.msra.mxu0 %v76
    %99 = vmatprep.subr.bf16.mxu0 0
    %100 = vmatpush1.bf16.msra.mxu0 %v77
    %101 = vmatprep.subr.bf16.mxu0 0
    %102 = vmatpush1.bf16.msra.mxu0 %v78
    %103 = vmatprep.subr.bf16.mxu0 0
    %104 = vmatpush1.bf16.msra.mxu0 0
    %105 = vmatprep.subr.bf16.mxu0 0
    %106 = vmatpush1.bf16.msra.mxu0 0
    %107 = vmatprep.subr.bf16.mxu0 0
    %108 = vmatpush1.bf16.msra.mxu0 0
    %109 = vmatprep.subr.bf16.mxu0 0
    %110 = vmatpush1.bf16.msra.mxu0 0
    %111 = vmatprep.subr.bf16.mxu0 0
    %112 = vmatpush1.bf16.msra.mxu0 0
    %113 = vmatprep.subr.bf16.mxu0 0
    %114 = vmatpush1.bf16.msra.mxu0 0
    %115 = vmatprep.subr.bf16.mxu0 0
    %116 = vmatpush1.bf16.msra.mxu0 0
    %117 = vmatprep.subr.bf16.mxu0 0
    %118 = vmatpush1.bf16.msra.mxu0 0
    %119 = vmatprep.mubr.bf16.mxu0 0
    %120 = vmatmul.mubr.bf16.gmra.mrb[0].mxu0 %v22
    %v121 = vpop.f32.mrb[0].mxu0
    %v122 = vadd.f32 0.0, %v121
    %v123 = vpop.f32.mrb[0].mxu0
    %v124 = vpop.f32.mrb[0].mxu0
    %v125 = vpop.f32.mrb[0].mxu0
    %126 = vdwg.mxu0
    %v127 = vadd.f32 %v21, %v122
    %128 = vst [vmem:[#allocation2] sm:$0x3] %v127
    // Predicated region
    $region18: #{face_recog_forward.5} parent=1 // pred_check
      %p129 = pneg %p16
    $region19: #{face_recog_forward.5} parent=1 // pred_check_branch
      %131 = sbr.rel (%p129) target = $region21
    $region20: #{face_recog_forward.5} parent=1 // pred_region
      %v132 = vld [vmem:[#allocation2] sm:$0x3]
      %v133 = vld [vmem:[%s2] sm:$0x1]
      %v135 = vlaneseq
      %v136 = vshrl.u32 %v135, 7
      %v137 = vsub.s32 0, %v136
      %v138 = vrot.slane %v133, %v137
      %v140 = vadd.f32 %v132, %v138
      %141 = vst [vmem:[#allocation3] sm:$0x3] %v140
    $region21: #{face_recog_forward.5} parent=1 // pred_fallthru
      _
    // Predicated region
    $region22: #{face_recog_forward.5} parent=1 // pred_check
      _
    $region23: #{face_recog_forward.5} parent=1 // pred_check_branch
      %143 = sbr.rel (0) target = $region25
    $region24: #{face_recog_forward.5} parent=1 // pred_region
      %s145 = ssub.s32 32, 32
      %146 = vsyncadd [#allocation4], %s145
      %s148 = sshll.u32 [#allocation3], 4
      %s149 = int_to_ptr.vmem [resolvable:$true] %s148
      %151 = dma.vmem_to_hbm [thread:$0]  %s149, 32, %s3, [#allocation4]
    $region25: #{face_recog_forward.5} parent=1 // pred_fallthru
      _
    // Predicated region
    $region26: #{face_recog_forward.5} parent=1 // pred_check
      _
    $region27: #{face_recog_forward.5} parent=1 // pred_check_branch
      %153 = sbr.rel (0) target = $region29
    $region28: #{face_recog_forward.5} parent=1 // pred_region
      %154 = dma.done [#allocation4], 32
    $region29: #{face_recog_forward.5} parent=1 // pred_fallthru
      _
    %155 = vsyncpa [#allocation4], 1

// kernel: face_recog_forward.3
$region0: #{face_recog_forward.3}
  #allocation0 [shape = 'u32[]', space=smem, size = 0x4, offset = 0x4, fixed_abs, tag = 'smem constant byte address 0x4 - core index']
  #allocation1 [shape = 'u32[144,128]{1,0:T(1,128)}', space=vmem, size = 0x12000, scoped, tag = 'internal scratch']
  %s0 = inlined_call_operand.vmem [shape: f32[2,456,128], index: 0, kind: input, shape index: {}]
  %s1 = inlined_call_operand.vmem [shape: bf16[9,128,128], index: 1, kind: input, shape index: {}]
  %s2 = inlined_call_operand.vmem [shape: f32[1,128], index: 2, kind: input, shape index: {}]
  %s3 = inlined_call_operand.vmem [shape: f32[2,384,128], index: 3, kind: output, shape index: {}]
  %s4 = sld [smem:[#allocation0]]
  $region45: #{face_recog_forward.3} parent=0
    _
  %s6 = ssub.s32 1, %s4
  %s7 = scalar_select 0, %s6, %s4
  loop: start=0, step=1, limit=4
  $region2: #{face_recog_forward.3} parent=0 // loop_pre_header
    _
  $region3: #{face_recog_forward.3} parent=0 // loop_header
    %s9 = sphi 0, %s13
    %p10 = scmp.ge.s32.totalorder %s9, 4
    %s16 = sphi 0, %s28
    %s17 = sphi 0, %s24
    %s18 = sphi 0, %s16
    %s19 = sphi 0, %s17
    %s20 = sphi 0, %s18
    %s21 = sphi 0, %s19
    %s31 = sphi 0, %s33
    %s34 = sphi 0, %s31
    %s35 = sphi 0, %s34
    %s51 = sphi 0, %s35
    %s57 = sphi 0, %s59
    %s60 = sphi 0, %s57
    %s61 = sphi 0, %s60
    %s77 = sphi 0, %s61
    %s83 = sphi 0, %s85
    %s86 = sphi 0, %s83
    %s87 = sphi 0, %s86
    %s103 = sphi 0, %s87
    %s111 = sphi 0, %s113
    %s114 = sphi 0, %s111
    %s115 = sphi 0, %s114
    %s131 = sphi 0, %s115
  $region4: #{face_recog_forward.3} parent=0 // loop_header_branch
    %12 = sbr.rel (%p10) target = $region8
  $region5: #{face_recog_forward.3} parent=0 // loop_body
    %s14 = ssub.s32 %s9, 1
    %s15 = ssub.s32 %s9, 2
    %s22 = sadd.s32 1, %s17
    %p23 = scmp.ge.s32.totalorder %s22, 1
    %s24 = scalar_select %p23, 0, %s22
    %s25 = sadd.s32 1, %s16
    %s26 = scalar_select %p23, %s25, %s16
    %p27 = scmp.ge.s32.totalorder %s26, 2
    %s28 = scalar_select %p27, 0, %s26
    %s29 = ssub.s32 %s16, %s28
    %p30 = scmp.eq.s32.totalorder %s29, 0
    %s32 = sadd.s32 %s31, 1
    %s33 = scalar_select %p30, %s31, %s32
    %p36 = pneg %p30
    %p37 = scmp.eq.s32.totalorder %s9, 1
    %p38 = por %p36, %p37
    %p39 = scmp.ne.s32.totalorder %s31, %s34
    %p40 = scmp.eq.s32.totalorder %s9, 0
    %p41 = por %p39, %p40
    %p42 = scmp.ne.s32.totalorder %s31, %s34
    %p43 = scmp.eq.s32.totalorder %s14, 1
    %p44 = por %p42, %p43
    %p45 = scmp.ne.s32.totalorder %s34, %s35
    %p46 = scmp.eq.s32.totalorder %s14, 0
    %p47 = por %p45, %p46
    %p48 = scmp.ne.s32.totalorder %s34, %s35
    %p49 = scmp.eq.s32.totalorder %s15, 1
    %p50 = por %p48, %p49
    %p52 = scmp.ne.s32.totalorder %s35, %s51
    %p53 = scmp.eq.s32.totalorder %s15, 0
    %p54 = por %p52, %p53
    %s55 = ssub.s32 %s17, %s24
    %p56 = scmp.eq.s32.totalorder %s55, 0
    %s58 = sadd.s32 %s57, 1
    %s59 = scalar_select %p56, %s57, %s58
    %p62 = pneg %p56
    %p63 = scmp.eq.s32.totalorder %s9, 1
    %p64 = por %p62, %p63
    %p65 = scmp.ne.s32.totalorder %s57, %s60
    %p66 = scmp.eq.s32.totalorder %s9, 0
    %p67 = por %p65, %p66
    %p68 = scmp.ne.s32.totalorder %s57, %s60
    %p69 = scmp.eq.s32.totalorder %s14, 1
    %p70 = por %p68, %p69
    %p71 = scmp.ne.s32.totalorder %s60, %s61
    %p72 = scmp.eq.s32.totalorder %s14, 0
    %p73 = por %p71, %p72
    %p74 = scmp.ne.s32.totalorder %s60, %s61
    %p75 = scmp.eq.s32.totalorder %s15, 1
    %p76 = por %p74, %p75
    %p78 = scmp.ne.s32.totalorder %s61, %s77
    %p79 = scmp.eq.s32.totalorder %s15, 0
    %p80 = por %p78, %p79
    %s81 = ssub.s32 %s17, %s24
    %p82 = scmp.eq.s32.totalorder %s81, 0
    %s84 = sadd.s32 %s83, 1
    %s85 = scalar_select %p82, %s83, %s84
    %p88 = pneg %p82
    %p89 = scmp.eq.s32.totalorder %s9, 1
    %p90 = por %p88, %p89
    %p91 = scmp.ne.s32.totalorder %s83, %s86
    %p92 = scmp.eq.s32.totalorder %s9, 0
    %p93 = por %p91, %p92
    %p94 = scmp.ne.s32.totalorder %s83, %s86
    %p95 = scmp.eq.s32.totalorder %s14, 1
    %p96 = por %p94, %p95
    %p97 = scmp.ne.s32.totalorder %s86, %s87
    %p98 = scmp.eq.s32.totalorder %s14, 0
    %p99 = por %p97, %p98
    %p100 = scmp.ne.s32.totalorder %s86, %s87
    %p101 = scmp.eq.s32.totalorder %s15, 1
    %p102 = por %p100, %p101
    %p104 = scmp.ne.s32.totalorder %s87, %s103
    %p105 = scmp.eq.s32.totalorder %s15, 0
    %p106 = por %p104, %p105
    %s107 = ssub.s32 %s16, %s28
    %s108 = ssub.s32 %s17, %s24
    %s109 = sor.u32 %s107, %s108
    %p110 = scmp.eq.s32.totalorder %s109, 0
    %s112 = sadd.s32 %s111, 1
    %s113 = scalar_select %p110, %s111, %s112
    %p116 = pneg %p110
    %p117 = scmp.eq.s32.totalorder %s9, 1
    %p118 = por %p116, %p117
    %p119 = scmp.ne.s32.totalorder %s111, %s114
    %p120 = scmp.eq.s32.totalorder %s9, 0
    %p121 = por %p119, %p120
    %p122 = scmp.ne.s32.totalorder %s111, %s114
    %p123 = scmp.eq.s32.totalorder %s14, 1
    %p124 = por %p122, %p123
    %p125 = scmp.ne.s32.totalorder %s114, %s115
    %p126 = scmp.eq.s32.totalorder %s14, 0
    %p127 = por %p125, %p126
    %p128 = scmp.ne.s32.totalorder %s114, %s115
    %p129 = scmp.eq.s32.totalorder %s15, 1
    %p130 = por %p128, %p129
    %p132 = scmp.ne.s32.totalorder %s115, %s131
    %p133 = scmp.eq.s32.totalorder %s15, 0
    %p134 = por %p132, %p133
    %p135 = scmp.le.s32.totalorder 1, %s9
    %p136 = scmp.lt.s32.totalorder %s9, 3
    %p137 = pnand %p135, %p136
    %p138 = pneg %p137
    // Predicated region
    $region9: #{face_recog_forward.3} parent=5 // pred_check
      _
    $region10: #{face_recog_forward.3} parent=5 // pred_check_branch
      %140 = sbr.rel (%p137) target = $region12
    $region11: #{face_recog_forward.3} parent=5 // pred_region
      %s141 = ssub.s32 %s9, 1
      // Predicated region
      $region13: #{face_recog_forward.3} parent=11 // pred_check
        %p142 = pneg %p73
      $region14: #{face_recog_forward.3} parent=11 // pred_check_branch
        %144 = sbr.rel (%p142) target = $region16
      $region15: #{face_recog_forward.3} parent=11 // pred_region
        %p145 = scmp.lt.s32.totalorder %s19, 0
        %s146 = scalar_select %p145, %s19, 0
        %s147 = smul.addr %s146, 4
        %s148 = scalar_lea.vmem %s1, %s147
      $region16: #{face_recog_forward.3} parent=11 // pred_fallthru
        _
      // Predicated region
      $region17: #{face_recog_forward.3} parent=11 // pred_check
        %p149 = pneg %p99
      $region18: #{face_recog_forward.3} parent=11 // pred_check_branch
        %151 = sbr.rel (%p149) target = $region20
      $region19: #{face_recog_forward.3} parent=11 // pred_region
        %p152 = scmp.lt.s32.totalorder %s19, 0
        %s153 = scalar_select %p152, %s19, 0
        %s154 = scalar_lea.vmem %s2, %s153
      $region20: #{face_recog_forward.3} parent=11 // pred_fallthru
        _
    $region12: #{face_recog_forward.3} parent=5 // pred_fallthru
      _
    %p155 = scmp.lt.s32.totalorder %s9, 2
    // Predicated region
    $region21: #{face_recog_forward.3} parent=5 // pred_check
      %p156 = pneg %p155
    $region22: #{face_recog_forward.3} parent=5 // pred_check_branch
      %158 = sbr.rel (%p156) target = $region24
    $region23: #{face_recog_forward.3} parent=5 // pred_region
      // Predicated region
      $region25: #{face_recog_forward.3} parent=23 // pred_check
        %p159 = pneg %p41
      $region26: #{face_recog_forward.3} parent=23 // pred_check_branch
        %161 = sbr.rel (%p159) target = $region28
      $region27: #{face_recog_forward.3} parent=23 // pred_region
        %p162 = scmp.lt.s32.totalorder %s16, 1
        %s163 = scalar_select %p162, %s16, 1
        %s164 = smul.addr %s163, 57
        %s165 = smul.addr %s164, 8
        %s166 = scalar_lea.vmem %s0, %s165
      $region28: #{face_recog_forward.3} parent=23 // pred_fallthru
        _
    $region24: #{face_recog_forward.3} parent=5 // pred_fallthru
      _
    %p167 = scmp.le.s32.totalorder 1, %s9
    %p168 = scmp.lt.s32.totalorder %s9, 3
    %p169 = pnand %p167, %p168
    %p170 = pneg %p169
    // Predicated region
    $region29: #{face_recog_forward.3} parent=5 // pred_check
      _
    $region30: #{face_recog_forward.3} parent=5 // pred_check_branch
      %172 = sbr.rel (%p169) target = $region32
    $region31: #{face_recog_forward.3} parent=5 // pred_region
      %s173 = ssub.s32 %s9, 1
      %p174 = scmp.lt.s32.totalorder %s18, 1
      %s175 = scalar_select %p174, %s18, 1
      %s176 = smul.addr %s175, 57
      %s177 = smul.addr %s176, 8
      %s178 = scalar_lea.vmem %s0, %s177
      %p179 = pneg %p47
      %p180 = pneg %p44
      %p181 = scmp.lt.s32.totalorder %s19, 0
      %s182 = scalar_select %p181, %s19, 0
      %s183 = smul.addr %s182, 4
      %s184 = scalar_lea.vmem %s1, %s183
      %p185 = pneg %p73
      %p186 = pneg %p70
      %p187 = scmp.lt.s32.totalorder %s19, 0
      %s188 = scalar_select %p187, %s19, 0
      %s189 = scalar_lea.vmem %s2, %s188
      %p190 = pneg %p99
      %p191 = pneg %p96
      %p192 = pneg %p127
      %p193 = pneg %p124
      %p194 = scmp.lt.s32.totalorder %s18, 1
      %s195 = scalar_select %p194, %s18, 1
      %p196 = scmp.lt.s32.totalorder %s19, 0
      %s197 = scalar_select %p196, %s19, 0
      %s198 = smul.addr %s195, 48
      %s199 = sadd.s32 %s197, %s198
      %s200 = smul.addr %s199, 8
      %s201 = scalar_lea.vmem %s3, %s200
      %p202 = scmp.lt.s32.totalorder %s18, 1
      %s203 = scalar_select %p202, %s18, 1
      %s204 = smul.addr %s203, 57
      %s205 = smul.addr %s204, 8
      %s206 = scalar_lea.vmem %s0, %s205
      %p207 = scmp.lt.s32.totalorder %s19, 0
      %s208 = scalar_select %p207, %s19, 0
      %s209 = smul.addr %s208, 4
      %s210 = scalar_lea.vmem %s1, %s209
      %p211 = scmp.lt.s32.totalorder %s19, 0
      %s212 = scalar_select %p211, %s19, 0
      %s213 = scalar_lea.vmem %s2, %s212
      %p214 = scmp.lt.s32.totalorder %s18, 1
      %s215 = scalar_select %p214, %s18, 1
      %p216 = scmp.lt.s32.totalorder %s19, 0
      %s217 = scalar_select %p216, %s19, 0
      %s218 = smul.addr %s215, 48
      %s219 = sadd.s32 %s217, %s218
      %s220 = smul.addr %s219, 8
      %s221 = scalar_lea.vmem %s3, %s220
      %v223 = vld [vmem:[%s206] sm:$0xff]
      %v224 = vld [vmem:[%s206 + $0x8] sm:$0xff]
      %v225 = vld [vmem:[%s206 + $0x10] sm:$0xff]
      %v226 = vld [vmem:[%s206 + $0x18] sm:$0xff]
      %v227 = vld [vmem:[%s206 + $0x20] sm:$0xff]
      %v228 = vld [vmem:[%s206 + $0x28] sm:$0xff]
      %v229 = vld [vmem:[%s206 + $0x30] sm:$0xff]
      %v230 = vld [vmem:[%s206 + $0x38] sm:$0xff]
      %v231 = vld [vmem:[%s206 + $0x40] sm:$0xff]
      %v232 = vld [vmem:[%s206 + $0x48] sm:$0xff]
      %v233 = vld [vmem:[%s206 + $0x50] sm:$0xff]
      %v234 = vld [vmem:[%s206 + $0x58] sm:$0xff]
      %v235 = vld [vmem:[%s206 + $0x60] sm:$0xff]
      %v236 = vld [vmem:[%s206 + $0x68] sm:$0xff]
      %v237 = vld [vmem:[%s206 + $0x70] sm:$0xff]
      %v238 = vld [vmem:[%s206 + $0x78] sm:$0xff]
      %v239 = vld [vmem:[%s206 + $0x80] sm:$0xff]
      %v240 = vld [vmem:[%s206 + $0x88] sm:$0xff]
      %v241 = vld [vmem:[%s206 + $0x90] sm:$0xff]
      %v242 = vld [vmem:[%s206 + $0x98] sm:$0xff]
      %v243 = vld [vmem:[%s206 + $0xa0] sm:$0xff]
      %v244 = vld [vmem:[%s206 + $0xa8] sm:$0xff]
      %v245 = vld [vmem:[%s206 + $0xb0] sm:$0xff]
      %v246 = vld [vmem:[%s206 + $0xb8] sm:$0xff]
      %v247 = vld [vmem:[%s206 + $0xc0] sm:$0xff]
      %v248 = vld [vmem:[%s206 + $0xc8] sm:$0xff]
      %v249 = vld [vmem:[%s206 + $0xd0] sm:$0xff]
      %v250 = vld [vmem:[%s206 + $0xd8] sm:$0xff]
      %v251 = vld [vmem:[%s206 + $0xe0] sm:$0xff]
      %v252 = vld [vmem:[%s206 + $0xe8] sm:$0xff]
      %v253 = vld [vmem:[%s206 + $0xf0] sm:$0xff]
      %v254 = vld [vmem:[%s206 + $0xf8] sm:$0xff]
      %v255 = vld [vmem:[%s206 + $0x100] sm:$0xff]
      %v256 = vld [vmem:[%s206 + $0x108] sm:$0xff]
      %v257 = vld [vmem:[%s206 + $0x110] sm:$0xff]
      %v258 = vld [vmem:[%s206 + $0x118] sm:$0xff]
      %v259 = vld [vmem:[%s206 + $0x120] sm:$0xff]
      %v260 = vld [vmem:[%s206 + $0x128] sm:$0xff]
      %v261 = vld [vmem:[%s206 + $0x130] sm:$0xff]
      %v262 = vld [vmem:[%s206 + $0x138] sm:$0xff]
      %v263 = vld [vmem:[%s206 + $0x140] sm:$0xff]
      %v264 = vld [vmem:[%s206 + $0x148] sm:$0xff]
      %v265 = vld [vmem:[%s206 + $0x150] sm:$0xff]
      %v266 = vld [vmem:[%s206 + $0x158] sm:$0xff]
      %v267 = vld [vmem:[%s206 + $0x160] sm:$0xff]
      %v268 = vld [vmem:[%s206 + $0x168] sm:$0xff]
      %v269 = vld [vmem:[%s206 + $0x170] sm:$0xff]
      %v270 = vld [vmem:[%s206 + $0x178] sm:$0xff]
      %v271 = vpack.c.bf16 %v224, %v223
      %v272 = vpack.c.bf16 %v226, %v225
      %v273 = vpack.c.bf16 %v228, %v227
      %v274 = vpack.c.bf16 %v230, %v229
      %v275 = vpack.c.bf16 %v232, %v231
      %v276 = vpack.c.bf16 %v234, %v233
      %v277 = vpack.c.bf16 %v236, %v235
      %v278 = vpack.c.bf16 %v238, %v237
      %v279 = vpack.c.bf16 %v240, %v239
      %v280 = vpack.c.bf16 %v242, %v241
      %v281 = vpack.c.bf16 %v244, %v243
      %v282 = vpack.c.bf16 %v246, %v245
      %v283 = vpack.c.bf16 %v248, %v247
      %v284 = vpack.c.bf16 %v250, %v249
      %v285 = vpack.c.bf16 %v252, %v251
      %v286 = vpack.c.bf16 %v254, %v253
      %v287 = vpack.c.bf16 %v256, %v255
      %v288 = vpack.c.bf16 %v258, %v257
      %v289 = vpack.c.bf16 %v260, %v259
      %v290 = vpack.c.bf16 %v262, %v261
      %v291 = vpack.c.bf16 %v264, %v263
      %v292 = vpack.c.bf16 %v266, %v265
      %v293 = vpack.c.bf16 %v268, %v267
      %v294 = vpack.c.bf16 %v270, %v269
      %v295 = vld [vmem:[%s210] sm:$0xf]
      %v296 = vld [vmem:[%s210 + $0x4] sm:$0xf]
      %v297 = vld [vmem:[%s210 + $0x8] sm:$0xf]
      %v298 = vld [vmem:[%s210 + $0xc] sm:$0xf]
      %v299 = vld [vmem:[%s210 + $0x10] sm:$0xf]
      %v300 = vld [vmem:[%s210 + $0x14] sm:$0xf]
      %v301 = vld [vmem:[%s210 + $0x18] sm:$0xf]
      %v302 = vld [vmem:[%s210 + $0x1c] sm:$0xf]
      %v303 = vld [vmem:[%s210 + $0x20] sm:$0xf]
      %v304 = vld [vmem:[%s210 + $0x24] sm:$0xf]
      %v305 = vld [vmem:[%s210 + $0x28] sm:$0xf]
      %v306 = vld [vmem:[%s210 + $0x2c] sm:$0xf]
      %v307 = vld [vmem:[%s210 + $0x30] sm:$0xf]
      %v308 = vld [vmem:[%s210 + $0x34] sm:$0xf]
      %v309 = vld [vmem:[%s210 + $0x38] sm:$0xf]
      %v310 = vld [vmem:[%s210 + $0x3c] sm:$0xf]
      %v311 = vld [vmem:[%s206 + $0x1] sm:$0xff]
      %v312 = vld [vmem:[%s206 + $0x9] sm:$0xff]
      %v313 = vld [vmem:[%s206 + $0x11] sm:$0xff]
      %v314 = vld [vmem:[%s206 + $0x19] sm:$0xff]
      %v315 = vld [vmem:[%s206 + $0x21] sm:$0xff]
      %v316 = vld [vmem:[%s206 + $0x29] sm:$0xff]
      %v317 = vld [vmem:[%s206 + $0x31] sm:$0xff]
      %v318 = vld [vmem:[%s206 + $0x39] sm:$0xff]
      %v319 = vld [vmem:[%s206 + $0x41] sm:$0xff]
      %v320 = vld [vmem:[%s206 + $0x49] sm:$0xff]
      %v321 = vld [vmem:[%s206 + $0x51] sm:$0xff]
      %v322 = vld [vmem:[%s206 + $0x59] sm:$0xff]
      %v323 = vld [vmem:[%s206 + $0x61] sm:$0xff]
      %v324 = vld [vmem:[%s206 + $0x69] sm:$0xff]
      %v325 = vld [vmem:[%s206 + $0x71] sm:$0xff]
      %v326 = vld [vmem:[%s206 + $0x79] sm:$0xff]
      %v327 = vld [vmem:[%s206 + $0x81] sm:$0xff]
      %v328 = vld [vmem:[%s206 + $0x89] sm:$0xff]
      %v329 = vld [vmem:[%s206 + $0x91] sm:$0xff]
      %v330 = vld [vmem:[%s206 + $0x99] sm:$0xff]
      %v331 = vld [vmem:[%s206 + $0xa1] sm:$0xff]
      %v332 = vld [vmem:[%s206 + $0xa9] sm:$0xff]
      %v333 = vld [vmem:[%s206 + $0xb1] sm:$0xff]
      %v334 = vld [vmem:[%s206 + $0xb9] sm:$0xff]
      %v335 = vld [vmem:[%s206 + $0xc1] sm:$0xff]
      %v336 = vld [vmem:[%s206 + $0xc9] sm:$0xff]
      %v337 = vld [vmem:[%s206 + $0xd1] sm:$0xff]
      %v338 = vld [vmem:[%s206 + $0xd9] sm:$0xff]
      %v339 = vld [vmem:[%s206 + $0xe1] sm:$0xff]
      %v340 = vld [vmem:[%s206 + $0xe9] sm:$0xff]
      %v341 = vld [vmem:[%s206 + $0xf1] sm:$0xff]
      %v342 = vld [vmem:[%s206 + $0xf9] sm:$0xff]
      %v343 = vld [vmem:[%s206 + $0x101] sm:$0xff]
      %v344 = vld [vmem:[%s206 + $0x109] sm:$0xff]
      %v345 = vld [vmem:[%s206 + $0x111] sm:$0xff]
      %v346 = vld [vmem:[%s206 + $0x119] sm:$0xff]
      %v347 = vld [vmem:[%s206 + $0x121] sm:$0xff]
      %v348 = vld [vmem:[%s206 + $0x129] sm:$0xff]
      %v349 = vld [vmem:[%s206 + $0x131] sm:$0xff]
      %v350 = vld [vmem:[%s206 + $0x139] sm:$0xff]
      %v351 = vld [vmem:[%s206 + $0x141] sm:$0xff]
      %v352 = vld [vmem:[%s206 + $0x149] sm:$0xff]
      %v353 = vld [vmem:[%s206 + $0x151] sm:$0xff]
      %v354 = vld [vmem:[%s206 + $0x159] sm:$0xff]
      %v355 = vld [vmem:[%s206 + $0x161] sm:$0xff]
      %v356 = vld [vmem:[%s206 + $0x169] sm:$0xff]
      %v357 = vld [vmem:[%s206 + $0x171] sm:$0xff]
      %v358 = vld [vmem:[%s206 + $0x179] sm:$0xff]
      %v359 = vpack.c.bf16 %v312, %v311
      %v360 = vpack.c.bf16 %v314, %v313
      %v361 = vpack.c.bf16 %v316, %v315
      %v362 = vpack.c.bf16 %v318, %v317
      %v363 = vpack.c.bf16 %v320, %v319
      %v364 = vpack.c.bf16 %v322, %v321
      %v365 = vpack.c.bf16 %v324, %v323
      %v366 = vpack.c.bf16 %v326, %v325
      %v367 = vpack.c.bf16 %v328, %v327
      %v368 = vpack.c.bf16 %v330, %v329
      %v369 = vpack.c.bf16 %v332, %v331
      %v370 = vpack.c.bf16 %v334, %v333
      %v371 = vpack.c.bf16 %v336, %v335
      %v372 = vpack.c.bf16 %v338, %v337
      %v373 = vpack.c.bf16 %v340, %v339
      %v374 = vpack.c.bf16 %v342, %v341
      %v375 = vpack.c.bf16 %v344, %v343
      %v376 = vpack.c.bf16 %v346, %v345
      %v377 = vpack.c.bf16 %v348, %v347
      %v378 = vpack.c.bf16 %v350, %v349
      %v379 = vpack.c.bf16 %v352, %v351
      %v380 = vpack.c.bf16 %v354, %v353
      %v381 = vpack.c.bf16 %v356, %v355
      %v382 = vpack.c.bf16 %v358, %v357
      %s383 = scalar_lea.vmem %s210, 64
      %v384 = vld [vmem:[%s383] sm:$0xf]
      %v385 = vld [vmem:[%s383 + $0x4] sm:$0xf]
      %v386 = vld [vmem:[%s383 + $0x8] sm:$0xf]
      %v387 = vld [vmem:[%s383 + $0xc] sm:$0xf]
      %v388 = vld [vmem:[%s383 + $0x10] sm:$0xf]
      %v389 = vld [vmem:[%s383 + $0x14] sm:$0xf]
      %v390 = vld [vmem:[%s383 + $0x18] sm:$0xf]
      %v391 = vld [vmem:[%s383 + $0x1c] sm:$0xf]
      %v392 = vld [vmem:[%s383 + $0x20] sm:$0xf]
      %v393 = vld [vmem:[%s383 + $0x24] sm:$0xf]
      %v394 = vld [vmem:[%s383 + $0x28] sm:$0xf]
      %v395 = vld [vmem:[%s383 + $0x2c] sm:$0xf]
      %v396 = vld [vmem:[%s383 + $0x30] sm:$0xf]
      %v397 = vld [vmem:[%s383 + $0x34] sm:$0xf]
      %v398 = vld [vmem:[%s383 + $0x38] sm:$0xf]
      %v399 = vld [vmem:[%s383 + $0x3c] sm:$0xf]
      %v416 = vunpack.c.l.b16 %v384
      %v417 = vunpack.c.l.b16 %v385
      %v418 = vunpack.c.l.b16 %v386
      %v419 = vunpack.c.l.b16 %v387
      %v420 = vunpack.c.l.b16 %v388
      %v421 = vunpack.c.l.b16 %v389
      %v422 = vunpack.c.l.b16 %v390
      %v423 = vunpack.c.l.b16 %v391
      %v424 = vunpack.c.l.b16 %v392
      %v425 = vunpack.c.l.b16 %v393
      %v426 = vunpack.c.l.b16 %v394
      %v427 = vunpack.c.l.b16 %v395
      %v428 = vunpack.c.l.b16 %v396
      %v429 = vunpack.c.l.b16 %v397
      %v430 = vunpack.c.l.b16 %v398
      %v431 = vunpack.c.l.b16 %v399
      %v432 = vpack.c.b16 %v417, %v416
      %v433 = vpack.c.b16 %v419, %v418
      %v434 = vpack.c.b16 %v421, %v420
      %v435 = vpack.c.b16 %v423, %v422
      %v436 = vpack.c.b16 %v425, %v424
      %v437 = vpack.c.b16 %v427, %v426
      %v438 = vpack.c.b16 %v429, %v428
      %v439 = vpack.c.b16 %v431, %v430
      %448 = vmatprep.subr.bf16.mxu0 0
      %449 = vmatpush1.bf16.msra.mxu0 %v432
      %450 = vmatprep.subr.bf16.mxu0 0
      %451 = vmatpush1.bf16.msra.mxu0 %v433
      %452 = vmatprep.subr.bf16.mxu0 0
      %453 = vmatpush1.bf16.msra.mxu0 %v434
      %454 = vmatprep.subr.bf16.mxu0 0
      %455 = vmatpush1.bf16.msra.mxu0 %v435
      %456 = vmatprep.subr.bf16.mxu0 0
      %457 = vmatpush1.bf16.msra.mxu0 %v436
      %458 = vmatprep.subr.bf16.mxu0 0
      %459 = vmatpush1.bf16.msra.mxu0 %v437
      %460 = vmatprep.subr.bf16.mxu0 0
      %461 = vmatpush1.bf16.msra.mxu0 %v438
      %462 = vmatprep.subr.bf16.mxu0 0
      %463 = vmatpush1.bf16.msra.mxu0 %v439
      %464 = vmatprep.subr.bf16.mxu0 0
      %465 = vmatpush1.bf16.msra.mxu0 0
      %466 = vmatprep.subr.bf16.mxu0 0
      %467 = vmatpush1.bf16.msra.mxu0 0
      %468 = vmatprep.subr.bf16.mxu0 0
      %469 = vmatpush1.bf16.msra.mxu0 0
      %470 = vmatprep.subr.bf16.mxu0 0
      %471 = vmatpush1.bf16.msra.mxu0 0
      %472 = vmatprep.subr.bf16.mxu0 0
      %473 = vmatpush1.bf16.msra.mxu0 0
      %474 = vmatprep.subr.bf16.mxu0 0
      %475 = vmatpush1.bf16.msra.mxu0 0
      %476 = vmatprep.subr.bf16.mxu0 0
      %477 = vmatpush1.bf16.msra.mxu0 0
      %478 = vmatprep.subr.bf16.mxu0 0
      %479 = vmatpush1.bf16.msra.mxu0 0
      %480 = vmatprep.mubr.bf16.mxu0 0
      %481 = vmatmul.mubr.bf16.gmra.mrb[0].mxu0 %v359
      %v482 = vpop.f32.mrb[0].mxu0
      %v483 = vadd.f32 0.0, %v482
      %v484 = vpop.f32.mrb[0].mxu0
      %v485 = vpop.f32.mrb[0].mxu0
      %v486 = vadd.f32 0.0, %v485
      %v487 = vpop.f32.mrb[0].mxu0
      %488 = vmatprep.mubr.bf16.mxu0 0
      %489 = vmatmul.mubr.bf16.gmra.mrb[0].mxu0 %v360
      %v490 = vpop.f32.mrb[0].mxu0
      %v491 = vadd.f32 0.0, %v490
      %v492 = vpop.f32.mrb[0].mxu0
      %v493 = vpop.f32.mrb[0].mxu0
      %v494 = vadd.f32 0.0, %v493
      %v495 = vpop.f32.mrb[0].mxu0
      %496 = vmatprep.mubr.bf16.mxu0 0
      %497 = vmatmul.mubr.bf16.gmra.mrb[0].mxu0 %v361
      %v498 = vpop.f32.mrb[0].mxu0
      %v499 = vadd.f32 0.0, %v498
      %v500 = vpop.f32.mrb[0].mxu0
      %v501 = vpop.f32.mrb[0].mxu0
      %v502 = vadd.f32 0.0, %v501
      %v503 = vpop.f32.mrb[0].mxu0
      %504 = vmatprep.mubr.bf16.mxu0 0
      %505 = vmatmul.mubr.bf16.gmra.mrb[0].mxu0 %v362
      %v506 = vpop.f32.mrb[0].mxu0
      %v507 = vadd.f32 0.0, %v506
      %v508 = vpop.f32.mrb[0].mxu0
      %v509 = vpop.f32.mrb[0].mxu0
      %v510 = vadd.f32 0.0, %v509
      %v511 = vpop.f32.mrb[0].mxu0
      %512 = vmatprep.mubr.bf16.mxu0 0
      %513 = vmatmul.mubr.bf16.gmra.mrb[0].mxu0 %v363
      %v514 = vpop.f32.mrb[0].mxu0
      %v515 = vadd.f32 0.0, %v514
      %v516 = vpop.f32.mrb[0].mxu0
      %v517 = vpop.f32.mrb[0].mxu0
      %v518 = vadd.f32 0.0, %v517
      %v519 = vpop.f32.mrb[0].mxu0
      %520 = vmatprep.mubr.bf16.mxu0 0
      %521 = vmatmul.mubr.bf16.gmra.mrb[0].mxu0 %v364
      %v522 = vpop.f32.mrb[0].mxu0
      %v523 = vadd.f32 0.0, %v522
      %v524 = vpop.f32.mrb[0].mxu0
      %v525 = vpop.f32.mrb[0].mxu0
      %v526 = vadd.f32 0.0, %v525
      %v527 = vpop.f32.mrb[0].mxu0
      %528 = vmatprep.mubr.bf16.mxu0 0
      %529 = vmatmul.mubr.bf16.gmra.mrb[0].mxu0 %v365
      %v530 = vpop.f32.mrb[0].mxu0
      %v531 = vadd.f32 0.0, %v530
      %v532 = vpop.f32.mrb[0].mxu0
      %v533 = vpop.f32.mrb[0].mxu0
      %v534 = vadd.f32 0.0, %v533
      %v535 = vpop.f32.mrb[0].mxu0
      %536 = vmatprep.mubr.bf16.mxu0 0
      %537 = vmatmul.mubr.bf16.gmra.mrb[0].mxu0 %v366
      %v538 = vpop.f32.mrb[0].mxu0
      %v539 = vadd.f32 0.0, %v538
      %v540 = vpop.f32.mrb[0].mxu0
      %v541 = vpop.f32.mrb[0].mxu0
      %v542 = vadd.f32 0.0, %v541
      %v543 = vpop.f32.mrb[0].mxu0
      %544 = vmatprep.mubr.bf16.mxu0 0
      %545 = vmatmul.mubr.bf16.gmra.mrb[0].mxu0 %v367
      %v546 = vpop.f32.mrb[0].mxu0
      %v547 = vadd.f32 0.0, %v546
      %v548 = vpop.f32.mrb[0].mxu0
      %v549 = vpop.f32.mrb[0].mxu0
      %v550 = vadd.f32 0.0, %v549
      %v551 = vpop.f32.mrb[0].mxu0
      %552 = vmatprep.mubr.bf16.mxu0 0
      %553 = vmatmul.mubr.bf16.gmra.mrb[0].mxu0 %v368
      %v554 = vpop.f32.mrb[0].mxu0
      %v555 = vadd.f32 0.0, %v554
      %v556 = vpop.f32.mrb[0].mxu0
      %v557 = vpop.f32.mrb[0].mxu0
      %v558 = vadd.f32 0.0, %v557
      %v559 = vpop.f32.mrb[0].mxu0
      %560 = vmatprep.mubr.bf16.mxu0 0
      %561 = vmatmul.mubr.bf16.gmra.mrb[0].mxu0 %v369
      %v562 = vpop.f32.mrb[0].mxu0
      %v563 = vadd.f32 0.0, %v562
      %v564 = vpop.f32.mrb[0].mxu0
      %v565 = vpop.f32.mrb[0].mxu0
      %v566 = vadd.f32 0.0, %v565
      %v567 = vpop.f32.mrb[0].mxu0
      %568 = vmatprep.mubr.bf16.mxu0 0
      %569 = vmatmul.mubr.bf16.gmra.mrb[0].mxu0 %v370
      %v570 = vpop.f32.mrb[0].mxu0
      %v571 = vadd.f32 0.0, %v570
      %v572 = vpop.f32.mrb[0].mxu0
      %v573 = vpop.f32.mrb[0].mxu0
      %v574 = vadd.f32 0.0, %v573
      %v575 = vpop.f32.mrb[0].mxu0
      %576 = vmatprep.mubr.bf16.mxu0 0
      %577 = vmatmul.mubr.bf16.gmra.mrb[0].mxu0 %v371
      %v578 = vpop.f32.mrb[0].mxu0
      %v579 = vadd.f32 0.0, %v578
      %v580 = vpop.f32.mrb[0].mxu0
      %v581 = vpop.f32.mrb[0].mxu0
      %v582 = vadd.f32 0.0, %v581
      %v583 = vpop.f32.mrb[0].mxu0
      %584 = vmatprep.mubr.bf16.mxu0 0
      %585 = vmatmul.mubr.bf16.gmra.mrb[0].mxu0 %v372
      %v586 = vpop.f32.mrb[0].mxu0
      %v587 = vadd.f32 0.0, %v586
      %v588 = vpop.f32.mrb[0].mxu0
      %v589 = vpop.f32.mrb[0].mxu0
      %v590 = vadd.f32 0.0, %v589
      %v591 = vpop.f32.mrb[0].mxu0
      %592 = vmatprep.mubr.bf16.mxu0 0
      %593 = vmatmul.mubr.bf16.gmra.mrb[0].mxu0 %v373
      %v594 = vpop.f32.mrb[0].mxu0
      %v595 = vadd.f32 0.0, %v594
      %v596 = vpop.f32.mrb[0].mxu0
      %v597 = vpop.f32.mrb[0].mxu0
      %v598 = vadd.f32 0.0, %v597
      %v599 = vpop.f32.mrb[0].mxu0
      %600 = vmatprep.mubr.bf16.mxu0 0
      %601 = vmatmul.mubr.bf16.gmra.mrb[0].mxu0 %v374
      %v602 = vpop.f32.mrb[0].mxu0
      %v603 = vadd.f32 0.0, %v602
      %v604 = vpop.f32.mrb[0].mxu0
      %v605 = vpop.f32.mrb[0].mxu0
      %v606 = vadd.f32 0.0, %v605
      %v607 = vpop.f32.mrb[0].mxu0
      %608 = vmatprep.mubr.bf16.mxu0 0
      %609 = vmatmul.mubr.bf16.gmra.mrb[0].mxu0 %v375
      %v610 = vpop.f32.mrb[0].mxu0
      %v611 = vadd.f32 0.0, %v610
      %v612 = vpop.f32.mrb[0].mxu0
      %v613 = vpop.f32.mrb[0].mxu0
      %v614 = vadd.f32 0.0, %v613
      %v615 = vpop.f32.mrb[0].mxu0
      %616 = vmatprep.mubr.bf16.mxu0 0
      %617 = vmatmul.mubr.bf16.gmra.mrb[0].mxu0 %v376
      %v618 = vpop.f32.mrb[0].mxu0
      %v619 = vadd.f32 0.0, %v618
      %v620 = vpop.f32.mrb[0].mxu0
      %v621 = vpop.f32.mrb[0].mxu0
      %v622 = vadd.f32 0.0, %v621
      %v623 = vpop.f32.mrb[0].mxu0
      %624 = vmatprep.mubr.bf16.mxu0 0
      %625 = vmatmul.mubr.bf16.gmra.mrb[0].mxu0 %v377
      %v626 = vpop.f32.mrb[0].mxu0
      %v627 = vadd.f32 0.0, %v626
      %v628 = vpop.f32.mrb[0].mxu0
      %v629 = vpop.f32.mrb[0].mxu0
      %v630 = vadd.f32 0.0, %v629
      %v631 = vpop.f32.mrb[0].mxu0
      %632 = vmatprep.mubr.bf16.mxu0 0
      %633 = vmatmul.mubr.bf16.gmra.mrb[0].mxu0 %v378
      %v634 = vpop.f32.mrb[0].mxu0
      %v635 = vadd.f32 0.0, %v634
      %v636 = vpop.f32.mrb[0].mxu0
      %v637 = vpop.f32.mrb[0].mxu0
      %v638 = vadd.f32 0.0, %v637
      %v639 = vpop.f32.mrb[0].mxu0
      %640 = vmatprep.mubr.bf16.mxu0 0
      %641 = vmatmul.mubr.bf16.gmra.mrb[0].mxu0 %v379
      %v642 = vpop.f32.mrb[0].mxu0
      %v643 = vadd.f32 0.0, %v642
      %v644 = vpop.f32.mrb[0].mxu0
      %v645 = vpop.f32.mrb[0].mxu0
      %v646 = vadd.f32 0.0, %v645
      %v647 = vpop.f32.mrb[0].mxu0
      %648 = vmatprep.mubr.bf16.mxu0 0
      %649 = vmatmul.mubr.bf16.gmra.mrb[0].mxu0 %v380
      %v650 = vpop.f32.mrb[0].mxu0
      %v651 = vadd.f32 0.0, %v650
      %v652 = vpop.f32.mrb[0].mxu0
      %v653 = vpop.f32.mrb[0].mxu0
      %v654 = vadd.f32 0.0, %v653
      %v655 = vpop.f32.mrb[0].mxu0
      %656 = vmatprep.mubr.bf16.mxu0 0
      %657 = vmatmul.mubr.bf16.gmra.mrb[0].mxu0 %v381
      %v658 = vpop.f32.mrb[0].mxu0
      %v659 = vadd.f32 0.0, %v658
      %v660 = vpop.f32.mrb[0].mxu0
      %v661 = vpop.f32.mrb[0].mxu0
      %v662 = vadd.f32 0.0, %v661
      %v663 = vpop.f32.mrb[0].mxu0
      %664 = vmatprep.mubr.bf16.mxu0 0
      %665 = vmatmul.mubr.bf16.gmra.mrb[0].mxu0 %v382
      %v666 = vpop.f32.mrb[0].mxu0
      %v667 = vadd.f32 0.0, %v666
      %v668 = vpop.f32.mrb[0].mxu0
      %v669 = vpop.f32.mrb[0].mxu0
      %v670 = vadd.f32 0.0, %v669
      %v671 = vpop.f32.mrb[0].mxu0
      %672 = vdwg.mxu0
      %v689 = vunpack.c.l.b16 %v295
      %v690 = vunpack.c.l.b16 %v296
      %v691 = vunpack.c.l.b16 %v297
      %v692 = vunpack.c.l.b16 %v298
      %v693 = vunpack.c.l.b16 %v299
      %v694 = vunpack.c.l.b16 %v300
      %v695 = vunpack.c.l.b16 %v301
      %v696 = vunpack.c.l.b16 %v302
      %v697 = vunpack.c.l.b16 %v303
      %v698 = vunpack.c.l.b16 %v304
      %v699 = vunpack.c.l.b16 %v305
      %v700 = vunpack.c.l.b16 %v306
      %v701 = vunpack.c.l.b16 %v307
      %v702 = vunpack.c.l.b16 %v308
      %v703 = vunpack.c.l.b16 %v309
      %v704 = vunpack.c.l.b16 %v310
      %v705 = vpack.c.b16 %v690, %v689
      %v706 = vpack.c.b16 %v692, %v691
      %v707 = vpack.c.b16 %v694, %v693
      %v708 = vpack.c.b16 %v696, %v695
      %v709 = vpack.c.b16 %v698, %v697
      %v710 = vpack.c.b16 %v700, %v699
      %v711 = vpack.c.b16 %v702, %v701
      %v712 = vpack.c.b16 %v704, %v703
      %721 = vmatprep.subr.bf16.mxu0 0
      %722 = vmatpush1.bf16.msra.mxu0 %v705
      %723 = vmatprep.subr.bf16.mxu0 0
      %724 = vmatpush1.bf16.msra.mxu0 %v706
      %725 = vmatprep.subr.bf16.mxu0 0
      %726 = vmatpush1.bf16.msra.mxu0 %v707
      %727 = vmatprep.subr.bf16.mxu0 0
      %728 = vmatpush1.bf16.msra.mxu0 %v708
      %729 = vmatprep.subr.bf16.mxu0 0
      %730 = vmatpush1.bf16.msra.mxu0 %v709
      %731 = vmatprep.subr.bf16.mxu0 0
      %732 = vmatpush1.bf16.msra.mxu0 %v710
      %733 = vmatprep.subr.bf16.mxu0 0
      %734 = vmatpush1.bf16.msra.mxu0 %v711
      %735 = vmatprep.subr.bf16.mxu0 0
      %736 = vmatpush1.bf16.msra.mxu0 %v712
      %737 = vmatprep.subr.bf16.mxu0 0
      %738 = vmatpush1.bf16.msra.mxu0 0
      %739 = vmatprep.subr.bf16.mxu0 0
      %740 = vmatpush1.bf16.msra.mxu0 0
      %741 = vmatprep.subr.bf16.mxu0 0
      %742 = vmatpush1.bf16.msra.mxu0 0
      %743 = vmatprep.subr.bf16.mxu0 0
      %744 = vmatpush1.bf16.msra.mxu0 0
      %745 = vmatprep.subr.bf16.mxu0 0
      %746 = vmatpush1.bf16.msra.mxu0 0
      %747 = vmatprep.subr.bf16.mxu0 0
      %748 = vmatpush1.bf16.msra.mxu0 0
      %749 = vmatprep.subr.bf16.mxu0 0
      %750 = vmatpush1.bf16.msra.mxu0 0
      %751 = vmatprep.subr.bf16.mxu0 0
      %752 = vmatpush1.bf16.msra.mxu0 0
      %753 = vmatprep.mubr.bf16.mxu0 0
      %754 = vmatmul.mubr.bf16.gmra.mrb[0].mxu0 %v271
      %v755 = vpop.f32.mrb[0].mxu0
      %v756 = vadd.f32 %v483, %v755
      %v757 = vpop.f32.mrb[0].mxu0
      %v758 = vpop.f32.mrb[0].mxu0
      %v759 = vadd.f32 %v486, %v758
      %v760 = vpop.f32.mrb[0].mxu0
      %761 = vmatprep.mubr.bf16.mxu0 0
      %762 = vmatmul.mubr.bf16.gmra.mrb[0].mxu0 %v272
      %v763 = vpop.f32.mrb[0].mxu0
      %v764 = vadd.f32 %v491, %v763
      %v765 = vpop.f32.mrb[0].mxu0
      %v766 = vpop.f32.mrb[0].mxu0
      %v767 = vadd.f32 %v494, %v766
      %v768 = vpop.f32.mrb[0].mxu0
      %769 = vmatprep.mubr.bf16.mxu0 0
      %770 = vmatmul.mubr.bf16.gmra.mrb[0].mxu0 %v273
      %v771 = vpop.f32.mrb[0].mxu0
      %v772 = vadd.f32 %v499, %v771
      %v773 = vpop.f32.mrb[0].mxu0
      %v774 = vpop.f32.mrb[0].mxu0
      %v775 = vadd.f32 %v502, %v774
      %v776 = vpop.f32.mrb[0].mxu0
      %777 = vmatprep.mubr.bf16.mxu0 0
      %778 = vmatmul.mubr.bf16.gmra.mrb[0].mxu0 %v274
      %v779 = vpop.f32.mrb[0].mxu0
      %v780 = vadd.f32 %v507, %v779
      %v781 = vpop.f32.mrb[0].mxu0
      %v782 = vpop.f32.mrb[0].mxu0
      %v783 = vadd.f32 %v510, %v782
      %v784 = vpop.f32.mrb[0].mxu0
      %785 = vmatprep.mubr.bf16.mxu0 0
      %786 = vmatmul.mubr.bf16.gmra.mrb[0].mxu0 %v275
      %v787 = vpop.f32.mrb[0].mxu0
      %v788 = vadd.f32 %v515, %v787
      %v789 = vpop.f32.mrb[0].mxu0
      %v790 = vpop.f32.mrb[0].mxu0
      %v791 = vadd.f32 %v518, %v790
      %v792 = vpop.f32.mrb[0].mxu0
      %793 = vmatprep.mubr.bf16.mxu0 0
      %794 = vmatmul.mubr.bf16.gmra.mrb[0].mxu0 %v276
      %v795 = vpop.f32.mrb[0].mxu0
      %v796 = vadd.f32 %v523, %v795
      %v797 = vpop.f32.mrb[0].mxu0
      %v798 = vpop.f32.mrb[0].mxu0
      %v799 = vadd.f32 %v526, %v798
      %v800 = vpop.f32.mrb[0].mxu0
      %801 = vmatprep.mubr.bf16.mxu0 0
      %802 = vmatmul.mubr.bf16.gmra.mrb[0].mxu0 %v277
      %v803 = vpop.f32.mrb[0].mxu0
      %v804 = vadd.f32 %v531, %v803
      %v805 = vpop.f32.mrb[0].mxu0
      %v806 = vpop.f32.mrb[0].mxu0
      %v807 = vadd.f32 %v534, %v806
      %v808 = vpop.f32.mrb[0].mxu0
      %809 = vmatprep.mubr.bf16.mxu0 0
      %810 = vmatmul.mubr.bf16.gmra.mrb[0].mxu0 %v278
      %v811 = vpop.f32.mrb[0].mxu0
      %v812 = vadd.f32 %v539, %v811
      %v813 = vpop.f32.mrb[0].mxu0
      %v814 = vpop.f32.mrb[0].mxu0
      %v815 = vadd.f32 %v542, %v814
      %v816 = vpop.f32.mrb[0].mxu0
      %817 = vmatprep.mubr.bf16.mxu0 0
      %818 = vmatmul.mubr.bf16.gmra.mrb[0].mxu0 %v279
      %v819 = vpop.f32.mrb[0].mxu0
      %v820 = vadd.f32 %v547, %v819
      %v821 = vpop.f32.mrb[0].mxu0
      %v822 = vpop.f32.mrb[0].mxu0
      %v823 = vadd.f32 %v550, %v822
      %v824 = vpop.f32.mrb[0].mxu0
      %825 = vmatprep.mubr.bf16.mxu0 0
      %826 = vmatmul.mubr.bf16.gmra.mrb[0].mxu0 %v280
      %v827 = vpop.f32.mrb[0].mxu0
      %v828 = vadd.f32 %v555, %v827
      %v829 = vpop.f32.mrb[0].mxu0
      %v830 = vpop.f32.mrb[0].mxu0
      %v831 = vadd.f32 %v558, %v830
      %v832 = vpop.f32.mrb[0].mxu0
      %833 = vmatprep.mubr.bf16.mxu0 0
      %834 = vmatmul.mubr.bf16.gmra.mrb[0].mxu0 %v281
      %v835 = vpop.f32.mrb[0].mxu0
      %v836 = vadd.f32 %v563, %v835
      %v837 = vpop.f32.mrb[0].mxu0
      %v838 = vpop.f32.mrb[0].mxu0
      %v839 = vadd.f32 %v566, %v838
      %v840 = vpop.f32.mrb[0].mxu0
      %841 = vmatprep.mubr.bf16.mxu0 0
      %842 = vmatmul.mubr.bf16.gmra.mrb[0].mxu0 %v282
      %v843 = vpop.f32.mrb[0].mxu0
      %v844 = vadd.f32 %v571, %v843
      %v845 = vpop.f32.mrb[0].mxu0
      %v846 = vpop.f32.mrb[0].mxu0
      %v847 = vadd.f32 %v574, %v846
      %v848 = vpop.f32.mrb[0].mxu0
      %849 = vmatprep.mubr.bf16.mxu0 0
      %850 = vmatmul.mubr.bf16.gmra.mrb[0].mxu0 %v283
      %v851 = vpop.f32.mrb[0].mxu0
      %v852 = vadd.f32 %v579, %v851
      %v853 = vpop.f32.mrb[0].mxu0
      %v854 = vpop.f32.mrb[0].mxu0
      %v855 = vadd.f32 %v582, %v854
      %v856 = vpop.f32.mrb[0].mxu0
      %857 = vmatprep.mubr.bf16.mxu0 0
      %858 = vmatmul.mubr.bf16.gmra.mrb[0].mxu0 %v284
      %v859 = vpop.f32.mrb[0].mxu0
      %v860 = vadd.f32 %v587, %v859
      %v861 = vpop.f32.mrb[0].mxu0
      %v862 = vpop.f32.mrb[0].mxu0
      %v863 = vadd.f32 %v590, %v862
      %v864 = vpop.f32.mrb[0].mxu0
      %865 = vmatprep.mubr.bf16.mxu0 0
      %866 = vmatmul.mubr.bf16.gmra.mrb[0].mxu0 %v285
      %v867 = vpop.f32.mrb[0].mxu0
      %v868 = vadd.f32 %v595, %v867
      %v869 = vpop.f32.mrb[0].mxu0
      %v870 = vpop.f32.mrb[0].mxu0
      %v871 = vadd.f32 %v598, %v870
      %v872 = vpop.f32.mrb[0].mxu0
      %873 = vmatprep.mubr.bf16.mxu0 0
      %874 = vmatmul.mubr.bf16.gmra.mrb[0].mxu0 %v286
      %v875 = vpop.f32.mrb[0].mxu0
      %v876 = vadd.f32 %v603, %v875
      %v877 = vpop.f32.mrb[0].mxu0
      %v878 = vpop.f32.mrb[0].mxu0
      %v879 = vadd.f32 %v606, %v878
      %v880 = vpop.f32.mrb[0].mxu0
      %881 = vmatprep.mubr.bf16.mxu0 0
      %882 = vmatmul.mubr.bf16.gmra.mrb[0].mxu0 %v287
      %v883 = vpop.f32.mrb[0].mxu0
      %v884 = vadd.f32 %v611, %v883
      %v885 = vpop.f32.mrb[0].mxu0
      %v886 = vpop.f32.mrb[0].mxu0
      %v887 = vadd.f32 %v614, %v886
      %v888 = vpop.f32.mrb[0].mxu0
      %889 = vmatprep.mubr.bf16.mxu0 0
      %890 = vmatmul.mubr.bf16.gmra.mrb[0].mxu0 %v288
      %v891 = vpop.f32.mrb[0].mxu0
      %v892 = vadd.f32 %v619, %v891
      %v893 = vpop.f32.mrb[0].mxu0
      %v894 = vpop.f32.mrb[0].mxu0
      %v895 = vadd.f32 %v622, %v894
      %v896 = vpop.f32.mrb[0].mxu0
      %897 = vmatprep.mubr.bf16.mxu0 0
      %898 = vmatmul.mubr.bf16.gmra.mrb[0].mxu0 %v289
      %v899 = vpop.f32.mrb[0].mxu0
      %v900 = vadd.f32 %v627, %v899
      %v901 = vpop.f32.mrb[0].mxu0
      %v902 = vpop.f32.mrb[0].mxu0
      %v903 = vadd.f32 %v630, %v902
      %v904 = vpop.f32.mrb[0].mxu0
      %905 = vmatprep.mubr.bf16.mxu0 0
      %906 = vmatmul.mubr.bf16.gmra.mrb[0].mxu0 %v290
      %v907 = vpop.f32.mrb[0].mxu0
      %v908 = vadd.f32 %v635, %v907
      %v909 = vpop.f32.mrb[0].mxu0
      %v910 = vpop.f32.mrb[0].mxu0
      %v911 = vadd.f32 %v638, %v910
      %v912 = vpop.f32.mrb[0].mxu0
      %913 = vmatprep.mubr.bf16.mxu0 0
      %914 = vmatmul.mubr.bf16.gmra.mrb[0].mxu0 %v291
      %v915 = vpop.f32.mrb[0].mxu0
      %v916 = vadd.f32 %v643, %v915
      %v917 = vpop.f32.mrb[0].mxu0
      %v918 = vpop.f32.mrb[0].mxu0
      %v919 = vadd.f32 %v646, %v918
      %v920 = vpop.f32.mrb[0].mxu0
      %921 = vmatprep.mubr.bf16.mxu0 0
      %922 = vmatmul.mubr.bf16.gmra.mrb[0].mxu0 %v292
      %v923 = vpop.f32.mrb[0].mxu0
      %v924 = vadd.f32 %v651, %v923
      %v925 = vpop.f32.mrb[0].mxu0
      %v926 = vpop.f32.mrb[0].mxu0
      %v927 = vadd.f32 %v654, %v926
      %v928 = vpop.f32.mrb[0].mxu0
      %929 = vmatprep.mubr.bf16.mxu0 0
      %930 = vmatmul.mubr.bf16.gmra.mrb[0].mxu0 %v293
      %v931 = vpop.f32.mrb[0].mxu0
      %v932 = vadd.f32 %v659, %v931
      %v933 = vpop.f32.mrb[0].mxu0
      %v934 = vpop.f32.mrb[0].mxu0
      %v935 = vadd.f32 %v662, %v934
      %v936 = vpop.f32.mrb[0].mxu0
      %937 = vmatprep.mubr.bf16.mxu0 0
      %938 = vmatmul.mubr.bf16.gmra.mrb[0].mxu0 %v294
      %v939 = vpop.f32.mrb[0].mxu0
      %v940 = vadd.f32 %v667, %v939
      %v941 = vpop.f32.mrb[0].mxu0
      %v942 = vpop.f32.mrb[0].mxu0
      %v943 = vadd.f32 %v670, %v942
      %v944 = vpop.f32.mrb[0].mxu0
      %945 = vdwg.mxu0
      %v946 = vld [vmem:[%s206 + $0x2] sm:$0xff]
      %v947 = vld [vmem:[%s206 + $0xa] sm:$0xff]
      %v948 = vld [vmem:[%s206 + $0x12] sm:$0xff]
      %v949 = vld [vmem:[%s206 + $0x1a] sm:$0xff]
      %v950 = vld [vmem:[%s206 + $0x22] sm:$0xff]
      %v951 = vld [vmem:[%s206 + $0x2a] sm:$0xff]
      %v952 = vld [vmem:[%s206 + $0x32] sm:$0xff]
      %v953 = vld [vmem:[%s206 + $0x3a] sm:$0xff]
      %v954 = vld [vmem:[%s206 + $0x42] sm:$0xff]
      %v955 = vld [vmem:[%s206 + $0x4a] sm:$0xff]
      %v956 = vld [vmem:[%s206 + $0x52] sm:$0xff]
      %v957 = vld [vmem:[%s206 + $0x5a] sm:$0xff]
      %v958 = vld [vmem:[%s206 + $0x62] sm:$0xff]
      %v959 = vld [vmem:[%s206 + $0x6a] sm:$0xff]
      %v960 = vld [vmem:[%s206 + $0x72] sm:$0xff]
      %v961 = vld [vmem:[%s206 + $0x7a] sm:$0xff]
      %v962 = vld [vmem:[%s206 + $0x82] sm:$0xff]
      %v963 = vld [vmem:[%s206 + $0x8a] sm:$0xff]
      %v964 = vld [vmem:[%s206 + $0x92] sm:$0xff]
      %v965 = vld [vmem:[%s206 + $0x9a] sm:$0xff]
      %v966 = vld [vmem:[%s206 + $0xa2] sm:$0xff]
      %v967 = vld [vmem:[%s206 + $0xaa] sm:$0xff]
      %v968 = vld [vmem:[%s206 + $0xb2] sm:$0xff]
      %v969 = vld [vmem:[%s206 + $0xba] sm:$0xff]
      %v970 = vld [vmem:[%s206 + $0xc2] sm:$0xff]
      %v971 = vld [vmem:[%s206 + $0xca] sm:$0xff]
      %v972 = vld [vmem:[%s206 + $0xd2] sm:$0xff]
      %v973 = vld [vmem:[%s206 + $0xda] sm:$0xff]
      %v974 = vld [vmem:[%s206 + $0xe2] sm:$0xff]
      %v975 = vld [vmem:[%s206 + $0xea] sm:$0xff]
      %v976 = vld [vmem:[%s206 + $0xf2] sm:$0xff]
      %v977 = vld [vmem:[%s206 + $0xfa] sm:$0xff]
      %v978 = vld [vmem:[%s206 + $0x102] sm:$0xff]
      %v979 = vld [vmem:[%s206 + $0x10a] sm:$0xff]
      %v980 = vld [vmem:[%s206 + $0x112] sm:$0xff]
      %v981 = vld [vmem:[%s206 + $0x11a] sm:$0xff]
      %v982 = vld [vmem:[%s206 + $0x122] sm:$0xff]
      %v983 = vld [vmem:[%s206 + $0x12a] sm:$0xff]
      %v984 = vld [vmem:[%s206 + $0x132] sm:$0xff]
      %v985 = vld [vmem:[%s206 + $0x13a] sm:$0xff]
      %v986 = vld [vmem:[%s206 + $0x142] sm:$0xff]
      %v987 = vld [vmem:[%s206 + $0x14a] sm:$0xff]
      %v988 = vld [vmem:[%s206 + $0x152] sm:$0xff]
      %v989 = vld [vmem:[%s206 + $0x15a] sm:$0xff]
      %v990 = vld [vmem:[%s206 + $0x162] sm:$0xff]
      %v991 = vld [vmem:[%s206 + $0x16a] sm:$0xff]
      %v992 = vld [vmem:[%s206 + $0x172] sm:$0xff]
      %v993 = vld [vmem:[%s206 + $0x17a] sm:$0xff]
      %v994 = vpack.c.bf16 %v947, %v946
      %v995 = vpack.c.bf16 %v949, %v948
      %v996 = vpack.c.bf16 %v951, %v950
      %v997 = vpack.c.bf16 %v953, %v952
      %v998 = vpack.c.bf16 %v955, %v954
      %v999 = vpack.c.bf16 %v957, %v956
      %v1000 = vpack.c.bf16 %v959, %v958
      %v1001 = vpack.c.bf16 %v961, %v960
      %v1002 = vpack.c.bf16 %v963, %v962
      %v1003 = vpack.c.bf16 %v965, %v964
      %v1004 = vpack.c.bf16 %v967, %v966
      %v1005 = vpack.c.bf16 %v969, %v968
      %v1006 = vpack.c.bf16 %v971, %v970
      %v1007 = vpack.c.bf16 %v973, %v972
      %v1008 = vpack.c.bf16 %v975, %v974
      %v1009 = vpack.c.bf16 %v977, %v976
      %v1010 = vpack.c.bf16 %v979, %v978
      %v1011 = vpack.c.bf16 %v981, %v980
      %v1012 = vpack.c.bf16 %v983, %v982
      %v1013 = vpack.c.bf16 %v985, %v984
      %v1014 = vpack.c.bf16 %v987, %v986
      %v1015 = vpack.c.bf16 %v989, %v988
      %v1016 = vpack.c.bf16 %v991, %v990
      %v1017 = vpack.c.bf16 %v993, %v992
      %s1018 = scalar_lea.vmem %s210, 128
      %v1019 = vld [vmem:[%s1018] sm:$0xf]
      %v1020 = vld [vmem:[%s1018 + $0x4] sm:$0xf]
      %v1021 = vld [vmem:[%s1018 + $0x8] sm:$0xf]
      %v1022 = vld [vmem:[%s1018 + $0xc] sm:$0xf]
      %v1023 = vld [vmem:[%s1018 + $0x10] sm:$0xf]
      %v1024 = vld [vmem:[%s1018 + $0x14] sm:$0xf]
      %v1025 = vld [vmem:[%s1018 + $0x18] sm:$0xf]
      %v1026 = vld [vmem:[%s1018 + $0x1c] sm:$0xf]
      %v1027 = vld [vmem:[%s1018 + $0x20] sm:$0xf]
      %v1028 = vld [vmem:[%s1018 + $0x24] sm:$0xf]
      %v1029 = vld [vmem:[%s1018 + $0x28] sm:$0xf]
      %v1030 = vld [vmem:[%s1018 + $0x2c] sm:$0xf]
      %v1031 = vld [vmem:[%s1018 + $0x30] sm:$0xf]
      %v1032 = vld [vmem:[%s1018 + $0x34] sm:$0xf]
      %v1033 = vld [vmem:[%s1018 + $0x38] sm:$0xf]
      %v1034 = vld [vmem:[%s1018 + $0x3c] sm:$0xf]
      %v1051 = vunpack.c.l.b16 %v1019
      %v1052 = vunpack.c.l.b16 %v1020
      %v1053 = vunpack.c.l.b16 %v1021
      %v1054 = vunpack.c.l.b16 %v1022
      %v1055 = vunpack.c.l.b16 %v1023
      %v1056 = vunpack.c.l.b16 %v1024
      %v1057 = vunpack.c.l.b16 %v1025
      %v1058 = vunpack.c.l.b16 %v1026
      %v1059 = vunpack.c.l.b16 %v1027
      %v1060 = vunpack.c.l.b16 %v1028
      %v1061 = vunpack.c.l.b16 %v1029
      %v1062 = vunpack.c.l.b16 %v1030
      %v1063 = vunpack.c.l.b16 %v1031
      %v1064 = vunpack.c.l.b16 %v1032
      %v1065 = vunpack.c.l.b16 %v1033
      %v1066 = vunpack.c.l.b16 %v1034
      %v1067 = vpack.c.b16 %v1052, %v1051
      %v1068 = vpack.c.b16 %v1054, %v1053
      %v1069 = vpack.c.b16 %v1056, %v1055
      %v1070 = vpack.c.b16 %v1058, %v1057
      %v1071 = vpack.c.b16 %v1060, %v1059
      %v1072 = vpack.c.b16 %v1062, %v1061
      %v1073 = vpack.c.b16 %v1064, %v1063
      %v1074 = vpack.c.b16 %v1066, %v1065
      %1083 = vmatprep.subr.bf16.mxu0 0
      %1084 = vmatpush1.bf16.msra.mxu0 %v1067
      %1085 = vmatprep.subr.bf16.mxu0 0
      %1086 = vmatpush1.bf16.msra.mxu0 %v1068
      %1087 = vmatprep.subr.bf16.mxu0 0
      %1088 = vmatpush1.bf16.msra.mxu0 %v1069
      %1089 = vmatprep.subr.bf16.mxu0 0
      %1090 = vmatpush1.bf16.msra.mxu0 %v1070
      %1091 = vmatprep.subr.bf16.mxu0 0
      %1092 = vmatpush1.bf16.msra.mxu0 %v1071
      %1093 = vmatprep.subr.bf16.mxu0 0
      %1094 = vmatpush1.bf16.msra.mxu0 %v1072
      %1095 = vmatprep.subr.bf16.mxu0 0
      %1096 = vmatpush1.bf16.msra.mxu0 %v1073
      %1097 = vmatprep.subr.bf16.mxu0 0
      %1098 = vmatpush1.bf16.msra.mxu0 %v1074
      %1099 = vmatprep.subr.bf16.mxu0 0
      %1100 = vmatpush1.bf16.msra.mxu0 0
      %1101 = vmatprep.subr.bf16.mxu0 0
      %1102 = vmatpush1.bf16.msra.mxu0 0
      %1103 = vmatprep.subr.bf16.mxu0 0
      %1104 = vmatpush1.bf16.msra.mxu0 0
      %1105 = vmatprep.subr.bf16.mxu0 0
      %1106 = vmatpush1.bf16.msra.mxu0 0
      %1107 = vmatprep.subr.bf16.mxu0 0
      %1108 = vmatpush1.bf16.msra.mxu0 0
      %1109 = vmatprep.subr.bf16.mxu0 0
      %1110 = vmatpush1.bf16.msra.mxu0 0
      %1111 = vmatprep.subr.bf16.mxu0 0
      %1112 = vmatpush1.bf16.msra.mxu0 0
      %1113 = vmatprep.subr.bf16.mxu0 0
      %1114 = vmatpush1.bf16.msra.mxu0 0
      %1115 = vmatprep.mubr.bf16.mxu0 0
      %1116 = vmatmul.mubr.bf16.gmra.mrb[0].mxu0 %v994
      %v1117 = vpop.f32.mrb[0].mxu0
      %v1118 = vadd.f32 0.0, %v1117
      %v1119 = vpop.f32.mrb[0].mxu0
      %v1120 = vpop.f32.mrb[0].mxu0
      %v1121 = vadd.f32 0.0, %v1120
      %v1122 = vpop.f32.mrb[0].mxu0
      %1123 = vmatprep.mubr.bf16.mxu0 0
      %1124 = vmatmul.mubr.bf16.gmra.mrb[0].mxu0 %v995
      %v1125 = vpop.f32.mrb[0].mxu0
      %v1126 = vadd.f32 0.0, %v1125
      %v1127 = vpop.f32.mrb[0].mxu0
      %v1128 = vpop.f32.mrb[0].mxu0
      %v1129 = vadd.f32 0.0, %v1128
      %v1130 = vpop.f32.mrb[0].mxu0
      %1131 = vmatprep.mubr.bf16.mxu0 0
      %1132 = vmatmul.mubr.bf16.gmra.mrb[0].mxu0 %v996
      %v1133 = vpop.f32.mrb[0].mxu0
      %v1134 = vadd.f32 0.0, %v1133
      %v1135 = vpop.f32.mrb[0].mxu0
      %v1136 = vpop.f32.mrb[0].mxu0
      %v1137 = vadd.f32 0.0, %v1136
      %v1138 = vpop.f32.mrb[0].mxu0
      %1139 = vmatprep.mubr.bf16.mxu0 0
      %1140 = vmatmul.mubr.bf16.gmra.mrb[0].mxu0 %v997
      %v1141 = vpop.f32.mrb[0].mxu0
      %v1142 = vadd.f32 0.0, %v1141
      %v1143 = vpop.f32.mrb[0].mxu0
      %v1144 = vpop.f32.mrb[0].mxu0
      %v1145 = vadd.f32 0.0, %v1144
      %v1146 = vpop.f32.mrb[0].mxu0
      %1147 = vmatprep.mubr.bf16.mxu0 0
      %1148 = vmatmul.mubr.bf16.gmra.mrb[0].mxu0 %v998
      %v1149 = vpop.f32.mrb[0].mxu0
      %v1150 = vadd.f32 0.0, %v1149
      %v1151 = vpop.f32.mrb[0].mxu0
      %v1152 = vpop.f32.mrb[0].mxu0
      %v1153 = vadd.f32 0.0, %v1152
      %v1154 = vpop.f32.mrb[0].mxu0
      %1155 = vmatprep.mubr.bf16.mxu0 0
      %1156 = vmatmul.mubr.bf16.gmra.mrb[0].mxu0 %v999
      %v1157 = vpop.f32.mrb[0].mxu0
      %v1158 = vadd.f32 0.0, %v1157
      %v1159 = vpop.f32.mrb[0].mxu0
      %v1160 = vpop.f32.mrb[0].mxu0
      %v1161 = vadd.f32 0.0, %v1160
      %v1162 = vpop.f32.mrb[0].mxu0
      %1163 = vmatprep.mubr.bf16.mxu0 0
      %1164 = vmatmul.mubr.bf16.gmra.mrb[0].mxu0 %v1000
      %v1165 = vpop.f32.mrb[0].mxu0
      %v1166 = vadd.f32 0.0, %v1165
      %v1167 = vpop.f32.mrb[0].mxu0
      %v1168 = vpop.f32.mrb[0].mxu0
      %v1169 = vadd.f32 0.0, %v1168
      %v1170 = vpop.f32.mrb[0].mxu0
      %1171 = vmatprep.mubr.bf16.mxu0 0
      %1172 = vmatmul.mubr.bf16.gmra.mrb[0].mxu0 %v1001
      %v1173 = vpop.f32.mrb[0].mxu0
      %v1174 = vadd.f32 0.0, %v1173
      %v1175 = vpop.f32.mrb[0].mxu0
      %v1176 = vpop.f32.mrb[0].mxu0
      %v1177 = vadd.f32 0.0, %v1176
      %v1178 = vpop.f32.mrb[0].mxu0
      %1179 = vmatprep.mubr.bf16.mxu0 0
      %1180 = vmatmul.mubr.bf16.gmra.mrb[0].mxu0 %v1002
      %v1181 = vpop.f32.mrb[0].mxu0
      %v1182 = vadd.f32 0.0, %v1181
      %v1183 = vpop.f32.mrb[0].mxu0
      %v1184 = vpop.f32.mrb[0].mxu0
      %v1185 = vadd.f32 0.0, %v1184
      %v1186 = vpop.f32.mrb[0].mxu0
      %1187 = vmatprep.mubr.bf16.mxu0 0
      %1188 = vmatmul.mubr.bf16.gmra.mrb[0].mxu0 %v1003
      %v1189 = vpop.f32.mrb[0].mxu0
      %v1190 = vadd.f32 0.0, %v1189
      %v1191 = vpop.f32.mrb[0].mxu0
      %v1192 = vpop.f32.mrb[0].mxu0
      %v1193 = vadd.f32 0.0, %v1192
      %v1194 = vpop.f32.mrb[0].mxu0
      %1195 = vmatprep.mubr.bf16.mxu0 0
      %1196 = vmatmul.mubr.bf16.gmra.mrb[0].mxu0 %v1004
      %v1197 = vpop.f32.mrb[0].mxu0
      %v1198 = vadd.f32 0.0, %v1197
      %v1199 = vpop.f32.mrb[0].mxu0
      %v1200 = vpop.f32.mrb[0].mxu0
      %v1201 = vadd.f32 0.0, %v1200
      %v1202 = vpop.f32.mrb[0].mxu0
      %1203 = vmatprep.mubr.bf16.mxu0 0
      %1204 = vmatmul.mubr.bf16.gmra.mrb[0].mxu0 %v1005
      %v1205 = vpop.f32.mrb[0].mxu0
      %v1206 = vadd.f32 0.0, %v1205
      %v1207 = vpop.f32.mrb[0].mxu0
      %v1208 = vpop.f32.mrb[0].mxu0
      %v1209 = vadd.f32 0.0, %v1208
      %v1210 = vpop.f32.mrb[0].mxu0
      %1211 = vmatprep.mubr.bf16.mxu0 0
      %1212 = vmatmul.mubr.bf16.gmra.mrb[0].mxu0 %v1006
      %v1213 = vpop.f32.mrb[0].mxu0
      %v1214 = vadd.f32 0.0, %v1213
      %v1215 = vpop.f32.mrb[0].mxu0
      %v1216 = vpop.f32.mrb[0].mxu0
      %v1217 = vadd.f32 0.0, %v1216
      %v1218 = vpop.f32.mrb[0].mxu0
      %1219 = vmatprep.mubr.bf16.mxu0 0
      %1220 = vmatmul.mubr.bf16.gmra.mrb[0].mxu0 %v1007
      %v1221 = vpop.f32.mrb[0].mxu0
      %v1222 = vadd.f32 0.0, %v1221
      %v1223 = vpop.f32.mrb[0].mxu0
      %v1224 = vpop.f32.mrb[0].mxu0
      %v1225 = vadd.f32 0.0, %v1224
      %v1226 = vpop.f32.mrb[0].mxu0
      %1227 = vmatprep.mubr.bf16.mxu0 0
      %1228 = vmatmul.mubr.bf16.gmra.mrb[0].mxu0 %v1008
      %v1229 = vpop.f32.mrb[0].mxu0
      %v1230 = vadd.f32 0.0, %v1229
      %v1231 = vpop.f32.mrb[0].mxu0
      %v1232 = vpop.f32.mrb[0].mxu0
      %v1233 = vadd.f32 0.0, %v1232
      %v1234 = vpop.f32.mrb[0].mxu0
      %1235 = vmatprep.mubr.bf16.mxu0 0
      %1236 = vmatmul.mubr.bf16.gmra.mrb[0].mxu0 %v1009
      %v1237 = vpop.f32.mrb[0].mxu0
      %v1238 = vadd.f32 0.0, %v1237
      %v1239 = vpop.f32.mrb[0].mxu0
      %v1240 = vpop.f32.mrb[0].mxu0
      %v1241 = vadd.f32 0.0, %v1240
      %v1242 = vpop.f32.mrb[0].mxu0
      %1243 = vmatprep.mubr.bf16.mxu0 0
      %1244 = vmatmul.mubr.bf16.gmra.mrb[0].mxu0 %v1010
      %v1245 = vpop.f32.mrb[0].mxu0
      %v1246 = vadd.f32 0.0, %v1245
      %v1247 = vpop.f32.mrb[0].mxu0
      %v1248 = vpop.f32.mrb[0].mxu0
      %v1249 = vadd.f32 0.0, %v1248
      %v1250 = vpop.f32.mrb[0].mxu0
      %1251 = vmatprep.mubr.bf16.mxu0 0
      %1252 = vmatmul.mubr.bf16.gmra.mrb[0].mxu0 %v1011
      %v1253 = vpop.f32.mrb[0].mxu0
      %v1254 = vadd.f32 0.0, %v1253
      %v1255 = vpop.f32.mrb[0].mxu0
      %v1256 = vpop.f32.mrb[0].mxu0
      %v1257 = vadd.f32 0.0, %v1256
      %v1258 = vpop.f32.mrb[0].mxu0
      %1259 = vmatprep.mubr.bf16.mxu0 0
      %1260 = vmatmul.mubr.bf16.gmra.mrb[0].mxu0 %v1012
      %v1261 = vpop.f32.mrb[0].mxu0
      %v1262 = vadd.f32 0.0, %v1261
      %v1263 = vpop.f32.mrb[0].mxu0
      %v1264 = vpop.f32.mrb[0].mxu0
      %v1265 = vadd.f32 0.0, %v1264
      %v1266 = vpop.f32.mrb[0].mxu0
      %1267 = vmatprep.mubr.bf16.mxu0 0
      %1268 = vmatmul.mubr.bf16.gmra.mrb[0].mxu0 %v1013
      %v1269 = vpop.f32.mrb[0].mxu0
      %v1270 = vadd.f32 0.0, %v1269
      %v1271 = vpop.f32.mrb[0].mxu0
      %v1272 = vpop.f32.mrb[0].mxu0
      %v1273 = vadd.f32 0.0, %v1272
      %v1274 = vpop.f32.mrb[0].mxu0
      %1275 = vmatprep.mubr.bf16.mxu0 0
      %1276 = vmatmul.mubr.bf16.gmra.mrb[0].mxu0 %v1014
      %v1277 = vpop.f32.mrb[0].mxu0
      %v1278 = vadd.f32 0.0, %v1277
      %v1279 = vpop.f32.mrb[0].mxu0
      %v1280 = vpop.f32.mrb[0].mxu0
      %v1281 = vadd.f32 0.0, %v1280
      %v1282 = vpop.f32.mrb[0].mxu0
      %1283 = vmatprep.mubr.bf16.mxu0 0
      %1284 = vmatmul.mubr.bf16.gmra.mrb[0].mxu0 %v1015
      %v1285 = vpop.f32.mrb[0].mxu0
      %v1286 = vadd.f32 0.0, %v1285
      %v1287 = vpop.f32.mrb[0].mxu0
      %v1288 = vpop.f32.mrb[0].mxu0
      %v1289 = vadd.f32 0.0, %v1288
      %v1290 = vpop.f32.mrb[0].mxu0
      %1291 = vmatprep.mubr.bf16.mxu0 0
      %1292 = vmatmul.mubr.bf16.gmra.mrb[0].mxu0 %v1016
      %v1293 = vpop.f32.mrb[0].mxu0
      %v1294 = vadd.f32 0.0, %v1293
      %v1295 = vpop.f32.mrb[0].mxu0
      %v1296 = vpop.f32.mrb[0].mxu0
      %v1297 = vadd.f32 0.0, %v1296
      %v1298 = vpop.f32.mrb[0].mxu0
      %1299 = vmatprep.mubr.bf16.mxu0 0
      %1300 = vmatmul.mubr.bf16.gmra.mrb[0].mxu0 %v1017
      %v1301 = vpop.f32.mrb[0].mxu0
      %v1302 = vadd.f32 0.0, %v1301
      %v1303 = vpop.f32.mrb[0].mxu0
      %v1304 = vpop.f32.mrb[0].mxu0
      %v1305 = vadd.f32 0.0, %v1304
      %v1306 = vpop.f32.mrb[0].mxu0
      %1307 = vdwg.mxu0
      %v1308 = vadd.f32 %v756, %v1118
      %v1309 = vadd.f32 %v759, %v1121
      %v1310 = vadd.f32 %v764, %v1126
      %v1311 = vadd.f32 %v767, %v1129
      %v1312 = vadd.f32 %v772, %v1134
      %v1313 = vadd.f32 %v775, %v1137
      %v1314 = vadd.f32 %v780, %v1142
      %v1315 = vadd.f32 %v783, %v1145
      %v1316 = vadd.f32 %v788, %v1150
      %v1317 = vadd.f32 %v791, %v1153
      %v1318 = vadd.f32 %v796, %v1158
      %v1319 = vadd.f32 %v799, %v1161
      %v1320 = vadd.f32 %v804, %v1166
      %v1321 = vadd.f32 %v807, %v1169
      %v1322 = vadd.f32 %v812, %v1174
      %v1323 = vadd.f32 %v815, %v1177
      %v1324 = vadd.f32 %v820, %v1182
      %v1325 = vadd.f32 %v823, %v1185
      %v1326 = vadd.f32 %v828, %v1190
      %v1327 = vadd.f32 %v831, %v1193
      %v1328 = vadd.f32 %v836, %v1198
      %v1329 = vadd.f32 %v839, %v1201
      %v1330 = vadd.f32 %v844, %v1206
      %v1331 = vadd.f32 %v847, %v1209
      %v1332 = vadd.f32 %v852, %v1214
      %v1333 = vadd.f32 %v855, %v1217
      %v1334 = vadd.f32 %v860, %v1222
      %v1335 = vadd.f32 %v863, %v1225
      %v1336 = vadd.f32 %v868, %v1230
      %v1337 = vadd.f32 %v871, %v1233
      %v1338 = vadd.f32 %v876, %v1238
      %v1339 = vadd.f32 %v879, %v1241
      %v1340 = vadd.f32 %v884, %v1246
      %v1341 = vadd.f32 %v887, %v1249
      %v1342 = vadd.f32 %v892, %v1254
      %v1343 = vadd.f32 %v895, %v1257
      %v1344 = vadd.f32 %v900, %v1262
      %v1345 = vadd.f32 %v903, %v1265
      %v1346 = vadd.f32 %v908, %v1270
      %v1347 = vadd.f32 %v911, %v1273
      %v1348 = vadd.f32 %v916, %v1278
      %v1349 = vadd.f32 %v919, %v1281
      %v1350 = vadd.f32 %v924, %v1286
      %v1351 = vadd.f32 %v927, %v1289
      %v1352 = vadd.f32 %v932, %v1294
      %v1353 = vadd.f32 %v935, %v1297
      %v1354 = vadd.f32 %v940, %v1302
      %v1355 = vadd.f32 %v943, %v1305
      %v1356 = vld [vmem:[%s206 + $0x18] sm:$0xff]
      %v1357 = vld [vmem:[%s206 + $0x20] sm:$0xff]
      %v1358 = vld [vmem:[%s206 + $0x28] sm:$0xff]
      %v1359 = vld [vmem:[%s206 + $0x30] sm:$0xff]
      %v1360 = vld [vmem:[%s206 + $0x38] sm:$0xff]
      %v1361 = vld [vmem:[%s206 + $0x40] sm:$0xff]
      %v1362 = vld [vmem:[%s206 + $0x48] sm:$0xff]
      %v1363 = vld [vmem:[%s206 + $0x50] sm:$0xff]
      %v1364 = vld [vmem:[%s206 + $0x58] sm:$0xff]
      %v1365 = vld [vmem:[%s206 + $0x60] sm:$0xff]
      %v1366 = vld [vmem:[%s206 + $0x68] sm:$0xff]
      %v1367 = vld [vmem:[%s206 + $0x70] sm:$0xff]
      %v1368 = vld [vmem:[%s206 + $0x78] sm:$0xff]
      %v1369 = vld [vmem:[%s206 + $0x80] sm:$0xff]
      %v1370 = vld [vmem:[%s206 + $0x88] sm:$0xff]
      %v1371 = vld [vmem:[%s206 + $0x90] sm:$0xff]
      %v1372 = vld [vmem:[%s206 + $0x98] sm:$0xff]
      %v1373 = vld [vmem:[%s206 + $0xa0] sm:$0xff]
      %v1374 = vld [vmem:[%s206 + $0xa8] sm:$0xff]
      %v1375 = vld [vmem:[%s206 + $0xb0] sm:$0xff]
      %v1376 = vld [vmem:[%s206 + $0xb8] sm:$0xff]
      %v1377 = vld [vmem:[%s206 + $0xc0] sm:$0xff]
      %v1378 = vld [vmem:[%s206 + $0xc8] sm:$0xff]
      %v1379 = vld [vmem:[%s206 + $0xd0] sm:$0xff]
      %v1380 = vld [vmem:[%s206 + $0xd8] sm:$0xff]
      %v1381 = vld [vmem:[%s206 + $0xe0] sm:$0xff]
      %v1382 = vld [vmem:[%s206 + $0xe8] sm:$0xff]
      %v1383 = vld [vmem:[%s206 + $0xf0] sm:$0xff]
      %v1384 = vld [vmem:[%s206 + $0xf8] sm:$0xff]
      %v1385 = vld [vmem:[%s206 + $0x100] sm:$0xff]
      %v1386 = vld [vmem:[%s206 + $0x108] sm:$0xff]
      %v1387 = vld [vmem:[%s206 + $0x110] sm:$0xff]
      %v1388 = vld [vmem:[%s206 + $0x118] sm:$0xff]
      %v1389 = vld [vmem:[%s206 + $0x120] sm:$0xff]
      %v1390 = vld [vmem:[%s206 + $0x128] sm:$0xff]
      %v1391 = vld [vmem:[%s206 + $0x130] sm:$0xff]
      %v1392 = vld [vmem:[%s206 + $0x138] sm:$0xff]
      %v1393 = vld [vmem:[%s206 + $0x140] sm:$0xff]
      %v1394 = vld [vmem:[%s206 + $0x148] sm:$0xff]
      %v1395 = vld [vmem:[%s206 + $0x150] sm:$0xff]
      %v1396 = vld [vmem:[%s206 + $0x158] sm:$0xff]
      %v1397 = vld [vmem:[%s206 + $0x160] sm:$0xff]
      %v1398 = vld [vmem:[%s206 + $0x168] sm:$0xff]
      %v1399 = vld [vmem:[%s206 + $0x170] sm:$0xff]
      %v1400 = vld [vmem:[%s206 + $0x178] sm:$0xff]
      %v1401 = vld [vmem:[%s206 + $0x180] sm:$0xff]
      %v1402 = vld [vmem:[%s206 + $0x188] sm:$0xff]
      %v1403 = vld [vmem:[%s206 + $0x190] sm:$0xff]
      %v1404 = vpack.c.bf16 %v1357, %v1356
      %v1405 = vpack.c.bf16 %v1359, %v1358
      %v1406 = vpack.c.bf16 %v1361, %v1360
      %v1407 = vpack.c.bf16 %v1363, %v1362
      %v1408 = vpack.c.bf16 %v1365, %v1364
      %v1409 = vpack.c.bf16 %v1367, %v1366
      %v1410 = vpack.c.bf16 %v1369, %v1368
      %v1411 = vpack.c.bf16 %v1371, %v1370
      %v1412 = vpack.c.bf16 %v1373, %v1372
      %v1413 = vpack.c.bf16 %v1375, %v1374
      %v1414 = vpack.c.bf16 %v1377, %v1376
      %v1415 = vpack.c.bf16 %v1379, %v1378
      %v1416 = vpack.c.bf16 %v1381, %v1380
      %v1417 = vpack.c.bf16 %v1383, %v1382
      %v1418 = vpack.c.bf16 %v1385, %v1384
      %v1419 = vpack.c.bf16 %v1387, %v1386
      %v1420 = vpack.c.bf16 %v1389, %v1388
      %v1421 = vpack.c.bf16 %v1391, %v1390
      %v1422 = vpack.c.bf16 %v1393, %v1392
      %v1423 = vpack.c.bf16 %v1395, %v1394
      %v1424 = vpack.c.bf16 %v1397, %v1396
      %v1425 = vpack.c.bf16 %v1399, %v1398
      %v1426 = vpack.c.bf16 %v1401, %v1400
      %v1427 = vpack.c.bf16 %v1403, %v1402
      %s1428 = scalar_lea.vmem %s210, 192
      %v1429 = vld [vmem:[%s1428] sm:$0xf]
      %v1430 = vld [vmem:[%s1428 + $0x4] sm:$0xf]
      %v1431 = vld [vmem:[%s1428 + $0x8] sm:$0xf]
      %v1432 = vld [vmem:[%s1428 + $0xc] sm:$0xf]
      %v1433 = vld [vmem:[%s1428 + $0x10] sm:$0xf]
      %v1434 = vld [vmem:[%s1428 + $0x14] sm:$0xf]
      %v1435 = vld [vmem:[%s1428 + $0x18] sm:$0xf]
      %v1436 = vld [vmem:[%s1428 + $0x1c] sm:$0xf]
      %v1437 = vld [vmem:[%s1428 + $0x20] sm:$0xf]
      %v1438 = vld [vmem:[%s1428 + $0x24] sm:$0xf]
      %v1439 = vld [vmem:[%s1428 + $0x28] sm:$0xf]
      %v1440 = vld [vmem:[%s1428 + $0x2c] sm:$0xf]
      %v1441 = vld [vmem:[%s1428 + $0x30] sm:$0xf]
      %v1442 = vld [vmem:[%s1428 + $0x34] sm:$0xf]
      %v1443 = vld [vmem:[%s1428 + $0x38] sm:$0xf]
      %v1444 = vld [vmem:[%s1428 + $0x3c] sm:$0xf]
      %v1461 = vunpack.c.l.b16 %v1429
      %v1462 = vunpack.c.l.b16 %v1430
      %v1463 = vunpack.c.l.b16 %v1431
      %v1464 = vunpack.c.l.b16 %v1432
      %v1465 = vunpack.c.l.b16 %v1433
      %v1466 = vunpack.c.l.b16 %v1434
      %v1467 = vunpack.c.l.b16 %v1435
      %v1468 = vunpack.c.l.b16 %v1436
      %v1469 = vunpack.c.l.b16 %v1437
      %v1470 = vunpack.c.l.b16 %v1438
      %v1471 = vunpack.c.l.b16 %v1439
      %v1472 = vunpack.c.l.b16 %v1440
      %v1473 = vunpack.c.l.b16 %v1441
      %v1474 = vunpack.c.l.b16 %v1442
      %v1475 = vunpack.c.l.b16 %v1443
      %v1476 = vunpack.c.l.b16 %v1444
      %v1477 = vpack.c.b16 %v1462, %v1461
      %v1478 = vpack.c.b16 %v1464, %v1463
      %v1479 = vpack.c.b16 %v1466, %v1465
      %v1480 = vpack.c.b16 %v1468, %v1467
      %v1481 = vpack.c.b16 %v1470, %v1469
      %v1482 = vpack.c.b16 %v1472, %v1471
      %v1483 = vpack.c.b16 %v1474, %v1473
      %v1484 = vpack.c.b16 %v1476, %v1475
      %1493 = vmatprep.subr.bf16.mxu0 0
      %1494 = vmatpush1.bf16.msra.mxu0 %v1477
      %1495 = vmatprep.subr.bf16.mxu0 0
      %1496 = vmatpush1.bf16.msra.mxu0 %v1478
      %1497 = vmatprep.subr.bf16.mxu0 0
      %1498 = vmatpush1.bf16.msra.mxu0 %v1479
      %1499 = vmatprep.subr.bf16.mxu0 0
      %1500 = vmatpush1.bf16.msra.mxu0 %v1480
      %1501 = vmatprep.subr.bf16.mxu0 0
      %1502 = vmatpush1.bf16.msra.mxu0 %v1481
      %1503 = vmatprep.subr.bf16.mxu0 0
      %1504 = vmatpush1.bf16.msra.mxu0 %v1482
      %1505 = vmatprep.subr.bf16.mxu0 0
      %1506 = vmatpush1.bf16.msra.mxu0 %v1483
      %1507 = vmatprep.subr.bf16.mxu0 0
      %1508 = vmatpush1.bf16.msra.mxu0 %v1484
      %1509 = vmatprep.subr.bf16.mxu0 0
      %1510 = vmatpush1.bf16.msra.mxu0 0
      %1511 = vmatprep.subr.bf16.mxu0 0
      %1512 = vmatpush1.bf16.msra.mxu0 0
      %1513 = vmatprep.subr.bf16.mxu0 0
      %1514 = vmatpush1.bf16.msra.mxu0 0
      %1515 = vmatprep.subr.bf16.mxu0 0
      %1516 = vmatpush1.bf16.msra.mxu0 0
      %1517 = vmatprep.subr.bf16.mxu0 0
      %1518 = vmatpush1.bf16.msra.mxu0 0
      %1519 = vmatprep.subr.bf16.mxu0 0
      %1520 = vmatpush1.bf16.msra.mxu0 0
      %1521 = vmatprep.subr.bf16.mxu0 0
      %1522 = vmatpush1.bf16.msra.mxu0 0
      %1523 = vmatprep.subr.bf16.mxu0 0
      %1524 = vmatpush1.bf16.msra.mxu0 0
      %1525 = vmatprep.mubr.bf16.mxu0 0
      %1526 = vmatmul.mubr.bf16.gmra.mrb[0].mxu0 %v1404
      %v1527 = vpop.f32.mrb[0].mxu0
      %v1528 = vadd.f32 0.0, %v1527
      %v1529 = vpop.f32.mrb[0].mxu0
      %v1530 = vpop.f32.mrb[0].mxu0
      %v1531 = vadd.f32 0.0, %v1530
      %v1532 = vpop.f32.mrb[0].mxu0
      %1533 = vmatprep.mubr.bf16.mxu0 0
      %1534 = vmatmul.mubr.bf16.gmra.mrb[0].mxu0 %v1405
      %v1535 = vpop.f32.mrb[0].mxu0
      %v1536 = vadd.f32 0.0, %v1535
      %v1537 = vpop.f32.mrb[0].mxu0
      %v1538 = vpop.f32.mrb[0].mxu0
      %v1539 = vadd.f32 0.0, %v1538
      %v1540 = vpop.f32.mrb[0].mxu0
      %1541 = vmatprep.mubr.bf16.mxu0 0
      %1542 = vmatmul.mubr.bf16.gmra.mrb[0].mxu0 %v1406
      %v1543 = vpop.f32.mrb[0].mxu0
      %v1544 = vadd.f32 0.0, %v1543
      %v1545 = vpop.f32.mrb[0].mxu0
      %v1546 = vpop.f32.mrb[0].mxu0
      %v1547 = vadd.f32 0.0, %v1546
      %v1548 = vpop.f32.mrb[0].mxu0
      %1549 = vmatprep.mubr.bf16.mxu0 0
      %1550 = vmatmul.mubr.bf16.gmra.mrb[0].mxu0 %v1407
      %v1551 = vpop.f32.mrb[0].mxu0
      %v1552 = vadd.f32 0.0, %v1551
      %v1553 = vpop.f32.mrb[0].mxu0
      %v1554 = vpop.f32.mrb[0].mxu0
      %v1555 = vadd.f32 0.0, %v1554
      %v1556 = vpop.f32.mrb[0].mxu0
      %1557 = vmatprep.mubr.bf16.mxu0 0
      %1558 = vmatmul.mubr.bf16.gmra.mrb[0].mxu0 %v1408
      %v1559 = vpop.f32.mrb[0].mxu0
      %v1560 = vadd.f32 0.0, %v1559
      %v1561 = vpop.f32.mrb[0].mxu0
      %v1562 = vpop.f32.mrb[0].mxu0
      %v1563 = vadd.f32 0.0, %v1562
      %v1564 = vpop.f32.mrb[0].mxu0
      %1565 = vmatprep.mubr.bf16.mxu0 0
      %1566 = vmatmul.mubr.bf16.gmra.mrb[0].mxu0 %v1409
      %v1567 = vpop.f32.mrb[0].mxu0
      %v1568 = vadd.f32 0.0, %v1567
      %v1569 = vpop.f32.mrb[0].mxu0
      %v1570 = vpop.f32.mrb[0].mxu0
      %v1571 = vadd.f32 0.0, %v1570
      %v1572 = vpop.f32.mrb[0].mxu0
      %1573 = vmatprep.mubr.bf16.mxu0 0
      %1574 = vmatmul.mubr.bf16.gmra.mrb[0].mxu0 %v1410
      %v1575 = vpop.f32.mrb[0].mxu0
      %v1576 = vadd.f32 0.0, %v1575
      %v1577 = vpop.f32.mrb[0].mxu0
      %v1578 = vpop.f32.mrb[0].mxu0
      %v1579 = vadd.f32 0.0, %v1578
      %v1580 = vpop.f32.mrb[0].mxu0
      %1581 = vmatprep.mubr.bf16.mxu0 0
      %1582 = vmatmul.mubr.bf16.gmra.mrb[0].mxu0 %v1411
      %v1583 = vpop.f32.mrb[0].mxu0
      %v1584 = vadd.f32 0.0, %v1583
      %v1585 = vpop.f32.mrb[0].mxu0
      %v1586 = vpop.f32.mrb[0].mxu0
      %v1587 = vadd.f32 0.0, %v1586
      %v1588 = vpop.f32.mrb[0].mxu0
      %1589 = vmatprep.mubr.bf16.mxu0 0
      %1590 = vmatmul.mubr.bf16.gmra.mrb[0].mxu0 %v1412
      %v1591 = vpop.f32.mrb[0].mxu0
      %v1592 = vadd.f32 0.0, %v1591
      %v1593 = vpop.f32.mrb[0].mxu0
      %v1594 = vpop.f32.mrb[0].mxu0
      %v1595 = vadd.f32 0.0, %v1594
      %v1596 = vpop.f32.mrb[0].mxu0
      %1597 = vmatprep.mubr.bf16.mxu0 0
      %1598 = vmatmul.mubr.bf16.gmra.mrb[0].mxu0 %v1413
      %v1599 = vpop.f32.mrb[0].mxu0
      %v1600 = vadd.f32 0.0, %v1599
      %v1601 = vpop.f32.mrb[0].mxu0
      %v1602 = vpop.f32.mrb[0].mxu0
      %v1603 = vadd.f32 0.0, %v1602
      %v1604 = vpop.f32.mrb[0].mxu0
      %1605 = vmatprep.mubr.bf16.mxu0 0
      %1606 = vmatmul.mubr.bf16.gmra.mrb[0].mxu0 %v1414
      %v1607 = vpop.f32.mrb[0].mxu0
      %v1608 = vadd.f32 0.0, %v1607
      %v1609 = vpop.f32.mrb[0].mxu0
      %v1610 = vpop.f32.mrb[0].mxu0
      %v1611 = vadd.f32 0.0, %v1610
      %v1612 = vpop.f32.mrb[0].mxu0
      %1613 = vmatprep.mubr.bf16.mxu0 0
      %1614 = vmatmul.mubr.bf16.gmra.mrb[0].mxu0 %v1415
      %v1615 = vpop.f32.mrb[0].mxu0
      %v1616 = vadd.f32 0.0, %v1615
      %v1617 = vpop.f32.mrb[0].mxu0
      %v1618 = vpop.f32.mrb[0].mxu0
      %v1619 = vadd.f32 0.0, %v1618
      %v1620 = vpop.f32.mrb[0].mxu0
      %1621 = vmatprep.mubr.bf16.mxu0 0
      %1622 = vmatmul.mubr.bf16.gmra.mrb[0].mxu0 %v1416
      %v1623 = vpop.f32.mrb[0].mxu0
      %v1624 = vadd.f32 0.0, %v1623
      %v1625 = vpop.f32.mrb[0].mxu0
      %v1626 = vpop.f32.mrb[0].mxu0
      %v1627 = vadd.f32 0.0, %v1626
      %v1628 = vpop.f32.mrb[0].mxu0
      %1629 = vmatprep.mubr.bf16.mxu0 0
      %1630 = vmatmul.mubr.bf16.gmra.mrb[0].mxu0 %v1417
      %v1631 = vpop.f32.mrb[0].mxu0
      %v1632 = vadd.f32 0.0, %v1631
      %v1633 = vpop.f32.mrb[0].mxu0
      %v1634 = vpop.f32.mrb[0].mxu0
      %v1635 = vadd.f32 0.0, %v1634
      %v1636 = vpop.f32.mrb[0].mxu0
      %1637 = vmatprep.mubr.bf16.mxu0 0
      %1638 = vmatmul.mubr.bf16.gmra.mrb[0].mxu0 %v1418
      %v1639 = vpop.f32.mrb[0].mxu0
      %v1640 = vadd.f32 0.0, %v1639
      %v1641 = vpop.f32.mrb[0].mxu0
      %v1642 = vpop.f32.mrb[0].mxu0
      %v1643 = vadd.f32 0.0, %v1642
      %v1644 = vpop.f32.mrb[0].mxu0
      %1645 = vmatprep.mubr.bf16.mxu0 0
      %1646 = vmatmul.mubr.bf16.gmra.mrb[0].mxu0 %v1419
      %v1647 = vpop.f32.mrb[0].mxu0
      %v1648 = vadd.f32 0.0, %v1647
      %v1649 = vpop.f32.mrb[0].mxu0
      %v1650 = vpop.f32.mrb[0].mxu0
      %v1651 = vadd.f32 0.0, %v1650
      %v1652 = vpop.f32.mrb[0].mxu0
      %1653 = vmatprep.mubr.bf16.mxu0 0
      %1654 = vmatmul.mubr.bf16.gmra.mrb[0].mxu0 %v1420
      %v1655 = vpop.f32.mrb[0].mxu0
      %v1656 = vadd.f32 0.0, %v1655
      %v1657 = vpop.f32.mrb[0].mxu0
      %v1658 = vpop.f32.mrb[0].mxu0
      %v1659 = vadd.f32 0.0, %v1658
      %v1660 = vpop.f32.mrb[0].mxu0
      %1661 = vmatprep.mubr.bf16.mxu0 0
      %1662 = vmatmul.mubr.bf16.gmra.mrb[0].mxu0 %v1421
      %v1663 = vpop.f32.mrb[0].mxu0
      %v1664 = vadd.f32 0.0, %v1663
      %v1665 = vpop.f32.mrb[0].mxu0
      %v1666 = vpop.f32.mrb[0].mxu0
      %v1667 = vadd.f32 0.0, %v1666
      %v1668 = vpop.f32.mrb[0].mxu0
      %1669 = vmatprep.mubr.bf16.mxu0 0
      %1670 = vmatmul.mubr.bf16.gmra.mrb[0].mxu0 %v1422
      %v1671 = vpop.f32.mrb[0].mxu0
      %v1672 = vadd.f32 0.0, %v1671
      %v1673 = vpop.f32.mrb[0].mxu0
      %v1674 = vpop.f32.mrb[0].mxu0
      %v1675 = vadd.f32 0.0, %v1674
      %v1676 = vpop.f32.mrb[0].mxu0
      %1677 = vmatprep.mubr.bf16.mxu0 0
      %1678 = vmatmul.mubr.bf16.gmra.mrb[0].mxu0 %v1423
      %v1679 = vpop.f32.mrb[0].mxu0
      %v1680 = vadd.f32 0.0, %v1679
      %v1681 = vpop.f32.mrb[0].mxu0
      %v1682 = vpop.f32.mrb[0].mxu0
      %v1683 = vadd.f32 0.0, %v1682
      %v1684 = vpop.f32.mrb[0].mxu0
      %1685 = vmatprep.mubr.bf16.mxu0 0
      %1686 = vmatmul.mubr.bf16.gmra.mrb[0].mxu0 %v1424
      %v1687 = vpop.f32.mrb[0].mxu0
      %v1688 = vadd.f32 0.0, %v1687
      %v1689 = vpop.f32.mrb[0].mxu0
      %v1690 = vpop.f32.mrb[0].mxu0
      %v1691 = vadd.f32 0.0, %v1690
      %v1692 = vpop.f32.mrb[0].mxu0
      %1693 = vmatprep.mubr.bf16.mxu0 0
      %1694 = vmatmul.mubr.bf16.gmra.mrb[0].mxu0 %v1425
      %v1695 = vpop.f32.mrb[0].mxu0
      %v1696 = vadd.f32 0.0, %v1695
      %v1697 = vpop.f32.mrb[0].mxu0
      %v1698 = vpop.f32.mrb[0].mxu0
      %v1699 = vadd.f32 0.0, %v1698
      %v1700 = vpop.f32.mrb[0].mxu0
      %1701 = vmatprep.mubr.bf16.mxu0 0
      %1702 = vmatmul.mubr.bf16.gmra.mrb[0].mxu0 %v1426
      %v1703 = vpop.f32.mrb[0].mxu0
      %v1704 = vadd.f32 0.0, %v1703
      %v1705 = vpop.f32.mrb[0].mxu0
      %v1706 = vpop.f32.mrb[0].mxu0
      %v1707 = vadd.f32 0.0, %v1706
      %v1708 = vpop.f32.mrb[0].mxu0
      %1709 = vmatprep.mubr.bf16.mxu0 0
      %1710 = vmatmul.mubr.bf16.gmra.mrb[0].mxu0 %v1427
      %v1711 = vpop.f32.mrb[0].mxu0
      %v1712 = vadd.f32 0.0, %v1711
      %v1713 = vpop.f32.mrb[0].mxu0
      %v1714 = vpop.f32.mrb[0].mxu0
      %v1715 = vadd.f32 0.0, %v1714
      %v1716 = vpop.f32.mrb[0].mxu0
      %1717 = vdwg.mxu0
      %v1718 = vadd.f32 %v1308, %v1528
      %v1719 = vadd.f32 %v1309, %v1531
      %v1720 = vadd.f32 %v1310, %v1536
      %v1721 = vadd.f32 %v1311, %v1539
      %v1722 = vadd.f32 %v1312, %v1544
      %v1723 = vadd.f32 %v1313, %v1547
      %v1724 = vadd.f32 %v1314, %v1552
      %v1725 = vadd.f32 %v1315, %v1555
      %v1726 = vadd.f32 %v1316, %v1560
      %v1727 = vadd.f32 %v1317, %v1563
      %v1728 = vadd.f32 %v1318, %v1568
      %v1729 = vadd.f32 %v1319, %v1571
      %v1730 = vadd.f32 %v1320, %v1576
      %v1731 = vadd.f32 %v1321, %v1579
      %v1732 = vadd.f32 %v1322, %v1584
      %v1733 = vadd.f32 %v1323, %v1587
      %v1734 = vadd.f32 %v1324, %v1592
      %v1735 = vadd.f32 %v1325, %v1595
      %v1736 = vadd.f32 %v1326, %v1600
      %v1737 = vadd.f32 %v1327, %v1603
      %v1738 = vadd.f32 %v1328, %v1608
      %v1739 = vadd.f32 %v1329, %v1611
      %v1740 = vadd.f32 %v1330, %v1616
      %v1741 = vadd.f32 %v1331, %v1619
      %v1742 = vadd.f32 %v1332, %v1624
      %v1743 = vadd.f32 %v1333, %v1627
      %v1744 = vadd.f32 %v1334, %v1632
      %v1745 = vadd.f32 %v1335, %v1635
      %v1746 = vadd.f32 %v1336, %v1640
      %v1747 = vadd.f32 %v1337, %v1643
      %v1748 = vadd.f32 %v1338, %v1648
      %v1749 = vadd.f32 %v1339, %v1651
      %v1750 = vadd.f32 %v1340, %v1656
      %v1751 = vadd.f32 %v1341, %v1659
      %v1752 = vadd.f32 %v1342, %v1664
      %v1753 = vadd.f32 %v1343, %v1667
      %v1754 = vadd.f32 %v1344, %v1672
      %v1755 = vadd.f32 %v1345, %v1675
      %v1756 = vadd.f32 %v1346, %v1680
      %v1757 = vadd.f32 %v1347, %v1683
      %v1758 = vadd.f32 %v1348, %v1688
      %v1759 = vadd.f32 %v1349, %v1691
      %v1760 = vadd.f32 %v1350, %v1696
      %v1761 = vadd.f32 %v1351, %v1699
      %v1762 = vadd.f32 %v1352, %v1704
      %v1763 = vadd.f32 %v1353, %v1707
      %v1764 = vadd.f32 %v1354, %v1712
      %v1765 = vadd.f32 %v1355, %v1715
      %v1766 = vld [vmem:[%s206 + $0x19] sm:$0xff]
      %v1767 = vld [vmem:[%s206 + $0x21] sm:$0xff]
      %v1768 = vld [vmem:[%s206 + $0x29] sm:$0xff]
      %v1769 = vld [vmem:[%s206 + $0x31] sm:$0xff]
      %v1770 = vld [vmem:[%s206 + $0x39] sm:$0xff]
      %v1771 = vld [vmem:[%s206 + $0x41] sm:$0xff]
      %v1772 = vld [vmem:[%s206 + $0x49] sm:$0xff]
      %v1773 = vld [vmem:[%s206 + $0x51] sm:$0xff]
      %v1774 = vld [vmem:[%s206 + $0x59] sm:$0xff]
      %v1775 = vld [vmem:[%s206 + $0x61] sm:$0xff]
      %v1776 = vld [vmem:[%s206 + $0x69] sm:$0xff]
      %v1777 = vld [vmem:[%s206 + $0x71] sm:$0xff]
      %v1778 = vld [vmem:[%s206 + $0x79] sm:$0xff]
      %v1779 = vld [vmem:[%s206 + $0x81] sm:$0xff]
      %v1780 = vld [vmem:[%s206 + $0x89] sm:$0xff]
      %v1781 = vld [vmem:[%s206 + $0x91] sm:$0xff]
      %v1782 = vld [vmem:[%s206 + $0x99] sm:$0xff]
      %v1783 = vld [vmem:[%s206 + $0xa1] sm:$0xff]
      %v1784 = vld [vmem:[%s206 + $0xa9] sm:$0xff]
      %v1785 = vld [vmem:[%s206 + $0xb1] sm:$0xff]
      %v1786 = vld [vmem:[%s206 + $0xb9] sm:$0xff]
      %v1787 = vld [vmem:[%s206 + $0xc1] sm:$0xff]
      %v1788 = vld [vmem:[%s206 + $0xc9] sm:$0xff]
      %v1789 = vld [vmem:[%s206 + $0xd1] sm:$0xff]
      %v1790 = vld [vmem:[%s206 + $0xd9] sm:$0xff]
      %v1791 = vld [vmem:[%s206 + $0xe1] sm:$0xff]
      %v1792 = vld [vmem:[%s206 + $0xe9] sm:$0xff]
      %v1793 = vld [vmem:[%s206 + $0xf1] sm:$0xff]
      %v1794 = vld [vmem:[%s206 + $0xf9] sm:$0xff]
      %v1795 = vld [vmem:[%s206 + $0x101] sm:$0xff]
      %v1796 = vld [vmem:[%s206 + $0x109] sm:$0xff]
      %v1797 = vld [vmem:[%s206 + $0x111] sm:$0xff]
      %v1798 = vld [vmem:[%s206 + $0x119] sm:$0xff]
      %v1799 = vld [vmem:[%s206 + $0x121] sm:$0xff]
      %v1800 = vld [vmem:[%s206 + $0x129] sm:$0xff]
      %v1801 = vld [vmem:[%s206 + $0x131] sm:$0xff]
      %v1802 = vld [vmem:[%s206 + $0x139] sm:$0xff]
      %v1803 = vld [vmem:[%s206 + $0x141] sm:$0xff]
      %v1804 = vld [vmem:[%s206 + $0x149] sm:$0xff]
      %v1805 = vld [vmem:[%s206 + $0x151] sm:$0xff]
      %v1806 = vld [vmem:[%s206 + $0x159] sm:$0xff]
      %v1807 = vld [vmem:[%s206 + $0x161] sm:$0xff]
      %v1808 = vld [vmem:[%s206 + $0x169] sm:$0xff]
      %v1809 = vld [vmem:[%s206 + $0x171] sm:$0xff]
      %v1810 = vld [vmem:[%s206 + $0x179] sm:$0xff]
      %v1811 = vld [vmem:[%s206 + $0x181] sm:$0xff]
      %v1812 = vld [vmem:[%s206 + $0x189] sm:$0xff]
      %v1813 = vld [vmem:[%s206 + $0x191] sm:$0xff]
      %v1814 = vpack.c.bf16 %v1767, %v1766
      %v1815 = vpack.c.bf16 %v1769, %v1768
      %v1816 = vpack.c.bf16 %v1771, %v1770
      %v1817 = vpack.c.bf16 %v1773, %v1772
      %v1818 = vpack.c.bf16 %v1775, %v1774
      %v1819 = vpack.c.bf16 %v1777, %v1776
      %v1820 = vpack.c.bf16 %v1779, %v1778
      %v1821 = vpack.c.bf16 %v1781, %v1780
      %v1822 = vpack.c.bf16 %v1783, %v1782
      %v1823 = vpack.c.bf16 %v1785, %v1784
      %v1824 = vpack.c.bf16 %v1787, %v1786
      %v1825 = vpack.c.bf16 %v1789, %v1788
      %v1826 = vpack.c.bf16 %v1791, %v1790
      %v1827 = vpack.c.bf16 %v1793, %v1792
      %v1828 = vpack.c.bf16 %v1795, %v1794
      %v1829 = vpack.c.bf16 %v1797, %v1796
      %v1830 = vpack.c.bf16 %v1799, %v1798
      %v1831 = vpack.c.bf16 %v1801, %v1800
      %v1832 = vpack.c.bf16 %v1803, %v1802
      %v1833 = vpack.c.bf16 %v1805, %v1804
      %v1834 = vpack.c.bf16 %v1807, %v1806
      %v1835 = vpack.c.bf16 %v1809, %v1808
      %v1836 = vpack.c.bf16 %v1811, %v1810
      %v1837 = vpack.c.bf16 %v1813, %v1812
      %s1838 = scalar_lea.vmem %s210, 256
      %v1839 = vld [vmem:[%s1838] sm:$0xf]
      %v1840 = vld [vmem:[%s1838 + $0x4] sm:$0xf]
      %v1841 = vld [vmem:[%s1838 + $0x8] sm:$0xf]
      %v1842 = vld [vmem:[%s1838 + $0xc] sm:$0xf]
      %v1843 = vld [vmem:[%s1838 + $0x10] sm:$0xf]
      %v1844 = vld [vmem:[%s1838 + $0x14] sm:$0xf]
      %v1845 = vld [vmem:[%s1838 + $0x18] sm:$0xf]
      %v1846 = vld [vmem:[%s1838 + $0x1c] sm:$0xf]
      %v1847 = vld [vmem:[%s1838 + $0x20] sm:$0xf]
      %v1848 = vld [vmem:[%s1838 + $0x24] sm:$0xf]
      %v1849 = vld [vmem:[%s1838 + $0x28] sm:$0xf]
      %v1850 = vld [vmem:[%s1838 + $0x2c] sm:$0xf]
      %v1851 = vld [vmem:[%s1838 + $0x30] sm:$0xf]
      %v1852 = vld [vmem:[%s1838 + $0x34] sm:$0xf]
      %v1853 = vld [vmem:[%s1838 + $0x38] sm:$0xf]
      %v1854 = vld [vmem:[%s1838 + $0x3c] sm:$0xf]
      %v1871 = vunpack.c.l.b16 %v1839
      %v1872 = vunpack.c.l.b16 %v1840
      %v1873 = vunpack.c.l.b16 %v1841
      %v1874 = vunpack.c.l.b16 %v1842
      %v1875 = vunpack.c.l.b16 %v1843
      %v1876 = vunpack.c.l.b16 %v1844
      %v1877 = vunpack.c.l.b16 %v1845
      %v1878 = vunpack.c.l.b16 %v1846
      %v1879 = vunpack.c.l.b16 %v1847
      %v1880 = vunpack.c.l.b16 %v1848
      %v1881 = vunpack.c.l.b16 %v1849
      %v1882 = vunpack.c.l.b16 %v1850
      %v1883 = vunpack.c.l.b16 %v1851
      %v1884 = vunpack.c.l.b16 %v1852
      %v1885 = vunpack.c.l.b16 %v1853
      %v1886 = vunpack.c.l.b16 %v1854
      %v1887 = vpack.c.b16 %v1872, %v1871
      %v1888 = vpack.c.b16 %v1874, %v1873
      %v1889 = vpack.c.b16 %v1876, %v1875
      %v1890 = vpack.c.b16 %v1878, %v1877
      %v1891 = vpack.c.b16 %v1880, %v1879
      %v1892 = vpack.c.b16 %v1882, %v1881
      %v1893 = vpack.c.b16 %v1884, %v1883
      %v1894 = vpack.c.b16 %v1886, %v1885
      %1903 = vmatprep.subr.bf16.mxu0 0
      %1904 = vmatpush1.bf16.msra.mxu0 %v1887
      %1905 = vmatprep.subr.bf16.mxu0 0
      %1906 = vmatpush1.bf16.msra.mxu0 %v1888
      %1907 = vmatprep.subr.bf16.mxu0 0
      %1908 = vmatpush1.bf16.msra.mxu0 %v1889
      %1909 = vmatprep.subr.bf16.mxu0 0
      %1910 = vmatpush1.bf16.msra.mxu0 %v1890
      %1911 = vmatprep.subr.bf16.mxu0 0
      %1912 = vmatpush1.bf16.msra.mxu0 %v1891
      %1913 = vmatprep.subr.bf16.mxu0 0
      %1914 = vmatpush1.bf16.msra.mxu0 %v1892
      %1915 = vmatprep.subr.bf16.mxu0 0
      %1916 = vmatpush1.bf16.msra.mxu0 %v1893
      %1917 = vmatprep.subr.bf16.mxu0 0
      %1918 = vmatpush1.bf16.msra.mxu0 %v1894
      %1919 = vmatprep.subr.bf16.mxu0 0
      %1920 = vmatpush1.bf16.msra.mxu0 0
      %1921 = vmatprep.subr.bf16.mxu0 0
      %1922 = vmatpush1.bf16.msra.mxu0 0
      %1923 = vmatprep.subr.bf16.mxu0 0
      %1924 = vmatpush1.bf16.msra.mxu0 0
      %1925 = vmatprep.subr.bf16.mxu0 0
      %1926 = vmatpush1.bf16.msra.mxu0 0
      %1927 = vmatprep.subr.bf16.mxu0 0
      %1928 = vmatpush1.bf16.msra.mxu0 0
      %1929 = vmatprep.subr.bf16.mxu0 0
      %1930 = vmatpush1.bf16.msra.mxu0 0
      %1931 = vmatprep.subr.bf16.mxu0 0
      %1932 = vmatpush1.bf16.msra.mxu0 0
      %1933 = vmatprep.subr.bf16.mxu0 0
      %1934 = vmatpush1.bf16.msra.mxu0 0
      %1935 = vmatprep.mubr.bf16.mxu0 0
      %1936 = vmatmul.mubr.bf16.gmra.mrb[0].mxu0 %v1814
      %v1937 = vpop.f32.mrb[0].mxu0
      %v1938 = vadd.f32 0.0, %v1937
      %v1939 = vpop.f32.mrb[0].mxu0
      %v1940 = vpop.f32.mrb[0].mxu0
      %v1941 = vadd.f32 0.0, %v1940
      %v1942 = vpop.f32.mrb[0].mxu0
      %1943 = vmatprep.mubr.bf16.mxu0 0
      %1944 = vmatmul.mubr.bf16.gmra.mrb[0].mxu0 %v1815
      %v1945 = vpop.f32.mrb[0].mxu0
      %v1946 = vadd.f32 0.0, %v1945
      %v1947 = vpop.f32.mrb[0].mxu0
      %v1948 = vpop.f32.mrb[0].mxu0
      %v1949 = vadd.f32 0.0, %v1948
      %v1950 = vpop.f32.mrb[0].mxu0
      %1951 = vmatprep.mubr.bf16.mxu0 0
      %1952 = vmatmul.mubr.bf16.gmra.mrb[0].mxu0 %v1816
      %v1953 = vpop.f32.mrb[0].mxu0
      %v1954 = vadd.f32 0.0, %v1953
      %v1955 = vpop.f32.mrb[0].mxu0
      %v1956 = vpop.f32.mrb[0].mxu0
      %v1957 = vadd.f32 0.0, %v1956
      %v1958 = vpop.f32.mrb[0].mxu0
      %1959 = vmatprep.mubr.bf16.mxu0 0
      %1960 = vmatmul.mubr.bf16.gmra.mrb[0].mxu0 %v1817
      %v1961 = vpop.f32.mrb[0].mxu0
      %v1962 = vadd.f32 0.0, %v1961
      %v1963 = vpop.f32.mrb[0].mxu0
      %v1964 = vpop.f32.mrb[0].mxu0
      %v1965 = vadd.f32 0.0, %v1964
      %v1966 = vpop.f32.mrb[0].mxu0
      %1967 = vmatprep.mubr.bf16.mxu0 0
      %1968 = vmatmul.mubr.bf16.gmra.mrb[0].mxu0 %v1818
      %v1969 = vpop.f32.mrb[0].mxu0
      %v1970 = vadd.f32 0.0, %v1969
      %v1971 = vpop.f32.mrb[0].mxu0
      %v1972 = vpop.f32.mrb[0].mxu0
      %v1973 = vadd.f32 0.0, %v1972
      %v1974 = vpop.f32.mrb[0].mxu0
      %1975 = vmatprep.mubr.bf16.mxu0 0
      %1976 = vmatmul.mubr.bf16.gmra.mrb[0].mxu0 %v1819
      %v1977 = vpop.f32.mrb[0].mxu0
      %v1978 = vadd.f32 0.0, %v1977
      %v1979 = vpop.f32.mrb[0].mxu0
      %v1980 = vpop.f32.mrb[0].mxu0
      %v1981 = vadd.f32 0.0, %v1980
      %v1982 = vpop.f32.mrb[0].mxu0
      %1983 = vmatprep.mubr.bf16.mxu0 0
      %1984 = vmatmul.mubr.bf16.gmra.mrb[0].mxu0 %v1820
      %v1985 = vpop.f32.mrb[0].mxu0
      %v1986 = vadd.f32 0.0, %v1985
      %v1987 = vpop.f32.mrb[0].mxu0
      %v1988 = vpop.f32.mrb[0].mxu0
      %v1989 = vadd.f32 0.0, %v1988
      %v1990 = vpop.f32.mrb[0].mxu0
      %1991 = vmatprep.mubr.bf16.mxu0 0
      %1992 = vmatmul.mubr.bf16.gmra.mrb[0].mxu0 %v1821
      %v1993 = vpop.f32.mrb[0].mxu0
      %v1994 = vadd.f32 0.0, %v1993
      %v1995 = vpop.f32.mrb[0].mxu0
      %v1996 = vpop.f32.mrb[0].mxu0
      %v1997 = vadd.f32 0.0, %v1996
      %v1998 = vpop.f32.mrb[0].mxu0
      %1999 = vmatprep.mubr.bf16.mxu0 0
      %2000 = vmatmul.mubr.bf16.gmra.mrb[0].mxu0 %v1822
      %v2001 = vpop.f32.mrb[0].mxu0
      %v2002 = vadd.f32 0.0, %v2001
      %v2003 = vpop.f32.mrb[0].mxu0
      %v2004 = vpop.f32.mrb[0].mxu0
      %v2005 = vadd.f32 0.0, %v2004
      %v2006 = vpop.f32.mrb[0].mxu0
      %2007 = vmatprep.mubr.bf16.mxu0 0
      %2008 = vmatmul.mubr.bf16.gmra.mrb[0].mxu0 %v1823
      %v2009 = vpop.f32.mrb[0].mxu0
      %v2010 = vadd.f32 0.0, %v2009
      %v2011 = vpop.f32.mrb[0].mxu0
      %v2012 = vpop.f32.mrb[0].mxu0
      %v2013 = vadd.f32 0.0, %v2012
      %v2014 = vpop.f32.mrb[0].mxu0
      %2015 = vmatprep.mubr.bf16.mxu0 0
      %2016 = vmatmul.mubr.bf16.gmra.mrb[0].mxu0 %v1824
      %v2017 = vpop.f32.mrb[0].mxu0
      %v2018 = vadd.f32 0.0, %v2017
      %v2019 = vpop.f32.mrb[0].mxu0
      %v2020 = vpop.f32.mrb[0].mxu0
      %v2021 = vadd.f32 0.0, %v2020
      %v2022 = vpop.f32.mrb[0].mxu0
      %2023 = vmatprep.mubr.bf16.mxu0 0
      %2024 = vmatmul.mubr.bf16.gmra.mrb[0].mxu0 %v1825
      %v2025 = vpop.f32.mrb[0].mxu0
      %v2026 = vadd.f32 0.0, %v2025
      %v2027 = vpop.f32.mrb[0].mxu0
      %v2028 = vpop.f32.mrb[0].mxu0
      %v2029 = vadd.f32 0.0, %v2028
      %v2030 = vpop.f32.mrb[0].mxu0
      %2031 = vmatprep.mubr.bf16.mxu0 0
      %2032 = vmatmul.mubr.bf16.gmra.mrb[0].mxu0 %v1826
      %v2033 = vpop.f32.mrb[0].mxu0
      %v2034 = vadd.f32 0.0, %v2033
      %v2035 = vpop.f32.mrb[0].mxu0
      %v2036 = vpop.f32.mrb[0].mxu0
      %v2037 = vadd.f32 0.0, %v2036
      %v2038 = vpop.f32.mrb[0].mxu0
      %2039 = vmatprep.mubr.bf16.mxu0 0
      %2040 = vmatmul.mubr.bf16.gmra.mrb[0].mxu0 %v1827
      %v2041 = vpop.f32.mrb[0].mxu0
      %v2042 = vadd.f32 0.0, %v2041
      %v2043 = vpop.f32.mrb[0].mxu0
      %v2044 = vpop.f32.mrb[0].mxu0
      %v2045 = vadd.f32 0.0, %v2044
      %v2046 = vpop.f32.mrb[0].mxu0
      %2047 = vmatprep.mubr.bf16.mxu0 0
      %2048 = vmatmul.mubr.bf16.gmra.mrb[0].mxu0 %v1828
      %v2049 = vpop.f32.mrb[0].mxu0
      %v2050 = vadd.f32 0.0, %v2049
      %v2051 = vpop.f32.mrb[0].mxu0
      %v2052 = vpop.f32.mrb[0].mxu0
      %v2053 = vadd.f32 0.0, %v2052
      %v2054 = vpop.f32.mrb[0].mxu0
      %2055 = vmatprep.mubr.bf16.mxu0 0
      %2056 = vmatmul.mubr.bf16.gmra.mrb[0].mxu0 %v1829
      %v2057 = vpop.f32.mrb[0].mxu0
      %v2058 = vadd.f32 0.0, %v2057
      %v2059 = vpop.f32.mrb[0].mxu0
      %v2060 = vpop.f32.mrb[0].mxu0
      %v2061 = vadd.f32 0.0, %v2060
      %v2062 = vpop.f32.mrb[0].mxu0
      %2063 = vmatprep.mubr.bf16.mxu0 0
      %2064 = vmatmul.mubr.bf16.gmra.mrb[0].mxu0 %v1830
      %v2065 = vpop.f32.mrb[0].mxu0
      %v2066 = vadd.f32 0.0, %v2065
      %v2067 = vpop.f32.mrb[0].mxu0
      %v2068 = vpop.f32.mrb[0].mxu0
      %v2069 = vadd.f32 0.0, %v2068
      %v2070 = vpop.f32.mrb[0].mxu0
      %2071 = vmatprep.mubr.bf16.mxu0 0
      %2072 = vmatmul.mubr.bf16.gmra.mrb[0].mxu0 %v1831
      %v2073 = vpop.f32.mrb[0].mxu0
      %v2074 = vadd.f32 0.0, %v2073
      %v2075 = vpop.f32.mrb[0].mxu0
      %v2076 = vpop.f32.mrb[0].mxu0
      %v2077 = vadd.f32 0.0, %v2076
      %v2078 = vpop.f32.mrb[0].mxu0
      %2079 = vmatprep.mubr.bf16.mxu0 0
      %2080 = vmatmul.mubr.bf16.gmra.mrb[0].mxu0 %v1832
      %v2081 = vpop.f32.mrb[0].mxu0
      %v2082 = vadd.f32 0.0, %v2081
      %v2083 = vpop.f32.mrb[0].mxu0
      %v2084 = vpop.f32.mrb[0].mxu0
      %v2085 = vadd.f32 0.0, %v2084
      %v2086 = vpop.f32.mrb[0].mxu0
      %2087 = vmatprep.mubr.bf16.mxu0 0
      %2088 = vmatmul.mubr.bf16.gmra.mrb[0].mxu0 %v1833
      %v2089 = vpop.f32.mrb[0].mxu0
      %v2090 = vadd.f32 0.0, %v2089
      %v2091 = vpop.f32.mrb[0].mxu0
      %v2092 = vpop.f32.mrb[0].mxu0
      %v2093 = vadd.f32 0.0, %v2092
      %v2094 = vpop.f32.mrb[0].mxu0
      %2095 = vmatprep.mubr.bf16.mxu0 0
      %2096 = vmatmul.mubr.bf16.gmra.mrb[0].mxu0 %v1834
      %v2097 = vpop.f32.mrb[0].mxu0
      %v2098 = vadd.f32 0.0, %v2097
      %v2099 = vpop.f32.mrb[0].mxu0
      %v2100 = vpop.f32.mrb[0].mxu0
      %v2101 = vadd.f32 0.0, %v2100
      %v2102 = vpop.f32.mrb[0].mxu0
      %2103 = vmatprep.mubr.bf16.mxu0 0
      %2104 = vmatmul.mubr.bf16.gmra.mrb[0].mxu0 %v1835
      %v2105 = vpop.f32.mrb[0].mxu0
      %v2106 = vadd.f32 0.0, %v2105
      %v2107 = vpop.f32.mrb[0].mxu0
      %v2108 = vpop.f32.mrb[0].mxu0
      %v2109 = vadd.f32 0.0, %v2108
      %v2110 = vpop.f32.mrb[0].mxu0
      %2111 = vmatprep.mubr.bf16.mxu0 0
      %2112 = vmatmul.mubr.bf16.gmra.mrb[0].mxu0 %v1836
      %v2113 = vpop.f32.mrb[0].mxu0
      %v2114 = vadd.f32 0.0, %v2113
      %v2115 = vpop.f32.mrb[0].mxu0
      %v2116 = vpop.f32.mrb[0].mxu0
      %v2117 = vadd.f32 0.0, %v2116
      %v2118 = vpop.f32.mrb[0].mxu0
      %2119 = vmatprep.mubr.bf16.mxu0 0
      %2120 = vmatmul.mubr.bf16.gmra.mrb[0].mxu0 %v1837
      %v2121 = vpop.f32.mrb[0].mxu0
      %v2122 = vadd.f32 0.0, %v2121
      %v2123 = vpop.f32.mrb[0].mxu0
      %v2124 = vpop.f32.mrb[0].mxu0
      %v2125 = vadd.f32 0.0, %v2124
      %v2126 = vpop.f32.mrb[0].mxu0
      %2127 = vdwg.mxu0
      %v2128 = vadd.f32 %v1718, %v1938
      %v2129 = vadd.f32 %v1719, %v1941
      %v2130 = vadd.f32 %v1720, %v1946
      %v2131 = vadd.f32 %v1721, %v1949
      %v2132 = vadd.f32 %v1722, %v1954
      %v2133 = vadd.f32 %v1723, %v1957
      %v2134 = vadd.f32 %v1724, %v1962
      %v2135 = vadd.f32 %v1725, %v1965
      %v2136 = vadd.f32 %v1726, %v1970
      %v2137 = vadd.f32 %v1727, %v1973
      %v2138 = vadd.f32 %v1728, %v1978
      %v2139 = vadd.f32 %v1729, %v1981
      %v2140 = vadd.f32 %v1730, %v1986
      %v2141 = vadd.f32 %v1731, %v1989
      %v2142 = vadd.f32 %v1732, %v1994
      %v2143 = vadd.f32 %v1733, %v1997
      %v2144 = vadd.f32 %v1734, %v2002
      %v2145 = vadd.f32 %v1735, %v2005
      %v2146 = vadd.f32 %v1736, %v2010
      %v2147 = vadd.f32 %v1737, %v2013
      %v2148 = vadd.f32 %v1738, %v2018
      %v2149 = vadd.f32 %v1739, %v2021
      %v2150 = vadd.f32 %v1740, %v2026
      %v2151 = vadd.f32 %v1741, %v2029
      %v2152 = vadd.f32 %v1742, %v2034
      %v2153 = vadd.f32 %v1743, %v2037
      %v2154 = vadd.f32 %v1744, %v2042
      %v2155 = vadd.f32 %v1745, %v2045
      %v2156 = vadd.f32 %v1746, %v2050
      %v2157 = vadd.f32 %v1747, %v2053
      %v2158 = vadd.f32 %v1748, %v2058
      %v2159 = vadd.f32 %v1749, %v2061
      %v2160 = vadd.f32 %v1750, %v2066
      %v2161 = vadd.f32 %v1751, %v2069
      %v2162 = vadd.f32 %v1752, %v2074
      %v2163 = vadd.f32 %v1753, %v2077
      %v2164 = vadd.f32 %v1754, %v2082
      %v2165 = vadd.f32 %v1755, %v2085
      %v2166 = vadd.f32 %v1756, %v2090
      %v2167 = vadd.f32 %v1757, %v2093
      %v2168 = vadd.f32 %v1758, %v2098
      %v2169 = vadd.f32 %v1759, %v2101
      %v2170 = vadd.f32 %v1760, %v2106
      %v2171 = vadd.f32 %v1761, %v2109
      %v2172 = vadd.f32 %v1762, %v2114
      %v2173 = vadd.f32 %v1763, %v2117
      %v2174 = vadd.f32 %v1764, %v2122
      %v2175 = vadd.f32 %v1765, %v2125
      %v2176 = vld [vmem:[%s206 + $0x1a] sm:$0xff]
      %v2177 = vld [vmem:[%s206 + $0x22] sm:$0xff]
      %v2178 = vld [vmem:[%s206 + $0x2a] sm:$0xff]
      %v2179 = vld [vmem:[%s206 + $0x32] sm:$0xff]
      %v2180 = vld [vmem:[%s206 + $0x3a] sm:$0xff]
      %v2181 = vld [vmem:[%s206 + $0x42] sm:$0xff]
      %v2182 = vld [vmem:[%s206 + $0x4a] sm:$0xff]
      %v2183 = vld [vmem:[%s206 + $0x52] sm:$0xff]
      %v2184 = vld [vmem:[%s206 + $0x5a] sm:$0xff]
      %v2185 = vld [vmem:[%s206 + $0x62] sm:$0xff]
      %v2186 = vld [vmem:[%s206 + $0x6a] sm:$0xff]
      %v2187 = vld [vmem:[%s206 + $0x72] sm:$0xff]
      %v2188 = vld [vmem:[%s206 + $0x7a] sm:$0xff]
      %v2189 = vld [vmem:[%s206 + $0x82] sm:$0xff]
      %v2190 = vld [vmem:[%s206 + $0x8a] sm:$0xff]
      %v2191 = vld [vmem:[%s206 + $0x92] sm:$0xff]
      %v2192 = vld [vmem:[%s206 + $0x9a] sm:$0xff]
      %v2193 = vld [vmem:[%s206 + $0xa2] sm:$0xff]
      %v2194 = vld [vmem:[%s206 + $0xaa] sm:$0xff]
      %v2195 = vld [vmem:[%s206 + $0xb2] sm:$0xff]
      %v2196 = vld [vmem:[%s206 + $0xba] sm:$0xff]
      %v2197 = vld [vmem:[%s206 + $0xc2] sm:$0xff]
      %v2198 = vld [vmem:[%s206 + $0xca] sm:$0xff]
      %v2199 = vld [vmem:[%s206 + $0xd2] sm:$0xff]
      %v2200 = vld [vmem:[%s206 + $0xda] sm:$0xff]
      %v2201 = vld [vmem:[%s206 + $0xe2] sm:$0xff]
      %v2202 = vld [vmem:[%s206 + $0xea] sm:$0xff]
      %v2203 = vld [vmem:[%s206 + $0xf2] sm:$0xff]
      %v2204 = vld [vmem:[%s206 + $0xfa] sm:$0xff]
      %v2205 = vld [vmem:[%s206 + $0x102] sm:$0xff]
      %v2206 = vld [vmem:[%s206 + $0x10a] sm:$0xff]
      %v2207 = vld [vmem:[%s206 + $0x112] sm:$0xff]
      %v2208 = vld [vmem:[%s206 + $0x11a] sm:$0xff]
      %v2209 = vld [vmem:[%s206 + $0x122] sm:$0xff]
      %v2210 = vld [vmem:[%s206 + $0x12a] sm:$0xff]
      %v2211 = vld [vmem:[%s206 + $0x132] sm:$0xff]
      %v2212 = vld [vmem:[%s206 + $0x13a] sm:$0xff]
      %v2213 = vld [vmem:[%s206 + $0x142] sm:$0xff]
      %v2214 = vld [vmem:[%s206 + $0x14a] sm:$0xff]
      %v2215 = vld [vmem:[%s206 + $0x152] sm:$0xff]
      %v2216 = vld [vmem:[%s206 + $0x15a] sm:$0xff]
      %v2217 = vld [vmem:[%s206 + $0x162] sm:$0xff]
      %v2218 = vld [vmem:[%s206 + $0x16a] sm:$0xff]
      %v2219 = vld [vmem:[%s206 + $0x172] sm:$0xff]
      %v2220 = vld [vmem:[%s206 + $0x17a] sm:$0xff]
      %v2221 = vld [vmem:[%s206 + $0x182] sm:$0xff]
      %v2222 = vld [vmem:[%s206 + $0x18a] sm:$0xff]
      %v2223 = vld [vmem:[%s206 + $0x192] sm:$0xff]
      %v2224 = vpack.c.bf16 %v2177, %v2176
      %v2225 = vpack.c.bf16 %v2179, %v2178
      %v2226 = vpack.c.bf16 %v2181, %v2180
      %v2227 = vpack.c.bf16 %v2183, %v2182
      %v2228 = vpack.c.bf16 %v2185, %v2184
      %v2229 = vpack.c.bf16 %v2187, %v2186
      %v2230 = vpack.c.bf16 %v2189, %v2188
      %v2231 = vpack.c.bf16 %v2191, %v2190
      %v2232 = vpack.c.bf16 %v2193, %v2192
      %v2233 = vpack.c.bf16 %v2195, %v2194
      %v2234 = vpack.c.bf16 %v2197, %v2196
      %v2235 = vpack.c.bf16 %v2199, %v2198
      %v2236 = vpack.c.bf16 %v2201, %v2200
      %v2237 = vpack.c.bf16 %v2203, %v2202
      %v2238 = vpack.c.bf16 %v2205, %v2204
      %v2239 = vpack.c.bf16 %v2207, %v2206
      %v2240 = vpack.c.bf16 %v2209, %v2208
      %v2241 = vpack.c.bf16 %v2211, %v2210
      %v2242 = vpack.c.bf16 %v2213, %v2212
      %v2243 = vpack.c.bf16 %v2215, %v2214
      %v2244 = vpack.c.bf16 %v2217, %v2216
      %v2245 = vpack.c.bf16 %v2219, %v2218
      %v2246 = vpack.c.bf16 %v2221, %v2220
      %v2247 = vpack.c.bf16 %v2223, %v2222
      %s2248 = scalar_lea.vmem %s210, 320
      %v2249 = vld [vmem:[%s2248] sm:$0xf]
      %v2250 = vld [vmem:[%s2248 + $0x4] sm:$0xf]
      %v2251 = vld [vmem:[%s2248 + $0x8] sm:$0xf]
      %v2252 = vld [vmem:[%s2248 + $0xc] sm:$0xf]
      %v2253 = vld [vmem:[%s2248 + $0x10] sm:$0xf]
      %v2254 = vld [vmem:[%s2248 + $0x14] sm:$0xf]
      %v2255 = vld [vmem:[%s2248 + $0x18] sm:$0xf]
      %v2256 = vld [vmem:[%s2248 + $0x1c] sm:$0xf]
      %v2257 = vld [vmem:[%s2248 + $0x20] sm:$0xf]
      %v2258 = vld [vmem:[%s2248 + $0x24] sm:$0xf]
      %v2259 = vld [vmem:[%s2248 + $0x28] sm:$0xf]
      %v2260 = vld [vmem:[%s2248 + $0x2c] sm:$0xf]
      %v2261 = vld [vmem:[%s2248 + $0x30] sm:$0xf]
      %v2262 = vld [vmem:[%s2248 + $0x34] sm:$0xf]
      %v2263 = vld [vmem:[%s2248 + $0x38] sm:$0xf]
      %v2264 = vld [vmem:[%s2248 + $0x3c] sm:$0xf]
      %v2281 = vunpack.c.l.b16 %v2249
      %v2282 = vunpack.c.l.b16 %v2250
      %v2283 = vunpack.c.l.b16 %v2251
      %v2284 = vunpack.c.l.b16 %v2252
      %v2285 = vunpack.c.l.b16 %v2253
      %v2286 = vunpack.c.l.b16 %v2254
      %v2287 = vunpack.c.l.b16 %v2255
      %v2288 = vunpack.c.l.b16 %v2256
      %v2289 = vunpack.c.l.b16 %v2257
      %v2290 = vunpack.c.l.b16 %v2258
      %v2291 = vunpack.c.l.b16 %v2259
      %v2292 = vunpack.c.l.b16 %v2260
      %v2293 = vunpack.c.l.b16 %v2261
      %v2294 = vunpack.c.l.b16 %v2262
      %v2295 = vunpack.c.l.b16 %v2263
      %v2296 = vunpack.c.l.b16 %v2264
      %v2297 = vpack.c.b16 %v2282, %v2281
      %v2298 = vpack.c.b16 %v2284, %v2283
      %v2299 = vpack.c.b16 %v2286, %v2285
      %v2300 = vpack.c.b16 %v2288, %v2287
      %v2301 = vpack.c.b16 %v2290, %v2289
      %v2302 = vpack.c.b16 %v2292, %v2291
      %v2303 = vpack.c.b16 %v2294, %v2293
      %v2304 = vpack.c.b16 %v2296, %v2295
      %2313 = vmatprep.subr.bf16.mxu0 0
      %2314 = vmatpush1.bf16.msra.mxu0 %v2297
      %2315 = vmatprep.subr.bf16.mxu0 0
      %2316 = vmatpush1.bf16.msra.mxu0 %v2298
      %2317 = vmatprep.subr.bf16.mxu0 0
      %2318 = vmatpush1.bf16.msra.mxu0 %v2299
      %2319 = vmatprep.subr.bf16.mxu0 0
      %2320 = vmatpush1.bf16.msra.mxu0 %v2300
      %2321 = vmatprep.subr.bf16.mxu0 0
      %2322 = vmatpush1.bf16.msra.mxu0 %v2301
      %2323 = vmatprep.subr.bf16.mxu0 0
      %2324 = vmatpush1.bf16.msra.mxu0 %v2302
      %2325 = vmatprep.subr.bf16.mxu0 0
      %2326 = vmatpush1.bf16.msra.mxu0 %v2303
      %2327 = vmatprep.subr.bf16.mxu0 0
      %2328 = vmatpush1.bf16.msra.mxu0 %v2304
      %2329 = vmatprep.subr.bf16.mxu0 0
      %2330 = vmatpush1.bf16.msra.mxu0 0
      %2331 = vmatprep.subr.bf16.mxu0 0
      %2332 = vmatpush1.bf16.msra.mxu0 0
      %2333 = vmatprep.subr.bf16.mxu0 0
      %2334 = vmatpush1.bf16.msra.mxu0 0
      %2335 = vmatprep.subr.bf16.mxu0 0
      %2336 = vmatpush1.bf16.msra.mxu0 0
      %2337 = vmatprep.subr.bf16.mxu0 0
      %2338 = vmatpush1.bf16.msra.mxu0 0
      %2339 = vmatprep.subr.bf16.mxu0 0
      %2340 = vmatpush1.bf16.msra.mxu0 0
      %2341 = vmatprep.subr.bf16.mxu0 0
      %2342 = vmatpush1.bf16.msra.mxu0 0
      %2343 = vmatprep.subr.bf16.mxu0 0
      %2344 = vmatpush1.bf16.msra.mxu0 0
      %2345 = vmatprep.mubr.bf16.mxu0 0
      %2346 = vmatmul.mubr.bf16.gmra.mrb[0].mxu0 %v2224
      %v2347 = vpop.f32.mrb[0].mxu0
      %v2348 = vadd.f32 0.0, %v2347
      %v2349 = vpop.f32.mrb[0].mxu0
      %v2350 = vpop.f32.mrb[0].mxu0
      %v2351 = vadd.f32 0.0, %v2350
      %v2352 = vpop.f32.mrb[0].mxu0
      %2353 = vmatprep.mubr.bf16.mxu0 0
      %2354 = vmatmul.mubr.bf16.gmra.mrb[0].mxu0 %v2225
      %v2355 = vpop.f32.mrb[0].mxu0
      %v2356 = vadd.f32 0.0, %v2355
      %v2357 = vpop.f32.mrb[0].mxu0
      %v2358 = vpop.f32.mrb[0].mxu0
      %v2359 = vadd.f32 0.0, %v2358
      %v2360 = vpop.f32.mrb[0].mxu0
      %2361 = vmatprep.mubr.bf16.mxu0 0
      %2362 = vmatmul.mubr.bf16.gmra.mrb[0].mxu0 %v2226
      %v2363 = vpop.f32.mrb[0].mxu0
      %v2364 = vadd.f32 0.0, %v2363
      %v2365 = vpop.f32.mrb[0].mxu0
      %v2366 = vpop.f32.mrb[0].mxu0
      %v2367 = vadd.f32 0.0, %v2366
      %v2368 = vpop.f32.mrb[0].mxu0
      %2369 = vmatprep.mubr.bf16.mxu0 0
      %2370 = vmatmul.mubr.bf16.gmra.mrb[0].mxu0 %v2227
      %v2371 = vpop.f32.mrb[0].mxu0
      %v2372 = vadd.f32 0.0, %v2371
      %v2373 = vpop.f32.mrb[0].mxu0
      %v2374 = vpop.f32.mrb[0].mxu0
      %v2375 = vadd.f32 0.0, %v2374
      %v2376 = vpop.f32.mrb[0].mxu0
      %2377 = vmatprep.mubr.bf16.mxu0 0
      %2378 = vmatmul.mubr.bf16.gmra.mrb[0].mxu0 %v2228
      %v2379 = vpop.f32.mrb[0].mxu0
      %v2380 = vadd.f32 0.0, %v2379
      %v2381 = vpop.f32.mrb[0].mxu0
      %v2382 = vpop.f32.mrb[0].mxu0
      %v2383 = vadd.f32 0.0, %v2382
      %v2384 = vpop.f32.mrb[0].mxu0
      %2385 = vmatprep.mubr.bf16.mxu0 0
      %2386 = vmatmul.mubr.bf16.gmra.mrb[0].mxu0 %v2229
      %v2387 = vpop.f32.mrb[0].mxu0
      %v2388 = vadd.f32 0.0, %v2387
      %v2389 = vpop.f32.mrb[0].mxu0
      %v2390 = vpop.f32.mrb[0].mxu0
      %v2391 = vadd.f32 0.0, %v2390
      %v2392 = vpop.f32.mrb[0].mxu0
      %2393 = vmatprep.mubr.bf16.mxu0 0
      %2394 = vmatmul.mubr.bf16.gmra.mrb[0].mxu0 %v2230
      %v2395 = vpop.f32.mrb[0].mxu0
      %v2396 = vadd.f32 0.0, %v2395
      %v2397 = vpop.f32.mrb[0].mxu0
      %v2398 = vpop.f32.mrb[0].mxu0
      %v2399 = vadd.f32 0.0, %v2398
      %v2400 = vpop.f32.mrb[0].mxu0
      %2401 = vmatprep.mubr.bf16.mxu0 0
      %2402 = vmatmul.mubr.bf16.gmra.mrb[0].mxu0 %v2231
      %v2403 = vpop.f32.mrb[0].mxu0
      %v2404 = vadd.f32 0.0, %v2403
      %v2405 = vpop.f32.mrb[0].mxu0
      %v2406 = vpop.f32.mrb[0].mxu0
      %v2407 = vadd.f32 0.0, %v2406
      %v2408 = vpop.f32.mrb[0].mxu0
      %2409 = vmatprep.mubr.bf16.mxu0 0
      %2410 = vmatmul.mubr.bf16.gmra.mrb[0].mxu0 %v2232
      %v2411 = vpop.f32.mrb[0].mxu0
      %v2412 = vadd.f32 0.0, %v2411
      %v2413 = vpop.f32.mrb[0].mxu0
      %v2414 = vpop.f32.mrb[0].mxu0
      %v2415 = vadd.f32 0.0, %v2414
      %v2416 = vpop.f32.mrb[0].mxu0
      %2417 = vmatprep.mubr.bf16.mxu0 0
      %2418 = vmatmul.mubr.bf16.gmra.mrb[0].mxu0 %v2233
      %v2419 = vpop.f32.mrb[0].mxu0
      %v2420 = vadd.f32 0.0, %v2419
      %v2421 = vpop.f32.mrb[0].mxu0
      %v2422 = vpop.f32.mrb[0].mxu0
      %v2423 = vadd.f32 0.0, %v2422
      %v2424 = vpop.f32.mrb[0].mxu0
      %2425 = vmatprep.mubr.bf16.mxu0 0
      %2426 = vmatmul.mubr.bf16.gmra.mrb[0].mxu0 %v2234
      %v2427 = vpop.f32.mrb[0].mxu0
      %v2428 = vadd.f32 0.0, %v2427
      %v2429 = vpop.f32.mrb[0].mxu0
      %v2430 = vpop.f32.mrb[0].mxu0
      %v2431 = vadd.f32 0.0, %v2430
      %v2432 = vpop.f32.mrb[0].mxu0
      %2433 = vmatprep.mubr.bf16.mxu0 0
      %2434 = vmatmul.mubr.bf16.gmra.mrb[0].mxu0 %v2235
      %v2435 = vpop.f32.mrb[0].mxu0
      %v2436 = vadd.f32 0.0, %v2435
      %v2437 = vpop.f32.mrb[0].mxu0
      %v2438 = vpop.f32.mrb[0].mxu0
      %v2439 = vadd.f32 0.0, %v2438
      %v2440 = vpop.f32.mrb[0].mxu0
      %2441 = vmatprep.mubr.bf16.mxu0 0
      %2442 = vmatmul.mubr.bf16.gmra.mrb[0].mxu0 %v2236
      %v2443 = vpop.f32.mrb[0].mxu0
      %v2444 = vadd.f32 0.0, %v2443
      %v2445 = vpop.f32.mrb[0].mxu0
      %v2446 = vpop.f32.mrb[0].mxu0
      %v2447 = vadd.f32 0.0, %v2446
      %v2448 = vpop.f32.mrb[0].mxu0
      %2449 = vmatprep.mubr.bf16.mxu0 0
      %2450 = vmatmul.mubr.bf16.gmra.mrb[0].mxu0 %v2237
      %v2451 = vpop.f32.mrb[0].mxu0
      %v2452 = vadd.f32 0.0, %v2451
      %v2453 = vpop.f32.mrb[0].mxu0
      %v2454 = vpop.f32.mrb[0].mxu0
      %v2455 = vadd.f32 0.0, %v2454
      %v2456 = vpop.f32.mrb[0].mxu0
      %2457 = vmatprep.mubr.bf16.mxu0 0
      %2458 = vmatmul.mubr.bf16.gmra.mrb[0].mxu0 %v2238
      %v2459 = vpop.f32.mrb[0].mxu0
      %v2460 = vadd.f32 0.0, %v2459
      %v2461 = vpop.f32.mrb[0].mxu0
      %v2462 = vpop.f32.mrb[0].mxu0
      %v2463 = vadd.f32 0.0, %v2462
      %v2464 = vpop.f32.mrb[0].mxu0
      %2465 = vmatprep.mubr.bf16.mxu0 0
      %2466 = vmatmul.mubr.bf16.gmra.mrb[0].mxu0 %v2239
      %v2467 = vpop.f32.mrb[0].mxu0
      %v2468 = vadd.f32 0.0, %v2467
      %v2469 = vpop.f32.mrb[0].mxu0
      %v2470 = vpop.f32.mrb[0].mxu0
      %v2471 = vadd.f32 0.0, %v2470
      %v2472 = vpop.f32.mrb[0].mxu0
      %2473 = vmatprep.mubr.bf16.mxu0 0
      %2474 = vmatmul.mubr.bf16.gmra.mrb[0].mxu0 %v2240
      %v2475 = vpop.f32.mrb[0].mxu0
      %v2476 = vadd.f32 0.0, %v2475
      %v2477 = vpop.f32.mrb[0].mxu0
      %v2478 = vpop.f32.mrb[0].mxu0
      %v2479 = vadd.f32 0.0, %v2478
      %v2480 = vpop.f32.mrb[0].mxu0
      %2481 = vmatprep.mubr.bf16.mxu0 0
      %2482 = vmatmul.mubr.bf16.gmra.mrb[0].mxu0 %v2241
      %v2483 = vpop.f32.mrb[0].mxu0
      %v2484 = vadd.f32 0.0, %v2483
      %v2485 = vpop.f32.mrb[0].mxu0
      %v2486 = vpop.f32.mrb[0].mxu0
      %v2487 = vadd.f32 0.0, %v2486
      %v2488 = vpop.f32.mrb[0].mxu0
      %2489 = vmatprep.mubr.bf16.mxu0 0
      %2490 = vmatmul.mubr.bf16.gmra.mrb[0].mxu0 %v2242
      %v2491 = vpop.f32.mrb[0].mxu0
      %v2492 = vadd.f32 0.0, %v2491
      %v2493 = vpop.f32.mrb[0].mxu0
      %v2494 = vpop.f32.mrb[0].mxu0
      %v2495 = vadd.f32 0.0, %v2494
      %v2496 = vpop.f32.mrb[0].mxu0
      %2497 = vmatprep.mubr.bf16.mxu0 0
      %2498 = vmatmul.mubr.bf16.gmra.mrb[0].mxu0 %v2243
      %v2499 = vpop.f32.mrb[0].mxu0
      %v2500 = vadd.f32 0.0, %v2499
      %v2501 = vpop.f32.mrb[0].mxu0
      %v2502 = vpop.f32.mrb[0].mxu0
      %v2503 = vadd.f32 0.0, %v2502
      %v2504 = vpop.f32.mrb[0].mxu0
      %2505 = vmatprep.mubr.bf16.mxu0 0
      %2506 = vmatmul.mubr.bf16.gmra.mrb[0].mxu0 %v2244
      %v2507 = vpop.f32.mrb[0].mxu0
      %v2508 = vadd.f32 0.0, %v2507
      %v2509 = vpop.f32.mrb[0].mxu0
      %v2510 = vpop.f32.mrb[0].mxu0
      %v2511 = vadd.f32 0.0, %v2510
      %v2512 = vpop.f32.mrb[0].mxu0
      %2513 = vmatprep.mubr.bf16.mxu0 0
      %2514 = vmatmul.mubr.bf16.gmra.mrb[0].mxu0 %v2245
      %v2515 = vpop.f32.mrb[0].mxu0
      %v2516 = vadd.f32 0.0, %v2515
      %v2517 = vpop.f32.mrb[0].mxu0
      %v2518 = vpop.f32.mrb[0].mxu0
      %v2519 = vadd.f32 0.0, %v2518
      %v2520 = vpop.f32.mrb[0].mxu0
      %2521 = vmatprep.mubr.bf16.mxu0 0
      %2522 = vmatmul.mubr.bf16.gmra.mrb[0].mxu0 %v2246
      %v2523 = vpop.f32.mrb[0].mxu0
      %v2524 = vadd.f32 0.0, %v2523
      %v2525 = vpop.f32.mrb[0].mxu0
      %v2526 = vpop.f32.mrb[0].mxu0
      %v2527 = vadd.f32 0.0, %v2526
      %v2528 = vpop.f32.mrb[0].mxu0
      %2529 = vmatprep.mubr.bf16.mxu0 0
      %2530 = vmatmul.mubr.bf16.gmra.mrb[0].mxu0 %v2247
      %v2531 = vpop.f32.mrb[0].mxu0
      %v2532 = vadd.f32 0.0, %v2531
      %v2533 = vpop.f32.mrb[0].mxu0
      %v2534 = vpop.f32.mrb[0].mxu0
      %v2535 = vadd.f32 0.0, %v2534
      %v2536 = vpop.f32.mrb[0].mxu0
      %2537 = vdwg.mxu0
      %v2538 = vadd.f32 %v2128, %v2348
      %v2539 = vadd.f32 %v2129, %v2351
      %v2540 = vadd.f32 %v2130, %v2356
      %v2541 = vadd.f32 %v2131, %v2359
      %v2542 = vadd.f32 %v2132, %v2364
      %v2543 = vadd.f32 %v2133, %v2367
      %v2544 = vadd.f32 %v2134, %v2372
      %v2545 = vadd.f32 %v2135, %v2375
      %v2546 = vadd.f32 %v2136, %v2380
      %v2547 = vadd.f32 %v2137, %v2383
      %v2548 = vadd.f32 %v2138, %v2388
      %v2549 = vadd.f32 %v2139, %v2391
      %v2550 = vadd.f32 %v2140, %v2396
      %v2551 = vadd.f32 %v2141, %v2399
      %v2552 = vadd.f32 %v2142, %v2404
      %v2553 = vadd.f32 %v2143, %v2407
      %v2554 = vadd.f32 %v2144, %v2412
      %v2555 = vadd.f32 %v2145, %v2415
      %v2556 = vadd.f32 %v2146, %v2420
      %v2557 = vadd.f32 %v2147, %v2423
      %v2558 = vadd.f32 %v2148, %v2428
      %v2559 = vadd.f32 %v2149, %v2431
      %v2560 = vadd.f32 %v2150, %v2436
      %v2561 = vadd.f32 %v2151, %v2439
      %v2562 = vadd.f32 %v2152, %v2444
      %v2563 = vadd.f32 %v2153, %v2447
      %v2564 = vadd.f32 %v2154, %v2452
      %v2565 = vadd.f32 %v2155, %v2455
      %v2566 = vadd.f32 %v2156, %v2460
      %v2567 = vadd.f32 %v2157, %v2463
      %v2568 = vadd.f32 %v2158, %v2468
      %v2569 = vadd.f32 %v2159, %v2471
      %v2570 = vadd.f32 %v2160, %v2476
      %v2571 = vadd.f32 %v2161, %v2479
      %v2572 = vadd.f32 %v2162, %v2484
      %v2573 = vadd.f32 %v2163, %v2487
      %v2574 = vadd.f32 %v2164, %v2492
      %v2575 = vadd.f32 %v2165, %v2495
      %v2576 = vadd.f32 %v2166, %v2500
      %v2577 = vadd.f32 %v2167, %v2503
      %v2578 = vadd.f32 %v2168, %v2508
      %v2579 = vadd.f32 %v2169, %v2511
      %v2580 = vadd.f32 %v2170, %v2516
      %v2581 = vadd.f32 %v2171, %v2519
      %v2582 = vadd.f32 %v2172, %v2524
      %v2583 = vadd.f32 %v2173, %v2527
      %v2584 = vadd.f32 %v2174, %v2532
      %v2585 = vadd.f32 %v2175, %v2535
      %v2586 = vld [vmem:[%s206 + $0x30] sm:$0xff]
      %v2587 = vld [vmem:[%s206 + $0x38] sm:$0xff]
      %v2588 = vld [vmem:[%s206 + $0x40] sm:$0xff]
      %v2589 = vld [vmem:[%s206 + $0x48] sm:$0xff]
      %v2590 = vld [vmem:[%s206 + $0x50] sm:$0xff]
      %v2591 = vld [vmem:[%s206 + $0x58] sm:$0xff]
      %v2592 = vld [vmem:[%s206 + $0x60] sm:$0xff]
      %v2593 = vld [vmem:[%s206 + $0x68] sm:$0xff]
      %v2594 = vld [vmem:[%s206 + $0x70] sm:$0xff]
      %v2595 = vld [vmem:[%s206 + $0x78] sm:$0xff]
      %v2596 = vld [vmem:[%s206 + $0x80] sm:$0xff]
      %v2597 = vld [vmem:[%s206 + $0x88] sm:$0xff]
      %v2598 = vld [vmem:[%s206 + $0x90] sm:$0xff]
      %v2599 = vld [vmem:[%s206 + $0x98] sm:$0xff]
      %v2600 = vld [vmem:[%s206 + $0xa0] sm:$0xff]
      %v2601 = vld [vmem:[%s206 + $0xa8] sm:$0xff]
      %v2602 = vld [vmem:[%s206 + $0xb0] sm:$0xff]
      %v2603 = vld [vmem:[%s206 + $0xb8] sm:$0xff]
      %v2604 = vld [vmem:[%s206 + $0xc0] sm:$0xff]
      %v2605 = vld [vmem:[%s206 + $0xc8] sm:$0xff]
      %v2606 = vld [vmem:[%s206 + $0xd0] sm:$0xff]
      %v2607 = vld [vmem:[%s206 + $0xd8] sm:$0xff]
      %v2608 = vld [vmem:[%s206 + $0xe0] sm:$0xff]
      %v2609 = vld [vmem:[%s206 + $0xe8] sm:$0xff]
      %v2610 = vld [vmem:[%s206 + $0xf0] sm:$0xff]
      %v2611 = vld [vmem:[%s206 + $0xf8] sm:$0xff]
      %v2612 = vld [vmem:[%s206 + $0x100] sm:$0xff]
      %v2613 = vld [vmem:[%s206 + $0x108] sm:$0xff]
      %v2614 = vld [vmem:[%s206 + $0x110] sm:$0xff]
      %v2615 = vld [vmem:[%s206 + $0x118] sm:$0xff]
      %v2616 = vld [vmem:[%s206 + $0x120] sm:$0xff]
      %v2617 = vld [vmem:[%s206 + $0x128] sm:$0xff]
      %v2618 = vld [vmem:[%s206 + $0x130] sm:$0xff]
      %v2619 = vld [vmem:[%s206 + $0x138] sm:$0xff]
      %v2620 = vld [vmem:[%s206 + $0x140] sm:$0xff]
      %v2621 = vld [vmem:[%s206 + $0x148] sm:$0xff]
      %v2622 = vld [vmem:[%s206 + $0x150] sm:$0xff]
      %v2623 = vld [vmem:[%s206 + $0x158] sm:$0xff]
      %v2624 = vld [vmem:[%s206 + $0x160] sm:$0xff]
      %v2625 = vld [vmem:[%s206 + $0x168] sm:$0xff]
      %v2626 = vld [vmem:[%s206 + $0x170] sm:$0xff]
      %v2627 = vld [vmem:[%s206 + $0x178] sm:$0xff]
      %v2628 = vld [vmem:[%s206 + $0x180] sm:$0xff]
      %v2629 = vld [vmem:[%s206 + $0x188] sm:$0xff]
      %v2630 = vld [vmem:[%s206 + $0x190] sm:$0xff]
      %v2631 = vld [vmem:[%s206 + $0x198] sm:$0xff]
      %v2632 = vld [vmem:[%s206 + $0x1a0] sm:$0xff]
      %v2633 = vld [vmem:[%s206 + $0x1a8] sm:$0xff]
      %v2634 = vpack.c.bf16 %v2587, %v2586
      %v2635 = vpack.c.bf16 %v2589, %v2588
      %v2636 = vpack.c.bf16 %v2591, %v2590
      %v2637 = vpack.c.bf16 %v2593, %v2592
      %v2638 = vpack.c.bf16 %v2595, %v2594
      %v2639 = vpack.c.bf16 %v2597, %v2596
      %v2640 = vpack.c.bf16 %v2599, %v2598
      %v2641 = vpack.c.bf16 %v2601, %v2600
      %v2642 = vpack.c.bf16 %v2603, %v2602
      %v2643 = vpack.c.bf16 %v2605, %v2604
      %v2644 = vpack.c.bf16 %v2607, %v2606
      %v2645 = vpack.c.bf16 %v2609, %v2608
      %v2646 = vpack.c.bf16 %v2611, %v2610
      %v2647 = vpack.c.bf16 %v2613, %v2612
      %v2648 = vpack.c.bf16 %v2615, %v2614
      %v2649 = vpack.c.bf16 %v2617, %v2616
      %v2650 = vpack.c.bf16 %v2619, %v2618
      %v2651 = vpack.c.bf16 %v2621, %v2620
      %v2652 = vpack.c.bf16 %v2623, %v2622
      %v2653 = vpack.c.bf16 %v2625, %v2624
      %v2654 = vpack.c.bf16 %v2627, %v2626
      %v2655 = vpack.c.bf16 %v2629, %v2628
      %v2656 = vpack.c.bf16 %v2631, %v2630
      %v2657 = vpack.c.bf16 %v2633, %v2632
      %s2658 = scalar_lea.vmem %s210, 384
      %v2659 = vld [vmem:[%s2658] sm:$0xf]
      %v2660 = vld [vmem:[%s2658 + $0x4] sm:$0xf]
      %v2661 = vld [vmem:[%s2658 + $0x8] sm:$0xf]
      %v2662 = vld [vmem:[%s2658 + $0xc] sm:$0xf]
      %v2663 = vld [vmem:[%s2658 + $0x10] sm:$0xf]
      %v2664 = vld [vmem:[%s2658 + $0x14] sm:$0xf]
      %v2665 = vld [vmem:[%s2658 + $0x18] sm:$0xf]
      %v2666 = vld [vmem:[%s2658 + $0x1c] sm:$0xf]
      %v2667 = vld [vmem:[%s2658 + $0x20] sm:$0xf]
      %v2668 = vld [vmem:[%s2658 + $0x24] sm:$0xf]
      %v2669 = vld [vmem:[%s2658 + $0x28] sm:$0xf]
      %v2670 = vld [vmem:[%s2658 + $0x2c] sm:$0xf]
      %v2671 = vld [vmem:[%s2658 + $0x30] sm:$0xf]
      %v2672 = vld [vmem:[%s2658 + $0x34] sm:$0xf]
      %v2673 = vld [vmem:[%s2658 + $0x38] sm:$0xf]
      %v2674 = vld [vmem:[%s2658 + $0x3c] sm:$0xf]
      %v2691 = vunpack.c.l.b16 %v2659
      %v2692 = vunpack.c.l.b16 %v2660
      %v2693 = vunpack.c.l.b16 %v2661
      %v2694 = vunpack.c.l.b16 %v2662
      %v2695 = vunpack.c.l.b16 %v2663
      %v2696 = vunpack.c.l.b16 %v2664
      %v2697 = vunpack.c.l.b16 %v2665
      %v2698 = vunpack.c.l.b16 %v2666
      %v2699 = vunpack.c.l.b16 %v2667
      %v2700 = vunpack.c.l.b16 %v2668
      %v2701 = vunpack.c.l.b16 %v2669
      %v2702 = vunpack.c.l.b16 %v2670
      %v2703 = vunpack.c.l.b16 %v2671
      %v2704 = vunpack.c.l.b16 %v2672
      %v2705 = vunpack.c.l.b16 %v2673
      %v2706 = vunpack.c.l.b16 %v2674
      %v2707 = vpack.c.b16 %v2692, %v2691
      %v2708 = vpack.c.b16 %v2694, %v2693
      %v2709 = vpack.c.b16 %v2696, %v2695
      %v2710 = vpack.c.b16 %v2698, %v2697
      %v2711 = vpack.c.b16 %v2700, %v2699
      %v2712 = vpack.c.b16 %v2702, %v2701
      %v2713 = vpack.c.b16 %v2704, %v2703
      %v2714 = vpack.c.b16 %v2706, %v2705
      %2723 = vmatprep.subr.bf16.mxu0 0
      %2724 = vmatpush1.bf16.msra.mxu0 %v2707
      %2725 = vmatprep.subr.bf16.mxu0 0
      %2726 = vmatpush1.bf16.msra.mxu0 %v2708
      %2727 = vmatprep.subr.bf16.mxu0 0
      %2728 = vmatpush1.bf16.msra.mxu0 %v2709
      %2729 = vmatprep.subr.bf16.mxu0 0
      %2730 = vmatpush1.bf16.msra.mxu0 %v2710
      %2731 = vmatprep.subr.bf16.mxu0 0
      %2732 = vmatpush1.bf16.msra.mxu0 %v2711
      %2733 = vmatprep.subr.bf16.mxu0 0
      %2734 = vmatpush1.bf16.msra.mxu0 %v2712
      %2735 = vmatprep.subr.bf16.mxu0 0
      %2736 = vmatpush1.bf16.msra.mxu0 %v2713
      %2737 = vmatprep.subr.bf16.mxu0 0
      %2738 = vmatpush1.bf16.msra.mxu0 %v2714
      %2739 = vmatprep.subr.bf16.mxu0 0
      %2740 = vmatpush1.bf16.msra.mxu0 0
      %2741 = vmatprep.subr.bf16.mxu0 0
      %2742 = vmatpush1.bf16.msra.mxu0 0
      %2743 = vmatprep.subr.bf16.mxu0 0
      %2744 = vmatpush1.bf16.msra.mxu0 0
      %2745 = vmatprep.subr.bf16.mxu0 0
      %2746 = vmatpush1.bf16.msra.mxu0 0
      %2747 = vmatprep.subr.bf16.mxu0 0
      %2748 = vmatpush1.bf16.msra.mxu0 0
      %2749 = vmatprep.subr.bf16.mxu0 0
      %2750 = vmatpush1.bf16.msra.mxu0 0
      %2751 = vmatprep.subr.bf16.mxu0 0
      %2752 = vmatpush1.bf16.msra.mxu0 0
      %2753 = vmatprep.subr.bf16.mxu0 0
      %2754 = vmatpush1.bf16.msra.mxu0 0
      %2755 = vmatprep.mubr.bf16.mxu0 0
      %2756 = vmatmul.mubr.bf16.gmra.mrb[0].mxu0 %v2634
      %v2757 = vpop.f32.mrb[0].mxu0
      %v2758 = vadd.f32 0.0, %v2757
      %v2759 = vpop.f32.mrb[0].mxu0
      %v2760 = vpop.f32.mrb[0].mxu0
      %v2761 = vadd.f32 0.0, %v2760
      %v2762 = vpop.f32.mrb[0].mxu0
      %2763 = vmatprep.mubr.bf16.mxu0 0
      %2764 = vmatmul.mubr.bf16.gmra.mrb[0].mxu0 %v2635
      %v2765 = vpop.f32.mrb[0].mxu0
      %v2766 = vadd.f32 0.0, %v2765
      %v2767 = vpop.f32.mrb[0].mxu0
      %v2768 = vpop.f32.mrb[0].mxu0
      %v2769 = vadd.f32 0.0, %v2768
      %v2770 = vpop.f32.mrb[0].mxu0
      %2771 = vmatprep.mubr.bf16.mxu0 0
      %2772 = vmatmul.mubr.bf16.gmra.mrb[0].mxu0 %v2636
      %v2773 = vpop.f32.mrb[0].mxu0
      %v2774 = vadd.f32 0.0, %v2773
      %v2775 = vpop.f32.mrb[0].mxu0
      %v2776 = vpop.f32.mrb[0].mxu0
      %v2777 = vadd.f32 0.0, %v2776
      %v2778 = vpop.f32.mrb[0].mxu0
      %2779 = vmatprep.mubr.bf16.mxu0 0
      %2780 = vmatmul.mubr.bf16.gmra.mrb[0].mxu0 %v2637
      %v2781 = vpop.f32.mrb[0].mxu0
      %v2782 = vadd.f32 0.0, %v2781
      %v2783 = vpop.f32.mrb[0].mxu0
      %v2784 = vpop.f32.mrb[0].mxu0
      %v2785 = vadd.f32 0.0, %v2784
      %v2786 = vpop.f32.mrb[0].mxu0
      %2787 = vmatprep.mubr.bf16.mxu0 0
      %2788 = vmatmul.mubr.bf16.gmra.mrb[0].mxu0 %v2638
      %v2789 = vpop.f32.mrb[0].mxu0
      %v2790 = vadd.f32 0.0, %v2789
      %v2791 = vpop.f32.mrb[0].mxu0
      %v2792 = vpop.f32.mrb[0].mxu0
      %v2793 = vadd.f32 0.0, %v2792
      %v2794 = vpop.f32.mrb[0].mxu0
      %2795 = vmatprep.mubr.bf16.mxu0 0
      %2796 = vmatmul.mubr.bf16.gmra.mrb[0].mxu0 %v2639
      %v2797 = vpop.f32.mrb[0].mxu0
      %v2798 = vadd.f32 0.0, %v2797
      %v2799 = vpop.f32.mrb[0].mxu0
      %v2800 = vpop.f32.mrb[0].mxu0
      %v2801 = vadd.f32 0.0, %v2800
      %v2802 = vpop.f32.mrb[0].mxu0
      %2803 = vmatprep.mubr.bf16.mxu0 0
      %2804 = vmatmul.mubr.bf16.gmra.mrb[0].mxu0 %v2640
      %v2805 = vpop.f32.mrb[0].mxu0
      %v2806 = vadd.f32 0.0, %v2805
      %v2807 = vpop.f32.mrb[0].mxu0
      %v2808 = vpop.f32.mrb[0].mxu0
      %v2809 = vadd.f32 0.0, %v2808
      %v2810 = vpop.f32.mrb[0].mxu0
      %2811 = vmatprep.mubr.bf16.mxu0 0
      %2812 = vmatmul.mubr.bf16.gmra.mrb[0].mxu0 %v2641
      %v2813 = vpop.f32.mrb[0].mxu0
      %v2814 = vadd.f32 0.0, %v2813
      %v2815 = vpop.f32.mrb[0].mxu0
      %v2816 = vpop.f32.mrb[0].mxu0
      %v2817 = vadd.f32 0.0, %v2816
      %v2818 = vpop.f32.mrb[0].mxu0
      %2819 = vmatprep.mubr.bf16.mxu0 0
      %2820 = vmatmul.mubr.bf16.gmra.mrb[0].mxu0 %v2642
      %v2821 = vpop.f32.mrb[0].mxu0
      %v2822 = vadd.f32 0.0, %v2821
      %v2823 = vpop.f32.mrb[0].mxu0
      %v2824 = vpop.f32.mrb[0].mxu0
      %v2825 = vadd.f32 0.0, %v2824
      %v2826 = vpop.f32.mrb[0].mxu0
      %2827 = vmatprep.mubr.bf16.mxu0 0
      %2828 = vmatmul.mubr.bf16.gmra.mrb[0].mxu0 %v2643
      %v2829 = vpop.f32.mrb[0].mxu0
      %v2830 = vadd.f32 0.0, %v2829
      %v2831 = vpop.f32.mrb[0].mxu0
      %v2832 = vpop.f32.mrb[0].mxu0
      %v2833 = vadd.f32 0.0, %v2832
      %v2834 = vpop.f32.mrb[0].mxu0
      %2835 = vmatprep.mubr.bf16.mxu0 0
      %2836 = vmatmul.mubr.bf16.gmra.mrb[0].mxu0 %v2644
      %v2837 = vpop.f32.mrb[0].mxu0
      %v2838 = vadd.f32 0.0, %v2837
      %v2839 = vpop.f32.mrb[0].mxu0
      %v2840 = vpop.f32.mrb[0].mxu0
      %v2841 = vadd.f32 0.0, %v2840
      %v2842 = vpop.f32.mrb[0].mxu0
      %2843 = vmatprep.mubr.bf16.mxu0 0
      %2844 = vmatmul.mubr.bf16.gmra.mrb[0].mxu0 %v2645
      %v2845 = vpop.f32.mrb[0].mxu0
      %v2846 = vadd.f32 0.0, %v2845
      %v2847 = vpop.f32.mrb[0].mxu0
      %v2848 = vpop.f32.mrb[0].mxu0
      %v2849 = vadd.f32 0.0, %v2848
      %v2850 = vpop.f32.mrb[0].mxu0
      %2851 = vmatprep.mubr.bf16.mxu0 0
      %2852 = vmatmul.mubr.bf16.gmra.mrb[0].mxu0 %v2646
      %v2853 = vpop.f32.mrb[0].mxu0
      %v2854 = vadd.f32 0.0, %v2853
      %v2855 = vpop.f32.mrb[0].mxu0
      %v2856 = vpop.f32.mrb[0].mxu0
      %v2857 = vadd.f32 0.0, %v2856
      %v2858 = vpop.f32.mrb[0].mxu0
      %2859 = vmatprep.mubr.bf16.mxu0 0
      %2860 = vmatmul.mubr.bf16.gmra.mrb[0].mxu0 %v2647
      %v2861 = vpop.f32.mrb[0].mxu0
      %v2862 = vadd.f32 0.0, %v2861
      %v2863 = vpop.f32.mrb[0].mxu0
      %v2864 = vpop.f32.mrb[0].mxu0
      %v2865 = vadd.f32 0.0, %v2864
      %v2866 = vpop.f32.mrb[0].mxu0
      %2867 = vmatprep.mubr.bf16.mxu0 0
      %2868 = vmatmul.mubr.bf16.gmra.mrb[0].mxu0 %v2648
      %v2869 = vpop.f32.mrb[0].mxu0
      %v2870 = vadd.f32 0.0, %v2869
      %v2871 = vpop.f32.mrb[0].mxu0
      %v2872 = vpop.f32.mrb[0].mxu0
      %v2873 = vadd.f32 0.0, %v2872
      %v2874 = vpop.f32.mrb[0].mxu0
      %2875 = vmatprep.mubr.bf16.mxu0 0
      %2876 = vmatmul.mubr.bf16.gmra.mrb[0].mxu0 %v2649
      %v2877 = vpop.f32.mrb[0].mxu0
      %v2878 = vadd.f32 0.0, %v2877
      %v2879 = vpop.f32.mrb[0].mxu0
      %v2880 = vpop.f32.mrb[0].mxu0
      %v2881 = vadd.f32 0.0, %v2880
      %v2882 = vpop.f32.mrb[0].mxu0
      %2883 = vmatprep.mubr.bf16.mxu0 0
      %2884 = vmatmul.mubr.bf16.gmra.mrb[0].mxu0 %v2650
      %v2885 = vpop.f32.mrb[0].mxu0
      %v2886 = vadd.f32 0.0, %v2885
      %v2887 = vpop.f32.mrb[0].mxu0
      %v2888 = vpop.f32.mrb[0].mxu0
      %v2889 = vadd.f32 0.0, %v2888
      %v2890 = vpop.f32.mrb[0].mxu0
      %2891 = vmatprep.mubr.bf16.mxu0 0
      %2892 = vmatmul.mubr.bf16.gmra.mrb[0].mxu0 %v2651
      %v2893 = vpop.f32.mrb[0].mxu0
      %v2894 = vadd.f32 0.0, %v2893
      %v2895 = vpop.f32.mrb[0].mxu0
      %v2896 = vpop.f32.mrb[0].mxu0
      %v2897 = vadd.f32 0.0, %v2896
      %v2898 = vpop.f32.mrb[0].mxu0
      %2899 = vmatprep.mubr.bf16.mxu0 0
      %2900 = vmatmul.mubr.bf16.gmra.mrb[0].mxu0 %v2652
      %v2901 = vpop.f32.mrb[0].mxu0
      %v2902 = vadd.f32 0.0, %v2901
      %v2903 = vpop.f32.mrb[0].mxu0
      %v2904 = vpop.f32.mrb[0].mxu0
      %v2905 = vadd.f32 0.0, %v2904
      %v2906 = vpop.f32.mrb[0].mxu0
      %2907 = vmatprep.mubr.bf16.mxu0 0
      %2908 = vmatmul.mubr.bf16.gmra.mrb[0].mxu0 %v2653
      %v2909 = vpop.f32.mrb[0].mxu0
      %v2910 = vadd.f32 0.0, %v2909
      %v2911 = vpop.f32.mrb[0].mxu0
      %v2912 = vpop.f32.mrb[0].mxu0
      %v2913 = vadd.f32 0.0, %v2912
      %v2914 = vpop.f32.mrb[0].mxu0
      %2915 = vmatprep.mubr.bf16.mxu0 0
      %2916 = vmatmul.mubr.bf16.gmra.mrb[0].mxu0 %v2654
      %v2917 = vpop.f32.mrb[0].mxu0
      %v2918 = vadd.f32 0.0, %v2917
      %v2919 = vpop.f32.mrb[0].mxu0
      %v2920 = vpop.f32.mrb[0].mxu0
      %v2921 = vadd.f32 0.0, %v2920
      %v2922 = vpop.f32.mrb[0].mxu0
      %2923 = vmatprep.mubr.bf16.mxu0 0
      %2924 = vmatmul.mubr.bf16.gmra.mrb[0].mxu0 %v2655
      %v2925 = vpop.f32.mrb[0].mxu0
      %v2926 = vadd.f32 0.0, %v2925
      %v2927 = vpop.f32.mrb[0].mxu0
      %v2928 = vpop.f32.mrb[0].mxu0
      %v2929 = vadd.f32 0.0, %v2928
      %v2930 = vpop.f32.mrb[0].mxu0
      %2931 = vmatprep.mubr.bf16.mxu0 0
      %2932 = vmatmul.mubr.bf16.gmra.mrb[0].mxu0 %v2656
      %v2933 = vpop.f32.mrb[0].mxu0
      %v2934 = vadd.f32 0.0, %v2933
      %v2935 = vpop.f32.mrb[0].mxu0
      %v2936 = vpop.f32.mrb[0].mxu0
      %v2937 = vadd.f32 0.0, %v2936
      %v2938 = vpop.f32.mrb[0].mxu0
      %2939 = vmatprep.mubr.bf16.mxu0 0
      %2940 = vmatmul.mubr.bf16.gmra.mrb[0].mxu0 %v2657
      %v2941 = vpop.f32.mrb[0].mxu0
      %v2942 = vadd.f32 0.0, %v2941
      %v2943 = vpop.f32.mrb[0].mxu0
      %v2944 = vpop.f32.mrb[0].mxu0
      %v2945 = vadd.f32 0.0, %v2944
      %v2946 = vpop.f32.mrb[0].mxu0
      %2947 = vdwg.mxu0
      %v2948 = vadd.f32 %v2538, %v2758
      %v2949 = vadd.f32 %v2539, %v2761
      %v2950 = vadd.f32 %v2540, %v2766
      %v2951 = vadd.f32 %v2541, %v2769
      %v2952 = vadd.f32 %v2542, %v2774
      %v2953 = vadd.f32 %v2543, %v2777
      %v2954 = vadd.f32 %v2544, %v2782
      %v2955 = vadd.f32 %v2545, %v2785
      %v2956 = vadd.f32 %v2546, %v2790
      %v2957 = vadd.f32 %v2547, %v2793
      %v2958 = vadd.f32 %v2548, %v2798
      %v2959 = vadd.f32 %v2549, %v2801
      %v2960 = vadd.f32 %v2550, %v2806
      %v2961 = vadd.f32 %v2551, %v2809
      %v2962 = vadd.f32 %v2552, %v2814
      %v2963 = vadd.f32 %v2553, %v2817
      %v2964 = vadd.f32 %v2554, %v2822
      %v2965 = vadd.f32 %v2555, %v2825
      %v2966 = vadd.f32 %v2556, %v2830
      %v2967 = vadd.f32 %v2557, %v2833
      %v2968 = vadd.f32 %v2558, %v2838
      %v2969 = vadd.f32 %v2559, %v2841
      %v2970 = vadd.f32 %v2560, %v2846
      %v2971 = vadd.f32 %v2561, %v2849
      %v2972 = vadd.f32 %v2562, %v2854
      %v2973 = vadd.f32 %v2563, %v2857
      %v2974 = vadd.f32 %v2564, %v2862
      %v2975 = vadd.f32 %v2565, %v2865
      %v2976 = vadd.f32 %v2566, %v2870
      %v2977 = vadd.f32 %v2567, %v2873
      %v2978 = vadd.f32 %v2568, %v2878
      %v2979 = vadd.f32 %v2569, %v2881
      %v2980 = vadd.f32 %v2570, %v2886
      %v2981 = vadd.f32 %v2571, %v2889
      %v2982 = vadd.f32 %v2572, %v2894
      %v2983 = vadd.f32 %v2573, %v2897
      %v2984 = vadd.f32 %v2574, %v2902
      %v2985 = vadd.f32 %v2575, %v2905
      %v2986 = vadd.f32 %v2576, %v2910
      %v2987 = vadd.f32 %v2577, %v2913
      %v2988 = vadd.f32 %v2578, %v2918
      %v2989 = vadd.f32 %v2579, %v2921
      %v2990 = vadd.f32 %v2580, %v2926
      %v2991 = vadd.f32 %v2581, %v2929
      %v2992 = vadd.f32 %v2582, %v2934
      %v2993 = vadd.f32 %v2583, %v2937
      %v2994 = vadd.f32 %v2584, %v2942
      %v2995 = vadd.f32 %v2585, %v2945
      %v2996 = vld [vmem:[%s206 + $0x31] sm:$0xff]
      %v2997 = vld [vmem:[%s206 + $0x39] sm:$0xff]
      %v2998 = vld [vmem:[%s206 + $0x41] sm:$0xff]
      %v2999 = vld [vmem:[%s206 + $0x49] sm:$0xff]
      %v3000 = vld [vmem:[%s206 + $0x51] sm:$0xff]
      %v3001 = vld [vmem:[%s206 + $0x59] sm:$0xff]
      %v3002 = vld [vmem:[%s206 + $0x61] sm:$0xff]
      %v3003 = vld [vmem:[%s206 + $0x69] sm:$0xff]
      %v3004 = vld [vmem:[%s206 + $0x71] sm:$0xff]
      %v3005 = vld [vmem:[%s206 + $0x79] sm:$0xff]
      %v3006 = vld [vmem:[%s206 + $0x81] sm:$0xff]
      %v3007 = vld [vmem:[%s206 + $0x89] sm:$0xff]
      %v3008 = vld [vmem:[%s206 + $0x91] sm:$0xff]
      %v3009 = vld [vmem:[%s206 + $0x99] sm:$0xff]
      %v3010 = vld [vmem:[%s206 + $0xa1] sm:$0xff]
      %v3011 = vld [vmem:[%s206 + $0xa9] sm:$0xff]
      %v3012 = vld [vmem:[%s206 + $0xb1] sm:$0xff]
      %v3013 = vld [vmem:[%s206 + $0xb9] sm:$0xff]
      %v3014 = vld [vmem:[%s206 + $0xc1] sm:$0xff]
      %v3015 = vld [vmem:[%s206 + $0xc9] sm:$0xff]
      %v3016 = vld [vmem:[%s206 + $0xd1] sm:$0xff]
      %v3017 = vld [vmem:[%s206 + $0xd9] sm:$0xff]
      %v3018 = vld [vmem:[%s206 + $0xe1] sm:$0xff]
      %v3019 = vld [vmem:[%s206 + $0xe9] sm:$0xff]
      %v3020 = vld [vmem:[%s206 + $0xf1] sm:$0xff]
      %v3021 = vld [vmem:[%s206 + $0xf9] sm:$0xff]
      %v3022 = vld [vmem:[%s206 + $0x101] sm:$0xff]
      %v3023 = vld [vmem:[%s206 + $0x109] sm:$0xff]
      %v3024 = vld [vmem:[%s206 + $0x111] sm:$0xff]
      %v3025 = vld [vmem:[%s206 + $0x119] sm:$0xff]
      %v3026 = vld [vmem:[%s206 + $0x121] sm:$0xff]
      %v3027 = vld [vmem:[%s206 + $0x129] sm:$0xff]
      %v3028 = vld [vmem:[%s206 + $0x131] sm:$0xff]
      %v3029 = vld [vmem:[%s206 + $0x139] sm:$0xff]
      %v3030 = vld [vmem:[%s206 + $0x141] sm:$0xff]
      %v3031 = vld [vmem:[%s206 + $0x149] sm:$0xff]
      %v3032 = vld [vmem:[%s206 + $0x151] sm:$0xff]
      %v3033 = vld [vmem:[%s206 + $0x159] sm:$0xff]
      %v3034 = vld [vmem:[%s206 + $0x161] sm:$0xff]
      %v3035 = vld [vmem:[%s206 + $0x169] sm:$0xff]
      %v3036 = vld [vmem:[%s206 + $0x171] sm:$0xff]
      %v3037 = vld [vmem:[%s206 + $0x179] sm:$0xff]
      %v3038 = vld [vmem:[%s206 + $0x181] sm:$0xff]
      %v3039 = vld [vmem:[%s206 + $0x189] sm:$0xff]
      %v3040 = vld [vmem:[%s206 + $0x191] sm:$0xff]
      %v3041 = vld [vmem:[%s206 + $0x199] sm:$0xff]
      %v3042 = vld [vmem:[%s206 + $0x1a1] sm:$0xff]
      %v3043 = vld [vmem:[%s206 + $0x1a9] sm:$0xff]
      %v3044 = vpack.c.bf16 %v2997, %v2996
      %v3045 = vpack.c.bf16 %v2999, %v2998
      %v3046 = vpack.c.bf16 %v3001, %v3000
      %v3047 = vpack.c.bf16 %v3003, %v3002
      %v3048 = vpack.c.bf16 %v3005, %v3004
      %v3049 = vpack.c.bf16 %v3007, %v3006
      %v3050 = vpack.c.bf16 %v3009, %v3008
      %v3051 = vpack.c.bf16 %v3011, %v3010
      %v3052 = vpack.c.bf16 %v3013, %v3012
      %v3053 = vpack.c.bf16 %v3015, %v3014
      %v3054 = vpack.c.bf16 %v3017, %v3016
      %v3055 = vpack.c.bf16 %v3019, %v3018
      %v3056 = vpack.c.bf16 %v3021, %v3020
      %v3057 = vpack.c.bf16 %v3023, %v3022
      %v3058 = vpack.c.bf16 %v3025, %v3024
      %v3059 = vpack.c.bf16 %v3027, %v3026
      %v3060 = vpack.c.bf16 %v3029, %v3028
      %v3061 = vpack.c.bf16 %v3031, %v3030
      %v3062 = vpack.c.bf16 %v3033, %v3032
      %v3063 = vpack.c.bf16 %v3035, %v3034
      %v3064 = vpack.c.bf16 %v3037, %v3036
      %v3065 = vpack.c.bf16 %v3039, %v3038
      %v3066 = vpack.c.bf16 %v3041, %v3040
      %v3067 = vpack.c.bf16 %v3043, %v3042
      %s3068 = scalar_lea.vmem %s210, 448
      %v3069 = vld [vmem:[%s3068] sm:$0xf]
      %v3070 = vld [vmem:[%s3068 + $0x4] sm:$0xf]
      %v3071 = vld [vmem:[%s3068 + $0x8] sm:$0xf]
      %v3072 = vld [vmem:[%s3068 + $0xc] sm:$0xf]
      %v3073 = vld [vmem:[%s3068 + $0x10] sm:$0xf]
      %v3074 = vld [vmem:[%s3068 + $0x14] sm:$0xf]
      %v3075 = vld [vmem:[%s3068 + $0x18] sm:$0xf]
      %v3076 = vld [vmem:[%s3068 + $0x1c] sm:$0xf]
      %v3077 = vld [vmem:[%s3068 + $0x20] sm:$0xf]
      %v3078 = vld [vmem:[%s3068 + $0x24] sm:$0xf]
      %v3079 = vld [vmem:[%s3068 + $0x28] sm:$0xf]
      %v3080 = vld [vmem:[%s3068 + $0x2c] sm:$0xf]
      %v3081 = vld [vmem:[%s3068 + $0x30] sm:$0xf]
      %v3082 = vld [vmem:[%s3068 + $0x34] sm:$0xf]
      %v3083 = vld [vmem:[%s3068 + $0x38] sm:$0xf]
      %v3084 = vld [vmem:[%s3068 + $0x3c] sm:$0xf]
      %v3101 = vunpack.c.l.b16 %v3069
      %v3102 = vunpack.c.l.b16 %v3070
      %v3103 = vunpack.c.l.b16 %v3071
      %v3104 = vunpack.c.l.b16 %v3072
      %v3105 = vunpack.c.l.b16 %v3073
      %v3106 = vunpack.c.l.b16 %v3074
      %v3107 = vunpack.c.l.b16 %v3075
      %v3108 = vunpack.c.l.b16 %v3076
      %v3109 = vunpack.c.l.b16 %v3077
      %v3110 = vunpack.c.l.b16 %v3078
      %v3111 = vunpack.c.l.b16 %v3079
      %v3112 = vunpack.c.l.b16 %v3080
      %v3113 = vunpack.c.l.b16 %v3081
      %v3114 = vunpack.c.l.b16 %v3082
      %v3115 = vunpack.c.l.b16 %v3083
      %v3116 = vunpack.c.l.b16 %v3084
      %v3117 = vpack.c.b16 %v3102, %v3101
      %v3118 = vpack.c.b16 %v3104, %v3103
      %v3119 = vpack.c.b16 %v3106, %v3105
      %v3120 = vpack.c.b16 %v3108, %v3107
      %v3121 = vpack.c.b16 %v3110, %v3109
      %v3122 = vpack.c.b16 %v3112, %v3111
      %v3123 = vpack.c.b16 %v3114, %v3113
      %v3124 = vpack.c.b16 %v3116, %v3115
      %3133 = vmatprep.subr.bf16.mxu0 0
      %3134 = vmatpush1.bf16.msra.mxu0 %v3117
      %3135 = vmatprep.subr.bf16.mxu0 0
      %3136 = vmatpush1.bf16.msra.mxu0 %v3118
      %3137 = vmatprep.subr.bf16.mxu0 0
      %3138 = vmatpush1.bf16.msra.mxu0 %v3119
      %3139 = vmatprep.subr.bf16.mxu0 0
      %3140 = vmatpush1.bf16.msra.mxu0 %v3120
      %3141 = vmatprep.subr.bf16.mxu0 0
      %3142 = vmatpush1.bf16.msra.mxu0 %v3121
      %3143 = vmatprep.subr.bf16.mxu0 0
      %3144 = vmatpush1.bf16.msra.mxu0 %v3122
      %3145 = vmatprep.subr.bf16.mxu0 0
      %3146 = vmatpush1.bf16.msra.mxu0 %v3123
      %3147 = vmatprep.subr.bf16.mxu0 0
      %3148 = vmatpush1.bf16.msra.mxu0 %v3124
      %3149 = vmatprep.subr.bf16.mxu0 0
      %3150 = vmatpush1.bf16.msra.mxu0 0
      %3151 = vmatprep.subr.bf16.mxu0 0
      %3152 = vmatpush1.bf16.msra.mxu0 0
      %3153 = vmatprep.subr.bf16.mxu0 0
      %3154 = vmatpush1.bf16.msra.mxu0 0
      %3155 = vmatprep.subr.bf16.mxu0 0
      %3156 = vmatpush1.bf16.msra.mxu0 0
      %3157 = vmatprep.subr.bf16.mxu0 0
      %3158 = vmatpush1.bf16.msra.mxu0 0
      %3159 = vmatprep.subr.bf16.mxu0 0
      %3160 = vmatpush1.bf16.msra.mxu0 0
      %3161 = vmatprep.subr.bf16.mxu0 0
      %3162 = vmatpush1.bf16.msra.mxu0 0
      %3163 = vmatprep.subr.bf16.mxu0 0
      %3164 = vmatpush1.bf16.msra.mxu0 0
      %3165 = vmatprep.mubr.bf16.mxu0 0
      %3166 = vmatmul.mubr.bf16.gmra.mrb[0].mxu0 %v3044
      %v3167 = vpop.f32.mrb[0].mxu0
      %v3168 = vadd.f32 0.0, %v3167
      %v3169 = vpop.f32.mrb[0].mxu0
      %v3170 = vpop.f32.mrb[0].mxu0
      %v3171 = vadd.f32 0.0, %v3170
      %v3172 = vpop.f32.mrb[0].mxu0
      %3173 = vmatprep.mubr.bf16.mxu0 0
      %3174 = vmatmul.mubr.bf16.gmra.mrb[0].mxu0 %v3045
      %v3175 = vpop.f32.mrb[0].mxu0
      %v3176 = vadd.f32 0.0, %v3175
      %v3177 = vpop.f32.mrb[0].mxu0
      %v3178 = vpop.f32.mrb[0].mxu0
      %v3179 = vadd.f32 0.0, %v3178
      %v3180 = vpop.f32.mrb[0].mxu0
      %3181 = vmatprep.mubr.bf16.mxu0 0
      %3182 = vmatmul.mubr.bf16.gmra.mrb[0].mxu0 %v3046
      %v3183 = vpop.f32.mrb[0].mxu0
      %v3184 = vadd.f32 0.0, %v3183
      %v3185 = vpop.f32.mrb[0].mxu0
      %v3186 = vpop.f32.mrb[0].mxu0
      %v3187 = vadd.f32 0.0, %v3186
      %v3188 = vpop.f32.mrb[0].mxu0
      %3189 = vmatprep.mubr.bf16.mxu0 0
      %3190 = vmatmul.mubr.bf16.gmra.mrb[0].mxu0 %v3047
      %v3191 = vpop.f32.mrb[0].mxu0
      %v3192 = vadd.f32 0.0, %v3191
      %v3193 = vpop.f32.mrb[0].mxu0
      %v3194 = vpop.f32.mrb[0].mxu0
      %v3195 = vadd.f32 0.0, %v3194
      %v3196 = vpop.f32.mrb[0].mxu0
      %3197 = vmatprep.mubr.bf16.mxu0 0
      %3198 = vmatmul.mubr.bf16.gmra.mrb[0].mxu0 %v3048
      %v3199 = vpop.f32.mrb[0].mxu0
      %v3200 = vadd.f32 0.0, %v3199
      %v3201 = vpop.f32.mrb[0].mxu0
      %v3202 = vpop.f32.mrb[0].mxu0
      %v3203 = vadd.f32 0.0, %v3202
      %v3204 = vpop.f32.mrb[0].mxu0
      %3205 = vmatprep.mubr.bf16.mxu0 0
      %3206 = vmatmul.mubr.bf16.gmra.mrb[0].mxu0 %v3049
      %v3207 = vpop.f32.mrb[0].mxu0
      %v3208 = vadd.f32 0.0, %v3207
      %v3209 = vpop.f32.mrb[0].mxu0
      %v3210 = vpop.f32.mrb[0].mxu0
      %v3211 = vadd.f32 0.0, %v3210
      %v3212 = vpop.f32.mrb[0].mxu0
      %3213 = vmatprep.mubr.bf16.mxu0 0
      %3214 = vmatmul.mubr.bf16.gmra.mrb[0].mxu0 %v3050
      %v3215 = vpop.f32.mrb[0].mxu0
      %v3216 = vadd.f32 0.0, %v3215
      %v3217 = vpop.f32.mrb[0].mxu0
      %v3218 = vpop.f32.mrb[0].mxu0
      %v3219 = vadd.f32 0.0, %v3218
      %v3220 = vpop.f32.mrb[0].mxu0
      %3221 = vmatprep.mubr.bf16.mxu0 0
      %3222 = vmatmul.mubr.bf16.gmra.mrb[0].mxu0 %v3051
      %v3223 = vpop.f32.mrb[0].mxu0
      %v3224 = vadd.f32 0.0, %v3223
      %v3225 = vpop.f32.mrb[0].mxu0
      %v3226 = vpop.f32.mrb[0].mxu0
      %v3227 = vadd.f32 0.0, %v3226
      %v3228 = vpop.f32.mrb[0].mxu0
      %3229 = vmatprep.mubr.bf16.mxu0 0
      %3230 = vmatmul.mubr.bf16.gmra.mrb[0].mxu0 %v3052
      %v3231 = vpop.f32.mrb[0].mxu0
      %v3232 = vadd.f32 0.0, %v3231
      %v3233 = vpop.f32.mrb[0].mxu0
      %v3234 = vpop.f32.mrb[0].mxu0
      %v3235 = vadd.f32 0.0, %v3234
      %v3236 = vpop.f32.mrb[0].mxu0
      %3237 = vmatprep.mubr.bf16.mxu0 0
      %3238 = vmatmul.mubr.bf16.gmra.mrb[0].mxu0 %v3053
      %v3239 = vpop.f32.mrb[0].mxu0
      %v3240 = vadd.f32 0.0, %v3239
      %v3241 = vpop.f32.mrb[0].mxu0
      %v3242 = vpop.f32.mrb[0].mxu0
      %v3243 = vadd.f32 0.0, %v3242
      %v3244 = vpop.f32.mrb[0].mxu0
      %3245 = vmatprep.mubr.bf16.mxu0 0
      %3246 = vmatmul.mubr.bf16.gmra.mrb[0].mxu0 %v3054
      %v3247 = vpop.f32.mrb[0].mxu0
      %v3248 = vadd.f32 0.0, %v3247
      %v3249 = vpop.f32.mrb[0].mxu0
      %v3250 = vpop.f32.mrb[0].mxu0
      %v3251 = vadd.f32 0.0, %v3250
      %v3252 = vpop.f32.mrb[0].mxu0
      %3253 = vmatprep.mubr.bf16.mxu0 0
      %3254 = vmatmul.mubr.bf16.gmra.mrb[0].mxu0 %v3055
      %v3255 = vpop.f32.mrb[0].mxu0
      %v3256 = vadd.f32 0.0, %v3255
      %v3257 = vpop.f32.mrb[0].mxu0
      %v3258 = vpop.f32.mrb[0].mxu0
      %v3259 = vadd.f32 0.0, %v3258
      %v3260 = vpop.f32.mrb[0].mxu0
      %3261 = vmatprep.mubr.bf16.mxu0 0
      %3262 = vmatmul.mubr.bf16.gmra.mrb[0].mxu0 %v3056
      %v3263 = vpop.f32.mrb[0].mxu0
      %v3264 = vadd.f32 0.0, %v3263
      %v3265 = vpop.f32.mrb[0].mxu0
      %v3266 = vpop.f32.mrb[0].mxu0
      %v3267 = vadd.f32 0.0, %v3266
      %v3268 = vpop.f32.mrb[0].mxu0
      %3269 = vmatprep.mubr.bf16.mxu0 0
      %3270 = vmatmul.mubr.bf16.gmra.mrb[0].mxu0 %v3057
      %v3271 = vpop.f32.mrb[0].mxu0
      %v3272 = vadd.f32 0.0, %v3271
      %v3273 = vpop.f32.mrb[0].mxu0
      %v3274 = vpop.f32.mrb[0].mxu0
      %v3275 = vadd.f32 0.0, %v3274
      %v3276 = vpop.f32.mrb[0].mxu0
      %3277 = vmatprep.mubr.bf16.mxu0 0
      %3278 = vmatmul.mubr.bf16.gmra.mrb[0].mxu0 %v3058
      %v3279 = vpop.f32.mrb[0].mxu0
      %v3280 = vadd.f32 0.0, %v3279
      %v3281 = vpop.f32.mrb[0].mxu0
      %v3282 = vpop.f32.mrb[0].mxu0
      %v3283 = vadd.f32 0.0, %v3282
      %v3284 = vpop.f32.mrb[0].mxu0
      %3285 = vmatprep.mubr.bf16.mxu0 0
      %3286 = vmatmul.mubr.bf16.gmra.mrb[0].mxu0 %v3059
      %v3287 = vpop.f32.mrb[0].mxu0
      %v3288 = vadd.f32 0.0, %v3287
      %v3289 = vpop.f32.mrb[0].mxu0
      %v3290 = vpop.f32.mrb[0].mxu0
      %v3291 = vadd.f32 0.0, %v3290
      %v3292 = vpop.f32.mrb[0].mxu0
      %3293 = vmatprep.mubr.bf16.mxu0 0
      %3294 = vmatmul.mubr.bf16.gmra.mrb[0].mxu0 %v3060
      %v3295 = vpop.f32.mrb[0].mxu0
      %v3296 = vadd.f32 0.0, %v3295
      %v3297 = vpop.f32.mrb[0].mxu0
      %v3298 = vpop.f32.mrb[0].mxu0
      %v3299 = vadd.f32 0.0, %v3298
      %v3300 = vpop.f32.mrb[0].mxu0
      %3301 = vmatprep.mubr.bf16.mxu0 0
      %3302 = vmatmul.mubr.bf16.gmra.mrb[0].mxu0 %v3061
      %v3303 = vpop.f32.mrb[0].mxu0
      %v3304 = vadd.f32 0.0, %v3303
      %v3305 = vpop.f32.mrb[0].mxu0
      %v3306 = vpop.f32.mrb[0].mxu0
      %v3307 = vadd.f32 0.0, %v3306
      %v3308 = vpop.f32.mrb[0].mxu0
      %3309 = vmatprep.mubr.bf16.mxu0 0
      %3310 = vmatmul.mubr.bf16.gmra.mrb[0].mxu0 %v3062
      %v3311 = vpop.f32.mrb[0].mxu0
      %v3312 = vadd.f32 0.0, %v3311
      %v3313 = vpop.f32.mrb[0].mxu0
      %v3314 = vpop.f32.mrb[0].mxu0
      %v3315 = vadd.f32 0.0, %v3314
      %v3316 = vpop.f32.mrb[0].mxu0
      %3317 = vmatprep.mubr.bf16.mxu0 0
      %3318 = vmatmul.mubr.bf16.gmra.mrb[0].mxu0 %v3063
      %v3319 = vpop.f32.mrb[0].mxu0
      %v3320 = vadd.f32 0.0, %v3319
      %v3321 = vpop.f32.mrb[0].mxu0
      %v3322 = vpop.f32.mrb[0].mxu0
      %v3323 = vadd.f32 0.0, %v3322
      %v3324 = vpop.f32.mrb[0].mxu0
      %3325 = vmatprep.mubr.bf16.mxu0 0
      %3326 = vmatmul.mubr.bf16.gmra.mrb[0].mxu0 %v3064
      %v3327 = vpop.f32.mrb[0].mxu0
      %v3328 = vadd.f32 0.0, %v3327
      %v3329 = vpop.f32.mrb[0].mxu0
      %v3330 = vpop.f32.mrb[0].mxu0
      %v3331 = vadd.f32 0.0, %v3330
      %v3332 = vpop.f32.mrb[0].mxu0
      %3333 = vmatprep.mubr.bf16.mxu0 0
      %3334 = vmatmul.mubr.bf16.gmra.mrb[0].mxu0 %v3065
      %v3335 = vpop.f32.mrb[0].mxu0
      %v3336 = vadd.f32 0.0, %v3335
      %v3337 = vpop.f32.mrb[0].mxu0
      %v3338 = vpop.f32.mrb[0].mxu0
      %v3339 = vadd.f32 0.0, %v3338
      %v3340 = vpop.f32.mrb[0].mxu0
      %3341 = vmatprep.mubr.bf16.mxu0 0
      %3342 = vmatmul.mubr.bf16.gmra.mrb[0].mxu0 %v3066
      %v3343 = vpop.f32.mrb[0].mxu0
      %v3344 = vadd.f32 0.0, %v3343
      %v3345 = vpop.f32.mrb[0].mxu0
      %v3346 = vpop.f32.mrb[0].mxu0
      %v3347 = vadd.f32 0.0, %v3346
      %v3348 = vpop.f32.mrb[0].mxu0
      %3349 = vmatprep.mubr.bf16.mxu0 0
      %3350 = vmatmul.mubr.bf16.gmra.mrb[0].mxu0 %v3067
      %v3351 = vpop.f32.mrb[0].mxu0
      %v3352 = vadd.f32 0.0, %v3351
      %v3353 = vpop.f32.mrb[0].mxu0
      %v3354 = vpop.f32.mrb[0].mxu0
      %v3355 = vadd.f32 0.0, %v3354
      %v3356 = vpop.f32.mrb[0].mxu0
      %3357 = vdwg.mxu0
      %v3358 = vadd.f32 %v2948, %v3168
      %v3359 = vadd.f32 %v2949, %v3171
      %v3360 = vadd.f32 %v2950, %v3176
      %v3361 = vadd.f32 %v2951, %v3179
      %v3362 = vadd.f32 %v2952, %v3184
      %v3363 = vadd.f32 %v2953, %v3187
      %v3364 = vadd.f32 %v2954, %v3192
      %v3365 = vadd.f32 %v2955, %v3195
      %v3366 = vadd.f32 %v2956, %v3200
      %v3367 = vadd.f32 %v2957, %v3203
      %v3368 = vadd.f32 %v2958, %v3208
      %v3369 = vadd.f32 %v2959, %v3211
      %v3370 = vadd.f32 %v2960, %v3216
      %v3371 = vadd.f32 %v2961, %v3219
      %v3372 = vadd.f32 %v2962, %v3224
      %v3373 = vadd.f32 %v2963, %v3227
      %v3374 = vadd.f32 %v2964, %v3232
      %v3375 = vadd.f32 %v2965, %v3235
      %v3376 = vadd.f32 %v2966, %v3240
      %v3377 = vadd.f32 %v2967, %v3243
      %v3378 = vadd.f32 %v2968, %v3248
      %v3379 = vadd.f32 %v2969, %v3251
      %v3380 = vadd.f32 %v2970, %v3256
      %v3381 = vadd.f32 %v2971, %v3259
      %v3382 = vadd.f32 %v2972, %v3264
      %v3383 = vadd.f32 %v2973, %v3267
      %v3384 = vadd.f32 %v2974, %v3272
      %v3385 = vadd.f32 %v2975, %v3275
      %v3386 = vadd.f32 %v2976, %v3280
      %v3387 = vadd.f32 %v2977, %v3283
      %v3388 = vadd.f32 %v2978, %v3288
      %v3389 = vadd.f32 %v2979, %v3291
      %v3390 = vadd.f32 %v2980, %v3296
      %v3391 = vadd.f32 %v2981, %v3299
      %v3392 = vadd.f32 %v2982, %v3304
      %v3393 = vadd.f32 %v2983, %v3307
      %v3394 = vadd.f32 %v2984, %v3312
      %v3395 = vadd.f32 %v2985, %v3315
      %v3396 = vadd.f32 %v2986, %v3320
      %v3397 = vadd.f32 %v2987, %v3323
      %v3398 = vadd.f32 %v2988, %v3328
      %v3399 = vadd.f32 %v2989, %v3331
      %v3400 = vadd.f32 %v2990, %v3336
      %v3401 = vadd.f32 %v2991, %v3339
      %v3402 = vadd.f32 %v2992, %v3344
      %v3403 = vadd.f32 %v2993, %v3347
      %v3404 = vadd.f32 %v2994, %v3352
      %v3405 = vadd.f32 %v2995, %v3355
      %v3406 = vld [vmem:[%s206 + $0x32] sm:$0xff]
      %v3407 = vld [vmem:[%s206 + $0x3a] sm:$0xff]
      %v3408 = vld [vmem:[%s206 + $0x42] sm:$0xff]
      %v3409 = vld [vmem:[%s206 + $0x4a] sm:$0xff]
      %v3410 = vld [vmem:[%s206 + $0x52] sm:$0xff]
      %v3411 = vld [vmem:[%s206 + $0x5a] sm:$0xff]
      %v3412 = vld [vmem:[%s206 + $0x62] sm:$0xff]
      %v3413 = vld [vmem:[%s206 + $0x6a] sm:$0xff]
      %v3414 = vld [vmem:[%s206 + $0x72] sm:$0xff]
      %v3415 = vld [vmem:[%s206 + $0x7a] sm:$0xff]
      %v3416 = vld [vmem:[%s206 + $0x82] sm:$0xff]
      %v3417 = vld [vmem:[%s206 + $0x8a] sm:$0xff]
      %v3418 = vld [vmem:[%s206 + $0x92] sm:$0xff]
      %v3419 = vld [vmem:[%s206 + $0x9a] sm:$0xff]
      %v3420 = vld [vmem:[%s206 + $0xa2] sm:$0xff]
      %v3421 = vld [vmem:[%s206 + $0xaa] sm:$0xff]
      %v3422 = vld [vmem:[%s206 + $0xb2] sm:$0xff]
      %v3423 = vld [vmem:[%s206 + $0xba] sm:$0xff]
      %v3424 = vld [vmem:[%s206 + $0xc2] sm:$0xff]
      %v3425 = vld [vmem:[%s206 + $0xca] sm:$0xff]
      %v3426 = vld [vmem:[%s206 + $0xd2] sm:$0xff]
      %v3427 = vld [vmem:[%s206 + $0xda] sm:$0xff]
      %v3428 = vld [vmem:[%s206 + $0xe2] sm:$0xff]
      %v3429 = vld [vmem:[%s206 + $0xea] sm:$0xff]
      %v3430 = vld [vmem:[%s206 + $0xf2] sm:$0xff]
      %v3431 = vld [vmem:[%s206 + $0xfa] sm:$0xff]
      %v3432 = vld [vmem:[%s206 + $0x102] sm:$0xff]
      %v3433 = vld [vmem:[%s206 + $0x10a] sm:$0xff]
      %v3434 = vld [vmem:[%s206 + $0x112] sm:$0xff]
      %v3435 = vld [vmem:[%s206 + $0x11a] sm:$0xff]
      %v3436 = vld [vmem:[%s206 + $0x122] sm:$0xff]
      %v3437 = vld [vmem:[%s206 + $0x12a] sm:$0xff]
      %v3438 = vld [vmem:[%s206 + $0x132] sm:$0xff]
      %v3439 = vld [vmem:[%s206 + $0x13a] sm:$0xff]
      %v3440 = vld [vmem:[%s206 + $0x142] sm:$0xff]
      %v3441 = vld [vmem:[%s206 + $0x14a] sm:$0xff]
      %v3442 = vld [vmem:[%s206 + $0x152] sm:$0xff]
      %v3443 = vld [vmem:[%s206 + $0x15a] sm:$0xff]
      %v3444 = vld [vmem:[%s206 + $0x162] sm:$0xff]
      %v3445 = vld [vmem:[%s206 + $0x16a] sm:$0xff]
      %v3446 = vld [vmem:[%s206 + $0x172] sm:$0xff]
      %v3447 = vld [vmem:[%s206 + $0x17a] sm:$0xff]
      %v3448 = vld [vmem:[%s206 + $0x182] sm:$0xff]
      %v3449 = vld [vmem:[%s206 + $0x18a] sm:$0xff]
      %v3450 = vld [vmem:[%s206 + $0x192] sm:$0xff]
      %v3451 = vld [vmem:[%s206 + $0x19a] sm:$0xff]
      %v3452 = vld [vmem:[%s206 + $0x1a2] sm:$0xff]
      %v3453 = vld [vmem:[%s206 + $0x1aa] sm:$0xff]
      %v3454 = vpack.c.bf16 %v3407, %v3406
      %v3455 = vpack.c.bf16 %v3409, %v3408
      %v3456 = vpack.c.bf16 %v3411, %v3410
      %v3457 = vpack.c.bf16 %v3413, %v3412
      %v3458 = vpack.c.bf16 %v3415, %v3414
      %v3459 = vpack.c.bf16 %v3417, %v3416
      %v3460 = vpack.c.bf16 %v3419, %v3418
      %v3461 = vpack.c.bf16 %v3421, %v3420
      %v3462 = vpack.c.bf16 %v3423, %v3422
      %v3463 = vpack.c.bf16 %v3425, %v3424
      %v3464 = vpack.c.bf16 %v3427, %v3426
      %v3465 = vpack.c.bf16 %v3429, %v3428
      %v3466 = vpack.c.bf16 %v3431, %v3430
      %v3467 = vpack.c.bf16 %v3433, %v3432
      %v3468 = vpack.c.bf16 %v3435, %v3434
      %v3469 = vpack.c.bf16 %v3437, %v3436
      %v3470 = vpack.c.bf16 %v3439, %v3438
      %v3471 = vpack.c.bf16 %v3441, %v3440
      %v3472 = vpack.c.bf16 %v3443, %v3442
      %v3473 = vpack.c.bf16 %v3445, %v3444
      %v3474 = vpack.c.bf16 %v3447, %v3446
      %v3475 = vpack.c.bf16 %v3449, %v3448
      %v3476 = vpack.c.bf16 %v3451, %v3450
      %v3477 = vpack.c.bf16 %v3453, %v3452
      %s3478 = scalar_lea.vmem %s210, 512
      %v3479 = vld [vmem:[%s3478] sm:$0xf]
      %v3480 = vld [vmem:[%s3478 + $0x4] sm:$0xf]
      %v3481 = vld [vmem:[%s3478 + $0x8] sm:$0xf]
      %v3482 = vld [vmem:[%s3478 + $0xc] sm:$0xf]
      %v3483 = vld [vmem:[%s3478 + $0x10] sm:$0xf]
      %v3484 = vld [vmem:[%s3478 + $0x14] sm:$0xf]
      %v3485 = vld [vmem:[%s3478 + $0x18] sm:$0xf]
      %v3486 = vld [vmem:[%s3478 + $0x1c] sm:$0xf]
      %v3487 = vld [vmem:[%s3478 + $0x20] sm:$0xf]
      %v3488 = vld [vmem:[%s3478 + $0x24] sm:$0xf]
      %v3489 = vld [vmem:[%s3478 + $0x28] sm:$0xf]
      %v3490 = vld [vmem:[%s3478 + $0x2c] sm:$0xf]
      %v3491 = vld [vmem:[%s3478 + $0x30] sm:$0xf]
      %v3492 = vld [vmem:[%s3478 + $0x34] sm:$0xf]
      %v3493 = vld [vmem:[%s3478 + $0x38] sm:$0xf]
      %v3494 = vld [vmem:[%s3478 + $0x3c] sm:$0xf]
      %v3511 = vunpack.c.l.b16 %v3479
      %v3512 = vunpack.c.l.b16 %v3480
      %v3513 = vunpack.c.l.b16 %v3481
      %v3514 = vunpack.c.l.b16 %v3482
      %v3515 = vunpack.c.l.b16 %v3483
      %v3516 = vunpack.c.l.b16 %v3484
      %v3517 = vunpack.c.l.b16 %v3485
      %v3518 = vunpack.c.l.b16 %v3486
      %v3519 = vunpack.c.l.b16 %v3487
      %v3520 = vunpack.c.l.b16 %v3488
      %v3521 = vunpack.c.l.b16 %v3489
      %v3522 = vunpack.c.l.b16 %v3490
      %v3523 = vunpack.c.l.b16 %v3491
      %v3524 = vunpack.c.l.b16 %v3492
      %v3525 = vunpack.c.l.b16 %v3493
      %v3526 = vunpack.c.l.b16 %v3494
      %v3527 = vpack.c.b16 %v3512, %v3511
      %v3528 = vpack.c.b16 %v3514, %v3513
      %v3529 = vpack.c.b16 %v3516, %v3515
      %v3530 = vpack.c.b16 %v3518, %v3517
      %v3531 = vpack.c.b16 %v3520, %v3519
      %v3532 = vpack.c.b16 %v3522, %v3521
      %v3533 = vpack.c.b16 %v3524, %v3523
      %v3534 = vpack.c.b16 %v3526, %v3525
      %3543 = vmatprep.subr.bf16.mxu0 0
      %3544 = vmatpush1.bf16.msra.mxu0 %v3527
      %3545 = vmatprep.subr.bf16.mxu0 0
      %3546 = vmatpush1.bf16.msra.mxu0 %v3528
      %3547 = vmatprep.subr.bf16.mxu0 0
      %3548 = vmatpush1.bf16.msra.mxu0 %v3529
      %3549 = vmatprep.subr.bf16.mxu0 0
      %3550 = vmatpush1.bf16.msra.mxu0 %v3530
      %3551 = vmatprep.subr.bf16.mxu0 0
      %3552 = vmatpush1.bf16.msra.mxu0 %v3531
      %3553 = vmatprep.subr.bf16.mxu0 0
      %3554 = vmatpush1.bf16.msra.mxu0 %v3532
      %3555 = vmatprep.subr.bf16.mxu0 0
      %3556 = vmatpush1.bf16.msra.mxu0 %v3533
      %3557 = vmatprep.subr.bf16.mxu0 0
      %3558 = vmatpush1.bf16.msra.mxu0 %v3534
      %3559 = vmatprep.subr.bf16.mxu0 0
      %3560 = vmatpush1.bf16.msra.mxu0 0
      %3561 = vmatprep.subr.bf16.mxu0 0
      %3562 = vmatpush1.bf16.msra.mxu0 0
      %3563 = vmatprep.subr.bf16.mxu0 0
      %3564 = vmatpush1.bf16.msra.mxu0 0
      %3565 = vmatprep.subr.bf16.mxu0 0
      %3566 = vmatpush1.bf16.msra.mxu0 0
      %3567 = vmatprep.subr.bf16.mxu0 0
      %3568 = vmatpush1.bf16.msra.mxu0 0
      %3569 = vmatprep.subr.bf16.mxu0 0
      %3570 = vmatpush1.bf16.msra.mxu0 0
      %3571 = vmatprep.subr.bf16.mxu0 0
      %3572 = vmatpush1.bf16.msra.mxu0 0
      %3573 = vmatprep.subr.bf16.mxu0 0
      %3574 = vmatpush1.bf16.msra.mxu0 0
      %3575 = vmatprep.mubr.bf16.mxu0 0
      %3576 = vmatmul.mubr.bf16.gmra.mrb[0].mxu0 %v3454
      %v3577 = vpop.f32.mrb[0].mxu0
      %v3578 = vadd.f32 0.0, %v3577
      %v3579 = vpop.f32.mrb[0].mxu0
      %v3580 = vpop.f32.mrb[0].mxu0
      %v3581 = vadd.f32 0.0, %v3580
      %v3582 = vpop.f32.mrb[0].mxu0
      %3583 = vmatprep.mubr.bf16.mxu0 0
      %3584 = vmatmul.mubr.bf16.gmra.mrb[0].mxu0 %v3455
      %v3585 = vpop.f32.mrb[0].mxu0
      %v3586 = vadd.f32 0.0, %v3585
      %v3587 = vpop.f32.mrb[0].mxu0
      %v3588 = vpop.f32.mrb[0].mxu0
      %v3589 = vadd.f32 0.0, %v3588
      %v3590 = vpop.f32.mrb[0].mxu0
      %3591 = vmatprep.mubr.bf16.mxu0 0
      %3592 = vmatmul.mubr.bf16.gmra.mrb[0].mxu0 %v3456
      %v3593 = vpop.f32.mrb[0].mxu0
      %v3594 = vadd.f32 0.0, %v3593
      %v3595 = vpop.f32.mrb[0].mxu0
      %v3596 = vpop.f32.mrb[0].mxu0
      %v3597 = vadd.f32 0.0, %v3596
      %v3598 = vpop.f32.mrb[0].mxu0
      %3599 = vmatprep.mubr.bf16.mxu0 0
      %3600 = vmatmul.mubr.bf16.gmra.mrb[0].mxu0 %v3457
      %v3601 = vpop.f32.mrb[0].mxu0
      %v3602 = vadd.f32 0.0, %v3601
      %v3603 = vpop.f32.mrb[0].mxu0
      %v3604 = vpop.f32.mrb[0].mxu0
      %v3605 = vadd.f32 0.0, %v3604
      %v3606 = vpop.f32.mrb[0].mxu0
      %3607 = vmatprep.mubr.bf16.mxu0 0
      %3608 = vmatmul.mubr.bf16.gmra.mrb[0].mxu0 %v3458
      %v3609 = vpop.f32.mrb[0].mxu0
      %v3610 = vadd.f32 0.0, %v3609
      %v3611 = vpop.f32.mrb[0].mxu0
      %v3612 = vpop.f32.mrb[0].mxu0
      %v3613 = vadd.f32 0.0, %v3612
      %v3614 = vpop.f32.mrb[0].mxu0
      %3615 = vmatprep.mubr.bf16.mxu0 0
      %3616 = vmatmul.mubr.bf16.gmra.mrb[0].mxu0 %v3459
      %v3617 = vpop.f32.mrb[0].mxu0
      %v3618 = vadd.f32 0.0, %v3617
      %v3619 = vpop.f32.mrb[0].mxu0
      %v3620 = vpop.f32.mrb[0].mxu0
      %v3621 = vadd.f32 0.0, %v3620
      %v3622 = vpop.f32.mrb[0].mxu0
      %3623 = vmatprep.mubr.bf16.mxu0 0
      %3624 = vmatmul.mubr.bf16.gmra.mrb[0].mxu0 %v3460
      %v3625 = vpop.f32.mrb[0].mxu0
      %v3626 = vadd.f32 0.0, %v3625
      %v3627 = vpop.f32.mrb[0].mxu0
      %v3628 = vpop.f32.mrb[0].mxu0
      %v3629 = vadd.f32 0.0, %v3628
      %v3630 = vpop.f32.mrb[0].mxu0
      %3631 = vmatprep.mubr.bf16.mxu0 0
      %3632 = vmatmul.mubr.bf16.gmra.mrb[0].mxu0 %v3461
      %v3633 = vpop.f32.mrb[0].mxu0
      %v3634 = vadd.f32 0.0, %v3633
      %v3635 = vpop.f32.mrb[0].mxu0
      %v3636 = vpop.f32.mrb[0].mxu0
      %v3637 = vadd.f32 0.0, %v3636
      %v3638 = vpop.f32.mrb[0].mxu0
      %3639 = vmatprep.mubr.bf16.mxu0 0
      %3640 = vmatmul.mubr.bf16.gmra.mrb[0].mxu0 %v3462
      %v3641 = vpop.f32.mrb[0].mxu0
      %v3642 = vadd.f32 0.0, %v3641
      %v3643 = vpop.f32.mrb[0].mxu0
      %v3644 = vpop.f32.mrb[0].mxu0
      %v3645 = vadd.f32 0.0, %v3644
      %v3646 = vpop.f32.mrb[0].mxu0
      %3647 = vmatprep.mubr.bf16.mxu0 0
      %3648 = vmatmul.mubr.bf16.gmra.mrb[0].mxu0 %v3463
      %v3649 = vpop.f32.mrb[0].mxu0
      %v3650 = vadd.f32 0.0, %v3649
      %v3651 = vpop.f32.mrb[0].mxu0
      %v3652 = vpop.f32.mrb[0].mxu0
      %v3653 = vadd.f32 0.0, %v3652
      %v3654 = vpop.f32.mrb[0].mxu0
      %3655 = vmatprep.mubr.bf16.mxu0 0
      %3656 = vmatmul.mubr.bf16.gmra.mrb[0].mxu0 %v3464
      %v3657 = vpop.f32.mrb[0].mxu0
      %v3658 = vadd.f32 0.0, %v3657
      %v3659 = vpop.f32.mrb[0].mxu0
      %v3660 = vpop.f32.mrb[0].mxu0
      %v3661 = vadd.f32 0.0, %v3660
      %v3662 = vpop.f32.mrb[0].mxu0
      %3663 = vmatprep.mubr.bf16.mxu0 0
      %3664 = vmatmul.mubr.bf16.gmra.mrb[0].mxu0 %v3465
      %v3665 = vpop.f32.mrb[0].mxu0
      %v3666 = vadd.f32 0.0, %v3665
      %v3667 = vpop.f32.mrb[0].mxu0
      %v3668 = vpop.f32.mrb[0].mxu0
      %v3669 = vadd.f32 0.0, %v3668
      %v3670 = vpop.f32.mrb[0].mxu0
      %3671 = vmatprep.mubr.bf16.mxu0 0
      %3672 = vmatmul.mubr.bf16.gmra.mrb[0].mxu0 %v3466
      %v3673 = vpop.f32.mrb[0].mxu0
      %v3674 = vadd.f32 0.0, %v3673
      %v3675 = vpop.f32.mrb[0].mxu0
      %v3676 = vpop.f32.mrb[0].mxu0
      %v3677 = vadd.f32 0.0, %v3676
      %v3678 = vpop.f32.mrb[0].mxu0
      %3679 = vmatprep.mubr.bf16.mxu0 0
      %3680 = vmatmul.mubr.bf16.gmra.mrb[0].mxu0 %v3467
      %v3681 = vpop.f32.mrb[0].mxu0
      %v3682 = vadd.f32 0.0, %v3681
      %v3683 = vpop.f32.mrb[0].mxu0
      %v3684 = vpop.f32.mrb[0].mxu0
      %v3685 = vadd.f32 0.0, %v3684
      %v3686 = vpop.f32.mrb[0].mxu0
      %3687 = vmatprep.mubr.bf16.mxu0 0
      %3688 = vmatmul.mubr.bf16.gmra.mrb[0].mxu0 %v3468
      %v3689 = vpop.f32.mrb[0].mxu0
      %v3690 = vadd.f32 0.0, %v3689
      %v3691 = vpop.f32.mrb[0].mxu0
      %v3692 = vpop.f32.mrb[0].mxu0
      %v3693 = vadd.f32 0.0, %v3692
      %v3694 = vpop.f32.mrb[0].mxu0
      %3695 = vmatprep.mubr.bf16.mxu0 0
      %3696 = vmatmul.mubr.bf16.gmra.mrb[0].mxu0 %v3469
      %v3697 = vpop.f32.mrb[0].mxu0
      %v3698 = vadd.f32 0.0, %v3697
      %v3699 = vpop.f32.mrb[0].mxu0
      %v3700 = vpop.f32.mrb[0].mxu0
      %v3701 = vadd.f32 0.0, %v3700
      %v3702 = vpop.f32.mrb[0].mxu0
      %3703 = vmatprep.mubr.bf16.mxu0 0
      %3704 = vmatmul.mubr.bf16.gmra.mrb[0].mxu0 %v3470
      %v3705 = vpop.f32.mrb[0].mxu0
      %v3706 = vadd.f32 0.0, %v3705
      %v3707 = vpop.f32.mrb[0].mxu0
      %v3708 = vpop.f32.mrb[0].mxu0
      %v3709 = vadd.f32 0.0, %v3708
      %v3710 = vpop.f32.mrb[0].mxu0
      %3711 = vmatprep.mubr.bf16.mxu0 0
      %3712 = vmatmul.mubr.bf16.gmra.mrb[0].mxu0 %v3471
      %v3713 = vpop.f32.mrb[0].mxu0
      %v3714 = vadd.f32 0.0, %v3713
      %v3715 = vpop.f32.mrb[0].mxu0
      %v3716 = vpop.f32.mrb[0].mxu0
      %v3717 = vadd.f32 0.0, %v3716
      %v3718 = vpop.f32.mrb[0].mxu0
      %3719 = vmatprep.mubr.bf16.mxu0 0
      %3720 = vmatmul.mubr.bf16.gmra.mrb[0].mxu0 %v3472
      %v3721 = vpop.f32.mrb[0].mxu0
      %v3722 = vadd.f32 0.0, %v3721
      %v3723 = vpop.f32.mrb[0].mxu0
      %v3724 = vpop.f32.mrb[0].mxu0
      %v3725 = vadd.f32 0.0, %v3724
      %v3726 = vpop.f32.mrb[0].mxu0
      %3727 = vmatprep.mubr.bf16.mxu0 0
      %3728 = vmatmul.mubr.bf16.gmra.mrb[0].mxu0 %v3473
      %v3729 = vpop.f32.mrb[0].mxu0
      %v3730 = vadd.f32 0.0, %v3729
      %v3731 = vpop.f32.mrb[0].mxu0
      %v3732 = vpop.f32.mrb[0].mxu0
      %v3733 = vadd.f32 0.0, %v3732
      %v3734 = vpop.f32.mrb[0].mxu0
      %3735 = vmatprep.mubr.bf16.mxu0 0
      %3736 = vmatmul.mubr.bf16.gmra.mrb[0].mxu0 %v3474
      %v3737 = vpop.f32.mrb[0].mxu0
      %v3738 = vadd.f32 0.0, %v3737
      %v3739 = vpop.f32.mrb[0].mxu0
      %v3740 = vpop.f32.mrb[0].mxu0
      %v3741 = vadd.f32 0.0, %v3740
      %v3742 = vpop.f32.mrb[0].mxu0
      %3743 = vmatprep.mubr.bf16.mxu0 0
      %3744 = vmatmul.mubr.bf16.gmra.mrb[0].mxu0 %v3475
      %v3745 = vpop.f32.mrb[0].mxu0
      %v3746 = vadd.f32 0.0, %v3745
      %v3747 = vpop.f32.mrb[0].mxu0
      %v3748 = vpop.f32.mrb[0].mxu0
      %v3749 = vadd.f32 0.0, %v3748
      %v3750 = vpop.f32.mrb[0].mxu0
      %3751 = vmatprep.mubr.bf16.mxu0 0
      %3752 = vmatmul.mubr.bf16.gmra.mrb[0].mxu0 %v3476
      %v3753 = vpop.f32.mrb[0].mxu0
      %v3754 = vadd.f32 0.0, %v3753
      %v3755 = vpop.f32.mrb[0].mxu0
      %v3756 = vpop.f32.mrb[0].mxu0
      %v3757 = vadd.f32 0.0, %v3756
      %v3758 = vpop.f32.mrb[0].mxu0
      %3759 = vmatprep.mubr.bf16.mxu0 0
      %3760 = vmatmul.mubr.bf16.gmra.mrb[0].mxu0 %v3477
      %v3761 = vpop.f32.mrb[0].mxu0
      %v3762 = vadd.f32 0.0, %v3761
      %v3763 = vpop.f32.mrb[0].mxu0
      %v3764 = vpop.f32.mrb[0].mxu0
      %v3765 = vadd.f32 0.0, %v3764
      %v3766 = vpop.f32.mrb[0].mxu0
      %3767 = vdwg.mxu0
      %v3768 = vadd.f32 %v3358, %v3578
      %v3769 = vadd.f32 %v3359, %v3581
      %v3770 = vadd.f32 %v3360, %v3586
      %v3771 = vadd.f32 %v3361, %v3589
      %v3772 = vadd.f32 %v3362, %v3594
      %v3773 = vadd.f32 %v3363, %v3597
      %v3774 = vadd.f32 %v3364, %v3602
      %v3775 = vadd.f32 %v3365, %v3605
      %v3776 = vadd.f32 %v3366, %v3610
      %v3777 = vadd.f32 %v3367, %v3613
      %v3778 = vadd.f32 %v3368, %v3618
      %v3779 = vadd.f32 %v3369, %v3621
      %v3780 = vadd.f32 %v3370, %v3626
      %v3781 = vadd.f32 %v3371, %v3629
      %v3782 = vadd.f32 %v3372, %v3634
      %v3783 = vadd.f32 %v3373, %v3637
      %v3784 = vadd.f32 %v3374, %v3642
      %v3785 = vadd.f32 %v3375, %v3645
      %v3786 = vadd.f32 %v3376, %v3650
      %v3787 = vadd.f32 %v3377, %v3653
      %v3788 = vadd.f32 %v3378, %v3658
      %v3789 = vadd.f32 %v3379, %v3661
      %v3790 = vadd.f32 %v3380, %v3666
      %v3791 = vadd.f32 %v3381, %v3669
      %v3792 = vadd.f32 %v3382, %v3674
      %v3793 = vadd.f32 %v3383, %v3677
      %v3794 = vadd.f32 %v3384, %v3682
      %v3795 = vadd.f32 %v3385, %v3685
      %v3796 = vadd.f32 %v3386, %v3690
      %v3797 = vadd.f32 %v3387, %v3693
      %v3798 = vadd.f32 %v3388, %v3698
      %v3799 = vadd.f32 %v3389, %v3701
      %v3800 = vadd.f32 %v3390, %v3706
      %v3801 = vadd.f32 %v3391, %v3709
      %v3802 = vadd.f32 %v3392, %v3714
      %v3803 = vadd.f32 %v3393, %v3717
      %v3804 = vadd.f32 %v3394, %v3722
      %v3805 = vadd.f32 %v3395, %v3725
      %v3806 = vadd.f32 %v3396, %v3730
      %v3807 = vadd.f32 %v3397, %v3733
      %v3808 = vadd.f32 %v3398, %v3738
      %v3809 = vadd.f32 %v3399, %v3741
      %v3810 = vadd.f32 %v3400, %v3746
      %v3811 = vadd.f32 %v3401, %v3749
      %v3812 = vadd.f32 %v3402, %v3754
      %v3813 = vadd.f32 %v3403, %v3757
      %v3814 = vadd.f32 %v3404, %v3762
      %v3815 = vadd.f32 %v3405, %v3765
      %v3816 = vld [vmem:[%s213] sm:$0x1]
      %v3818 = vlaneseq
      %v3819 = vshrl.u32 %v3818, 7
      %v3820 = vsub.s32 0, %v3819
      %v3821 = vrot.slane %v3816, %v3820
      %v3823 = vadd.f32 %v3768, %v3821
      %v3824 = vadd.f32 %v3769, %v3821
      %v3825 = vadd.f32 %v3770, %v3821
      %v3826 = vadd.f32 %v3771, %v3821
      %v3827 = vadd.f32 %v3772, %v3821
      %v3828 = vadd.f32 %v3773, %v3821
      %v3829 = vadd.f32 %v3774, %v3821
      %v3830 = vadd.f32 %v3775, %v3821
      %v3831 = vadd.f32 %v3776, %v3821
      %v3832 = vadd.f32 %v3777, %v3821
      %v3833 = vadd.f32 %v3778, %v3821
      %v3834 = vadd.f32 %v3779, %v3821
      %v3835 = vadd.f32 %v3780, %v3821
      %v3836 = vadd.f32 %v3781, %v3821
      %v3837 = vadd.f32 %v3782, %v3821
      %v3838 = vadd.f32 %v3783, %v3821
      %v3839 = vadd.f32 %v3784, %v3821
      %v3840 = vadd.f32 %v3785, %v3821
      %v3841 = vadd.f32 %v3786, %v3821
      %v3842 = vadd.f32 %v3787, %v3821
      %v3843 = vadd.f32 %v3788, %v3821
      %v3844 = vadd.f32 %v3789, %v3821
      %v3845 = vadd.f32 %v3790, %v3821
      %v3846 = vadd.f32 %v3791, %v3821
      %v3847 = vadd.f32 %v3792, %v3821
      %v3848 = vadd.f32 %v3793, %v3821
      %v3849 = vadd.f32 %v3794, %v3821
      %v3850 = vadd.f32 %v3795, %v3821
      %v3851 = vadd.f32 %v3796, %v3821
      %v3852 = vadd.f32 %v3797, %v3821
      %v3853 = vadd.f32 %v3798, %v3821
      %v3854 = vadd.f32 %v3799, %v3821
      %v3855 = vadd.f32 %v3800, %v3821
      %v3856 = vadd.f32 %v3801, %v3821
      %v3857 = vadd.f32 %v3802, %v3821
      %v3858 = vadd.f32 %v3803, %v3821
      %v3859 = vadd.f32 %v3804, %v3821
      %v3860 = vadd.f32 %v3805, %v3821
      %v3861 = vadd.f32 %v3806, %v3821
      %v3862 = vadd.f32 %v3807, %v3821
      %v3863 = vadd.f32 %v3808, %v3821
      %v3864 = vadd.f32 %v3809, %v3821
      %v3865 = vadd.f32 %v3810, %v3821
      %v3866 = vadd.f32 %v3811, %v3821
      %v3867 = vadd.f32 %v3812, %v3821
      %v3868 = vadd.f32 %v3813, %v3821
      %v3869 = vadd.f32 %v3814, %v3821
      %v3870 = vadd.f32 %v3815, %v3821
      %v3871 = vmax.f32 %v3823, 0.0
      %v3872 = vmax.f32 %v3824, 0.0
      %v3873 = vmax.f32 %v3825, 0.0
      %v3874 = vmax.f32 %v3826, 0.0
      %v3875 = vmax.f32 %v3827, 0.0
      %v3876 = vmax.f32 %v3828, 0.0
      %v3877 = vmax.f32 %v3829, 0.0
      %v3878 = vmax.f32 %v3830, 0.0
      %v3879 = vmax.f32 %v3831, 0.0
      %v3880 = vmax.f32 %v3832, 0.0
      %v3881 = vmax.f32 %v3833, 0.0
      %v3882 = vmax.f32 %v3834, 0.0
      %v3883 = vmax.f32 %v3835, 0.0
      %v3884 = vmax.f32 %v3836, 0.0
      %v3885 = vmax.f32 %v3837, 0.0
      %v3886 = vmax.f32 %v3838, 0.0
      %v3887 = vmax.f32 %v3839, 0.0
      %v3888 = vmax.f32 %v3840, 0.0
      %v3889 = vmax.f32 %v3841, 0.0
      %v3890 = vmax.f32 %v3842, 0.0
      %v3891 = vmax.f32 %v3843, 0.0
      %v3892 = vmax.f32 %v3844, 0.0
      %v3893 = vmax.f32 %v3845, 0.0
      %v3894 = vmax.f32 %v3846, 0.0
      %v3895 = vmax.f32 %v3847, 0.0
      %v3896 = vmax.f32 %v3848, 0.0
      %v3897 = vmax.f32 %v3849, 0.0
      %v3898 = vmax.f32 %v3850, 0.0
      %v3899 = vmax.f32 %v3851, 0.0
      %v3900 = vmax.f32 %v3852, 0.0
      %v3901 = vmax.f32 %v3853, 0.0
      %v3902 = vmax.f32 %v3854, 0.0
      %v3903 = vmax.f32 %v3855, 0.0
      %v3904 = vmax.f32 %v3856, 0.0
      %v3905 = vmax.f32 %v3857, 0.0
      %v3906 = vmax.f32 %v3858, 0.0
      %v3907 = vmax.f32 %v3859, 0.0
      %v3908 = vmax.f32 %v3860, 0.0
      %v3909 = vmax.f32 %v3861, 0.0
      %v3910 = vmax.f32 %v3862, 0.0
      %v3911 = vmax.f32 %v3863, 0.0
      %v3912 = vmax.f32 %v3864, 0.0
      %v3913 = vmax.f32 %v3865, 0.0
      %v3914 = vmax.f32 %v3866, 0.0
      %v3915 = vmax.f32 %v3867, 0.0
      %v3916 = vmax.f32 %v3868, 0.0
      %v3917 = vmax.f32 %v3869, 0.0
      %v3918 = vmax.f32 %v3870, 0.0
      %3919 = vst [vmem:[%s221] sm:$0xff] %v3871
      %3920 = vst [vmem:[%s221 + $0x8] sm:$0xff] %v3872
      %3921 = vst [vmem:[%s221 + $0x10] sm:$0xff] %v3873
      %3922 = vst [vmem:[%s221 + $0x18] sm:$0xff] %v3874
      %3923 = vst [vmem:[%s221 + $0x20] sm:$0xff] %v3875
      %3924 = vst [vmem:[%s221 + $0x28] sm:$0xff] %v3876
      %3925 = vst [vmem:[%s221 + $0x30] sm:$0xff] %v3877
      %3926 = vst [vmem:[%s221 + $0x38] sm:$0xff] %v3878
      %3927 = vst [vmem:[%s221 + $0x40] sm:$0xff] %v3879
      %3928 = vst [vmem:[%s221 + $0x48] sm:$0xff] %v3880
      %3929 = vst [vmem:[%s221 + $0x50] sm:$0xff] %v3881
      %3930 = vst [vmem:[%s221 + $0x58] sm:$0xff] %v3882
      %3931 = vst [vmem:[%s221 + $0x60] sm:$0xff] %v3883
      %3932 = vst [vmem:[%s221 + $0x68] sm:$0xff] %v3884
      %3933 = vst [vmem:[%s221 + $0x70] sm:$0xff] %v3885
      %3934 = vst [vmem:[%s221 + $0x78] sm:$0xff] %v3886
      %3935 = vst [vmem:[%s221 + $0x80] sm:$0xff] %v3887
      %3936 = vst [vmem:[%s221 + $0x88] sm:$0xff] %v3888
      %3937 = vst [vmem:[%s221 + $0x90] sm:$0xff] %v3889
      %3938 = vst [vmem:[%s221 + $0x98] sm:$0xff] %v3890
      %3939 = vst [vmem:[%s221 + $0xa0] sm:$0xff] %v3891
      %3940 = vst [vmem:[%s221 + $0xa8] sm:$0xff] %v3892
      %3941 = vst [vmem:[%s221 + $0xb0] sm:$0xff] %v3893
      %3942 = vst [vmem:[%s221 + $0xb8] sm:$0xff] %v3894
      %3943 = vst [vmem:[%s221 + $0xc0] sm:$0xff] %v3895
      %3944 = vst [vmem:[%s221 + $0xc8] sm:$0xff] %v3896
      %3945 = vst [vmem:[%s221 + $0xd0] sm:$0xff] %v3897
      %3946 = vst [vmem:[%s221 + $0xd8] sm:$0xff] %v3898
      %3947 = vst [vmem:[%s221 + $0xe0] sm:$0xff] %v3899
      %3948 = vst [vmem:[%s221 + $0xe8] sm:$0xff] %v3900
      %3949 = vst [vmem:[%s221 + $0xf0] sm:$0xff] %v3901
      %3950 = vst [vmem:[%s221 + $0xf8] sm:$0xff] %v3902
      %3951 = vst [vmem:[%s221 + $0x100] sm:$0xff] %v3903
      %3952 = vst [vmem:[%s221 + $0x108] sm:$0xff] %v3904
      %3953 = vst [vmem:[%s221 + $0x110] sm:$0xff] %v3905
      %3954 = vst [vmem:[%s221 + $0x118] sm:$0xff] %v3906
      %3955 = vst [vmem:[%s221 + $0x120] sm:$0xff] %v3907
      %3956 = vst [vmem:[%s221 + $0x128] sm:$0xff] %v3908
      %3957 = vst [vmem:[%s221 + $0x130] sm:$0xff] %v3909
      %3958 = vst [vmem:[%s221 + $0x138] sm:$0xff] %v3910
      %3959 = vst [vmem:[%s221 + $0x140] sm:$0xff] %v3911
      %3960 = vst [vmem:[%s221 + $0x148] sm:$0xff] %v3912
      %3961 = vst [vmem:[%s221 + $0x150] sm:$0xff] %v3913
      %3962 = vst [vmem:[%s221 + $0x158] sm:$0xff] %v3914
      %3963 = vst [vmem:[%s221 + $0x160] sm:$0xff] %v3915
      %3964 = vst [vmem:[%s221 + $0x168] sm:$0xff] %v3916
      %3965 = vst [vmem:[%s221 + $0x170] sm:$0xff] %v3917
      %3966 = vst [vmem:[%s221 + $0x178] sm:$0xff] %v3918
      %p3967 = scmp.lt.s32.totalorder %s18, 1
      %s3968 = scalar_select %p3967, %s18, 1
      %p3969 = scmp.lt.s32.totalorder %s19, 0
      %s3970 = scalar_select %p3969, %s19, 0
      %s3971 = smul.addr %s3968, 48
      %s3972 = sadd.s32 %s3970, %s3971
      %s3973 = smul.addr %s3972, 8
      %s3974 = scalar_lea.vmem %s3, %s3973
      // Predicated region
      $region33: #{face_recog_forward.3} parent=31 // pred_check
        %p3975 = pneg %p124
      $region34: #{face_recog_forward.3} parent=31 // pred_check_branch
        %3977 = sbr.rel (%p3975) target = $region36
      $region35: #{face_recog_forward.3} parent=31 // pred_region
        _
      $region36: #{face_recog_forward.3} parent=31 // pred_fallthru
        _
    $region32: #{face_recog_forward.3} parent=5 // pred_fallthru
      _
    %p3978 = scmp.le.s32.totalorder 2, %s9
    // Predicated region
    $region37: #{face_recog_forward.3} parent=5 // pred_check
      %p3979 = pneg %p3978
    $region38: #{face_recog_forward.3} parent=5 // pred_check_branch
      %3981 = sbr.rel (%p3979) target = $region40
    $region39: #{face_recog_forward.3} parent=5 // pred_region
      %s3982 = ssub.s32 %s9, 2
      // Predicated region
      $region41: #{face_recog_forward.3} parent=39 // pred_check
        %p3983 = pneg %p130
      $region42: #{face_recog_forward.3} parent=39 // pred_check_branch
        %3985 = sbr.rel (%p3983) target = $region44
      $region43: #{face_recog_forward.3} parent=39 // pred_region
        %p3986 = scmp.lt.s32.totalorder %s20, 1
        %s3987 = scalar_select %p3986, %s20, 1
        %p3988 = scmp.lt.s32.totalorder %s21, 0
        %s3989 = scalar_select %p3988, %s21, 0
        %s3990 = smul.addr %s3987, 48
        %s3991 = sadd.s32 %s3989, %s3990
        %s3992 = smul.addr %s3991, 8
        %s3993 = scalar_lea.vmem %s3, %s3992
      $region44: #{face_recog_forward.3} parent=39 // pred_fallthru
        _
    $region40: #{face_recog_forward.3} parent=5 // pred_fallthru
      _
  $region6: #{face_recog_forward.3} parent=0 // loop_footer
    %s13 = sadd.s32 1, %s9
  $region7: #{face_recog_forward.3} parent=0 // loop_footer_branch
    %8 = sbr.rel target = $region3
  $region8: #{face_recog_forward.3} parent=0 // loop_exit
    _

// kernel: face_recog_forward.4
$region0: #{face_recog_forward.4}
  #allocation0 [shape = 'u32[]', space=smem, size = 0x4, offset = 0x4, fixed_abs, tag = 'smem constant byte address 0x4 - core index']
  #allocation1 [shape = 'u32[144,128]{1,0:T(1,128)}', space=vmem, size = 0x12000, scoped, tag = 'internal scratch']
  %s0 = inlined_call_operand.vmem [shape: f32[2,456,128], index: 0, kind: input, shape index: {}]
  %s1 = inlined_call_operand.vmem [shape: bf16[9,128,128], index: 1, kind: input, shape index: {}]
  %s2 = inlined_call_operand.vmem [shape: f32[1,128], index: 2, kind: input, shape index: {}]
  %s3 = inlined_call_operand.vmem [shape: f32[2,1,128], index: 3, kind: output, shape index: {}]
  %s4 = sld [smem:[#allocation0]]
  $region45: #{face_recog_forward.4} parent=0
    _
  %s6 = ssub.s32 1, %s4
  %s7 = scalar_select 0, %s6, %s4
  loop: start=0, step=1, limit=4
  $region2: #{face_recog_forward.4} parent=0 // loop_pre_header
    _
  $region3: #{face_recog_forward.4} parent=0 // loop_header
    %s9 = sphi 0, %s13
    %p10 = scmp.ge.s32.totalorder %s9, 4
    %s16 = sphi 0, %s28
    %s17 = sphi 0, %s24
    %s18 = sphi 0, %s16
    %s19 = sphi 0, %s17
    %s20 = sphi 0, %s18
    %s21 = sphi 0, %s19
    %s31 = sphi 0, %s33
    %s34 = sphi 0, %s31
    %s35 = sphi 0, %s34
    %s51 = sphi 0, %s35
    %s57 = sphi 0, %s59
    %s60 = sphi 0, %s57
    %s61 = sphi 0, %s60
    %s77 = sphi 0, %s61
    %s83 = sphi 0, %s85
    %s86 = sphi 0, %s83
    %s87 = sphi 0, %s86
    %s103 = sphi 0, %s87
    %s111 = sphi 0, %s113
    %s114 = sphi 0, %s111
    %s115 = sphi 0, %s114
    %s131 = sphi 0, %s115
  $region4: #{face_recog_forward.4} parent=0 // loop_header_branch
    %12 = sbr.rel (%p10) target = $region8
  $region5: #{face_recog_forward.4} parent=0 // loop_body
    %s14 = ssub.s32 %s9, 1
    %s15 = ssub.s32 %s9, 2
    %s22 = sadd.s32 1, %s17
    %p23 = scmp.ge.s32.totalorder %s22, 1
    %s24 = scalar_select %p23, 0, %s22
    %s25 = sadd.s32 1, %s16
    %s26 = scalar_select %p23, %s25, %s16
    %p27 = scmp.ge.s32.totalorder %s26, 2
    %s28 = scalar_select %p27, 0, %s26
    %s29 = ssub.s32 %s16, %s28
    %p30 = scmp.eq.s32.totalorder %s29, 0
    %s32 = sadd.s32 %s31, 1
    %s33 = scalar_select %p30, %s31, %s32
    %p36 = pneg %p30
    %p37 = scmp.eq.s32.totalorder %s9, 1
    %p38 = por %p36, %p37
    %p39 = scmp.ne.s32.totalorder %s31, %s34
    %p40 = scmp.eq.s32.totalorder %s9, 0
    %p41 = por %p39, %p40
    %p42 = scmp.ne.s32.totalorder %s31, %s34
    %p43 = scmp.eq.s32.totalorder %s14, 1
    %p44 = por %p42, %p43
    %p45 = scmp.ne.s32.totalorder %s34, %s35
    %p46 = scmp.eq.s32.totalorder %s14, 0
    %p47 = por %p45, %p46
    %p48 = scmp.ne.s32.totalorder %s34, %s35
    %p49 = scmp.eq.s32.totalorder %s15, 1
    %p50 = por %p48, %p49
    %p52 = scmp.ne.s32.totalorder %s35, %s51
    %p53 = scmp.eq.s32.totalorder %s15, 0
    %p54 = por %p52, %p53
    %s55 = ssub.s32 %s17, %s24
    %p56 = scmp.eq.s32.totalorder %s55, 0
    %s58 = sadd.s32 %s57, 1
    %s59 = scalar_select %p56, %s57, %s58
    %p62 = pneg %p56
    %p63 = scmp.eq.s32.totalorder %s9, 1
    %p64 = por %p62, %p63
    %p65 = scmp.ne.s32.totalorder %s57, %s60
    %p66 = scmp.eq.s32.totalorder %s9, 0
    %p67 = por %p65, %p66
    %p68 = scmp.ne.s32.totalorder %s57, %s60
    %p69 = scmp.eq.s32.totalorder %s14, 1
    %p70 = por %p68, %p69
    %p71 = scmp.ne.s32.totalorder %s60, %s61
    %p72 = scmp.eq.s32.totalorder %s14, 0
    %p73 = por %p71, %p72
    %p74 = scmp.ne.s32.totalorder %s60, %s61
    %p75 = scmp.eq.s32.totalorder %s15, 1
    %p76 = por %p74, %p75
    %p78 = scmp.ne.s32.totalorder %s61, %s77
    %p79 = scmp.eq.s32.totalorder %s15, 0
    %p80 = por %p78, %p79
    %s81 = ssub.s32 %s17, %s24
    %p82 = scmp.eq.s32.totalorder %s81, 0
    %s84 = sadd.s32 %s83, 1
    %s85 = scalar_select %p82, %s83, %s84
    %p88 = pneg %p82
    %p89 = scmp.eq.s32.totalorder %s9, 1
    %p90 = por %p88, %p89
    %p91 = scmp.ne.s32.totalorder %s83, %s86
    %p92 = scmp.eq.s32.totalorder %s9, 0
    %p93 = por %p91, %p92
    %p94 = scmp.ne.s32.totalorder %s83, %s86
    %p95 = scmp.eq.s32.totalorder %s14, 1
    %p96 = por %p94, %p95
    %p97 = scmp.ne.s32.totalorder %s86, %s87
    %p98 = scmp.eq.s32.totalorder %s14, 0
    %p99 = por %p97, %p98
    %p100 = scmp.ne.s32.totalorder %s86, %s87
    %p101 = scmp.eq.s32.totalorder %s15, 1
    %p102 = por %p100, %p101
    %p104 = scmp.ne.s32.totalorder %s87, %s103
    %p105 = scmp.eq.s32.totalorder %s15, 0
    %p106 = por %p104, %p105
    %s107 = ssub.s32 %s16, %s28
    %s108 = ssub.s32 %s17, %s24
    %s109 = sor.u32 %s107, %s108
    %p110 = scmp.eq.s32.totalorder %s109, 0
    %s112 = sadd.s32 %s111, 1
    %s113 = scalar_select %p110, %s111, %s112
    %p116 = pneg %p110
    %p117 = scmp.eq.s32.totalorder %s9, 1
    %p118 = por %p116, %p117
    %p119 = scmp.ne.s32.totalorder %s111, %s114
    %p120 = scmp.eq.s32.totalorder %s9, 0
    %p121 = por %p119, %p120
    %p122 = scmp.ne.s32.totalorder %s111, %s114
    %p123 = scmp.eq.s32.totalorder %s14, 1
    %p124 = por %p122, %p123
    %p125 = scmp.ne.s32.totalorder %s114, %s115
    %p126 = scmp.eq.s32.totalorder %s14, 0
    %p127 = por %p125, %p126
    %p128 = scmp.ne.s32.totalorder %s114, %s115
    %p129 = scmp.eq.s32.totalorder %s15, 1
    %p130 = por %p128, %p129
    %p132 = scmp.ne.s32.totalorder %s115, %s131
    %p133 = scmp.eq.s32.totalorder %s15, 0
    %p134 = por %p132, %p133
    %p135 = scmp.le.s32.totalorder 1, %s9
    %p136 = scmp.lt.s32.totalorder %s9, 3
    %p137 = pnand %p135, %p136
    %p138 = pneg %p137
    // Predicated region
    $region9: #{face_recog_forward.4} parent=5 // pred_check
      _
    $region10: #{face_recog_forward.4} parent=5 // pred_check_branch
      %140 = sbr.rel (%p137) target = $region12
    $region11: #{face_recog_forward.4} parent=5 // pred_region
      %s141 = ssub.s32 %s9, 1
      // Predicated region
      $region13: #{face_recog_forward.4} parent=11 // pred_check
        %p142 = pneg %p73
      $region14: #{face_recog_forward.4} parent=11 // pred_check_branch
        %144 = sbr.rel (%p142) target = $region16
      $region15: #{face_recog_forward.4} parent=11 // pred_region
        %p145 = scmp.lt.s32.totalorder %s19, 0
        %s146 = scalar_select %p145, %s19, 0
        %s147 = smul.addr %s146, 4
        %s148 = scalar_lea.vmem %s1, %s147
      $region16: #{face_recog_forward.4} parent=11 // pred_fallthru
        _
      // Predicated region
      $region17: #{face_recog_forward.4} parent=11 // pred_check
        %p149 = pneg %p99
      $region18: #{face_recog_forward.4} parent=11 // pred_check_branch
        %151 = sbr.rel (%p149) target = $region20
      $region19: #{face_recog_forward.4} parent=11 // pred_region
        %p152 = scmp.lt.s32.totalorder %s19, 0
        %s153 = scalar_select %p152, %s19, 0
        %s154 = scalar_lea.vmem %s2, %s153
      $region20: #{face_recog_forward.4} parent=11 // pred_fallthru
        _
    $region12: #{face_recog_forward.4} parent=5 // pred_fallthru
      _
    %p155 = scmp.lt.s32.totalorder %s9, 2
    // Predicated region
    $region21: #{face_recog_forward.4} parent=5 // pred_check
      %p156 = pneg %p155
    $region22: #{face_recog_forward.4} parent=5 // pred_check_branch
      %158 = sbr.rel (%p156) target = $region24
    $region23: #{face_recog_forward.4} parent=5 // pred_region
      // Predicated region
      $region25: #{face_recog_forward.4} parent=23 // pred_check
        %p159 = pneg %p41
      $region26: #{face_recog_forward.4} parent=23 // pred_check_branch
        %161 = sbr.rel (%p159) target = $region28
      $region27: #{face_recog_forward.4} parent=23 // pred_region
        %p162 = scmp.lt.s32.totalorder %s16, 1
        %s163 = scalar_select %p162, %s16, 1
        %s164 = smul.addr %s163, 57
        %s165 = smul.addr %s164, 8
        %s166 = scalar_lea.vmem %s0, %s165
      $region28: #{face_recog_forward.4} parent=23 // pred_fallthru
        _
    $region24: #{face_recog_forward.4} parent=5 // pred_fallthru
      _
    %p167 = scmp.le.s32.totalorder 1, %s9
    %p168 = scmp.lt.s32.totalorder %s9, 3
    %p169 = pnand %p167, %p168
    %p170 = pneg %p169
    // Predicated region
    $region29: #{face_recog_forward.4} parent=5 // pred_check
      _
    $region30: #{face_recog_forward.4} parent=5 // pred_check_branch
      %172 = sbr.rel (%p169) target = $region32
    $region31: #{face_recog_forward.4} parent=5 // pred_region
      %s173 = ssub.s32 %s9, 1
      %p174 = scmp.lt.s32.totalorder %s18, 1
      %s175 = scalar_select %p174, %s18, 1
      %s176 = smul.addr %s175, 57
      %s177 = smul.addr %s176, 8
      %s178 = scalar_lea.vmem %s0, %s177
      %p179 = pneg %p47
      %p180 = pneg %p44
      %p181 = scmp.lt.s32.totalorder %s19, 0
      %s182 = scalar_select %p181, %s19, 0
      %s183 = smul.addr %s182, 4
      %s184 = scalar_lea.vmem %s1, %s183
      %p185 = pneg %p73
      %p186 = pneg %p70
      %p187 = scmp.lt.s32.totalorder %s19, 0
      %s188 = scalar_select %p187, %s19, 0
      %s189 = scalar_lea.vmem %s2, %s188
      %p190 = pneg %p99
      %p191 = pneg %p96
      %p192 = pneg %p127
      %p193 = pneg %p124
      %p194 = scmp.lt.s32.totalorder %s18, 1
      %s195 = scalar_select %p194, %s18, 1
      %p196 = scmp.lt.s32.totalorder %s19, 0
      %s197 = scalar_select %p196, %s19, 0
      %s198 = sadd.s32 %s197, %s195
      %s199 = scalar_lea.vmem %s3, %s198
      %p200 = scmp.lt.s32.totalorder %s18, 1
      %s201 = scalar_select %p200, %s18, 1
      %s202 = smul.addr %s201, 57
      %s203 = smul.addr %s202, 8
      %s204 = scalar_lea.vmem %s0, %s203
      %p205 = scmp.lt.s32.totalorder %s19, 0
      %s206 = scalar_select %p205, %s19, 0
      %s207 = smul.addr %s206, 4
      %s208 = scalar_lea.vmem %s1, %s207
      %p209 = scmp.lt.s32.totalorder %s19, 0
      %s210 = scalar_select %p209, %s19, 0
      %s211 = scalar_lea.vmem %s2, %s210
      %p212 = scmp.lt.s32.totalorder %s18, 1
      %s213 = scalar_select %p212, %s18, 1
      %p214 = scmp.lt.s32.totalorder %s19, 0
      %s215 = scalar_select %p214, %s19, 0
      %s216 = sadd.s32 %s215, %s213
      %s217 = scalar_lea.vmem %s3, %s216
      %v219 = vld [vmem:[%s204] sm:$0xff]
      %v220 = vld [vmem:[%s204 + $0x8] sm:$0xff]
      %v221 = vld [vmem:[%s204 + $0x10] sm:$0xff]
      %v222 = vld [vmem:[%s204 + $0x18] sm:$0xff]
      %v223 = vld [vmem:[%s204 + $0x20] sm:$0xff]
      %v224 = vld [vmem:[%s204 + $0x28] sm:$0xff]
      %v225 = vld [vmem:[%s204 + $0x30] sm:$0xff]
      %v226 = vld [vmem:[%s204 + $0x38] sm:$0xff]
      %v227 = vld [vmem:[%s204 + $0x40] sm:$0xff]
      %v228 = vld [vmem:[%s204 + $0x48] sm:$0xff]
      %v229 = vld [vmem:[%s204 + $0x50] sm:$0xff]
      %v230 = vld [vmem:[%s204 + $0x58] sm:$0xff]
      %v231 = vld [vmem:[%s204 + $0x60] sm:$0xff]
      %v232 = vld [vmem:[%s204 + $0x68] sm:$0xff]
      %v233 = vld [vmem:[%s204 + $0x70] sm:$0xff]
      %v234 = vld [vmem:[%s204 + $0x78] sm:$0xff]
      %v235 = vld [vmem:[%s204 + $0x80] sm:$0xff]
      %v236 = vld [vmem:[%s204 + $0x88] sm:$0xff]
      %v237 = vld [vmem:[%s204 + $0x90] sm:$0xff]
      %v238 = vld [vmem:[%s204 + $0x98] sm:$0xff]
      %v239 = vld [vmem:[%s204 + $0xa0] sm:$0xff]
      %v240 = vld [vmem:[%s204 + $0xa8] sm:$0xff]
      %v241 = vld [vmem:[%s204 + $0xb0] sm:$0xff]
      %v242 = vld [vmem:[%s204 + $0xb8] sm:$0xff]
      %v243 = vld [vmem:[%s204 + $0xc0] sm:$0xff]
      %v244 = vld [vmem:[%s204 + $0xc8] sm:$0xff]
      %v245 = vld [vmem:[%s204 + $0xd0] sm:$0xff]
      %v246 = vld [vmem:[%s204 + $0xd8] sm:$0xff]
      %v247 = vld [vmem:[%s204 + $0xe0] sm:$0xff]
      %v248 = vld [vmem:[%s204 + $0xe8] sm:$0xff]
      %v249 = vld [vmem:[%s204 + $0xf0] sm:$0xff]
      %v250 = vld [vmem:[%s204 + $0xf8] sm:$0xff]
      %v251 = vld [vmem:[%s204 + $0x100] sm:$0xff]
      %v252 = vld [vmem:[%s204 + $0x108] sm:$0xff]
      %v253 = vld [vmem:[%s204 + $0x110] sm:$0xff]
      %v254 = vld [vmem:[%s204 + $0x118] sm:$0xff]
      %v255 = vld [vmem:[%s204 + $0x120] sm:$0xff]
      %v256 = vld [vmem:[%s204 + $0x128] sm:$0xff]
      %v257 = vld [vmem:[%s204 + $0x130] sm:$0xff]
      %v258 = vld [vmem:[%s204 + $0x138] sm:$0xff]
      %v259 = vld [vmem:[%s204 + $0x140] sm:$0xff]
      %v260 = vld [vmem:[%s204 + $0x148] sm:$0xff]
      %v261 = vld [vmem:[%s204 + $0x150] sm:$0xff]
      %v262 = vld [vmem:[%s204 + $0x158] sm:$0xff]
      %v263 = vld [vmem:[%s204 + $0x160] sm:$0xff]
      %v264 = vld [vmem:[%s204 + $0x168] sm:$0xff]
      %v265 = vld [vmem:[%s204 + $0x170] sm:$0xff]
      %v266 = vld [vmem:[%s204 + $0x178] sm:$0xff]
      %v267 = vpack.c.bf16 %v220, %v219
      %v268 = vpack.c.bf16 %v222, %v221
      %v269 = vpack.c.bf16 %v224, %v223
      %v270 = vpack.c.bf16 %v226, %v225
      %v271 = vpack.c.bf16 %v228, %v227
      %v272 = vpack.c.bf16 %v230, %v229
      %v273 = vpack.c.bf16 %v232, %v231
      %v274 = vpack.c.bf16 %v234, %v233
      %v275 = vpack.c.bf16 %v236, %v235
      %v276 = vpack.c.bf16 %v238, %v237
      %v277 = vpack.c.bf16 %v240, %v239
      %v278 = vpack.c.bf16 %v242, %v241
      %v279 = vpack.c.bf16 %v244, %v243
      %v280 = vpack.c.bf16 %v246, %v245
      %v281 = vpack.c.bf16 %v248, %v247
      %v282 = vpack.c.bf16 %v250, %v249
      %v283 = vpack.c.bf16 %v252, %v251
      %v284 = vpack.c.bf16 %v254, %v253
      %v285 = vpack.c.bf16 %v256, %v255
      %v286 = vpack.c.bf16 %v258, %v257
      %v287 = vpack.c.bf16 %v260, %v259
      %v288 = vpack.c.bf16 %v262, %v261
      %v289 = vpack.c.bf16 %v264, %v263
      %v290 = vpack.c.bf16 %v266, %v265
      %v291 = vld [vmem:[%s208] sm:$0xf]
      %v292 = vld [vmem:[%s208 + $0x4] sm:$0xf]
      %v293 = vld [vmem:[%s208 + $0x8] sm:$0xf]
      %v294 = vld [vmem:[%s208 + $0xc] sm:$0xf]
      %v295 = vld [vmem:[%s208 + $0x10] sm:$0xf]
      %v296 = vld [vmem:[%s208 + $0x14] sm:$0xf]
      %v297 = vld [vmem:[%s208 + $0x18] sm:$0xf]
      %v298 = vld [vmem:[%s208 + $0x1c] sm:$0xf]
      %v299 = vld [vmem:[%s208 + $0x20] sm:$0xf]
      %v300 = vld [vmem:[%s208 + $0x24] sm:$0xf]
      %v301 = vld [vmem:[%s208 + $0x28] sm:$0xf]
      %v302 = vld [vmem:[%s208 + $0x2c] sm:$0xf]
      %v303 = vld [vmem:[%s208 + $0x30] sm:$0xf]
      %v304 = vld [vmem:[%s208 + $0x34] sm:$0xf]
      %v305 = vld [vmem:[%s208 + $0x38] sm:$0xf]
      %v306 = vld [vmem:[%s208 + $0x3c] sm:$0xf]
      %v307 = vld [vmem:[%s204 + $0x1] sm:$0xff]
      %v308 = vld [vmem:[%s204 + $0x9] sm:$0xff]
      %v309 = vld [vmem:[%s204 + $0x11] sm:$0xff]
      %v310 = vld [vmem:[%s204 + $0x19] sm:$0xff]
      %v311 = vld [vmem:[%s204 + $0x21] sm:$0xff]
      %v312 = vld [vmem:[%s204 + $0x29] sm:$0xff]
      %v313 = vld [vmem:[%s204 + $0x31] sm:$0xff]
      %v314 = vld [vmem:[%s204 + $0x39] sm:$0xff]
      %v315 = vld [vmem:[%s204 + $0x41] sm:$0xff]
      %v316 = vld [vmem:[%s204 + $0x49] sm:$0xff]
      %v317 = vld [vmem:[%s204 + $0x51] sm:$0xff]
      %v318 = vld [vmem:[%s204 + $0x59] sm:$0xff]
      %v319 = vld [vmem:[%s204 + $0x61] sm:$0xff]
      %v320 = vld [vmem:[%s204 + $0x69] sm:$0xff]
      %v321 = vld [vmem:[%s204 + $0x71] sm:$0xff]
      %v322 = vld [vmem:[%s204 + $0x79] sm:$0xff]
      %v323 = vld [vmem:[%s204 + $0x81] sm:$0xff]
      %v324 = vld [vmem:[%s204 + $0x89] sm:$0xff]
      %v325 = vld [vmem:[%s204 + $0x91] sm:$0xff]
      %v326 = vld [vmem:[%s204 + $0x99] sm:$0xff]
      %v327 = vld [vmem:[%s204 + $0xa1] sm:$0xff]
      %v328 = vld [vmem:[%s204 + $0xa9] sm:$0xff]
      %v329 = vld [vmem:[%s204 + $0xb1] sm:$0xff]
      %v330 = vld [vmem:[%s204 + $0xb9] sm:$0xff]
      %v331 = vld [vmem:[%s204 + $0xc1] sm:$0xff]
      %v332 = vld [vmem:[%s204 + $0xc9] sm:$0xff]
      %v333 = vld [vmem:[%s204 + $0xd1] sm:$0xff]
      %v334 = vld [vmem:[%s204 + $0xd9] sm:$0xff]
      %v335 = vld [vmem:[%s204 + $0xe1] sm:$0xff]
      %v336 = vld [vmem:[%s204 + $0xe9] sm:$0xff]
      %v337 = vld [vmem:[%s204 + $0xf1] sm:$0xff]
      %v338 = vld [vmem:[%s204 + $0xf9] sm:$0xff]
      %v339 = vld [vmem:[%s204 + $0x101] sm:$0xff]
      %v340 = vld [vmem:[%s204 + $0x109] sm:$0xff]
      %v341 = vld [vmem:[%s204 + $0x111] sm:$0xff]
      %v342 = vld [vmem:[%s204 + $0x119] sm:$0xff]
      %v343 = vld [vmem:[%s204 + $0x121] sm:$0xff]
      %v344 = vld [vmem:[%s204 + $0x129] sm:$0xff]
      %v345 = vld [vmem:[%s204 + $0x131] sm:$0xff]
      %v346 = vld [vmem:[%s204 + $0x139] sm:$0xff]
      %v347 = vld [vmem:[%s204 + $0x141] sm:$0xff]
      %v348 = vld [vmem:[%s204 + $0x149] sm:$0xff]
      %v349 = vld [vmem:[%s204 + $0x151] sm:$0xff]
      %v350 = vld [vmem:[%s204 + $0x159] sm:$0xff]
      %v351 = vld [vmem:[%s204 + $0x161] sm:$0xff]
      %v352 = vld [vmem:[%s204 + $0x169] sm:$0xff]
      %v353 = vld [vmem:[%s204 + $0x171] sm:$0xff]
      %v354 = vld [vmem:[%s204 + $0x179] sm:$0xff]
      %v355 = vpack.c.bf16 %v308, %v307
      %v356 = vpack.c.bf16 %v310, %v309
      %v357 = vpack.c.bf16 %v312, %v311
      %v358 = vpack.c.bf16 %v314, %v313
      %v359 = vpack.c.bf16 %v316, %v315
      %v360 = vpack.c.bf16 %v318, %v317
      %v361 = vpack.c.bf16 %v320, %v319
      %v362 = vpack.c.bf16 %v322, %v321
      %v363 = vpack.c.bf16 %v324, %v323
      %v364 = vpack.c.bf16 %v326, %v325
      %v365 = vpack.c.bf16 %v328, %v327
      %v366 = vpack.c.bf16 %v330, %v329
      %v367 = vpack.c.bf16 %v332, %v331
      %v368 = vpack.c.bf16 %v334, %v333
      %v369 = vpack.c.bf16 %v336, %v335
      %v370 = vpack.c.bf16 %v338, %v337
      %v371 = vpack.c.bf16 %v340, %v339
      %v372 = vpack.c.bf16 %v342, %v341
      %v373 = vpack.c.bf16 %v344, %v343
      %v374 = vpack.c.bf16 %v346, %v345
      %v375 = vpack.c.bf16 %v348, %v347
      %v376 = vpack.c.bf16 %v350, %v349
      %v377 = vpack.c.bf16 %v352, %v351
      %v378 = vpack.c.bf16 %v354, %v353
      %s379 = scalar_lea.vmem %s208, 64
      %v380 = vld [vmem:[%s379] sm:$0xf]
      %v381 = vld [vmem:[%s379 + $0x4] sm:$0xf]
      %v382 = vld [vmem:[%s379 + $0x8] sm:$0xf]
      %v383 = vld [vmem:[%s379 + $0xc] sm:$0xf]
      %v384 = vld [vmem:[%s379 + $0x10] sm:$0xf]
      %v385 = vld [vmem:[%s379 + $0x14] sm:$0xf]
      %v386 = vld [vmem:[%s379 + $0x18] sm:$0xf]
      %v387 = vld [vmem:[%s379 + $0x1c] sm:$0xf]
      %v388 = vld [vmem:[%s379 + $0x20] sm:$0xf]
      %v389 = vld [vmem:[%s379 + $0x24] sm:$0xf]
      %v390 = vld [vmem:[%s379 + $0x28] sm:$0xf]
      %v391 = vld [vmem:[%s379 + $0x2c] sm:$0xf]
      %v392 = vld [vmem:[%s379 + $0x30] sm:$0xf]
      %v393 = vld [vmem:[%s379 + $0x34] sm:$0xf]
      %v394 = vld [vmem:[%s379 + $0x38] sm:$0xf]
      %v395 = vld [vmem:[%s379 + $0x3c] sm:$0xf]
      %v412 = vunpack.c.l.b16 %v380
      %v413 = vunpack.c.l.b16 %v381
      %v414 = vunpack.c.l.b16 %v382
      %v415 = vunpack.c.l.b16 %v383
      %v416 = vunpack.c.l.b16 %v384
      %v417 = vunpack.c.l.b16 %v385
      %v418 = vunpack.c.l.b16 %v386
      %v419 = vunpack.c.l.b16 %v387
      %v420 = vunpack.c.l.b16 %v388
      %v421 = vunpack.c.l.b16 %v389
      %v422 = vunpack.c.l.b16 %v390
      %v423 = vunpack.c.l.b16 %v391
      %v424 = vunpack.c.l.b16 %v392
      %v425 = vunpack.c.l.b16 %v393
      %v426 = vunpack.c.l.b16 %v394
      %v427 = vunpack.c.l.b16 %v395
      %v428 = vpack.c.b16 %v413, %v412
      %v429 = vpack.c.b16 %v415, %v414
      %v430 = vpack.c.b16 %v417, %v416
      %v431 = vpack.c.b16 %v419, %v418
      %v432 = vpack.c.b16 %v421, %v420
      %v433 = vpack.c.b16 %v423, %v422
      %v434 = vpack.c.b16 %v425, %v424
      %v435 = vpack.c.b16 %v427, %v426
      %444 = vmatprep.subr.bf16.mxu0 0
      %445 = vmatpush1.bf16.msra.mxu0 %v428
      %446 = vmatprep.subr.bf16.mxu0 0
      %447 = vmatpush1.bf16.msra.mxu0 %v429
      %448 = vmatprep.subr.bf16.mxu0 0
      %449 = vmatpush1.bf16.msra.mxu0 %v430
      %450 = vmatprep.subr.bf16.mxu0 0
      %451 = vmatpush1.bf16.msra.mxu0 %v431
      %452 = vmatprep.subr.bf16.mxu0 0
      %453 = vmatpush1.bf16.msra.mxu0 %v432
      %454 = vmatprep.subr.bf16.mxu0 0
      %455 = vmatpush1.bf16.msra.mxu0 %v433
      %456 = vmatprep.subr.bf16.mxu0 0
      %457 = vmatpush1.bf16.msra.mxu0 %v434
      %458 = vmatprep.subr.bf16.mxu0 0
      %459 = vmatpush1.bf16.msra.mxu0 %v435
      %460 = vmatprep.subr.bf16.mxu0 0
      %461 = vmatpush1.bf16.msra.mxu0 0
      %462 = vmatprep.subr.bf16.mxu0 0
      %463 = vmatpush1.bf16.msra.mxu0 0
      %464 = vmatprep.subr.bf16.mxu0 0
      %465 = vmatpush1.bf16.msra.mxu0 0
      %466 = vmatprep.subr.bf16.mxu0 0
      %467 = vmatpush1.bf16.msra.mxu0 0
      %468 = vmatprep.subr.bf16.mxu0 0
      %469 = vmatpush1.bf16.msra.mxu0 0
      %470 = vmatprep.subr.bf16.mxu0 0
      %471 = vmatpush1.bf16.msra.mxu0 0
      %472 = vmatprep.subr.bf16.mxu0 0
      %473 = vmatpush1.bf16.msra.mxu0 0
      %474 = vmatprep.subr.bf16.mxu0 0
      %475 = vmatpush1.bf16.msra.mxu0 0
      %476 = vmatprep.mubr.bf16.mxu0 0
      %477 = vmatmul.mubr.bf16.gmra.mrb[0].mxu0 %v355
      %v478 = vpop.f32.mrb[0].mxu0
      %v479 = vadd.f32 0.0, %v478
      %v480 = vpop.f32.mrb[0].mxu0
      %v481 = vpop.f32.mrb[0].mxu0
      %v482 = vadd.f32 0.0, %v481
      %v483 = vpop.f32.mrb[0].mxu0
      %484 = vmatprep.mubr.bf16.mxu0 0
      %485 = vmatmul.mubr.bf16.gmra.mrb[0].mxu0 %v356
      %v486 = vpop.f32.mrb[0].mxu0
      %v487 = vadd.f32 0.0, %v486
      %v488 = vpop.f32.mrb[0].mxu0
      %v489 = vpop.f32.mrb[0].mxu0
      %v490 = vadd.f32 0.0, %v489
      %v491 = vpop.f32.mrb[0].mxu0
      %492 = vmatprep.mubr.bf16.mxu0 0
      %493 = vmatmul.mubr.bf16.gmra.mrb[0].mxu0 %v357
      %v494 = vpop.f32.mrb[0].mxu0
      %v495 = vadd.f32 0.0, %v494
      %v496 = vpop.f32.mrb[0].mxu0
      %v497 = vpop.f32.mrb[0].mxu0
      %v498 = vadd.f32 0.0, %v497
      %v499 = vpop.f32.mrb[0].mxu0
      %500 = vmatprep.mubr.bf16.mxu0 0
      %501 = vmatmul.mubr.bf16.gmra.mrb[0].mxu0 %v358
      %v502 = vpop.f32.mrb[0].mxu0
      %v503 = vadd.f32 0.0, %v502
      %v504 = vpop.f32.mrb[0].mxu0
      %v505 = vpop.f32.mrb[0].mxu0
      %v506 = vadd.f32 0.0, %v505
      %v507 = vpop.f32.mrb[0].mxu0
      %508 = vmatprep.mubr.bf16.mxu0 0
      %509 = vmatmul.mubr.bf16.gmra.mrb[0].mxu0 %v359
      %v510 = vpop.f32.mrb[0].mxu0
      %v511 = vadd.f32 0.0, %v510
      %v512 = vpop.f32.mrb[0].mxu0
      %v513 = vpop.f32.mrb[0].mxu0
      %v514 = vadd.f32 0.0, %v513
      %v515 = vpop.f32.mrb[0].mxu0
      %516 = vmatprep.mubr.bf16.mxu0 0
      %517 = vmatmul.mubr.bf16.gmra.mrb[0].mxu0 %v360
      %v518 = vpop.f32.mrb[0].mxu0
      %v519 = vadd.f32 0.0, %v518
      %v520 = vpop.f32.mrb[0].mxu0
      %v521 = vpop.f32.mrb[0].mxu0
      %v522 = vadd.f32 0.0, %v521
      %v523 = vpop.f32.mrb[0].mxu0
      %524 = vmatprep.mubr.bf16.mxu0 0
      %525 = vmatmul.mubr.bf16.gmra.mrb[0].mxu0 %v361
      %v526 = vpop.f32.mrb[0].mxu0
      %v527 = vadd.f32 0.0, %v526
      %v528 = vpop.f32.mrb[0].mxu0
      %v529 = vpop.f32.mrb[0].mxu0
      %v530 = vadd.f32 0.0, %v529
      %v531 = vpop.f32.mrb[0].mxu0
      %532 = vmatprep.mubr.bf16.mxu0 0
      %533 = vmatmul.mubr.bf16.gmra.mrb[0].mxu0 %v362
      %v534 = vpop.f32.mrb[0].mxu0
      %v535 = vadd.f32 0.0, %v534
      %v536 = vpop.f32.mrb[0].mxu0
      %v537 = vpop.f32.mrb[0].mxu0
      %v538 = vadd.f32 0.0, %v537
      %v539 = vpop.f32.mrb[0].mxu0
      %540 = vmatprep.mubr.bf16.mxu0 0
      %541 = vmatmul.mubr.bf16.gmra.mrb[0].mxu0 %v363
      %v542 = vpop.f32.mrb[0].mxu0
      %v543 = vadd.f32 0.0, %v542
      %v544 = vpop.f32.mrb[0].mxu0
      %v545 = vpop.f32.mrb[0].mxu0
      %v546 = vadd.f32 0.0, %v545
      %v547 = vpop.f32.mrb[0].mxu0
      %548 = vmatprep.mubr.bf16.mxu0 0
      %549 = vmatmul.mubr.bf16.gmra.mrb[0].mxu0 %v364
      %v550 = vpop.f32.mrb[0].mxu0
      %v551 = vadd.f32 0.0, %v550
      %v552 = vpop.f32.mrb[0].mxu0
      %v553 = vpop.f32.mrb[0].mxu0
      %v554 = vadd.f32 0.0, %v553
      %v555 = vpop.f32.mrb[0].mxu0
      %556 = vmatprep.mubr.bf16.mxu0 0
      %557 = vmatmul.mubr.bf16.gmra.mrb[0].mxu0 %v365
      %v558 = vpop.f32.mrb[0].mxu0
      %v559 = vadd.f32 0.0, %v558
      %v560 = vpop.f32.mrb[0].mxu0
      %v561 = vpop.f32.mrb[0].mxu0
      %v562 = vadd.f32 0.0, %v561
      %v563 = vpop.f32.mrb[0].mxu0
      %564 = vmatprep.mubr.bf16.mxu0 0
      %565 = vmatmul.mubr.bf16.gmra.mrb[0].mxu0 %v366
      %v566 = vpop.f32.mrb[0].mxu0
      %v567 = vadd.f32 0.0, %v566
      %v568 = vpop.f32.mrb[0].mxu0
      %v569 = vpop.f32.mrb[0].mxu0
      %v570 = vadd.f32 0.0, %v569
      %v571 = vpop.f32.mrb[0].mxu0
      %572 = vmatprep.mubr.bf16.mxu0 0
      %573 = vmatmul.mubr.bf16.gmra.mrb[0].mxu0 %v367
      %v574 = vpop.f32.mrb[0].mxu0
      %v575 = vadd.f32 0.0, %v574
      %v576 = vpop.f32.mrb[0].mxu0
      %v577 = vpop.f32.mrb[0].mxu0
      %v578 = vadd.f32 0.0, %v577
      %v579 = vpop.f32.mrb[0].mxu0
      %580 = vmatprep.mubr.bf16.mxu0 0
      %581 = vmatmul.mubr.bf16.gmra.mrb[0].mxu0 %v368
      %v582 = vpop.f32.mrb[0].mxu0
      %v583 = vadd.f32 0.0, %v582
      %v584 = vpop.f32.mrb[0].mxu0
      %v585 = vpop.f32.mrb[0].mxu0
      %v586 = vadd.f32 0.0, %v585
      %v587 = vpop.f32.mrb[0].mxu0
      %588 = vmatprep.mubr.bf16.mxu0 0
      %589 = vmatmul.mubr.bf16.gmra.mrb[0].mxu0 %v369
      %v590 = vpop.f32.mrb[0].mxu0
      %v591 = vadd.f32 0.0, %v590
      %v592 = vpop.f32.mrb[0].mxu0
      %v593 = vpop.f32.mrb[0].mxu0
      %v594 = vadd.f32 0.0, %v593
      %v595 = vpop.f32.mrb[0].mxu0
      %596 = vmatprep.mubr.bf16.mxu0 0
      %597 = vmatmul.mubr.bf16.gmra.mrb[0].mxu0 %v370
      %v598 = vpop.f32.mrb[0].mxu0
      %v599 = vadd.f32 0.0, %v598
      %v600 = vpop.f32.mrb[0].mxu0
      %v601 = vpop.f32.mrb[0].mxu0
      %v602 = vadd.f32 0.0, %v601
      %v603 = vpop.f32.mrb[0].mxu0
      %604 = vmatprep.mubr.bf16.mxu0 0
      %605 = vmatmul.mubr.bf16.gmra.mrb[0].mxu0 %v371
      %v606 = vpop.f32.mrb[0].mxu0
      %v607 = vadd.f32 0.0, %v606
      %v608 = vpop.f32.mrb[0].mxu0
      %v609 = vpop.f32.mrb[0].mxu0
      %v610 = vadd.f32 0.0, %v609
      %v611 = vpop.f32.mrb[0].mxu0
      %612 = vmatprep.mubr.bf16.mxu0 0
      %613 = vmatmul.mubr.bf16.gmra.mrb[0].mxu0 %v372
      %v614 = vpop.f32.mrb[0].mxu0
      %v615 = vadd.f32 0.0, %v614
      %v616 = vpop.f32.mrb[0].mxu0
      %v617 = vpop.f32.mrb[0].mxu0
      %v618 = vadd.f32 0.0, %v617
      %v619 = vpop.f32.mrb[0].mxu0
      %620 = vmatprep.mubr.bf16.mxu0 0
      %621 = vmatmul.mubr.bf16.gmra.mrb[0].mxu0 %v373
      %v622 = vpop.f32.mrb[0].mxu0
      %v623 = vadd.f32 0.0, %v622
      %v624 = vpop.f32.mrb[0].mxu0
      %v625 = vpop.f32.mrb[0].mxu0
      %v626 = vadd.f32 0.0, %v625
      %v627 = vpop.f32.mrb[0].mxu0
      %628 = vmatprep.mubr.bf16.mxu0 0
      %629 = vmatmul.mubr.bf16.gmra.mrb[0].mxu0 %v374
      %v630 = vpop.f32.mrb[0].mxu0
      %v631 = vadd.f32 0.0, %v630
      %v632 = vpop.f32.mrb[0].mxu0
      %v633 = vpop.f32.mrb[0].mxu0
      %v634 = vadd.f32 0.0, %v633
      %v635 = vpop.f32.mrb[0].mxu0
      %636 = vmatprep.mubr.bf16.mxu0 0
      %637 = vmatmul.mubr.bf16.gmra.mrb[0].mxu0 %v375
      %v638 = vpop.f32.mrb[0].mxu0
      %v639 = vadd.f32 0.0, %v638
      %v640 = vpop.f32.mrb[0].mxu0
      %v641 = vpop.f32.mrb[0].mxu0
      %v642 = vadd.f32 0.0, %v641
      %v643 = vpop.f32.mrb[0].mxu0
      %644 = vmatprep.mubr.bf16.mxu0 0
      %645 = vmatmul.mubr.bf16.gmra.mrb[0].mxu0 %v376
      %v646 = vpop.f32.mrb[0].mxu0
      %v647 = vadd.f32 0.0, %v646
      %v648 = vpop.f32.mrb[0].mxu0
      %v649 = vpop.f32.mrb[0].mxu0
      %v650 = vadd.f32 0.0, %v649
      %v651 = vpop.f32.mrb[0].mxu0
      %652 = vmatprep.mubr.bf16.mxu0 0
      %653 = vmatmul.mubr.bf16.gmra.mrb[0].mxu0 %v377
      %v654 = vpop.f32.mrb[0].mxu0
      %v655 = vadd.f32 0.0, %v654
      %v656 = vpop.f32.mrb[0].mxu0
      %v657 = vpop.f32.mrb[0].mxu0
      %v658 = vadd.f32 0.0, %v657
      %v659 = vpop.f32.mrb[0].mxu0
      %660 = vmatprep.mubr.bf16.mxu0 0
      %661 = vmatmul.mubr.bf16.gmra.mrb[0].mxu0 %v378
      %v662 = vpop.f32.mrb[0].mxu0
      %v663 = vadd.f32 0.0, %v662
      %v664 = vpop.f32.mrb[0].mxu0
      %v665 = vpop.f32.mrb[0].mxu0
      %v666 = vadd.f32 0.0, %v665
      %v667 = vpop.f32.mrb[0].mxu0
      %668 = vdwg.mxu0
      %v685 = vunpack.c.l.b16 %v291
      %v686 = vunpack.c.l.b16 %v292
      %v687 = vunpack.c.l.b16 %v293
      %v688 = vunpack.c.l.b16 %v294
      %v689 = vunpack.c.l.b16 %v295
      %v690 = vunpack.c.l.b16 %v296
      %v691 = vunpack.c.l.b16 %v297
      %v692 = vunpack.c.l.b16 %v298
      %v693 = vunpack.c.l.b16 %v299
      %v694 = vunpack.c.l.b16 %v300
      %v695 = vunpack.c.l.b16 %v301
      %v696 = vunpack.c.l.b16 %v302
      %v697 = vunpack.c.l.b16 %v303
      %v698 = vunpack.c.l.b16 %v304
      %v699 = vunpack.c.l.b16 %v305
      %v700 = vunpack.c.l.b16 %v306
      %v701 = vpack.c.b16 %v686, %v685
      %v702 = vpack.c.b16 %v688, %v687
      %v703 = vpack.c.b16 %v690, %v689
      %v704 = vpack.c.b16 %v692, %v691
      %v705 = vpack.c.b16 %v694, %v693
      %v706 = vpack.c.b16 %v696, %v695
      %v707 = vpack.c.b16 %v698, %v697
      %v708 = vpack.c.b16 %v700, %v699
      %717 = vmatprep.subr.bf16.mxu0 0
      %718 = vmatpush1.bf16.msra.mxu0 %v701
      %719 = vmatprep.subr.bf16.mxu0 0
      %720 = vmatpush1.bf16.msra.mxu0 %v702
      %721 = vmatprep.subr.bf16.mxu0 0
      %722 = vmatpush1.bf16.msra.mxu0 %v703
      %723 = vmatprep.subr.bf16.mxu0 0
      %724 = vmatpush1.bf16.msra.mxu0 %v704
      %725 = vmatprep.subr.bf16.mxu0 0
      %726 = vmatpush1.bf16.msra.mxu0 %v705
      %727 = vmatprep.subr.bf16.mxu0 0
      %728 = vmatpush1.bf16.msra.mxu0 %v706
      %729 = vmatprep.subr.bf16.mxu0 0
      %730 = vmatpush1.bf16.msra.mxu0 %v707
      %731 = vmatprep.subr.bf16.mxu0 0
      %732 = vmatpush1.bf16.msra.mxu0 %v708
      %733 = vmatprep.subr.bf16.mxu0 0
      %734 = vmatpush1.bf16.msra.mxu0 0
      %735 = vmatprep.subr.bf16.mxu0 0
      %736 = vmatpush1.bf16.msra.mxu0 0
      %737 = vmatprep.subr.bf16.mxu0 0
      %738 = vmatpush1.bf16.msra.mxu0 0
      %739 = vmatprep.subr.bf16.mxu0 0
      %740 = vmatpush1.bf16.msra.mxu0 0
      %741 = vmatprep.subr.bf16.mxu0 0
      %742 = vmatpush1.bf16.msra.mxu0 0
      %743 = vmatprep.subr.bf16.mxu0 0
      %744 = vmatpush1.bf16.msra.mxu0 0
      %745 = vmatprep.subr.bf16.mxu0 0
      %746 = vmatpush1.bf16.msra.mxu0 0
      %747 = vmatprep.subr.bf16.mxu0 0
      %748 = vmatpush1.bf16.msra.mxu0 0
      %749 = vmatprep.mubr.bf16.mxu0 0
      %750 = vmatmul.mubr.bf16.gmra.mrb[0].mxu0 %v267
      %v751 = vpop.f32.mrb[0].mxu0
      %v752 = vadd.f32 %v479, %v751
      %v753 = vpop.f32.mrb[0].mxu0
      %v754 = vpop.f32.mrb[0].mxu0
      %v755 = vadd.f32 %v482, %v754
      %v756 = vpop.f32.mrb[0].mxu0
      %757 = vmatprep.mubr.bf16.mxu0 0
      %758 = vmatmul.mubr.bf16.gmra.mrb[0].mxu0 %v268
      %v759 = vpop.f32.mrb[0].mxu0
      %v760 = vadd.f32 %v487, %v759
      %v761 = vpop.f32.mrb[0].mxu0
      %v762 = vpop.f32.mrb[0].mxu0
      %v763 = vadd.f32 %v490, %v762
      %v764 = vpop.f32.mrb[0].mxu0
      %765 = vmatprep.mubr.bf16.mxu0 0
      %766 = vmatmul.mubr.bf16.gmra.mrb[0].mxu0 %v269
      %v767 = vpop.f32.mrb[0].mxu0
      %v768 = vadd.f32 %v495, %v767
      %v769 = vpop.f32.mrb[0].mxu0
      %v770 = vpop.f32.mrb[0].mxu0
      %v771 = vadd.f32 %v498, %v770
      %v772 = vpop.f32.mrb[0].mxu0
      %773 = vmatprep.mubr.bf16.mxu0 0
      %774 = vmatmul.mubr.bf16.gmra.mrb[0].mxu0 %v270
      %v775 = vpop.f32.mrb[0].mxu0
      %v776 = vadd.f32 %v503, %v775
      %v777 = vpop.f32.mrb[0].mxu0
      %v778 = vpop.f32.mrb[0].mxu0
      %v779 = vadd.f32 %v506, %v778
      %v780 = vpop.f32.mrb[0].mxu0
      %781 = vmatprep.mubr.bf16.mxu0 0
      %782 = vmatmul.mubr.bf16.gmra.mrb[0].mxu0 %v271
      %v783 = vpop.f32.mrb[0].mxu0
      %v784 = vadd.f32 %v511, %v783
      %v785 = vpop.f32.mrb[0].mxu0
      %v786 = vpop.f32.mrb[0].mxu0
      %v787 = vadd.f32 %v514, %v786
      %v788 = vpop.f32.mrb[0].mxu0
      %789 = vmatprep.mubr.bf16.mxu0 0
      %790 = vmatmul.mubr.bf16.gmra.mrb[0].mxu0 %v272
      %v791 = vpop.f32.mrb[0].mxu0
      %v792 = vadd.f32 %v519, %v791
      %v793 = vpop.f32.mrb[0].mxu0
      %v794 = vpop.f32.mrb[0].mxu0
      %v795 = vadd.f32 %v522, %v794
      %v796 = vpop.f32.mrb[0].mxu0
      %797 = vmatprep.mubr.bf16.mxu0 0
      %798 = vmatmul.mubr.bf16.gmra.mrb[0].mxu0 %v273
      %v799 = vpop.f32.mrb[0].mxu0
      %v800 = vadd.f32 %v527, %v799
      %v801 = vpop.f32.mrb[0].mxu0
      %v802 = vpop.f32.mrb[0].mxu0
      %v803 = vadd.f32 %v530, %v802
      %v804 = vpop.f32.mrb[0].mxu0
      %805 = vmatprep.mubr.bf16.mxu0 0
      %806 = vmatmul.mubr.bf16.gmra.mrb[0].mxu0 %v274
      %v807 = vpop.f32.mrb[0].mxu0
      %v808 = vadd.f32 %v535, %v807
      %v809 = vpop.f32.mrb[0].mxu0
      %v810 = vpop.f32.mrb[0].mxu0
      %v811 = vadd.f32 %v538, %v810
      %v812 = vpop.f32.mrb[0].mxu0
      %813 = vmatprep.mubr.bf16.mxu0 0
      %814 = vmatmul.mubr.bf16.gmra.mrb[0].mxu0 %v275
      %v815 = vpop.f32.mrb[0].mxu0
      %v816 = vadd.f32 %v543, %v815
      %v817 = vpop.f32.mrb[0].mxu0
      %v818 = vpop.f32.mrb[0].mxu0
      %v819 = vadd.f32 %v546, %v818
      %v820 = vpop.f32.mrb[0].mxu0
      %821 = vmatprep.mubr.bf16.mxu0 0
      %822 = vmatmul.mubr.bf16.gmra.mrb[0].mxu0 %v276
      %v823 = vpop.f32.mrb[0].mxu0
      %v824 = vadd.f32 %v551, %v823
      %v825 = vpop.f32.mrb[0].mxu0
      %v826 = vpop.f32.mrb[0].mxu0
      %v827 = vadd.f32 %v554, %v826
      %v828 = vpop.f32.mrb[0].mxu0
      %829 = vmatprep.mubr.bf16.mxu0 0
      %830 = vmatmul.mubr.bf16.gmra.mrb[0].mxu0 %v277
      %v831 = vpop.f32.mrb[0].mxu0
      %v832 = vadd.f32 %v559, %v831
      %v833 = vpop.f32.mrb[0].mxu0
      %v834 = vpop.f32.mrb[0].mxu0
      %v835 = vadd.f32 %v562, %v834
      %v836 = vpop.f32.mrb[0].mxu0
      %837 = vmatprep.mubr.bf16.mxu0 0
      %838 = vmatmul.mubr.bf16.gmra.mrb[0].mxu0 %v278
      %v839 = vpop.f32.mrb[0].mxu0
      %v840 = vadd.f32 %v567, %v839
      %v841 = vpop.f32.mrb[0].mxu0
      %v842 = vpop.f32.mrb[0].mxu0
      %v843 = vadd.f32 %v570, %v842
      %v844 = vpop.f32.mrb[0].mxu0
      %845 = vmatprep.mubr.bf16.mxu0 0
      %846 = vmatmul.mubr.bf16.gmra.mrb[0].mxu0 %v279
      %v847 = vpop.f32.mrb[0].mxu0
      %v848 = vadd.f32 %v575, %v847
      %v849 = vpop.f32.mrb[0].mxu0
      %v850 = vpop.f32.mrb[0].mxu0
      %v851 = vadd.f32 %v578, %v850
      %v852 = vpop.f32.mrb[0].mxu0
      %853 = vmatprep.mubr.bf16.mxu0 0
      %854 = vmatmul.mubr.bf16.gmra.mrb[0].mxu0 %v280
      %v855 = vpop.f32.mrb[0].mxu0
      %v856 = vadd.f32 %v583, %v855
      %v857 = vpop.f32.mrb[0].mxu0
      %v858 = vpop.f32.mrb[0].mxu0
      %v859 = vadd.f32 %v586, %v858
      %v860 = vpop.f32.mrb[0].mxu0
      %861 = vmatprep.mubr.bf16.mxu0 0
      %862 = vmatmul.mubr.bf16.gmra.mrb[0].mxu0 %v281
      %v863 = vpop.f32.mrb[0].mxu0
      %v864 = vadd.f32 %v591, %v863
      %v865 = vpop.f32.mrb[0].mxu0
      %v866 = vpop.f32.mrb[0].mxu0
      %v867 = vadd.f32 %v594, %v866
      %v868 = vpop.f32.mrb[0].mxu0
      %869 = vmatprep.mubr.bf16.mxu0 0
      %870 = vmatmul.mubr.bf16.gmra.mrb[0].mxu0 %v282
      %v871 = vpop.f32.mrb[0].mxu0
      %v872 = vadd.f32 %v599, %v871
      %v873 = vpop.f32.mrb[0].mxu0
      %v874 = vpop.f32.mrb[0].mxu0
      %v875 = vadd.f32 %v602, %v874
      %v876 = vpop.f32.mrb[0].mxu0
      %877 = vmatprep.mubr.bf16.mxu0 0
      %878 = vmatmul.mubr.bf16.gmra.mrb[0].mxu0 %v283
      %v879 = vpop.f32.mrb[0].mxu0
      %v880 = vadd.f32 %v607, %v879
      %v881 = vpop.f32.mrb[0].mxu0
      %v882 = vpop.f32.mrb[0].mxu0
      %v883 = vadd.f32 %v610, %v882
      %v884 = vpop.f32.mrb[0].mxu0
      %885 = vmatprep.mubr.bf16.mxu0 0
      %886 = vmatmul.mubr.bf16.gmra.mrb[0].mxu0 %v284
      %v887 = vpop.f32.mrb[0].mxu0
      %v888 = vadd.f32 %v615, %v887
      %v889 = vpop.f32.mrb[0].mxu0
      %v890 = vpop.f32.mrb[0].mxu0
      %v891 = vadd.f32 %v618, %v890
      %v892 = vpop.f32.mrb[0].mxu0
      %893 = vmatprep.mubr.bf16.mxu0 0
      %894 = vmatmul.mubr.bf16.gmra.mrb[0].mxu0 %v285
      %v895 = vpop.f32.mrb[0].mxu0
      %v896 = vadd.f32 %v623, %v895
      %v897 = vpop.f32.mrb[0].mxu0
      %v898 = vpop.f32.mrb[0].mxu0
      %v899 = vadd.f32 %v626, %v898
      %v900 = vpop.f32.mrb[0].mxu0
      %901 = vmatprep.mubr.bf16.mxu0 0
      %902 = vmatmul.mubr.bf16.gmra.mrb[0].mxu0 %v286
      %v903 = vpop.f32.mrb[0].mxu0
      %v904 = vadd.f32 %v631, %v903
      %v905 = vpop.f32.mrb[0].mxu0
      %v906 = vpop.f32.mrb[0].mxu0
      %v907 = vadd.f32 %v634, %v906
      %v908 = vpop.f32.mrb[0].mxu0
      %909 = vmatprep.mubr.bf16.mxu0 0
      %910 = vmatmul.mubr.bf16.gmra.mrb[0].mxu0 %v287
      %v911 = vpop.f32.mrb[0].mxu0
      %v912 = vadd.f32 %v639, %v911
      %v913 = vpop.f32.mrb[0].mxu0
      %v914 = vpop.f32.mrb[0].mxu0
      %v915 = vadd.f32 %v642, %v914
      %v916 = vpop.f32.mrb[0].mxu0
      %917 = vmatprep.mubr.bf16.mxu0 0
      %918 = vmatmul.mubr.bf16.gmra.mrb[0].mxu0 %v288
      %v919 = vpop.f32.mrb[0].mxu0
      %v920 = vadd.f32 %v647, %v919
      %v921 = vpop.f32.mrb[0].mxu0
      %v922 = vpop.f32.mrb[0].mxu0
      %v923 = vadd.f32 %v650, %v922
      %v924 = vpop.f32.mrb[0].mxu0
      %925 = vmatprep.mubr.bf16.mxu0 0
      %926 = vmatmul.mubr.bf16.gmra.mrb[0].mxu0 %v289
      %v927 = vpop.f32.mrb[0].mxu0
      %v928 = vadd.f32 %v655, %v927
      %v929 = vpop.f32.mrb[0].mxu0
      %v930 = vpop.f32.mrb[0].mxu0
      %v931 = vadd.f32 %v658, %v930
      %v932 = vpop.f32.mrb[0].mxu0
      %933 = vmatprep.mubr.bf16.mxu0 0
      %934 = vmatmul.mubr.bf16.gmra.mrb[0].mxu0 %v290
      %v935 = vpop.f32.mrb[0].mxu0
      %v936 = vadd.f32 %v663, %v935
      %v937 = vpop.f32.mrb[0].mxu0
      %v938 = vpop.f32.mrb[0].mxu0
      %v939 = vadd.f32 %v666, %v938
      %v940 = vpop.f32.mrb[0].mxu0
      %941 = vdwg.mxu0
      %v942 = vld [vmem:[%s204 + $0x2] sm:$0xff]
      %v943 = vld [vmem:[%s204 + $0xa] sm:$0xff]
      %v944 = vld [vmem:[%s204 + $0x12] sm:$0xff]
      %v945 = vld [vmem:[%s204 + $0x1a] sm:$0xff]
      %v946 = vld [vmem:[%s204 + $0x22] sm:$0xff]
      %v947 = vld [vmem:[%s204 + $0x2a] sm:$0xff]
      %v948 = vld [vmem:[%s204 + $0x32] sm:$0xff]
      %v949 = vld [vmem:[%s204 + $0x3a] sm:$0xff]
      %v950 = vld [vmem:[%s204 + $0x42] sm:$0xff]
      %v951 = vld [vmem:[%s204 + $0x4a] sm:$0xff]
      %v952 = vld [vmem:[%s204 + $0x52] sm:$0xff]
      %v953 = vld [vmem:[%s204 + $0x5a] sm:$0xff]
      %v954 = vld [vmem:[%s204 + $0x62] sm:$0xff]
      %v955 = vld [vmem:[%s204 + $0x6a] sm:$0xff]
      %v956 = vld [vmem:[%s204 + $0x72] sm:$0xff]
      %v957 = vld [vmem:[%s204 + $0x7a] sm:$0xff]
      %v958 = vld [vmem:[%s204 + $0x82] sm:$0xff]
      %v959 = vld [vmem:[%s204 + $0x8a] sm:$0xff]
      %v960 = vld [vmem:[%s204 + $0x92] sm:$0xff]
      %v961 = vld [vmem:[%s204 + $0x9a] sm:$0xff]
      %v962 = vld [vmem:[%s204 + $0xa2] sm:$0xff]
      %v963 = vld [vmem:[%s204 + $0xaa] sm:$0xff]
      %v964 = vld [vmem:[%s204 + $0xb2] sm:$0xff]
      %v965 = vld [vmem:[%s204 + $0xba] sm:$0xff]
      %v966 = vld [vmem:[%s204 + $0xc2] sm:$0xff]
      %v967 = vld [vmem:[%s204 + $0xca] sm:$0xff]
      %v968 = vld [vmem:[%s204 + $0xd2] sm:$0xff]
      %v969 = vld [vmem:[%s204 + $0xda] sm:$0xff]
      %v970 = vld [vmem:[%s204 + $0xe2] sm:$0xff]
      %v971 = vld [vmem:[%s204 + $0xea] sm:$0xff]
      %v972 = vld [vmem:[%s204 + $0xf2] sm:$0xff]
      %v973 = vld [vmem:[%s204 + $0xfa] sm:$0xff]
      %v974 = vld [vmem:[%s204 + $0x102] sm:$0xff]
      %v975 = vld [vmem:[%s204 + $0x10a] sm:$0xff]
      %v976 = vld [vmem:[%s204 + $0x112] sm:$0xff]
      %v977 = vld [vmem:[%s204 + $0x11a] sm:$0xff]
      %v978 = vld [vmem:[%s204 + $0x122] sm:$0xff]
      %v979 = vld [vmem:[%s204 + $0x12a] sm:$0xff]
      %v980 = vld [vmem:[%s204 + $0x132] sm:$0xff]
      %v981 = vld [vmem:[%s204 + $0x13a] sm:$0xff]
      %v982 = vld [vmem:[%s204 + $0x142] sm:$0xff]
      %v983 = vld [vmem:[%s204 + $0x14a] sm:$0xff]
      %v984 = vld [vmem:[%s204 + $0x152] sm:$0xff]
      %v985 = vld [vmem:[%s204 + $0x15a] sm:$0xff]
      %v986 = vld [vmem:[%s204 + $0x162] sm:$0xff]
      %v987 = vld [vmem:[%s204 + $0x16a] sm:$0xff]
      %v988 = vld [vmem:[%s204 + $0x172] sm:$0xff]
      %v989 = vld [vmem:[%s204 + $0x17a] sm:$0xff]
      %v990 = vpack.c.bf16 %v943, %v942
      %v991 = vpack.c.bf16 %v945, %v944
      %v992 = vpack.c.bf16 %v947, %v946
      %v993 = vpack.c.bf16 %v949, %v948
      %v994 = vpack.c.bf16 %v951, %v950
      %v995 = vpack.c.bf16 %v953, %v952
      %v996 = vpack.c.bf16 %v955, %v954
      %v997 = vpack.c.bf16 %v957, %v956
      %v998 = vpack.c.bf16 %v959, %v958
      %v999 = vpack.c.bf16 %v961, %v960
      %v1000 = vpack.c.bf16 %v963, %v962
      %v1001 = vpack.c.bf16 %v965, %v964
      %v1002 = vpack.c.bf16 %v967, %v966
      %v1003 = vpack.c.bf16 %v969, %v968
      %v1004 = vpack.c.bf16 %v971, %v970
      %v1005 = vpack.c.bf16 %v973, %v972
      %v1006 = vpack.c.bf16 %v975, %v974
      %v1007 = vpack.c.bf16 %v977, %v976
      %v1008 = vpack.c.bf16 %v979, %v978
      %v1009 = vpack.c.bf16 %v981, %v980
      %v1010 = vpack.c.bf16 %v983, %v982
      %v1011 = vpack.c.bf16 %v985, %v984
      %v1012 = vpack.c.bf16 %v987, %v986
      %v1013 = vpack.c.bf16 %v989, %v988
      %s1014 = scalar_lea.vmem %s208, 128
      %v1015 = vld [vmem:[%s1014] sm:$0xf]
      %v1016 = vld [vmem:[%s1014 + $0x4] sm:$0xf]
      %v1017 = vld [vmem:[%s1014 + $0x8] sm:$0xf]
      %v1018 = vld [vmem:[%s1014 + $0xc] sm:$0xf]
      %v1019 = vld [vmem:[%s1014 + $0x10] sm:$0xf]
      %v1020 = vld [vmem:[%s1014 + $0x14] sm:$0xf]
      %v1021 = vld [vmem:[%s1014 + $0x18] sm:$0xf]
      %v1022 = vld [vmem:[%s1014 + $0x1c] sm:$0xf]
      %v1023 = vld [vmem:[%s1014 + $0x20] sm:$0xf]
      %v1024 = vld [vmem:[%s1014 + $0x24] sm:$0xf]
      %v1025 = vld [vmem:[%s1014 + $0x28] sm:$0xf]
      %v1026 = vld [vmem:[%s1014 + $0x2c] sm:$0xf]
      %v1027 = vld [vmem:[%s1014 + $0x30] sm:$0xf]
      %v1028 = vld [vmem:[%s1014 + $0x34] sm:$0xf]
      %v1029 = vld [vmem:[%s1014 + $0x38] sm:$0xf]
      %v1030 = vld [vmem:[%s1014 + $0x3c] sm:$0xf]
      %v1047 = vunpack.c.l.b16 %v1015
      %v1048 = vunpack.c.l.b16 %v1016
      %v1049 = vunpack.c.l.b16 %v1017
      %v1050 = vunpack.c.l.b16 %v1018
      %v1051 = vunpack.c.l.b16 %v1019
      %v1052 = vunpack.c.l.b16 %v1020
      %v1053 = vunpack.c.l.b16 %v1021
      %v1054 = vunpack.c.l.b16 %v1022
      %v1055 = vunpack.c.l.b16 %v1023
      %v1056 = vunpack.c.l.b16 %v1024
      %v1057 = vunpack.c.l.b16 %v1025
      %v1058 = vunpack.c.l.b16 %v1026
      %v1059 = vunpack.c.l.b16 %v1027
      %v1060 = vunpack.c.l.b16 %v1028
      %v1061 = vunpack.c.l.b16 %v1029
      %v1062 = vunpack.c.l.b16 %v1030
      %v1063 = vpack.c.b16 %v1048, %v1047
      %v1064 = vpack.c.b16 %v1050, %v1049
      %v1065 = vpack.c.b16 %v1052, %v1051
      %v1066 = vpack.c.b16 %v1054, %v1053
      %v1067 = vpack.c.b16 %v1056, %v1055
      %v1068 = vpack.c.b16 %v1058, %v1057
      %v1069 = vpack.c.b16 %v1060, %v1059
      %v1070 = vpack.c.b16 %v1062, %v1061
      %1079 = vmatprep.subr.bf16.mxu0 0
      %1080 = vmatpush1.bf16.msra.mxu0 %v1063
      %1081 = vmatprep.subr.bf16.mxu0 0
      %1082 = vmatpush1.bf16.msra.mxu0 %v1064
      %1083 = vmatprep.subr.bf16.mxu0 0
      %1084 = vmatpush1.bf16.msra.mxu0 %v1065
      %1085 = vmatprep.subr.bf16.mxu0 0
      %1086 = vmatpush1.bf16.msra.mxu0 %v1066
      %1087 = vmatprep.subr.bf16.mxu0 0
      %1088 = vmatpush1.bf16.msra.mxu0 %v1067
      %1089 = vmatprep.subr.bf16.mxu0 0
      %1090 = vmatpush1.bf16.msra.mxu0 %v1068
      %1091 = vmatprep.subr.bf16.mxu0 0
      %1092 = vmatpush1.bf16.msra.mxu0 %v1069
      %1093 = vmatprep.subr.bf16.mxu0 0
      %1094 = vmatpush1.bf16.msra.mxu0 %v1070
      %1095 = vmatprep.subr.bf16.mxu0 0
      %1096 = vmatpush1.bf16.msra.mxu0 0
      %1097 = vmatprep.subr.bf16.mxu0 0
      %1098 = vmatpush1.bf16.msra.mxu0 0
      %1099 = vmatprep.subr.bf16.mxu0 0
      %1100 = vmatpush1.bf16.msra.mxu0 0
      %1101 = vmatprep.subr.bf16.mxu0 0
      %1102 = vmatpush1.bf16.msra.mxu0 0
      %1103 = vmatprep.subr.bf16.mxu0 0
      %1104 = vmatpush1.bf16.msra.mxu0 0
      %1105 = vmatprep.subr.bf16.mxu0 0
      %1106 = vmatpush1.bf16.msra.mxu0 0
      %1107 = vmatprep.subr.bf16.mxu0 0
      %1108 = vmatpush1.bf16.msra.mxu0 0
      %1109 = vmatprep.subr.bf16.mxu0 0
      %1110 = vmatpush1.bf16.msra.mxu0 0
      %1111 = vmatprep.mubr.bf16.mxu0 0
      %1112 = vmatmul.mubr.bf16.gmra.mrb[0].mxu0 %v990
      %v1113 = vpop.f32.mrb[0].mxu0
      %v1114 = vadd.f32 0.0, %v1113
      %v1115 = vpop.f32.mrb[0].mxu0
      %v1116 = vpop.f32.mrb[0].mxu0
      %v1117 = vadd.f32 0.0, %v1116
      %v1118 = vpop.f32.mrb[0].mxu0
      %1119 = vmatprep.mubr.bf16.mxu0 0
      %1120 = vmatmul.mubr.bf16.gmra.mrb[0].mxu0 %v991
      %v1121 = vpop.f32.mrb[0].mxu0
      %v1122 = vadd.f32 0.0, %v1121
      %v1123 = vpop.f32.mrb[0].mxu0
      %v1124 = vpop.f32.mrb[0].mxu0
      %v1125 = vadd.f32 0.0, %v1124
      %v1126 = vpop.f32.mrb[0].mxu0
      %1127 = vmatprep.mubr.bf16.mxu0 0
      %1128 = vmatmul.mubr.bf16.gmra.mrb[0].mxu0 %v992
      %v1129 = vpop.f32.mrb[0].mxu0
      %v1130 = vadd.f32 0.0, %v1129
      %v1131 = vpop.f32.mrb[0].mxu0
      %v1132 = vpop.f32.mrb[0].mxu0
      %v1133 = vadd.f32 0.0, %v1132
      %v1134 = vpop.f32.mrb[0].mxu0
      %1135 = vmatprep.mubr.bf16.mxu0 0
      %1136 = vmatmul.mubr.bf16.gmra.mrb[0].mxu0 %v993
      %v1137 = vpop.f32.mrb[0].mxu0
      %v1138 = vadd.f32 0.0, %v1137
      %v1139 = vpop.f32.mrb[0].mxu0
      %v1140 = vpop.f32.mrb[0].mxu0
      %v1141 = vadd.f32 0.0, %v1140
      %v1142 = vpop.f32.mrb[0].mxu0
      %1143 = vmatprep.mubr.bf16.mxu0 0
      %1144 = vmatmul.mubr.bf16.gmra.mrb[0].mxu0 %v994
      %v1145 = vpop.f32.mrb[0].mxu0
      %v1146 = vadd.f32 0.0, %v1145
      %v1147 = vpop.f32.mrb[0].mxu0
      %v1148 = vpop.f32.mrb[0].mxu0
      %v1149 = vadd.f32 0.0, %v1148
      %v1150 = vpop.f32.mrb[0].mxu0
      %1151 = vmatprep.mubr.bf16.mxu0 0
      %1152 = vmatmul.mubr.bf16.gmra.mrb[0].mxu0 %v995
      %v1153 = vpop.f32.mrb[0].mxu0
      %v1154 = vadd.f32 0.0, %v1153
      %v1155 = vpop.f32.mrb[0].mxu0
      %v1156 = vpop.f32.mrb[0].mxu0
      %v1157 = vadd.f32 0.0, %v1156
      %v1158 = vpop.f32.mrb[0].mxu0
      %1159 = vmatprep.mubr.bf16.mxu0 0
      %1160 = vmatmul.mubr.bf16.gmra.mrb[0].mxu0 %v996
      %v1161 = vpop.f32.mrb[0].mxu0
      %v1162 = vadd.f32 0.0, %v1161
      %v1163 = vpop.f32.mrb[0].mxu0
      %v1164 = vpop.f32.mrb[0].mxu0
      %v1165 = vadd.f32 0.0, %v1164
      %v1166 = vpop.f32.mrb[0].mxu0
      %1167 = vmatprep.mubr.bf16.mxu0 0
      %1168 = vmatmul.mubr.bf16.gmra.mrb[0].mxu0 %v997
      %v1169 = vpop.f32.mrb[0].mxu0
      %v1170 = vadd.f32 0.0, %v1169
      %v1171 = vpop.f32.mrb[0].mxu0
      %v1172 = vpop.f32.mrb[0].mxu0
      %v1173 = vadd.f32 0.0, %v1172
      %v1174 = vpop.f32.mrb[0].mxu0
      %1175 = vmatprep.mubr.bf16.mxu0 0
      %1176 = vmatmul.mubr.bf16.gmra.mrb[0].mxu0 %v998
      %v1177 = vpop.f32.mrb[0].mxu0
      %v1178 = vadd.f32 0.0, %v1177
      %v1179 = vpop.f32.mrb[0].mxu0
      %v1180 = vpop.f32.mrb[0].mxu0
      %v1181 = vadd.f32 0.0, %v1180
      %v1182 = vpop.f32.mrb[0].mxu0
      %1183 = vmatprep.mubr.bf16.mxu0 0
      %1184 = vmatmul.mubr.bf16.gmra.mrb[0].mxu0 %v999
      %v1185 = vpop.f32.mrb[0].mxu0
      %v1186 = vadd.f32 0.0, %v1185
      %v1187 = vpop.f32.mrb[0].mxu0
      %v1188 = vpop.f32.mrb[0].mxu0
      %v1189 = vadd.f32 0.0, %v1188
      %v1190 = vpop.f32.mrb[0].mxu0
      %1191 = vmatprep.mubr.bf16.mxu0 0
      %1192 = vmatmul.mubr.bf16.gmra.mrb[0].mxu0 %v1000
      %v1193 = vpop.f32.mrb[0].mxu0
      %v1194 = vadd.f32 0.0, %v1193
      %v1195 = vpop.f32.mrb[0].mxu0
      %v1196 = vpop.f32.mrb[0].mxu0
      %v1197 = vadd.f32 0.0, %v1196
      %v1198 = vpop.f32.mrb[0].mxu0
      %1199 = vmatprep.mubr.bf16.mxu0 0
      %1200 = vmatmul.mubr.bf16.gmra.mrb[0].mxu0 %v1001
      %v1201 = vpop.f32.mrb[0].mxu0
      %v1202 = vadd.f32 0.0, %v1201
      %v1203 = vpop.f32.mrb[0].mxu0
      %v1204 = vpop.f32.mrb[0].mxu0
      %v1205 = vadd.f32 0.0, %v1204
      %v1206 = vpop.f32.mrb[0].mxu0
      %1207 = vmatprep.mubr.bf16.mxu0 0
      %1208 = vmatmul.mubr.bf16.gmra.mrb[0].mxu0 %v1002
      %v1209 = vpop.f32.mrb[0].mxu0
      %v1210 = vadd.f32 0.0, %v1209
      %v1211 = vpop.f32.mrb[0].mxu0
      %v1212 = vpop.f32.mrb[0].mxu0
      %v1213 = vadd.f32 0.0, %v1212
      %v1214 = vpop.f32.mrb[0].mxu0
      %1215 = vmatprep.mubr.bf16.mxu0 0
      %1216 = vmatmul.mubr.bf16.gmra.mrb[0].mxu0 %v1003
      %v1217 = vpop.f32.mrb[0].mxu0
      %v1218 = vadd.f32 0.0, %v1217
      %v1219 = vpop.f32.mrb[0].mxu0
      %v1220 = vpop.f32.mrb[0].mxu0
      %v1221 = vadd.f32 0.0, %v1220
      %v1222 = vpop.f32.mrb[0].mxu0
      %1223 = vmatprep.mubr.bf16.mxu0 0
      %1224 = vmatmul.mubr.bf16.gmra.mrb[0].mxu0 %v1004
      %v1225 = vpop.f32.mrb[0].mxu0
      %v1226 = vadd.f32 0.0, %v1225
      %v1227 = vpop.f32.mrb[0].mxu0
      %v1228 = vpop.f32.mrb[0].mxu0
      %v1229 = vadd.f32 0.0, %v1228
      %v1230 = vpop.f32.mrb[0].mxu0
      %1231 = vmatprep.mubr.bf16.mxu0 0
      %1232 = vmatmul.mubr.bf16.gmra.mrb[0].mxu0 %v1005
      %v1233 = vpop.f32.mrb[0].mxu0
      %v1234 = vadd.f32 0.0, %v1233
      %v1235 = vpop.f32.mrb[0].mxu0
      %v1236 = vpop.f32.mrb[0].mxu0
      %v1237 = vadd.f32 0.0, %v1236
      %v1238 = vpop.f32.mrb[0].mxu0
      %1239 = vmatprep.mubr.bf16.mxu0 0
      %1240 = vmatmul.mubr.bf16.gmra.mrb[0].mxu0 %v1006
      %v1241 = vpop.f32.mrb[0].mxu0
      %v1242 = vadd.f32 0.0, %v1241
      %v1243 = vpop.f32.mrb[0].mxu0
      %v1244 = vpop.f32.mrb[0].mxu0
      %v1245 = vadd.f32 0.0, %v1244
      %v1246 = vpop.f32.mrb[0].mxu0
      %1247 = vmatprep.mubr.bf16.mxu0 0
      %1248 = vmatmul.mubr.bf16.gmra.mrb[0].mxu0 %v1007
      %v1249 = vpop.f32.mrb[0].mxu0
      %v1250 = vadd.f32 0.0, %v1249
      %v1251 = vpop.f32.mrb[0].mxu0
      %v1252 = vpop.f32.mrb[0].mxu0
      %v1253 = vadd.f32 0.0, %v1252
      %v1254 = vpop.f32.mrb[0].mxu0
      %1255 = vmatprep.mubr.bf16.mxu0 0
      %1256 = vmatmul.mubr.bf16.gmra.mrb[0].mxu0 %v1008
      %v1257 = vpop.f32.mrb[0].mxu0
      %v1258 = vadd.f32 0.0, %v1257
      %v1259 = vpop.f32.mrb[0].mxu0
      %v1260 = vpop.f32.mrb[0].mxu0
      %v1261 = vadd.f32 0.0, %v1260
      %v1262 = vpop.f32.mrb[0].mxu0
      %1263 = vmatprep.mubr.bf16.mxu0 0
      %1264 = vmatmul.mubr.bf16.gmra.mrb[0].mxu0 %v1009
      %v1265 = vpop.f32.mrb[0].mxu0
      %v1266 = vadd.f32 0.0, %v1265
      %v1267 = vpop.f32.mrb[0].mxu0
      %v1268 = vpop.f32.mrb[0].mxu0
      %v1269 = vadd.f32 0.0, %v1268
      %v1270 = vpop.f32.mrb[0].mxu0
      %1271 = vmatprep.mubr.bf16.mxu0 0
      %1272 = vmatmul.mubr.bf16.gmra.mrb[0].mxu0 %v1010
      %v1273 = vpop.f32.mrb[0].mxu0
      %v1274 = vadd.f32 0.0, %v1273
      %v1275 = vpop.f32.mrb[0].mxu0
      %v1276 = vpop.f32.mrb[0].mxu0
      %v1277 = vadd.f32 0.0, %v1276
      %v1278 = vpop.f32.mrb[0].mxu0
      %1279 = vmatprep.mubr.bf16.mxu0 0
      %1280 = vmatmul.mubr.bf16.gmra.mrb[0].mxu0 %v1011
      %v1281 = vpop.f32.mrb[0].mxu0
      %v1282 = vadd.f32 0.0, %v1281
      %v1283 = vpop.f32.mrb[0].mxu0
      %v1284 = vpop.f32.mrb[0].mxu0
      %v1285 = vadd.f32 0.0, %v1284
      %v1286 = vpop.f32.mrb[0].mxu0
      %1287 = vmatprep.mubr.bf16.mxu0 0
      %1288 = vmatmul.mubr.bf16.gmra.mrb[0].mxu0 %v1012
      %v1289 = vpop.f32.mrb[0].mxu0
      %v1290 = vadd.f32 0.0, %v1289
      %v1291 = vpop.f32.mrb[0].mxu0
      %v1292 = vpop.f32.mrb[0].mxu0
      %v1293 = vadd.f32 0.0, %v1292
      %v1294 = vpop.f32.mrb[0].mxu0
      %1295 = vmatprep.mubr.bf16.mxu0 0
      %1296 = vmatmul.mubr.bf16.gmra.mrb[0].mxu0 %v1013
      %v1297 = vpop.f32.mrb[0].mxu0
      %v1298 = vadd.f32 0.0, %v1297
      %v1299 = vpop.f32.mrb[0].mxu0
      %v1300 = vpop.f32.mrb[0].mxu0
      %v1301 = vadd.f32 0.0, %v1300
      %v1302 = vpop.f32.mrb[0].mxu0
      %1303 = vdwg.mxu0
      %v1304 = vadd.f32 %v752, %v1114
      %v1305 = vadd.f32 %v755, %v1117
      %v1306 = vadd.f32 %v760, %v1122
      %v1307 = vadd.f32 %v763, %v1125
      %v1308 = vadd.f32 %v768, %v1130
      %v1309 = vadd.f32 %v771, %v1133
      %v1310 = vadd.f32 %v776, %v1138
      %v1311 = vadd.f32 %v779, %v1141
      %v1312 = vadd.f32 %v784, %v1146
      %v1313 = vadd.f32 %v787, %v1149
      %v1314 = vadd.f32 %v792, %v1154
      %v1315 = vadd.f32 %v795, %v1157
      %v1316 = vadd.f32 %v800, %v1162
      %v1317 = vadd.f32 %v803, %v1165
      %v1318 = vadd.f32 %v808, %v1170
      %v1319 = vadd.f32 %v811, %v1173
      %v1320 = vadd.f32 %v816, %v1178
      %v1321 = vadd.f32 %v819, %v1181
      %v1322 = vadd.f32 %v824, %v1186
      %v1323 = vadd.f32 %v827, %v1189
      %v1324 = vadd.f32 %v832, %v1194
      %v1325 = vadd.f32 %v835, %v1197
      %v1326 = vadd.f32 %v840, %v1202
      %v1327 = vadd.f32 %v843, %v1205
      %v1328 = vadd.f32 %v848, %v1210
      %v1329 = vadd.f32 %v851, %v1213
      %v1330 = vadd.f32 %v856, %v1218
      %v1331 = vadd.f32 %v859, %v1221
      %v1332 = vadd.f32 %v864, %v1226
      %v1333 = vadd.f32 %v867, %v1229
      %v1334 = vadd.f32 %v872, %v1234
      %v1335 = vadd.f32 %v875, %v1237
      %v1336 = vadd.f32 %v880, %v1242
      %v1337 = vadd.f32 %v883, %v1245
      %v1338 = vadd.f32 %v888, %v1250
      %v1339 = vadd.f32 %v891, %v1253
      %v1340 = vadd.f32 %v896, %v1258
      %v1341 = vadd.f32 %v899, %v1261
      %v1342 = vadd.f32 %v904, %v1266
      %v1343 = vadd.f32 %v907, %v1269
      %v1344 = vadd.f32 %v912, %v1274
      %v1345 = vadd.f32 %v915, %v1277
      %v1346 = vadd.f32 %v920, %v1282
      %v1347 = vadd.f32 %v923, %v1285
      %v1348 = vadd.f32 %v928, %v1290
      %v1349 = vadd.f32 %v931, %v1293
      %v1350 = vadd.f32 %v936, %v1298
      %v1351 = vadd.f32 %v939, %v1301
      %v1352 = vld [vmem:[%s204 + $0x18] sm:$0xff]
      %v1353 = vld [vmem:[%s204 + $0x20] sm:$0xff]
      %v1354 = vld [vmem:[%s204 + $0x28] sm:$0xff]
      %v1355 = vld [vmem:[%s204 + $0x30] sm:$0xff]
      %v1356 = vld [vmem:[%s204 + $0x38] sm:$0xff]
      %v1357 = vld [vmem:[%s204 + $0x40] sm:$0xff]
      %v1358 = vld [vmem:[%s204 + $0x48] sm:$0xff]
      %v1359 = vld [vmem:[%s204 + $0x50] sm:$0xff]
      %v1360 = vld [vmem:[%s204 + $0x58] sm:$0xff]
      %v1361 = vld [vmem:[%s204 + $0x60] sm:$0xff]
      %v1362 = vld [vmem:[%s204 + $0x68] sm:$0xff]
      %v1363 = vld [vmem:[%s204 + $0x70] sm:$0xff]
      %v1364 = vld [vmem:[%s204 + $0x78] sm:$0xff]
      %v1365 = vld [vmem:[%s204 + $0x80] sm:$0xff]
      %v1366 = vld [vmem:[%s204 + $0x88] sm:$0xff]
      %v1367 = vld [vmem:[%s204 + $0x90] sm:$0xff]
      %v1368 = vld [vmem:[%s204 + $0x98] sm:$0xff]
      %v1369 = vld [vmem:[%s204 + $0xa0] sm:$0xff]
      %v1370 = vld [vmem:[%s204 + $0xa8] sm:$0xff]
      %v1371 = vld [vmem:[%s204 + $0xb0] sm:$0xff]
      %v1372 = vld [vmem:[%s204 + $0xb8] sm:$0xff]
      %v1373 = vld [vmem:[%s204 + $0xc0] sm:$0xff]
      %v1374 = vld [vmem:[%s204 + $0xc8] sm:$0xff]
      %v1375 = vld [vmem:[%s204 + $0xd0] sm:$0xff]
      %v1376 = vld [vmem:[%s204 + $0xd8] sm:$0xff]
      %v1377 = vld [vmem:[%s204 + $0xe0] sm:$0xff]
      %v1378 = vld [vmem:[%s204 + $0xe8] sm:$0xff]
      %v1379 = vld [vmem:[%s204 + $0xf0] sm:$0xff]
      %v1380 = vld [vmem:[%s204 + $0xf8] sm:$0xff]
      %v1381 = vld [vmem:[%s204 + $0x100] sm:$0xff]
      %v1382 = vld [vmem:[%s204 + $0x108] sm:$0xff]
      %v1383 = vld [vmem:[%s204 + $0x110] sm:$0xff]
      %v1384 = vld [vmem:[%s204 + $0x118] sm:$0xff]
      %v1385 = vld [vmem:[%s204 + $0x120] sm:$0xff]
      %v1386 = vld [vmem:[%s204 + $0x128] sm:$0xff]
      %v1387 = vld [vmem:[%s204 + $0x130] sm:$0xff]
      %v1388 = vld [vmem:[%s204 + $0x138] sm:$0xff]
      %v1389 = vld [vmem:[%s204 + $0x140] sm:$0xff]
      %v1390 = vld [vmem:[%s204 + $0x148] sm:$0xff]
      %v1391 = vld [vmem:[%s204 + $0x150] sm:$0xff]
      %v1392 = vld [vmem:[%s204 + $0x158] sm:$0xff]
      %v1393 = vld [vmem:[%s204 + $0x160] sm:$0xff]
      %v1394 = vld [vmem:[%s204 + $0x168] sm:$0xff]
      %v1395 = vld [vmem:[%s204 + $0x170] sm:$0xff]
      %v1396 = vld [vmem:[%s204 + $0x178] sm:$0xff]
      %v1397 = vld [vmem:[%s204 + $0x180] sm:$0xff]
      %v1398 = vld [vmem:[%s204 + $0x188] sm:$0xff]
      %v1399 = vld [vmem:[%s204 + $0x190] sm:$0xff]
      %v1400 = vpack.c.bf16 %v1353, %v1352
      %v1401 = vpack.c.bf16 %v1355, %v1354
      %v1402 = vpack.c.bf16 %v1357, %v1356
      %v1403 = vpack.c.bf16 %v1359, %v1358
      %v1404 = vpack.c.bf16 %v1361, %v1360
      %v1405 = vpack.c.bf16 %v1363, %v1362
      %v1406 = vpack.c.bf16 %v1365, %v1364
      %v1407 = vpack.c.bf16 %v1367, %v1366
      %v1408 = vpack.c.bf16 %v1369, %v1368
      %v1409 = vpack.c.bf16 %v1371, %v1370
      %v1410 = vpack.c.bf16 %v1373, %v1372
      %v1411 = vpack.c.bf16 %v1375, %v1374
      %v1412 = vpack.c.bf16 %v1377, %v1376
      %v1413 = vpack.c.bf16 %v1379, %v1378
      %v1414 = vpack.c.bf16 %v1381, %v1380
      %v1415 = vpack.c.bf16 %v1383, %v1382
      %v1416 = vpack.c.bf16 %v1385, %v1384
      %v1417 = vpack.c.bf16 %v1387, %v1386
      %v1418 = vpack.c.bf16 %v1389, %v1388
      %v1419 = vpack.c.bf16 %v1391, %v1390
      %v1420 = vpack.c.bf16 %v1393, %v1392
      %v1421 = vpack.c.bf16 %v1395, %v1394
      %v1422 = vpack.c.bf16 %v1397, %v1396
      %v1423 = vpack.c.bf16 %v1399, %v1398
      %s1424 = scalar_lea.vmem %s208, 192
      %v1425 = vld [vmem:[%s1424] sm:$0xf]
      %v1426 = vld [vmem:[%s1424 + $0x4] sm:$0xf]
      %v1427 = vld [vmem:[%s1424 + $0x8] sm:$0xf]
      %v1428 = vld [vmem:[%s1424 + $0xc] sm:$0xf]
      %v1429 = vld [vmem:[%s1424 + $0x10] sm:$0xf]
      %v1430 = vld [vmem:[%s1424 + $0x14] sm:$0xf]
      %v1431 = vld [vmem:[%s1424 + $0x18] sm:$0xf]
      %v1432 = vld [vmem:[%s1424 + $0x1c] sm:$0xf]
      %v1433 = vld [vmem:[%s1424 + $0x20] sm:$0xf]
      %v1434 = vld [vmem:[%s1424 + $0x24] sm:$0xf]
      %v1435 = vld [vmem:[%s1424 + $0x28] sm:$0xf]
      %v1436 = vld [vmem:[%s1424 + $0x2c] sm:$0xf]
      %v1437 = vld [vmem:[%s1424 + $0x30] sm:$0xf]
      %v1438 = vld [vmem:[%s1424 + $0x34] sm:$0xf]
      %v1439 = vld [vmem:[%s1424 + $0x38] sm:$0xf]
      %v1440 = vld [vmem:[%s1424 + $0x3c] sm:$0xf]
      %v1457 = vunpack.c.l.b16 %v1425
      %v1458 = vunpack.c.l.b16 %v1426
      %v1459 = vunpack.c.l.b16 %v1427
      %v1460 = vunpack.c.l.b16 %v1428
      %v1461 = vunpack.c.l.b16 %v1429
      %v1462 = vunpack.c.l.b16 %v1430
      %v1463 = vunpack.c.l.b16 %v1431
      %v1464 = vunpack.c.l.b16 %v1432
      %v1465 = vunpack.c.l.b16 %v1433
      %v1466 = vunpack.c.l.b16 %v1434
      %v1467 = vunpack.c.l.b16 %v1435
      %v1468 = vunpack.c.l.b16 %v1436
      %v1469 = vunpack.c.l.b16 %v1437
      %v1470 = vunpack.c.l.b16 %v1438
      %v1471 = vunpack.c.l.b16 %v1439
      %v1472 = vunpack.c.l.b16 %v1440
      %v1473 = vpack.c.b16 %v1458, %v1457
      %v1474 = vpack.c.b16 %v1460, %v1459
      %v1475 = vpack.c.b16 %v1462, %v1461
      %v1476 = vpack.c.b16 %v1464, %v1463
      %v1477 = vpack.c.b16 %v1466, %v1465
      %v1478 = vpack.c.b16 %v1468, %v1467
      %v1479 = vpack.c.b16 %v1470, %v1469
      %v1480 = vpack.c.b16 %v1472, %v1471
      %1489 = vmatprep.subr.bf16.mxu0 0
      %1490 = vmatpush1.bf16.msra.mxu0 %v1473
      %1491 = vmatprep.subr.bf16.mxu0 0
      %1492 = vmatpush1.bf16.msra.mxu0 %v1474
      %1493 = vmatprep.subr.bf16.mxu0 0
      %1494 = vmatpush1.bf16.msra.mxu0 %v1475
      %1495 = vmatprep.subr.bf16.mxu0 0
      %1496 = vmatpush1.bf16.msra.mxu0 %v1476
      %1497 = vmatprep.subr.bf16.mxu0 0
      %1498 = vmatpush1.bf16.msra.mxu0 %v1477
      %1499 = vmatprep.subr.bf16.mxu0 0
      %1500 = vmatpush1.bf16.msra.mxu0 %v1478
      %1501 = vmatprep.subr.bf16.mxu0 0
      %1502 = vmatpush1.bf16.msra.mxu0 %v1479
      %1503 = vmatprep.subr.bf16.mxu0 0
      %1504 = vmatpush1.bf16.msra.mxu0 %v1480
      %1505 = vmatprep.subr.bf16.mxu0 0
      %1506 = vmatpush1.bf16.msra.mxu0 0
      %1507 = vmatprep.subr.bf16.mxu0 0
      %1508 = vmatpush1.bf16.msra.mxu0 0
      %1509 = vmatprep.subr.bf16.mxu0 0
      %1510 = vmatpush1.bf16.msra.mxu0 0
      %1511 = vmatprep.subr.bf16.mxu0 0
      %1512 = vmatpush1.bf16.msra.mxu0 0
      %1513 = vmatprep.subr.bf16.mxu0 0
      %1514 = vmatpush1.bf16.msra.mxu0 0
      %1515 = vmatprep.subr.bf16.mxu0 0
      %1516 = vmatpush1.bf16.msra.mxu0 0
      %1517 = vmatprep.subr.bf16.mxu0 0
      %1518 = vmatpush1.bf16.msra.mxu0 0
      %1519 = vmatprep.subr.bf16.mxu0 0
      %1520 = vmatpush1.bf16.msra.mxu0 0
      %1521 = vmatprep.mubr.bf16.mxu0 0
      %1522 = vmatmul.mubr.bf16.gmra.mrb[0].mxu0 %v1400
      %v1523 = vpop.f32.mrb[0].mxu0
      %v1524 = vadd.f32 0.0, %v1523
      %v1525 = vpop.f32.mrb[0].mxu0
      %v1526 = vpop.f32.mrb[0].mxu0
      %v1527 = vadd.f32 0.0, %v1526
      %v1528 = vpop.f32.mrb[0].mxu0
      %1529 = vmatprep.mubr.bf16.mxu0 0
      %1530 = vmatmul.mubr.bf16.gmra.mrb[0].mxu0 %v1401
      %v1531 = vpop.f32.mrb[0].mxu0
      %v1532 = vadd.f32 0.0, %v1531
      %v1533 = vpop.f32.mrb[0].mxu0
      %v1534 = vpop.f32.mrb[0].mxu0
      %v1535 = vadd.f32 0.0, %v1534
      %v1536 = vpop.f32.mrb[0].mxu0
      %1537 = vmatprep.mubr.bf16.mxu0 0
      %1538 = vmatmul.mubr.bf16.gmra.mrb[0].mxu0 %v1402
      %v1539 = vpop.f32.mrb[0].mxu0
      %v1540 = vadd.f32 0.0, %v1539
      %v1541 = vpop.f32.mrb[0].mxu0
      %v1542 = vpop.f32.mrb[0].mxu0
      %v1543 = vadd.f32 0.0, %v1542
      %v1544 = vpop.f32.mrb[0].mxu0
      %1545 = vmatprep.mubr.bf16.mxu0 0
      %1546 = vmatmul.mubr.bf16.gmra.mrb[0].mxu0 %v1403
      %v1547 = vpop.f32.mrb[0].mxu0
      %v1548 = vadd.f32 0.0, %v1547
      %v1549 = vpop.f32.mrb[0].mxu0
      %v1550 = vpop.f32.mrb[0].mxu0
      %v1551 = vadd.f32 0.0, %v1550
      %v1552 = vpop.f32.mrb[0].mxu0
      %1553 = vmatprep.mubr.bf16.mxu0 0
      %1554 = vmatmul.mubr.bf16.gmra.mrb[0].mxu0 %v1404
      %v1555 = vpop.f32.mrb[0].mxu0
      %v1556 = vadd.f32 0.0, %v1555
      %v1557 = vpop.f32.mrb[0].mxu0
      %v1558 = vpop.f32.mrb[0].mxu0
      %v1559 = vadd.f32 0.0, %v1558
      %v1560 = vpop.f32.mrb[0].mxu0
      %1561 = vmatprep.mubr.bf16.mxu0 0
      %1562 = vmatmul.mubr.bf16.gmra.mrb[0].mxu0 %v1405
      %v1563 = vpop.f32.mrb[0].mxu0
      %v1564 = vadd.f32 0.0, %v1563
      %v1565 = vpop.f32.mrb[0].mxu0
      %v1566 = vpop.f32.mrb[0].mxu0
      %v1567 = vadd.f32 0.0, %v1566
      %v1568 = vpop.f32.mrb[0].mxu0
      %1569 = vmatprep.mubr.bf16.mxu0 0
      %1570 = vmatmul.mubr.bf16.gmra.mrb[0].mxu0 %v1406
      %v1571 = vpop.f32.mrb[0].mxu0
      %v1572 = vadd.f32 0.0, %v1571
      %v1573 = vpop.f32.mrb[0].mxu0
      %v1574 = vpop.f32.mrb[0].mxu0
      %v1575 = vadd.f32 0.0, %v1574
      %v1576 = vpop.f32.mrb[0].mxu0
      %1577 = vmatprep.mubr.bf16.mxu0 0
      %1578 = vmatmul.mubr.bf16.gmra.mrb[0].mxu0 %v1407
      %v1579 = vpop.f32.mrb[0].mxu0
      %v1580 = vadd.f32 0.0, %v1579
      %v1581 = vpop.f32.mrb[0].mxu0
      %v1582 = vpop.f32.mrb[0].mxu0
      %v1583 = vadd.f32 0.0, %v1582
      %v1584 = vpop.f32.mrb[0].mxu0
      %1585 = vmatprep.mubr.bf16.mxu0 0
      %1586 = vmatmul.mubr.bf16.gmra.mrb[0].mxu0 %v1408
      %v1587 = vpop.f32.mrb[0].mxu0
      %v1588 = vadd.f32 0.0, %v1587
      %v1589 = vpop.f32.mrb[0].mxu0
      %v1590 = vpop.f32.mrb[0].mxu0
      %v1591 = vadd.f32 0.0, %v1590
      %v1592 = vpop.f32.mrb[0].mxu0
      %1593 = vmatprep.mubr.bf16.mxu0 0
      %1594 = vmatmul.mubr.bf16.gmra.mrb[0].mxu0 %v1409
      %v1595 = vpop.f32.mrb[0].mxu0
      %v1596 = vadd.f32 0.0, %v1595
      %v1597 = vpop.f32.mrb[0].mxu0
      %v1598 = vpop.f32.mrb[0].mxu0
      %v1599 = vadd.f32 0.0, %v1598
      %v1600 = vpop.f32.mrb[0].mxu0
      %1601 = vmatprep.mubr.bf16.mxu0 0
      %1602 = vmatmul.mubr.bf16.gmra.mrb[0].mxu0 %v1410
      %v1603 = vpop.f32.mrb[0].mxu0
      %v1604 = vadd.f32 0.0, %v1603
      %v1605 = vpop.f32.mrb[0].mxu0
      %v1606 = vpop.f32.mrb[0].mxu0
      %v1607 = vadd.f32 0.0, %v1606
      %v1608 = vpop.f32.mrb[0].mxu0
      %1609 = vmatprep.mubr.bf16.mxu0 0
      %1610 = vmatmul.mubr.bf16.gmra.mrb[0].mxu0 %v1411
      %v1611 = vpop.f32.mrb[0].mxu0
      %v1612 = vadd.f32 0.0, %v1611
      %v1613 = vpop.f32.mrb[0].mxu0
      %v1614 = vpop.f32.mrb[0].mxu0
      %v1615 = vadd.f32 0.0, %v1614
      %v1616 = vpop.f32.mrb[0].mxu0
      %1617 = vmatprep.mubr.bf16.mxu0 0
      %1618 = vmatmul.mubr.bf16.gmra.mrb[0].mxu0 %v1412
      %v1619 = vpop.f32.mrb[0].mxu0
      %v1620 = vadd.f32 0.0, %v1619
      %v1621 = vpop.f32.mrb[0].mxu0
      %v1622 = vpop.f32.mrb[0].mxu0
      %v1623 = vadd.f32 0.0, %v1622
      %v1624 = vpop.f32.mrb[0].mxu0
      %1625 = vmatprep.mubr.bf16.mxu0 0
      %1626 = vmatmul.mubr.bf16.gmra.mrb[0].mxu0 %v1413
      %v1627 = vpop.f32.mrb[0].mxu0
      %v1628 = vadd.f32 0.0, %v1627
      %v1629 = vpop.f32.mrb[0].mxu0
      %v1630 = vpop.f32.mrb[0].mxu0
      %v1631 = vadd.f32 0.0, %v1630
      %v1632 = vpop.f32.mrb[0].mxu0
      %1633 = vmatprep.mubr.bf16.mxu0 0
      %1634 = vmatmul.mubr.bf16.gmra.mrb[0].mxu0 %v1414
      %v1635 = vpop.f32.mrb[0].mxu0
      %v1636 = vadd.f32 0.0, %v1635
      %v1637 = vpop.f32.mrb[0].mxu0
      %v1638 = vpop.f32.mrb[0].mxu0
      %v1639 = vadd.f32 0.0, %v1638
      %v1640 = vpop.f32.mrb[0].mxu0
      %1641 = vmatprep.mubr.bf16.mxu0 0
      %1642 = vmatmul.mubr.bf16.gmra.mrb[0].mxu0 %v1415
      %v1643 = vpop.f32.mrb[0].mxu0
      %v1644 = vadd.f32 0.0, %v1643
      %v1645 = vpop.f32.mrb[0].mxu0
      %v1646 = vpop.f32.mrb[0].mxu0
      %v1647 = vadd.f32 0.0, %v1646
      %v1648 = vpop.f32.mrb[0].mxu0
      %1649 = vmatprep.mubr.bf16.mxu0 0
      %1650 = vmatmul.mubr.bf16.gmra.mrb[0].mxu0 %v1416
      %v1651 = vpop.f32.mrb[0].mxu0
      %v1652 = vadd.f32 0.0, %v1651
      %v1653 = vpop.f32.mrb[0].mxu0
      %v1654 = vpop.f32.mrb[0].mxu0
      %v1655 = vadd.f32 0.0, %v1654
      %v1656 = vpop.f32.mrb[0].mxu0
      %1657 = vmatprep.mubr.bf16.mxu0 0
      %1658 = vmatmul.mubr.bf16.gmra.mrb[0].mxu0 %v1417
      %v1659 = vpop.f32.mrb[0].mxu0
      %v1660 = vadd.f32 0.0, %v1659
      %v1661 = vpop.f32.mrb[0].mxu0
      %v1662 = vpop.f32.mrb[0].mxu0
      %v1663 = vadd.f32 0.0, %v1662
      %v1664 = vpop.f32.mrb[0].mxu0
      %1665 = vmatprep.mubr.bf16.mxu0 0
      %1666 = vmatmul.mubr.bf16.gmra.mrb[0].mxu0 %v1418
      %v1667 = vpop.f32.mrb[0].mxu0
      %v1668 = vadd.f32 0.0, %v1667
      %v1669 = vpop.f32.mrb[0].mxu0
      %v1670 = vpop.f32.mrb[0].mxu0
      %v1671 = vadd.f32 0.0, %v1670
      %v1672 = vpop.f32.mrb[0].mxu0
      %1673 = vmatprep.mubr.bf16.mxu0 0
      %1674 = vmatmul.mubr.bf16.gmra.mrb[0].mxu0 %v1419
      %v1675 = vpop.f32.mrb[0].mxu0
      %v1676 = vadd.f32 0.0, %v1675
      %v1677 = vpop.f32.mrb[0].mxu0
      %v1678 = vpop.f32.mrb[0].mxu0
      %v1679 = vadd.f32 0.0, %v1678
      %v1680 = vpop.f32.mrb[0].mxu0
      %1681 = vmatprep.mubr.bf16.mxu0 0
      %1682 = vmatmul.mubr.bf16.gmra.mrb[0].mxu0 %v1420
      %v1683 = vpop.f32.mrb[0].mxu0
      %v1684 = vadd.f32 0.0, %v1683
      %v1685 = vpop.f32.mrb[0].mxu0
      %v1686 = vpop.f32.mrb[0].mxu0
      %v1687 = vadd.f32 0.0, %v1686
      %v1688 = vpop.f32.mrb[0].mxu0
      %1689 = vmatprep.mubr.bf16.mxu0 0
      %1690 = vmatmul.mubr.bf16.gmra.mrb[0].mxu0 %v1421
      %v1691 = vpop.f32.mrb[0].mxu0
      %v1692 = vadd.f32 0.0, %v1691
      %v1693 = vpop.f32.mrb[0].mxu0
      %v1694 = vpop.f32.mrb[0].mxu0
      %v1695 = vadd.f32 0.0, %v1694
      %v1696 = vpop.f32.mrb[0].mxu0
      %1697 = vmatprep.mubr.bf16.mxu0 0
      %1698 = vmatmul.mubr.bf16.gmra.mrb[0].mxu0 %v1422
      %v1699 = vpop.f32.mrb[0].mxu0
      %v1700 = vadd.f32 0.0, %v1699
      %v1701 = vpop.f32.mrb[0].mxu0
      %v1702 = vpop.f32.mrb[0].mxu0
      %v1703 = vadd.f32 0.0, %v1702
      %v1704 = vpop.f32.mrb[0].mxu0
      %1705 = vmatprep.mubr.bf16.mxu0 0
      %1706 = vmatmul.mubr.bf16.gmra.mrb[0].mxu0 %v1423
      %v1707 = vpop.f32.mrb[0].mxu0
      %v1708 = vadd.f32 0.0, %v1707
      %v1709 = vpop.f32.mrb[0].mxu0
      %v1710 = vpop.f32.mrb[0].mxu0
      %v1711 = vadd.f32 0.0, %v1710
      %v1712 = vpop.f32.mrb[0].mxu0
      %1713 = vdwg.mxu0
      %v1714 = vadd.f32 %v1304, %v1524
      %v1715 = vadd.f32 %v1305, %v1527
      %v1716 = vadd.f32 %v1306, %v1532
      %v1717 = vadd.f32 %v1307, %v1535
      %v1718 = vadd.f32 %v1308, %v1540
      %v1719 = vadd.f32 %v1309, %v1543
      %v1720 = vadd.f32 %v1310, %v1548
      %v1721 = vadd.f32 %v1311, %v1551
      %v1722 = vadd.f32 %v1312, %v1556
      %v1723 = vadd.f32 %v1313, %v1559
      %v1724 = vadd.f32 %v1314, %v1564
      %v1725 = vadd.f32 %v1315, %v1567
      %v1726 = vadd.f32 %v1316, %v1572
      %v1727 = vadd.f32 %v1317, %v1575
      %v1728 = vadd.f32 %v1318, %v1580
      %v1729 = vadd.f32 %v1319, %v1583
      %v1730 = vadd.f32 %v1320, %v1588
      %v1731 = vadd.f32 %v1321, %v1591
      %v1732 = vadd.f32 %v1322, %v1596
      %v1733 = vadd.f32 %v1323, %v1599
      %v1734 = vadd.f32 %v1324, %v1604
      %v1735 = vadd.f32 %v1325, %v1607
      %v1736 = vadd.f32 %v1326, %v1612
      %v1737 = vadd.f32 %v1327, %v1615
      %v1738 = vadd.f32 %v1328, %v1620
      %v1739 = vadd.f32 %v1329, %v1623
      %v1740 = vadd.f32 %v1330, %v1628
      %v1741 = vadd.f32 %v1331, %v1631
      %v1742 = vadd.f32 %v1332, %v1636
      %v1743 = vadd.f32 %v1333, %v1639
      %v1744 = vadd.f32 %v1334, %v1644
      %v1745 = vadd.f32 %v1335, %v1647
      %v1746 = vadd.f32 %v1336, %v1652
      %v1747 = vadd.f32 %v1337, %v1655
      %v1748 = vadd.f32 %v1338, %v1660
      %v1749 = vadd.f32 %v1339, %v1663
      %v1750 = vadd.f32 %v1340, %v1668
      %v1751 = vadd.f32 %v1341, %v1671
      %v1752 = vadd.f32 %v1342, %v1676
      %v1753 = vadd.f32 %v1343, %v1679
      %v1754 = vadd.f32 %v1344, %v1684
      %v1755 = vadd.f32 %v1345, %v1687
      %v1756 = vadd.f32 %v1346, %v1692
      %v1757 = vadd.f32 %v1347, %v1695
      %v1758 = vadd.f32 %v1348, %v1700
      %v1759 = vadd.f32 %v1349, %v1703
      %v1760 = vadd.f32 %v1350, %v1708
      %v1761 = vadd.f32 %v1351, %v1711
      %v1762 = vld [vmem:[%s204 + $0x19] sm:$0xff]
      %v1763 = vld [vmem:[%s204 + $0x21] sm:$0xff]
      %v1764 = vld [vmem:[%s204 + $0x29] sm:$0xff]
      %v1765 = vld [vmem:[%s204 + $0x31] sm:$0xff]
      %v1766 = vld [vmem:[%s204 + $0x39] sm:$0xff]
      %v1767 = vld [vmem:[%s204 + $0x41] sm:$0xff]
      %v1768 = vld [vmem:[%s204 + $0x49] sm:$0xff]
      %v1769 = vld [vmem:[%s204 + $0x51] sm:$0xff]
      %v1770 = vld [vmem:[%s204 + $0x59] sm:$0xff]
      %v1771 = vld [vmem:[%s204 + $0x61] sm:$0xff]
      %v1772 = vld [vmem:[%s204 + $0x69] sm:$0xff]
      %v1773 = vld [vmem:[%s204 + $0x71] sm:$0xff]
      %v1774 = vld [vmem:[%s204 + $0x79] sm:$0xff]
      %v1775 = vld [vmem:[%s204 + $0x81] sm:$0xff]
      %v1776 = vld [vmem:[%s204 + $0x89] sm:$0xff]
      %v1777 = vld [vmem:[%s204 + $0x91] sm:$0xff]
      %v1778 = vld [vmem:[%s204 + $0x99] sm:$0xff]
      %v1779 = vld [vmem:[%s204 + $0xa1] sm:$0xff]
      %v1780 = vld [vmem:[%s204 + $0xa9] sm:$0xff]
      %v1781 = vld [vmem:[%s204 + $0xb1] sm:$0xff]
      %v1782 = vld [vmem:[%s204 + $0xb9] sm:$0xff]
      %v1783 = vld [vmem:[%s204 + $0xc1] sm:$0xff]
      %v1784 = vld [vmem:[%s204 + $0xc9] sm:$0xff]
      %v1785 = vld [vmem:[%s204 + $0xd1] sm:$0xff]
      %v1786 = vld [vmem:[%s204 + $0xd9] sm:$0xff]
      %v1787 = vld [vmem:[%s204 + $0xe1] sm:$0xff]
      %v1788 = vld [vmem:[%s204 + $0xe9] sm:$0xff]
      %v1789 = vld [vmem:[%s204 + $0xf1] sm:$0xff]
      %v1790 = vld [vmem:[%s204 + $0xf9] sm:$0xff]
      %v1791 = vld [vmem:[%s204 + $0x101] sm:$0xff]
      %v1792 = vld [vmem:[%s204 + $0x109] sm:$0xff]
      %v1793 = vld [vmem:[%s204 + $0x111] sm:$0xff]
      %v1794 = vld [vmem:[%s204 + $0x119] sm:$0xff]
      %v1795 = vld [vmem:[%s204 + $0x121] sm:$0xff]
      %v1796 = vld [vmem:[%s204 + $0x129] sm:$0xff]
      %v1797 = vld [vmem:[%s204 + $0x131] sm:$0xff]
      %v1798 = vld [vmem:[%s204 + $0x139] sm:$0xff]
      %v1799 = vld [vmem:[%s204 + $0x141] sm:$0xff]
      %v1800 = vld [vmem:[%s204 + $0x149] sm:$0xff]
      %v1801 = vld [vmem:[%s204 + $0x151] sm:$0xff]
      %v1802 = vld [vmem:[%s204 + $0x159] sm:$0xff]
      %v1803 = vld [vmem:[%s204 + $0x161] sm:$0xff]
      %v1804 = vld [vmem:[%s204 + $0x169] sm:$0xff]
      %v1805 = vld [vmem:[%s204 + $0x171] sm:$0xff]
      %v1806 = vld [vmem:[%s204 + $0x179] sm:$0xff]
      %v1807 = vld [vmem:[%s204 + $0x181] sm:$0xff]
      %v1808 = vld [vmem:[%s204 + $0x189] sm:$0xff]
      %v1809 = vld [vmem:[%s204 + $0x191] sm:$0xff]
      %v1810 = vpack.c.bf16 %v1763, %v1762
      %v1811 = vpack.c.bf16 %v1765, %v1764
      %v1812 = vpack.c.bf16 %v1767, %v1766
      %v1813 = vpack.c.bf16 %v1769, %v1768
      %v1814 = vpack.c.bf16 %v1771, %v1770
      %v1815 = vpack.c.bf16 %v1773, %v1772
      %v1816 = vpack.c.bf16 %v1775, %v1774
      %v1817 = vpack.c.bf16 %v1777, %v1776
      %v1818 = vpack.c.bf16 %v1779, %v1778
      %v1819 = vpack.c.bf16 %v1781, %v1780
      %v1820 = vpack.c.bf16 %v1783, %v1782
      %v1821 = vpack.c.bf16 %v1785, %v1784
      %v1822 = vpack.c.bf16 %v1787, %v1786
      %v1823 = vpack.c.bf16 %v1789, %v1788
      %v1824 = vpack.c.bf16 %v1791, %v1790
      %v1825 = vpack.c.bf16 %v1793, %v1792
      %v1826 = vpack.c.bf16 %v1795, %v1794
      %v1827 = vpack.c.bf16 %v1797, %v1796
      %v1828 = vpack.c.bf16 %v1799, %v1798
      %v1829 = vpack.c.bf16 %v1801, %v1800
      %v1830 = vpack.c.bf16 %v1803, %v1802
      %v1831 = vpack.c.bf16 %v1805, %v1804
      %v1832 = vpack.c.bf16 %v1807, %v1806
      %v1833 = vpack.c.bf16 %v1809, %v1808
      %s1834 = scalar_lea.vmem %s208, 256
      %v1835 = vld [vmem:[%s1834] sm:$0xf]
      %v1836 = vld [vmem:[%s1834 + $0x4] sm:$0xf]
      %v1837 = vld [vmem:[%s1834 + $0x8] sm:$0xf]
      %v1838 = vld [vmem:[%s1834 + $0xc] sm:$0xf]
      %v1839 = vld [vmem:[%s1834 + $0x10] sm:$0xf]
      %v1840 = vld [vmem:[%s1834 + $0x14] sm:$0xf]
      %v1841 = vld [vmem:[%s1834 + $0x18] sm:$0xf]
      %v1842 = vld [vmem:[%s1834 + $0x1c] sm:$0xf]
      %v1843 = vld [vmem:[%s1834 + $0x20] sm:$0xf]
      %v1844 = vld [vmem:[%s1834 + $0x24] sm:$0xf]
      %v1845 = vld [vmem:[%s1834 + $0x28] sm:$0xf]
      %v1846 = vld [vmem:[%s1834 + $0x2c] sm:$0xf]
      %v1847 = vld [vmem:[%s1834 + $0x30] sm:$0xf]
      %v1848 = vld [vmem:[%s1834 + $0x34] sm:$0xf]
      %v1849 = vld [vmem:[%s1834 + $0x38] sm:$0xf]
      %v1850 = vld [vmem:[%s1834 + $0x3c] sm:$0xf]
      %v1867 = vunpack.c.l.b16 %v1835
      %v1868 = vunpack.c.l.b16 %v1836
      %v1869 = vunpack.c.l.b16 %v1837
      %v1870 = vunpack.c.l.b16 %v1838
      %v1871 = vunpack.c.l.b16 %v1839
      %v1872 = vunpack.c.l.b16 %v1840
      %v1873 = vunpack.c.l.b16 %v1841
      %v1874 = vunpack.c.l.b16 %v1842
      %v1875 = vunpack.c.l.b16 %v1843
      %v1876 = vunpack.c.l.b16 %v1844
      %v1877 = vunpack.c.l.b16 %v1845
      %v1878 = vunpack.c.l.b16 %v1846
      %v1879 = vunpack.c.l.b16 %v1847
      %v1880 = vunpack.c.l.b16 %v1848
      %v1881 = vunpack.c.l.b16 %v1849
      %v1882 = vunpack.c.l.b16 %v1850
      %v1883 = vpack.c.b16 %v1868, %v1867
      %v1884 = vpack.c.b16 %v1870, %v1869
      %v1885 = vpack.c.b16 %v1872, %v1871
      %v1886 = vpack.c.b16 %v1874, %v1873
      %v1887 = vpack.c.b16 %v1876, %v1875
      %v1888 = vpack.c.b16 %v1878, %v1877
      %v1889 = vpack.c.b16 %v1880, %v1879
      %v1890 = vpack.c.b16 %v1882, %v1881
      %1899 = vmatprep.subr.bf16.mxu0 0
      %1900 = vmatpush1.bf16.msra.mxu0 %v1883
      %1901 = vmatprep.subr.bf16.mxu0 0
      %1902 = vmatpush1.bf16.msra.mxu0 %v1884
      %1903 = vmatprep.subr.bf16.mxu0 0
      %1904 = vmatpush1.bf16.msra.mxu0 %v1885
      %1905 = vmatprep.subr.bf16.mxu0 0
      %1906 = vmatpush1.bf16.msra.mxu0 %v1886
      %1907 = vmatprep.subr.bf16.mxu0 0
      %1908 = vmatpush1.bf16.msra.mxu0 %v1887
      %1909 = vmatprep.subr.bf16.mxu0 0
      %1910 = vmatpush1.bf16.msra.mxu0 %v1888
      %1911 = vmatprep.subr.bf16.mxu0 0
      %1912 = vmatpush1.bf16.msra.mxu0 %v1889
      %1913 = vmatprep.subr.bf16.mxu0 0
      %1914 = vmatpush1.bf16.msra.mxu0 %v1890
      %1915 = vmatprep.subr.bf16.mxu0 0
      %1916 = vmatpush1.bf16.msra.mxu0 0
      %1917 = vmatprep.subr.bf16.mxu0 0
      %1918 = vmatpush1.bf16.msra.mxu0 0
      %1919 = vmatprep.subr.bf16.mxu0 0
      %1920 = vmatpush1.bf16.msra.mxu0 0
      %1921 = vmatprep.subr.bf16.mxu0 0
      %1922 = vmatpush1.bf16.msra.mxu0 0
      %1923 = vmatprep.subr.bf16.mxu0 0
      %1924 = vmatpush1.bf16.msra.mxu0 0
      %1925 = vmatprep.subr.bf16.mxu0 0
      %1926 = vmatpush1.bf16.msra.mxu0 0
      %1927 = vmatprep.subr.bf16.mxu0 0
      %1928 = vmatpush1.bf16.msra.mxu0 0
      %1929 = vmatprep.subr.bf16.mxu0 0
      %1930 = vmatpush1.bf16.msra.mxu0 0
      %1931 = vmatprep.mubr.bf16.mxu0 0
      %1932 = vmatmul.mubr.bf16.gmra.mrb[0].mxu0 %v1810
      %v1933 = vpop.f32.mrb[0].mxu0
      %v1934 = vadd.f32 0.0, %v1933
      %v1935 = vpop.f32.mrb[0].mxu0
      %v1936 = vpop.f32.mrb[0].mxu0
      %v1937 = vadd.f32 0.0, %v1936
      %v1938 = vpop.f32.mrb[0].mxu0
      %1939 = vmatprep.mubr.bf16.mxu0 0
      %1940 = vmatmul.mubr.bf16.gmra.mrb[0].mxu0 %v1811
      %v1941 = vpop.f32.mrb[0].mxu0
      %v1942 = vadd.f32 0.0, %v1941
      %v1943 = vpop.f32.mrb[0].mxu0
      %v1944 = vpop.f32.mrb[0].mxu0
      %v1945 = vadd.f32 0.0, %v1944
      %v1946 = vpop.f32.mrb[0].mxu0
      %1947 = vmatprep.mubr.bf16.mxu0 0
      %1948 = vmatmul.mubr.bf16.gmra.mrb[0].mxu0 %v1812
      %v1949 = vpop.f32.mrb[0].mxu0
      %v1950 = vadd.f32 0.0, %v1949
      %v1951 = vpop.f32.mrb[0].mxu0
      %v1952 = vpop.f32.mrb[0].mxu0
      %v1953 = vadd.f32 0.0, %v1952
      %v1954 = vpop.f32.mrb[0].mxu0
      %1955 = vmatprep.mubr.bf16.mxu0 0
      %1956 = vmatmul.mubr.bf16.gmra.mrb[0].mxu0 %v1813
      %v1957 = vpop.f32.mrb[0].mxu0
      %v1958 = vadd.f32 0.0, %v1957
      %v1959 = vpop.f32.mrb[0].mxu0
      %v1960 = vpop.f32.mrb[0].mxu0
      %v1961 = vadd.f32 0.0, %v1960
      %v1962 = vpop.f32.mrb[0].mxu0
      %1963 = vmatprep.mubr.bf16.mxu0 0
      %1964 = vmatmul.mubr.bf16.gmra.mrb[0].mxu0 %v1814
      %v1965 = vpop.f32.mrb[0].mxu0
      %v1966 = vadd.f32 0.0, %v1965
      %v1967 = vpop.f32.mrb[0].mxu0
      %v1968 = vpop.f32.mrb[0].mxu0
      %v1969 = vadd.f32 0.0, %v1968
      %v1970 = vpop.f32.mrb[0].mxu0
      %1971 = vmatprep.mubr.bf16.mxu0 0
      %1972 = vmatmul.mubr.bf16.gmra.mrb[0].mxu0 %v1815
      %v1973 = vpop.f32.mrb[0].mxu0
      %v1974 = vadd.f32 0.0, %v1973
      %v1975 = vpop.f32.mrb[0].mxu0
      %v1976 = vpop.f32.mrb[0].mxu0
      %v1977 = vadd.f32 0.0, %v1976
      %v1978 = vpop.f32.mrb[0].mxu0
      %1979 = vmatprep.mubr.bf16.mxu0 0
      %1980 = vmatmul.mubr.bf16.gmra.mrb[0].mxu0 %v1816
      %v1981 = vpop.f32.mrb[0].mxu0
      %v1982 = vadd.f32 0.0, %v1981
      %v1983 = vpop.f32.mrb[0].mxu0
      %v1984 = vpop.f32.mrb[0].mxu0
      %v1985 = vadd.f32 0.0, %v1984
      %v1986 = vpop.f32.mrb[0].mxu0
      %1987 = vmatprep.mubr.bf16.mxu0 0
      %1988 = vmatmul.mubr.bf16.gmra.mrb[0].mxu0 %v1817
      %v1989 = vpop.f32.mrb[0].mxu0
      %v1990 = vadd.f32 0.0, %v1989
      %v1991 = vpop.f32.mrb[0].mxu0
      %v1992 = vpop.f32.mrb[0].mxu0
      %v1993 = vadd.f32 0.0, %v1992
      %v1994 = vpop.f32.mrb[0].mxu0
      %1995 = vmatprep.mubr.bf16.mxu0 0
      %1996 = vmatmul.mubr.bf16.gmra.mrb[0].mxu0 %v1818
      %v1997 = vpop.f32.mrb[0].mxu0
      %v1998 = vadd.f32 0.0, %v1997
      %v1999 = vpop.f32.mrb[0].mxu0
      %v2000 = vpop.f32.mrb[0].mxu0
      %v2001 = vadd.f32 0.0, %v2000
      %v2002 = vpop.f32.mrb[0].mxu0
      %2003 = vmatprep.mubr.bf16.mxu0 0
      %2004 = vmatmul.mubr.bf16.gmra.mrb[0].mxu0 %v1819
      %v2005 = vpop.f32.mrb[0].mxu0
      %v2006 = vadd.f32 0.0, %v2005
      %v2007 = vpop.f32.mrb[0].mxu0
      %v2008 = vpop.f32.mrb[0].mxu0
      %v2009 = vadd.f32 0.0, %v2008
      %v2010 = vpop.f32.mrb[0].mxu0
      %2011 = vmatprep.mubr.bf16.mxu0 0
      %2012 = vmatmul.mubr.bf16.gmra.mrb[0].mxu0 %v1820
      %v2013 = vpop.f32.mrb[0].mxu0
      %v2014 = vadd.f32 0.0, %v2013
      %v2015 = vpop.f32.mrb[0].mxu0
      %v2016 = vpop.f32.mrb[0].mxu0
      %v2017 = vadd.f32 0.0, %v2016
      %v2018 = vpop.f32.mrb[0].mxu0
      %2019 = vmatprep.mubr.bf16.mxu0 0
      %2020 = vmatmul.mubr.bf16.gmra.mrb[0].mxu0 %v1821
      %v2021 = vpop.f32.mrb[0].mxu0
      %v2022 = vadd.f32 0.0, %v2021
      %v2023 = vpop.f32.mrb[0].mxu0
      %v2024 = vpop.f32.mrb[0].mxu0
      %v2025 = vadd.f32 0.0, %v2024
      %v2026 = vpop.f32.mrb[0].mxu0
      %2027 = vmatprep.mubr.bf16.mxu0 0
      %2028 = vmatmul.mubr.bf16.gmra.mrb[0].mxu0 %v1822
      %v2029 = vpop.f32.mrb[0].mxu0
      %v2030 = vadd.f32 0.0, %v2029
      %v2031 = vpop.f32.mrb[0].mxu0
      %v2032 = vpop.f32.mrb[0].mxu0
      %v2033 = vadd.f32 0.0, %v2032
      %v2034 = vpop.f32.mrb[0].mxu0
      %2035 = vmatprep.mubr.bf16.mxu0 0
      %2036 = vmatmul.mubr.bf16.gmra.mrb[0].mxu0 %v1823
      %v2037 = vpop.f32.mrb[0].mxu0
      %v2038 = vadd.f32 0.0, %v2037
      %v2039 = vpop.f32.mrb[0].mxu0
      %v2040 = vpop.f32.mrb[0].mxu0
      %v2041 = vadd.f32 0.0, %v2040
      %v2042 = vpop.f32.mrb[0].mxu0
      %2043 = vmatprep.mubr.bf16.mxu0 0
      %2044 = vmatmul.mubr.bf16.gmra.mrb[0].mxu0 %v1824
      %v2045 = vpop.f32.mrb[0].mxu0
      %v2046 = vadd.f32 0.0, %v2045
      %v2047 = vpop.f32.mrb[0].mxu0
      %v2048 = vpop.f32.mrb[0].mxu0
      %v2049 = vadd.f32 0.0, %v2048
      %v2050 = vpop.f32.mrb[0].mxu0
      %2051 = vmatprep.mubr.bf16.mxu0 0
      %2052 = vmatmul.mubr.bf16.gmra.mrb[0].mxu0 %v1825
      %v2053 = vpop.f32.mrb[0].mxu0
      %v2054 = vadd.f32 0.0, %v2053
      %v2055 = vpop.f32.mrb[0].mxu0
      %v2056 = vpop.f32.mrb[0].mxu0
      %v2057 = vadd.f32 0.0, %v2056
      %v2058 = vpop.f32.mrb[0].mxu0
      %2059 = vmatprep.mubr.bf16.mxu0 0
      %2060 = vmatmul.mubr.bf16.gmra.mrb[0].mxu0 %v1826
      %v2061 = vpop.f32.mrb[0].mxu0
      %v2062 = vadd.f32 0.0, %v2061
      %v2063 = vpop.f32.mrb[0].mxu0
      %v2064 = vpop.f32.mrb[0].mxu0
      %v2065 = vadd.f32 0.0, %v2064
      %v2066 = vpop.f32.mrb[0].mxu0
      %2067 = vmatprep.mubr.bf16.mxu0 0
      %2068 = vmatmul.mubr.bf16.gmra.mrb[0].mxu0 %v1827
      %v2069 = vpop.f32.mrb[0].mxu0
      %v2070 = vadd.f32 0.0, %v2069
      %v2071 = vpop.f32.mrb[0].mxu0
      %v2072 = vpop.f32.mrb[0].mxu0
      %v2073 = vadd.f32 0.0, %v2072
      %v2074 = vpop.f32.mrb[0].mxu0
      %2075 = vmatprep.mubr.bf16.mxu0 0
      %2076 = vmatmul.mubr.bf16.gmra.mrb[0].mxu0 %v1828
      %v2077 = vpop.f32.mrb[0].mxu0
      %v2078 = vadd.f32 0.0, %v2077
      %v2079 = vpop.f32.mrb[0].mxu0
      %v2080 = vpop.f32.mrb[0].mxu0
      %v2081 = vadd.f32 0.0, %v2080
      %v2082 = vpop.f32.mrb[0].mxu0
      %2083 = vmatprep.mubr.bf16.mxu0 0
      %2084 = vmatmul.mubr.bf16.gmra.mrb[0].mxu0 %v1829
      %v2085 = vpop.f32.mrb[0].mxu0
      %v2086 = vadd.f32 0.0, %v2085
      %v2087 = vpop.f32.mrb[0].mxu0
      %v2088 = vpop.f32.mrb[0].mxu0
      %v2089 = vadd.f32 0.0, %v2088
      %v2090 = vpop.f32.mrb[0].mxu0
      %2091 = vmatprep.mubr.bf16.mxu0 0
      %2092 = vmatmul.mubr.bf16.gmra.mrb[0].mxu0 %v1830
      %v2093 = vpop.f32.mrb[0].mxu0
      %v2094 = vadd.f32 0.0, %v2093
      %v2095 = vpop.f32.mrb[0].mxu0
      %v2096 = vpop.f32.mrb[0].mxu0
      %v2097 = vadd.f32 0.0, %v2096
      %v2098 = vpop.f32.mrb[0].mxu0
      %2099 = vmatprep.mubr.bf16.mxu0 0
      %2100 = vmatmul.mubr.bf16.gmra.mrb[0].mxu0 %v1831
      %v2101 = vpop.f32.mrb[0].mxu0
      %v2102 = vadd.f32 0.0, %v2101
      %v2103 = vpop.f32.mrb[0].mxu0
      %v2104 = vpop.f32.mrb[0].mxu0
      %v2105 = vadd.f32 0.0, %v2104
      %v2106 = vpop.f32.mrb[0].mxu0
      %2107 = vmatprep.mubr.bf16.mxu0 0
      %2108 = vmatmul.mubr.bf16.gmra.mrb[0].mxu0 %v1832
      %v2109 = vpop.f32.mrb[0].mxu0
      %v2110 = vadd.f32 0.0, %v2109
      %v2111 = vpop.f32.mrb[0].mxu0
      %v2112 = vpop.f32.mrb[0].mxu0
      %v2113 = vadd.f32 0.0, %v2112
      %v2114 = vpop.f32.mrb[0].mxu0
      %2115 = vmatprep.mubr.bf16.mxu0 0
      %2116 = vmatmul.mubr.bf16.gmra.mrb[0].mxu0 %v1833
      %v2117 = vpop.f32.mrb[0].mxu0
      %v2118 = vadd.f32 0.0, %v2117
      %v2119 = vpop.f32.mrb[0].mxu0
      %v2120 = vpop.f32.mrb[0].mxu0
      %v2121 = vadd.f32 0.0, %v2120
      %v2122 = vpop.f32.mrb[0].mxu0
      %2123 = vdwg.mxu0
      %v2124 = vadd.f32 %v1714, %v1934
      %v2125 = vadd.f32 %v1715, %v1937
      %v2126 = vadd.f32 %v1716, %v1942
      %v2127 = vadd.f32 %v1717, %v1945
      %v2128 = vadd.f32 %v1718, %v1950
      %v2129 = vadd.f32 %v1719, %v1953
      %v2130 = vadd.f32 %v1720, %v1958
      %v2131 = vadd.f32 %v1721, %v1961
      %v2132 = vadd.f32 %v1722, %v1966
      %v2133 = vadd.f32 %v1723, %v1969
      %v2134 = vadd.f32 %v1724, %v1974
      %v2135 = vadd.f32 %v1725, %v1977
      %v2136 = vadd.f32 %v1726, %v1982
      %v2137 = vadd.f32 %v1727, %v1985
      %v2138 = vadd.f32 %v1728, %v1990
      %v2139 = vadd.f32 %v1729, %v1993
      %v2140 = vadd.f32 %v1730, %v1998
      %v2141 = vadd.f32 %v1731, %v2001
      %v2142 = vadd.f32 %v1732, %v2006
      %v2143 = vadd.f32 %v1733, %v2009
      %v2144 = vadd.f32 %v1734, %v2014
      %v2145 = vadd.f32 %v1735, %v2017
      %v2146 = vadd.f32 %v1736, %v2022
      %v2147 = vadd.f32 %v1737, %v2025
      %v2148 = vadd.f32 %v1738, %v2030
      %v2149 = vadd.f32 %v1739, %v2033
      %v2150 = vadd.f32 %v1740, %v2038
      %v2151 = vadd.f32 %v1741, %v2041
      %v2152 = vadd.f32 %v1742, %v2046
      %v2153 = vadd.f32 %v1743, %v2049
      %v2154 = vadd.f32 %v1744, %v2054
      %v2155 = vadd.f32 %v1745, %v2057
      %v2156 = vadd.f32 %v1746, %v2062
      %v2157 = vadd.f32 %v1747, %v2065
      %v2158 = vadd.f32 %v1748, %v2070
      %v2159 = vadd.f32 %v1749, %v2073
      %v2160 = vadd.f32 %v1750, %v2078
      %v2161 = vadd.f32 %v1751, %v2081
      %v2162 = vadd.f32 %v1752, %v2086
      %v2163 = vadd.f32 %v1753, %v2089
      %v2164 = vadd.f32 %v1754, %v2094
      %v2165 = vadd.f32 %v1755, %v2097
      %v2166 = vadd.f32 %v1756, %v2102
      %v2167 = vadd.f32 %v1757, %v2105
      %v2168 = vadd.f32 %v1758, %v2110
      %v2169 = vadd.f32 %v1759, %v2113
      %v2170 = vadd.f32 %v1760, %v2118
      %v2171 = vadd.f32 %v1761, %v2121
      %v2172 = vld [vmem:[%s204 + $0x1a] sm:$0xff]
      %v2173 = vld [vmem:[%s204 + $0x22] sm:$0xff]
      %v2174 = vld [vmem:[%s204 + $0x2a] sm:$0xff]
      %v2175 = vld [vmem:[%s204 + $0x32] sm:$0xff]
      %v2176 = vld [vmem:[%s204 + $0x3a] sm:$0xff]
      %v2177 = vld [vmem:[%s204 + $0x42] sm:$0xff]
      %v2178 = vld [vmem:[%s204 + $0x4a] sm:$0xff]
      %v2179 = vld [vmem:[%s204 + $0x52] sm:$0xff]
      %v2180 = vld [vmem:[%s204 + $0x5a] sm:$0xff]
      %v2181 = vld [vmem:[%s204 + $0x62] sm:$0xff]
      %v2182 = vld [vmem:[%s204 + $0x6a] sm:$0xff]
      %v2183 = vld [vmem:[%s204 + $0x72] sm:$0xff]
      %v2184 = vld [vmem:[%s204 + $0x7a] sm:$0xff]
      %v2185 = vld [vmem:[%s204 + $0x82] sm:$0xff]
      %v2186 = vld [vmem:[%s204 + $0x8a] sm:$0xff]
      %v2187 = vld [vmem:[%s204 + $0x92] sm:$0xff]
      %v2188 = vld [vmem:[%s204 + $0x9a] sm:$0xff]
      %v2189 = vld [vmem:[%s204 + $0xa2] sm:$0xff]
      %v2190 = vld [vmem:[%s204 + $0xaa] sm:$0xff]
      %v2191 = vld [vmem:[%s204 + $0xb2] sm:$0xff]
      %v2192 = vld [vmem:[%s204 + $0xba] sm:$0xff]
      %v2193 = vld [vmem:[%s204 + $0xc2] sm:$0xff]
      %v2194 = vld [vmem:[%s204 + $0xca] sm:$0xff]
      %v2195 = vld [vmem:[%s204 + $0xd2] sm:$0xff]
      %v2196 = vld [vmem:[%s204 + $0xda] sm:$0xff]
      %v2197 = vld [vmem:[%s204 + $0xe2] sm:$0xff]
      %v2198 = vld [vmem:[%s204 + $0xea] sm:$0xff]
      %v2199 = vld [vmem:[%s204 + $0xf2] sm:$0xff]
      %v2200 = vld [vmem:[%s204 + $0xfa] sm:$0xff]
      %v2201 = vld [vmem:[%s204 + $0x102] sm:$0xff]
      %v2202 = vld [vmem:[%s204 + $0x10a] sm:$0xff]
      %v2203 = vld [vmem:[%s204 + $0x112] sm:$0xff]
      %v2204 = vld [vmem:[%s204 + $0x11a] sm:$0xff]
      %v2205 = vld [vmem:[%s204 + $0x122] sm:$0xff]
      %v2206 = vld [vmem:[%s204 + $0x12a] sm:$0xff]
      %v2207 = vld [vmem:[%s204 + $0x132] sm:$0xff]
      %v2208 = vld [vmem:[%s204 + $0x13a] sm:$0xff]
      %v2209 = vld [vmem:[%s204 + $0x142] sm:$0xff]
      %v2210 = vld [vmem:[%s204 + $0x14a] sm:$0xff]
      %v2211 = vld [vmem:[%s204 + $0x152] sm:$0xff]
      %v2212 = vld [vmem:[%s204 + $0x15a] sm:$0xff]
      %v2213 = vld [vmem:[%s204 + $0x162] sm:$0xff]
      %v2214 = vld [vmem:[%s204 + $0x16a] sm:$0xff]
      %v2215 = vld [vmem:[%s204 + $0x172] sm:$0xff]
      %v2216 = vld [vmem:[%s204 + $0x17a] sm:$0xff]
      %v2217 = vld [vmem:[%s204 + $0x182] sm:$0xff]
      %v2218 = vld [vmem:[%s204 + $0x18a] sm:$0xff]
      %v2219 = vld [vmem:[%s204 + $0x192] sm:$0xff]
      %v2220 = vpack.c.bf16 %v2173, %v2172
      %v2221 = vpack.c.bf16 %v2175, %v2174
      %v2222 = vpack.c.bf16 %v2177, %v2176
      %v2223 = vpack.c.bf16 %v2179, %v2178
      %v2224 = vpack.c.bf16 %v2181, %v2180
      %v2225 = vpack.c.bf16 %v2183, %v2182
      %v2226 = vpack.c.bf16 %v2185, %v2184
      %v2227 = vpack.c.bf16 %v2187, %v2186
      %v2228 = vpack.c.bf16 %v2189, %v2188
      %v2229 = vpack.c.bf16 %v2191, %v2190
      %v2230 = vpack.c.bf16 %v2193, %v2192
      %v2231 = vpack.c.bf16 %v2195, %v2194
      %v2232 = vpack.c.bf16 %v2197, %v2196
      %v2233 = vpack.c.bf16 %v2199, %v2198
      %v2234 = vpack.c.bf16 %v2201, %v2200
      %v2235 = vpack.c.bf16 %v2203, %v2202
      %v2236 = vpack.c.bf16 %v2205, %v2204
      %v2237 = vpack.c.bf16 %v2207, %v2206
      %v2238 = vpack.c.bf16 %v2209, %v2208
      %v2239 = vpack.c.bf16 %v2211, %v2210
      %v2240 = vpack.c.bf16 %v2213, %v2212
      %v2241 = vpack.c.bf16 %v2215, %v2214
      %v2242 = vpack.c.bf16 %v2217, %v2216
      %v2243 = vpack.c.bf16 %v2219, %v2218
      %s2244 = scalar_lea.vmem %s208, 320
      %v2245 = vld [vmem:[%s2244] sm:$0xf]
      %v2246 = vld [vmem:[%s2244 + $0x4] sm:$0xf]
      %v2247 = vld [vmem:[%s2244 + $0x8] sm:$0xf]
      %v2248 = vld [vmem:[%s2244 + $0xc] sm:$0xf]
      %v2249 = vld [vmem:[%s2244 + $0x10] sm:$0xf]
      %v2250 = vld [vmem:[%s2244 + $0x14] sm:$0xf]
      %v2251 = vld [vmem:[%s2244 + $0x18] sm:$0xf]
      %v2252 = vld [vmem:[%s2244 + $0x1c] sm:$0xf]
      %v2253 = vld [vmem:[%s2244 + $0x20] sm:$0xf]
      %v2254 = vld [vmem:[%s2244 + $0x24] sm:$0xf]
      %v2255 = vld [vmem:[%s2244 + $0x28] sm:$0xf]
      %v2256 = vld [vmem:[%s2244 + $0x2c] sm:$0xf]
      %v2257 = vld [vmem:[%s2244 + $0x30] sm:$0xf]
      %v2258 = vld [vmem:[%s2244 + $0x34] sm:$0xf]
      %v2259 = vld [vmem:[%s2244 + $0x38] sm:$0xf]
      %v2260 = vld [vmem:[%s2244 + $0x3c] sm:$0xf]
      %v2277 = vunpack.c.l.b16 %v2245
      %v2278 = vunpack.c.l.b16 %v2246
      %v2279 = vunpack.c.l.b16 %v2247
      %v2280 = vunpack.c.l.b16 %v2248
      %v2281 = vunpack.c.l.b16 %v2249
      %v2282 = vunpack.c.l.b16 %v2250
      %v2283 = vunpack.c.l.b16 %v2251
      %v2284 = vunpack.c.l.b16 %v2252
      %v2285 = vunpack.c.l.b16 %v2253
      %v2286 = vunpack.c.l.b16 %v2254
      %v2287 = vunpack.c.l.b16 %v2255
      %v2288 = vunpack.c.l.b16 %v2256
      %v2289 = vunpack.c.l.b16 %v2257
      %v2290 = vunpack.c.l.b16 %v2258
      %v2291 = vunpack.c.l.b16 %v2259
      %v2292 = vunpack.c.l.b16 %v2260
      %v2293 = vpack.c.b16 %v2278, %v2277
      %v2294 = vpack.c.b16 %v2280, %v2279
      %v2295 = vpack.c.b16 %v2282, %v2281
      %v2296 = vpack.c.b16 %v2284, %v2283
      %v2297 = vpack.c.b16 %v2286, %v2285
      %v2298 = vpack.c.b16 %v2288, %v2287
      %v2299 = vpack.c.b16 %v2290, %v2289
      %v2300 = vpack.c.b16 %v2292, %v2291
      %2309 = vmatprep.subr.bf16.mxu0 0
      %2310 = vmatpush1.bf16.msra.mxu0 %v2293
      %2311 = vmatprep.subr.bf16.mxu0 0
      %2312 = vmatpush1.bf16.msra.mxu0 %v2294
      %2313 = vmatprep.subr.bf16.mxu0 0
      %2314 = vmatpush1.bf16.msra.mxu0 %v2295
      %2315 = vmatprep.subr.bf16.mxu0 0
      %2316 = vmatpush1.bf16.msra.mxu0 %v2296
      %2317 = vmatprep.subr.bf16.mxu0 0
      %2318 = vmatpush1.bf16.msra.mxu0 %v2297
      %2319 = vmatprep.subr.bf16.mxu0 0
      %2320 = vmatpush1.bf16.msra.mxu0 %v2298
      %2321 = vmatprep.subr.bf16.mxu0 0
      %2322 = vmatpush1.bf16.msra.mxu0 %v2299
      %2323 = vmatprep.subr.bf16.mxu0 0
      %2324 = vmatpush1.bf16.msra.mxu0 %v2300
      %2325 = vmatprep.subr.bf16.mxu0 0
      %2326 = vmatpush1.bf16.msra.mxu0 0
      %2327 = vmatprep.subr.bf16.mxu0 0
      %2328 = vmatpush1.bf16.msra.mxu0 0
      %2329 = vmatprep.subr.bf16.mxu0 0
      %2330 = vmatpush1.bf16.msra.mxu0 0
      %2331 = vmatprep.subr.bf16.mxu0 0
      %2332 = vmatpush1.bf16.msra.mxu0 0
      %2333 = vmatprep.subr.bf16.mxu0 0
      %2334 = vmatpush1.bf16.msra.mxu0 0
      %2335 = vmatprep.subr.bf16.mxu0 0
      %2336 = vmatpush1.bf16.msra.mxu0 0
      %2337 = vmatprep.subr.bf16.mxu0 0
      %2338 = vmatpush1.bf16.msra.mxu0 0
      %2339 = vmatprep.subr.bf16.mxu0 0
      %2340 = vmatpush1.bf16.msra.mxu0 0
      %2341 = vmatprep.mubr.bf16.mxu0 0
      %2342 = vmatmul.mubr.bf16.gmra.mrb[0].mxu0 %v2220
      %v2343 = vpop.f32.mrb[0].mxu0
      %v2344 = vadd.f32 0.0, %v2343
      %v2345 = vpop.f32.mrb[0].mxu0
      %v2346 = vpop.f32.mrb[0].mxu0
      %v2347 = vadd.f32 0.0, %v2346
      %v2348 = vpop.f32.mrb[0].mxu0
      %2349 = vmatprep.mubr.bf16.mxu0 0
      %2350 = vmatmul.mubr.bf16.gmra.mrb[0].mxu0 %v2221
      %v2351 = vpop.f32.mrb[0].mxu0
      %v2352 = vadd.f32 0.0, %v2351
      %v2353 = vpop.f32.mrb[0].mxu0
      %v2354 = vpop.f32.mrb[0].mxu0
      %v2355 = vadd.f32 0.0, %v2354
      %v2356 = vpop.f32.mrb[0].mxu0
      %2357 = vmatprep.mubr.bf16.mxu0 0
      %2358 = vmatmul.mubr.bf16.gmra.mrb[0].mxu0 %v2222
      %v2359 = vpop.f32.mrb[0].mxu0
      %v2360 = vadd.f32 0.0, %v2359
      %v2361 = vpop.f32.mrb[0].mxu0
      %v2362 = vpop.f32.mrb[0].mxu0
      %v2363 = vadd.f32 0.0, %v2362
      %v2364 = vpop.f32.mrb[0].mxu0
      %2365 = vmatprep.mubr.bf16.mxu0 0
      %2366 = vmatmul.mubr.bf16.gmra.mrb[0].mxu0 %v2223
      %v2367 = vpop.f32.mrb[0].mxu0
      %v2368 = vadd.f32 0.0, %v2367
      %v2369 = vpop.f32.mrb[0].mxu0
      %v2370 = vpop.f32.mrb[0].mxu0
      %v2371 = vadd.f32 0.0, %v2370
      %v2372 = vpop.f32.mrb[0].mxu0
      %2373 = vmatprep.mubr.bf16.mxu0 0
      %2374 = vmatmul.mubr.bf16.gmra.mrb[0].mxu0 %v2224
      %v2375 = vpop.f32.mrb[0].mxu0
      %v2376 = vadd.f32 0.0, %v2375
      %v2377 = vpop.f32.mrb[0].mxu0
      %v2378 = vpop.f32.mrb[0].mxu0
      %v2379 = vadd.f32 0.0, %v2378
      %v2380 = vpop.f32.mrb[0].mxu0
      %2381 = vmatprep.mubr.bf16.mxu0 0
      %2382 = vmatmul.mubr.bf16.gmra.mrb[0].mxu0 %v2225
      %v2383 = vpop.f32.mrb[0].mxu0
      %v2384 = vadd.f32 0.0, %v2383
      %v2385 = vpop.f32.mrb[0].mxu0
      %v2386 = vpop.f32.mrb[0].mxu0
      %v2387 = vadd.f32 0.0, %v2386
      %v2388 = vpop.f32.mrb[0].mxu0
      %2389 = vmatprep.mubr.bf16.mxu0 0
      %2390 = vmatmul.mubr.bf16.gmra.mrb[0].mxu0 %v2226
      %v2391 = vpop.f32.mrb[0].mxu0
      %v2392 = vadd.f32 0.0, %v2391
      %v2393 = vpop.f32.mrb[0].mxu0
      %v2394 = vpop.f32.mrb[0].mxu0
      %v2395 = vadd.f32 0.0, %v2394
      %v2396 = vpop.f32.mrb[0].mxu0
      %2397 = vmatprep.mubr.bf16.mxu0 0
      %2398 = vmatmul.mubr.bf16.gmra.mrb[0].mxu0 %v2227
      %v2399 = vpop.f32.mrb[0].mxu0
      %v2400 = vadd.f32 0.0, %v2399
      %v2401 = vpop.f32.mrb[0].mxu0
      %v2402 = vpop.f32.mrb[0].mxu0
      %v2403 = vadd.f32 0.0, %v2402
      %v2404 = vpop.f32.mrb[0].mxu0
      %2405 = vmatprep.mubr.bf16.mxu0 0
      %2406 = vmatmul.mubr.bf16.gmra.mrb[0].mxu0 %v2228
      %v2407 = vpop.f32.mrb[0].mxu0
      %v2408 = vadd.f32 0.0, %v2407
      %v2409 = vpop.f32.mrb[0].mxu0
      %v2410 = vpop.f32.mrb[0].mxu0
      %v2411 = vadd.f32 0.0, %v2410
      %v2412 = vpop.f32.mrb[0].mxu0
      %2413 = vmatprep.mubr.bf16.mxu0 0
      %2414 = vmatmul.mubr.bf16.gmra.mrb[0].mxu0 %v2229
      %v2415 = vpop.f32.mrb[0].mxu0
      %v2416 = vadd.f32 0.0, %v2415
      %v2417 = vpop.f32.mrb[0].mxu0
      %v2418 = vpop.f32.mrb[0].mxu0
      %v2419 = vadd.f32 0.0, %v2418
      %v2420 = vpop.f32.mrb[0].mxu0
      %2421 = vmatprep.mubr.bf16.mxu0 0
      %2422 = vmatmul.mubr.bf16.gmra.mrb[0].mxu0 %v2230
      %v2423 = vpop.f32.mrb[0].mxu0
      %v2424 = vadd.f32 0.0, %v2423
      %v2425 = vpop.f32.mrb[0].mxu0
      %v2426 = vpop.f32.mrb[0].mxu0
      %v2427 = vadd.f32 0.0, %v2426
      %v2428 = vpop.f32.mrb[0].mxu0
      %2429 = vmatprep.mubr.bf16.mxu0 0
      %2430 = vmatmul.mubr.bf16.gmra.mrb[0].mxu0 %v2231
      %v2431 = vpop.f32.mrb[0].mxu0
      %v2432 = vadd.f32 0.0, %v2431
      %v2433 = vpop.f32.mrb[0].mxu0
      %v2434 = vpop.f32.mrb[0].mxu0
      %v2435 = vadd.f32 0.0, %v2434
      %v2436 = vpop.f32.mrb[0].mxu0
      %2437 = vmatprep.mubr.bf16.mxu0 0
      %2438 = vmatmul.mubr.bf16.gmra.mrb[0].mxu0 %v2232
      %v2439 = vpop.f32.mrb[0].mxu0
      %v2440 = vadd.f32 0.0, %v2439
      %v2441 = vpop.f32.mrb[0].mxu0
      %v2442 = vpop.f32.mrb[0].mxu0
      %v2443 = vadd.f32 0.0, %v2442
      %v2444 = vpop.f32.mrb[0].mxu0
      %2445 = vmatprep.mubr.bf16.mxu0 0
      %2446 = vmatmul.mubr.bf16.gmra.mrb[0].mxu0 %v2233
      %v2447 = vpop.f32.mrb[0].mxu0
      %v2448 = vadd.f32 0.0, %v2447
      %v2449 = vpop.f32.mrb[0].mxu0
      %v2450 = vpop.f32.mrb[0].mxu0
      %v2451 = vadd.f32 0.0, %v2450
      %v2452 = vpop.f32.mrb[0].mxu0
      %2453 = vmatprep.mubr.bf16.mxu0 0
      %2454 = vmatmul.mubr.bf16.gmra.mrb[0].mxu0 %v2234
      %v2455 = vpop.f32.mrb[0].mxu0
      %v2456 = vadd.f32 0.0, %v2455
      %v2457 = vpop.f32.mrb[0].mxu0
      %v2458 = vpop.f32.mrb[0].mxu0
      %v2459 = vadd.f32 0.0, %v2458
      %v2460 = vpop.f32.mrb[0].mxu0
      %2461 = vmatprep.mubr.bf16.mxu0 0
      %2462 = vmatmul.mubr.bf16.gmra.mrb[0].mxu0 %v2235
      %v2463 = vpop.f32.mrb[0].mxu0
      %v2464 = vadd.f32 0.0, %v2463
      %v2465 = vpop.f32.mrb[0].mxu0
      %v2466 = vpop.f32.mrb[0].mxu0
      %v2467 = vadd.f32 0.0, %v2466
      %v2468 = vpop.f32.mrb[0].mxu0
      %2469 = vmatprep.mubr.bf16.mxu0 0
      %2470 = vmatmul.mubr.bf16.gmra.mrb[0].mxu0 %v2236
      %v2471 = vpop.f32.mrb[0].mxu0
      %v2472 = vadd.f32 0.0, %v2471
      %v2473 = vpop.f32.mrb[0].mxu0
      %v2474 = vpop.f32.mrb[0].mxu0
      %v2475 = vadd.f32 0.0, %v2474
      %v2476 = vpop.f32.mrb[0].mxu0
      %2477 = vmatprep.mubr.bf16.mxu0 0
      %2478 = vmatmul.mubr.bf16.gmra.mrb[0].mxu0 %v2237
      %v2479 = vpop.f32.mrb[0].mxu0
      %v2480 = vadd.f32 0.0, %v2479
      %v2481 = vpop.f32.mrb[0].mxu0
      %v2482 = vpop.f32.mrb[0].mxu0
      %v2483 = vadd.f32 0.0, %v2482
      %v2484 = vpop.f32.mrb[0].mxu0
      %2485 = vmatprep.mubr.bf16.mxu0 0
      %2486 = vmatmul.mubr.bf16.gmra.mrb[0].mxu0 %v2238
      %v2487 = vpop.f32.mrb[0].mxu0
      %v2488 = vadd.f32 0.0, %v2487
      %v2489 = vpop.f32.mrb[0].mxu0
      %v2490 = vpop.f32.mrb[0].mxu0
      %v2491 = vadd.f32 0.0, %v2490
      %v2492 = vpop.f32.mrb[0].mxu0
      %2493 = vmatprep.mubr.bf16.mxu0 0
      %2494 = vmatmul.mubr.bf16.gmra.mrb[0].mxu0 %v2239
      %v2495 = vpop.f32.mrb[0].mxu0
      %v2496 = vadd.f32 0.0, %v2495
      %v2497 = vpop.f32.mrb[0].mxu0
      %v2498 = vpop.f32.mrb[0].mxu0
      %v2499 = vadd.f32 0.0, %v2498
      %v2500 = vpop.f32.mrb[0].mxu0
      %2501 = vmatprep.mubr.bf16.mxu0 0
      %2502 = vmatmul.mubr.bf16.gmra.mrb[0].mxu0 %v2240
      %v2503 = vpop.f32.mrb[0].mxu0
      %v2504 = vadd.f32 0.0, %v2503
      %v2505 = vpop.f32.mrb[0].mxu0
      %v2506 = vpop.f32.mrb[0].mxu0
      %v2507 = vadd.f32 0.0, %v2506
      %v2508 = vpop.f32.mrb[0].mxu0
      %2509 = vmatprep.mubr.bf16.mxu0 0
      %2510 = vmatmul.mubr.bf16.gmra.mrb[0].mxu0 %v2241
      %v2511 = vpop.f32.mrb[0].mxu0
      %v2512 = vadd.f32 0.0, %v2511
      %v2513 = vpop.f32.mrb[0].mxu0
      %v2514 = vpop.f32.mrb[0].mxu0
      %v2515 = vadd.f32 0.0, %v2514
      %v2516 = vpop.f32.mrb[0].mxu0
      %2517 = vmatprep.mubr.bf16.mxu0 0
      %2518 = vmatmul.mubr.bf16.gmra.mrb[0].mxu0 %v2242
      %v2519 = vpop.f32.mrb[0].mxu0
      %v2520 = vadd.f32 0.0, %v2519
      %v2521 = vpop.f32.mrb[0].mxu0
      %v2522 = vpop.f32.mrb[0].mxu0
      %v2523 = vadd.f32 0.0, %v2522
      %v2524 = vpop.f32.mrb[0].mxu0
      %2525 = vmatprep.mubr.bf16.mxu0 0
      %2526 = vmatmul.mubr.bf16.gmra.mrb[0].mxu0 %v2243
      %v2527 = vpop.f32.mrb[0].mxu0
      %v2528 = vadd.f32 0.0, %v2527
      %v2529 = vpop.f32.mrb[0].mxu0
      %v2530 = vpop.f32.mrb[0].mxu0
      %v2531 = vadd.f32 0.0, %v2530
      %v2532 = vpop.f32.mrb[0].mxu0
      %2533 = vdwg.mxu0
      %v2534 = vadd.f32 %v2124, %v2344
      %v2535 = vadd.f32 %v2125, %v2347
      %v2536 = vadd.f32 %v2126, %v2352
      %v2537 = vadd.f32 %v2127, %v2355
      %v2538 = vadd.f32 %v2128, %v2360
      %v2539 = vadd.f32 %v2129, %v2363
      %v2540 = vadd.f32 %v2130, %v2368
      %v2541 = vadd.f32 %v2131, %v2371
      %v2542 = vadd.f32 %v2132, %v2376
      %v2543 = vadd.f32 %v2133, %v2379
      %v2544 = vadd.f32 %v2134, %v2384
      %v2545 = vadd.f32 %v2135, %v2387
      %v2546 = vadd.f32 %v2136, %v2392
      %v2547 = vadd.f32 %v2137, %v2395
      %v2548 = vadd.f32 %v2138, %v2400
      %v2549 = vadd.f32 %v2139, %v2403
      %v2550 = vadd.f32 %v2140, %v2408
      %v2551 = vadd.f32 %v2141, %v2411
      %v2552 = vadd.f32 %v2142, %v2416
      %v2553 = vadd.f32 %v2143, %v2419
      %v2554 = vadd.f32 %v2144, %v2424
      %v2555 = vadd.f32 %v2145, %v2427
      %v2556 = vadd.f32 %v2146, %v2432
      %v2557 = vadd.f32 %v2147, %v2435
      %v2558 = vadd.f32 %v2148, %v2440
      %v2559 = vadd.f32 %v2149, %v2443
      %v2560 = vadd.f32 %v2150, %v2448
      %v2561 = vadd.f32 %v2151, %v2451
      %v2562 = vadd.f32 %v2152, %v2456
      %v2563 = vadd.f32 %v2153, %v2459
      %v2564 = vadd.f32 %v2154, %v2464
      %v2565 = vadd.f32 %v2155, %v2467
      %v2566 = vadd.f32 %v2156, %v2472
      %v2567 = vadd.f32 %v2157, %v2475
      %v2568 = vadd.f32 %v2158, %v2480
      %v2569 = vadd.f32 %v2159, %v2483
      %v2570 = vadd.f32 %v2160, %v2488
      %v2571 = vadd.f32 %v2161, %v2491
      %v2572 = vadd.f32 %v2162, %v2496
      %v2573 = vadd.f32 %v2163, %v2499
      %v2574 = vadd.f32 %v2164, %v2504
      %v2575 = vadd.f32 %v2165, %v2507
      %v2576 = vadd.f32 %v2166, %v2512
      %v2577 = vadd.f32 %v2167, %v2515
      %v2578 = vadd.f32 %v2168, %v2520
      %v2579 = vadd.f32 %v2169, %v2523
      %v2580 = vadd.f32 %v2170, %v2528
      %v2581 = vadd.f32 %v2171, %v2531
      %v2582 = vld [vmem:[%s204 + $0x30] sm:$0xff]
      %v2583 = vld [vmem:[%s204 + $0x38] sm:$0xff]
      %v2584 = vld [vmem:[%s204 + $0x40] sm:$0xff]
      %v2585 = vld [vmem:[%s204 + $0x48] sm:$0xff]
      %v2586 = vld [vmem:[%s204 + $0x50] sm:$0xff]
      %v2587 = vld [vmem:[%s204 + $0x58] sm:$0xff]
      %v2588 = vld [vmem:[%s204 + $0x60] sm:$0xff]
      %v2589 = vld [vmem:[%s204 + $0x68] sm:$0xff]
      %v2590 = vld [vmem:[%s204 + $0x70] sm:$0xff]
      %v2591 = vld [vmem:[%s204 + $0x78] sm:$0xff]
      %v2592 = vld [vmem:[%s204 + $0x80] sm:$0xff]
      %v2593 = vld [vmem:[%s204 + $0x88] sm:$0xff]
      %v2594 = vld [vmem:[%s204 + $0x90] sm:$0xff]
      %v2595 = vld [vmem:[%s204 + $0x98] sm:$0xff]
      %v2596 = vld [vmem:[%s204 + $0xa0] sm:$0xff]
      %v2597 = vld [vmem:[%s204 + $0xa8] sm:$0xff]
      %v2598 = vld [vmem:[%s204 + $0xb0] sm:$0xff]
      %v2599 = vld [vmem:[%s204 + $0xb8] sm:$0xff]
      %v2600 = vld [vmem:[%s204 + $0xc0] sm:$0xff]
      %v2601 = vld [vmem:[%s204 + $0xc8] sm:$0xff]
      %v2602 = vld [vmem:[%s204 + $0xd0] sm:$0xff]
      %v2603 = vld [vmem:[%s204 + $0xd8] sm:$0xff]
      %v2604 = vld [vmem:[%s204 + $0xe0] sm:$0xff]
      %v2605 = vld [vmem:[%s204 + $0xe8] sm:$0xff]
      %v2606 = vld [vmem:[%s204 + $0xf0] sm:$0xff]
      %v2607 = vld [vmem:[%s204 + $0xf8] sm:$0xff]
      %v2608 = vld [vmem:[%s204 + $0x100] sm:$0xff]
      %v2609 = vld [vmem:[%s204 + $0x108] sm:$0xff]
      %v2610 = vld [vmem:[%s204 + $0x110] sm:$0xff]
      %v2611 = vld [vmem:[%s204 + $0x118] sm:$0xff]
      %v2612 = vld [vmem:[%s204 + $0x120] sm:$0xff]
      %v2613 = vld [vmem:[%s204 + $0x128] sm:$0xff]
      %v2614 = vld [vmem:[%s204 + $0x130] sm:$0xff]
      %v2615 = vld [vmem:[%s204 + $0x138] sm:$0xff]
      %v2616 = vld [vmem:[%s204 + $0x140] sm:$0xff]
      %v2617 = vld [vmem:[%s204 + $0x148] sm:$0xff]
      %v2618 = vld [vmem:[%s204 + $0x150] sm:$0xff]
      %v2619 = vld [vmem:[%s204 + $0x158] sm:$0xff]
      %v2620 = vld [vmem:[%s204 + $0x160] sm:$0xff]
      %v2621 = vld [vmem:[%s204 + $0x168] sm:$0xff]
      %v2622 = vld [vmem:[%s204 + $0x170] sm:$0xff]
      %v2623 = vld [vmem:[%s204 + $0x178] sm:$0xff]
      %v2624 = vld [vmem:[%s204 + $0x180] sm:$0xff]
      %v2625 = vld [vmem:[%s204 + $0x188] sm:$0xff]
      %v2626 = vld [vmem:[%s204 + $0x190] sm:$0xff]
      %v2627 = vld [vmem:[%s204 + $0x198] sm:$0xff]
      %v2628 = vld [vmem:[%s204 + $0x1a0] sm:$0xff]
      %v2629 = vld [vmem:[%s204 + $0x1a8] sm:$0xff]
      %v2630 = vpack.c.bf16 %v2583, %v2582
      %v2631 = vpack.c.bf16 %v2585, %v2584
      %v2632 = vpack.c.bf16 %v2587, %v2586
      %v2633 = vpack.c.bf16 %v2589, %v2588
      %v2634 = vpack.c.bf16 %v2591, %v2590
      %v2635 = vpack.c.bf16 %v2593, %v2592
      %v2636 = vpack.c.bf16 %v2595, %v2594
      %v2637 = vpack.c.bf16 %v2597, %v2596
      %v2638 = vpack.c.bf16 %v2599, %v2598
      %v2639 = vpack.c.bf16 %v2601, %v2600
      %v2640 = vpack.c.bf16 %v2603, %v2602
      %v2641 = vpack.c.bf16 %v2605, %v2604
      %v2642 = vpack.c.bf16 %v2607, %v2606
      %v2643 = vpack.c.bf16 %v2609, %v2608
      %v2644 = vpack.c.bf16 %v2611, %v2610
      %v2645 = vpack.c.bf16 %v2613, %v2612
      %v2646 = vpack.c.bf16 %v2615, %v2614
      %v2647 = vpack.c.bf16 %v2617, %v2616
      %v2648 = vpack.c.bf16 %v2619, %v2618
      %v2649 = vpack.c.bf16 %v2621, %v2620
      %v2650 = vpack.c.bf16 %v2623, %v2622
      %v2651 = vpack.c.bf16 %v2625, %v2624
      %v2652 = vpack.c.bf16 %v2627, %v2626
      %v2653 = vpack.c.bf16 %v2629, %v2628
      %s2654 = scalar_lea.vmem %s208, 384
      %v2655 = vld [vmem:[%s2654] sm:$0xf]
      %v2656 = vld [vmem:[%s2654 + $0x4] sm:$0xf]
      %v2657 = vld [vmem:[%s2654 + $0x8] sm:$0xf]
      %v2658 = vld [vmem:[%s2654 + $0xc] sm:$0xf]
      %v2659 = vld [vmem:[%s2654 + $0x10] sm:$0xf]
      %v2660 = vld [vmem:[%s2654 + $0x14] sm:$0xf]
      %v2661 = vld [vmem:[%s2654 + $0x18] sm:$0xf]
      %v2662 = vld [vmem:[%s2654 + $0x1c] sm:$0xf]
      %v2663 = vld [vmem:[%s2654 + $0x20] sm:$0xf]
      %v2664 = vld [vmem:[%s2654 + $0x24] sm:$0xf]
      %v2665 = vld [vmem:[%s2654 + $0x28] sm:$0xf]
      %v2666 = vld [vmem:[%s2654 + $0x2c] sm:$0xf]
      %v2667 = vld [vmem:[%s2654 + $0x30] sm:$0xf]
      %v2668 = vld [vmem:[%s2654 + $0x34] sm:$0xf]
      %v2669 = vld [vmem:[%s2654 + $0x38] sm:$0xf]
      %v2670 = vld [vmem:[%s2654 + $0x3c] sm:$0xf]
      %v2687 = vunpack.c.l.b16 %v2655
      %v2688 = vunpack.c.l.b16 %v2656
      %v2689 = vunpack.c.l.b16 %v2657
      %v2690 = vunpack.c.l.b16 %v2658
      %v2691 = vunpack.c.l.b16 %v2659
      %v2692 = vunpack.c.l.b16 %v2660
      %v2693 = vunpack.c.l.b16 %v2661
      %v2694 = vunpack.c.l.b16 %v2662
      %v2695 = vunpack.c.l.b16 %v2663
      %v2696 = vunpack.c.l.b16 %v2664
      %v2697 = vunpack.c.l.b16 %v2665
      %v2698 = vunpack.c.l.b16 %v2666
      %v2699 = vunpack.c.l.b16 %v2667
      %v2700 = vunpack.c.l.b16 %v2668
      %v2701 = vunpack.c.l.b16 %v2669
      %v2702 = vunpack.c.l.b16 %v2670
      %v2703 = vpack.c.b16 %v2688, %v2687
      %v2704 = vpack.c.b16 %v2690, %v2689
      %v2705 = vpack.c.b16 %v2692, %v2691
      %v2706 = vpack.c.b16 %v2694, %v2693
      %v2707 = vpack.c.b16 %v2696, %v2695
      %v2708 = vpack.c.b16 %v2698, %v2697
      %v2709 = vpack.c.b16 %v2700, %v2699
      %v2710 = vpack.c.b16 %v2702, %v2701
      %2719 = vmatprep.subr.bf16.mxu0 0
      %2720 = vmatpush1.bf16.msra.mxu0 %v2703
      %2721 = vmatprep.subr.bf16.mxu0 0
      %2722 = vmatpush1.bf16.msra.mxu0 %v2704
      %2723 = vmatprep.subr.bf16.mxu0 0
      %2724 = vmatpush1.bf16.msra.mxu0 %v2705
      %2725 = vmatprep.subr.bf16.mxu0 0
      %2726 = vmatpush1.bf16.msra.mxu0 %v2706
      %2727 = vmatprep.subr.bf16.mxu0 0
      %2728 = vmatpush1.bf16.msra.mxu0 %v2707
      %2729 = vmatprep.subr.bf16.mxu0 0
      %2730 = vmatpush1.bf16.msra.mxu0 %v2708
      %2731 = vmatprep.subr.bf16.mxu0 0
      %2732 = vmatpush1.bf16.msra.mxu0 %v2709
      %2733 = vmatprep.subr.bf16.mxu0 0
      %2734 = vmatpush1.bf16.msra.mxu0 %v2710
      %2735 = vmatprep.subr.bf16.mxu0 0
      %2736 = vmatpush1.bf16.msra.mxu0 0
      %2737 = vmatprep.subr.bf16.mxu0 0
      %2738 = vmatpush1.bf16.msra.mxu0 0
      %2739 = vmatprep.subr.bf16.mxu0 0
      %2740 = vmatpush1.bf16.msra.mxu0 0
      %2741 = vmatprep.subr.bf16.mxu0 0
      %2742 = vmatpush1.bf16.msra.mxu0 0
      %2743 = vmatprep.subr.bf16.mxu0 0
      %2744 = vmatpush1.bf16.msra.mxu0 0
      %2745 = vmatprep.subr.bf16.mxu0 0
      %2746 = vmatpush1.bf16.msra.mxu0 0
      %2747 = vmatprep.subr.bf16.mxu0 0
      %2748 = vmatpush1.bf16.msra.mxu0 0
      %2749 = vmatprep.subr.bf16.mxu0 0
      %2750 = vmatpush1.bf16.msra.mxu0 0
      %2751 = vmatprep.mubr.bf16.mxu0 0
      %2752 = vmatmul.mubr.bf16.gmra.mrb[0].mxu0 %v2630
      %v2753 = vpop.f32.mrb[0].mxu0
      %v2754 = vadd.f32 0.0, %v2753
      %v2755 = vpop.f32.mrb[0].mxu0
      %v2756 = vpop.f32.mrb[0].mxu0
      %v2757 = vadd.f32 0.0, %v2756
      %v2758 = vpop.f32.mrb[0].mxu0
      %2759 = vmatprep.mubr.bf16.mxu0 0
      %2760 = vmatmul.mubr.bf16.gmra.mrb[0].mxu0 %v2631
      %v2761 = vpop.f32.mrb[0].mxu0
      %v2762 = vadd.f32 0.0, %v2761
      %v2763 = vpop.f32.mrb[0].mxu0
      %v2764 = vpop.f32.mrb[0].mxu0
      %v2765 = vadd.f32 0.0, %v2764
      %v2766 = vpop.f32.mrb[0].mxu0
      %2767 = vmatprep.mubr.bf16.mxu0 0
      %2768 = vmatmul.mubr.bf16.gmra.mrb[0].mxu0 %v2632
      %v2769 = vpop.f32.mrb[0].mxu0
      %v2770 = vadd.f32 0.0, %v2769
      %v2771 = vpop.f32.mrb[0].mxu0
      %v2772 = vpop.f32.mrb[0].mxu0
      %v2773 = vadd.f32 0.0, %v2772
      %v2774 = vpop.f32.mrb[0].mxu0
      %2775 = vmatprep.mubr.bf16.mxu0 0
      %2776 = vmatmul.mubr.bf16.gmra.mrb[0].mxu0 %v2633
      %v2777 = vpop.f32.mrb[0].mxu0
      %v2778 = vadd.f32 0.0, %v2777
      %v2779 = vpop.f32.mrb[0].mxu0
      %v2780 = vpop.f32.mrb[0].mxu0
      %v2781 = vadd.f32 0.0, %v2780
      %v2782 = vpop.f32.mrb[0].mxu0
      %2783 = vmatprep.mubr.bf16.mxu0 0
      %2784 = vmatmul.mubr.bf16.gmra.mrb[0].mxu0 %v2634
      %v2785 = vpop.f32.mrb[0].mxu0
      %v2786 = vadd.f32 0.0, %v2785
      %v2787 = vpop.f32.mrb[0].mxu0
      %v2788 = vpop.f32.mrb[0].mxu0
      %v2789 = vadd.f32 0.0, %v2788
      %v2790 = vpop.f32.mrb[0].mxu0
      %2791 = vmatprep.mubr.bf16.mxu0 0
      %2792 = vmatmul.mubr.bf16.gmra.mrb[0].mxu0 %v2635
      %v2793 = vpop.f32.mrb[0].mxu0
      %v2794 = vadd.f32 0.0, %v2793
      %v2795 = vpop.f32.mrb[0].mxu0
      %v2796 = vpop.f32.mrb[0].mxu0
      %v2797 = vadd.f32 0.0, %v2796
      %v2798 = vpop.f32.mrb[0].mxu0
      %2799 = vmatprep.mubr.bf16.mxu0 0
      %2800 = vmatmul.mubr.bf16.gmra.mrb[0].mxu0 %v2636
      %v2801 = vpop.f32.mrb[0].mxu0
      %v2802 = vadd.f32 0.0, %v2801
      %v2803 = vpop.f32.mrb[0].mxu0
      %v2804 = vpop.f32.mrb[0].mxu0
      %v2805 = vadd.f32 0.0, %v2804
      %v2806 = vpop.f32.mrb[0].mxu0
      %2807 = vmatprep.mubr.bf16.mxu0 0
      %2808 = vmatmul.mubr.bf16.gmra.mrb[0].mxu0 %v2637
      %v2809 = vpop.f32.mrb[0].mxu0
      %v2810 = vadd.f32 0.0, %v2809
      %v2811 = vpop.f32.mrb[0].mxu0
      %v2812 = vpop.f32.mrb[0].mxu0
      %v2813 = vadd.f32 0.0, %v2812
      %v2814 = vpop.f32.mrb[0].mxu0
      %2815 = vmatprep.mubr.bf16.mxu0 0
      %2816 = vmatmul.mubr.bf16.gmra.mrb[0].mxu0 %v2638
      %v2817 = vpop.f32.mrb[0].mxu0
      %v2818 = vadd.f32 0.0, %v2817
      %v2819 = vpop.f32.mrb[0].mxu0
      %v2820 = vpop.f32.mrb[0].mxu0
      %v2821 = vadd.f32 0.0, %v2820
      %v2822 = vpop.f32.mrb[0].mxu0
      %2823 = vmatprep.mubr.bf16.mxu0 0
      %2824 = vmatmul.mubr.bf16.gmra.mrb[0].mxu0 %v2639
      %v2825 = vpop.f32.mrb[0].mxu0
      %v2826 = vadd.f32 0.0, %v2825
      %v2827 = vpop.f32.mrb[0].mxu0
      %v2828 = vpop.f32.mrb[0].mxu0
      %v2829 = vadd.f32 0.0, %v2828
      %v2830 = vpop.f32.mrb[0].mxu0
      %2831 = vmatprep.mubr.bf16.mxu0 0
      %2832 = vmatmul.mubr.bf16.gmra.mrb[0].mxu0 %v2640
      %v2833 = vpop.f32.mrb[0].mxu0
      %v2834 = vadd.f32 0.0, %v2833
      %v2835 = vpop.f32.mrb[0].mxu0
      %v2836 = vpop.f32.mrb[0].mxu0
      %v2837 = vadd.f32 0.0, %v2836
      %v2838 = vpop.f32.mrb[0].mxu0
      %2839 = vmatprep.mubr.bf16.mxu0 0
      %2840 = vmatmul.mubr.bf16.gmra.mrb[0].mxu0 %v2641
      %v2841 = vpop.f32.mrb[0].mxu0
      %v2842 = vadd.f32 0.0, %v2841
      %v2843 = vpop.f32.mrb[0].mxu0
      %v2844 = vpop.f32.mrb[0].mxu0
      %v2845 = vadd.f32 0.0, %v2844
      %v2846 = vpop.f32.mrb[0].mxu0
      %2847 = vmatprep.mubr.bf16.mxu0 0
      %2848 = vmatmul.mubr.bf16.gmra.mrb[0].mxu0 %v2642
      %v2849 = vpop.f32.mrb[0].mxu0
      %v2850 = vadd.f32 0.0, %v2849
      %v2851 = vpop.f32.mrb[0].mxu0
      %v2852 = vpop.f32.mrb[0].mxu0
      %v2853 = vadd.f32 0.0, %v2852
      %v2854 = vpop.f32.mrb[0].mxu0
      %2855 = vmatprep.mubr.bf16.mxu0 0
      %2856 = vmatmul.mubr.bf16.gmra.mrb[0].mxu0 %v2643
      %v2857 = vpop.f32.mrb[0].mxu0
      %v2858 = vadd.f32 0.0, %v2857
      %v2859 = vpop.f32.mrb[0].mxu0
      %v2860 = vpop.f32.mrb[0].mxu0
      %v2861 = vadd.f32 0.0, %v2860
      %v2862 = vpop.f32.mrb[0].mxu0
      %2863 = vmatprep.mubr.bf16.mxu0 0
      %2864 = vmatmul.mubr.bf16.gmra.mrb[0].mxu0 %v2644
      %v2865 = vpop.f32.mrb[0].mxu0
      %v2866 = vadd.f32 0.0, %v2865
      %v2867 = vpop.f32.mrb[0].mxu0
      %v2868 = vpop.f32.mrb[0].mxu0
      %v2869 = vadd.f32 0.0, %v2868
      %v2870 = vpop.f32.mrb[0].mxu0
      %2871 = vmatprep.mubr.bf16.mxu0 0
      %2872 = vmatmul.mubr.bf16.gmra.mrb[0].mxu0 %v2645
      %v2873 = vpop.f32.mrb[0].mxu0
      %v2874 = vadd.f32 0.0, %v2873
      %v2875 = vpop.f32.mrb[0].mxu0
      %v2876 = vpop.f32.mrb[0].mxu0
      %v2877 = vadd.f32 0.0, %v2876
      %v2878 = vpop.f32.mrb[0].mxu0
      %2879 = vmatprep.mubr.bf16.mxu0 0
      %2880 = vmatmul.mubr.bf16.gmra.mrb[0].mxu0 %v2646
      %v2881 = vpop.f32.mrb[0].mxu0
      %v2882 = vadd.f32 0.0, %v2881
      %v2883 = vpop.f32.mrb[0].mxu0
      %v2884 = vpop.f32.mrb[0].mxu0
      %v2885 = vadd.f32 0.0, %v2884
      %v2886 = vpop.f32.mrb[0].mxu0
      %2887 = vmatprep.mubr.bf16.mxu0 0
      %2888 = vmatmul.mubr.bf16.gmra.mrb[0].mxu0 %v2647
      %v2889 = vpop.f32.mrb[0].mxu0
      %v2890 = vadd.f32 0.0, %v2889
      %v2891 = vpop.f32.mrb[0].mxu0
      %v2892 = vpop.f32.mrb[0].mxu0
      %v2893 = vadd.f32 0.0, %v2892
      %v2894 = vpop.f32.mrb[0].mxu0
      %2895 = vmatprep.mubr.bf16.mxu0 0
      %2896 = vmatmul.mubr.bf16.gmra.mrb[0].mxu0 %v2648
      %v2897 = vpop.f32.mrb[0].mxu0
      %v2898 = vadd.f32 0.0, %v2897
      %v2899 = vpop.f32.mrb[0].mxu0
      %v2900 = vpop.f32.mrb[0].mxu0
      %v2901 = vadd.f32 0.0, %v2900
      %v2902 = vpop.f32.mrb[0].mxu0
      %2903 = vmatprep.mubr.bf16.mxu0 0
      %2904 = vmatmul.mubr.bf16.gmra.mrb[0].mxu0 %v2649
      %v2905 = vpop.f32.mrb[0].mxu0
      %v2906 = vadd.f32 0.0, %v2905
      %v2907 = vpop.f32.mrb[0].mxu0
      %v2908 = vpop.f32.mrb[0].mxu0
      %v2909 = vadd.f32 0.0, %v2908
      %v2910 = vpop.f32.mrb[0].mxu0
      %2911 = vmatprep.mubr.bf16.mxu0 0
      %2912 = vmatmul.mubr.bf16.gmra.mrb[0].mxu0 %v2650
      %v2913 = vpop.f32.mrb[0].mxu0
      %v2914 = vadd.f32 0.0, %v2913
      %v2915 = vpop.f32.mrb[0].mxu0
      %v2916 = vpop.f32.mrb[0].mxu0
      %v2917 = vadd.f32 0.0, %v2916
      %v2918 = vpop.f32.mrb[0].mxu0
      %2919 = vmatprep.mubr.bf16.mxu0 0
      %2920 = vmatmul.mubr.bf16.gmra.mrb[0].mxu0 %v2651
      %v2921 = vpop.f32.mrb[0].mxu0
      %v2922 = vadd.f32 0.0, %v2921
      %v2923 = vpop.f32.mrb[0].mxu0
      %v2924 = vpop.f32.mrb[0].mxu0
      %v2925 = vadd.f32 0.0, %v2924
      %v2926 = vpop.f32.mrb[0].mxu0
      %2927 = vmatprep.mubr.bf16.mxu0 0
      %2928 = vmatmul.mubr.bf16.gmra.mrb[0].mxu0 %v2652
      %v2929 = vpop.f32.mrb[0].mxu0
      %v2930 = vadd.f32 0.0, %v2929
      %v2931 = vpop.f32.mrb[0].mxu0
      %v2932 = vpop.f32.mrb[0].mxu0
      %v2933 = vadd.f32 0.0, %v2932
      %v2934 = vpop.f32.mrb[0].mxu0
      %2935 = vmatprep.mubr.bf16.mxu0 0
      %2936 = vmatmul.mubr.bf16.gmra.mrb[0].mxu0 %v2653
      %v2937 = vpop.f32.mrb[0].mxu0
      %v2938 = vadd.f32 0.0, %v2937
      %v2939 = vpop.f32.mrb[0].mxu0
      %v2940 = vpop.f32.mrb[0].mxu0
      %v2941 = vadd.f32 0.0, %v2940
      %v2942 = vpop.f32.mrb[0].mxu0
      %2943 = vdwg.mxu0
      %v2944 = vadd.f32 %v2534, %v2754
      %v2945 = vadd.f32 %v2535, %v2757
      %v2946 = vadd.f32 %v2536, %v2762
      %v2947 = vadd.f32 %v2537, %v2765
      %v2948 = vadd.f32 %v2538, %v2770
      %v2949 = vadd.f32 %v2539, %v2773
      %v2950 = vadd.f32 %v2540, %v2778
      %v2951 = vadd.f32 %v2541, %v2781
      %v2952 = vadd.f32 %v2542, %v2786
      %v2953 = vadd.f32 %v2543, %v2789
      %v2954 = vadd.f32 %v2544, %v2794
      %v2955 = vadd.f32 %v2545, %v2797
      %v2956 = vadd.f32 %v2546, %v2802
      %v2957 = vadd.f32 %v2547, %v2805
      %v2958 = vadd.f32 %v2548, %v2810
      %v2959 = vadd.f32 %v2549, %v2813
      %v2960 = vadd.f32 %v2550, %v2818
      %v2961 = vadd.f32 %v2551, %v2821
      %v2962 = vadd.f32 %v2552, %v2826
      %v2963 = vadd.f32 %v2553, %v2829
      %v2964 = vadd.f32 %v2554, %v2834
      %v2965 = vadd.f32 %v2555, %v2837
      %v2966 = vadd.f32 %v2556, %v2842
      %v2967 = vadd.f32 %v2557, %v2845
      %v2968 = vadd.f32 %v2558, %v2850
      %v2969 = vadd.f32 %v2559, %v2853
      %v2970 = vadd.f32 %v2560, %v2858
      %v2971 = vadd.f32 %v2561, %v2861
      %v2972 = vadd.f32 %v2562, %v2866
      %v2973 = vadd.f32 %v2563, %v2869
      %v2974 = vadd.f32 %v2564, %v2874
      %v2975 = vadd.f32 %v2565, %v2877
      %v2976 = vadd.f32 %v2566, %v2882
      %v2977 = vadd.f32 %v2567, %v2885
      %v2978 = vadd.f32 %v2568, %v2890
      %v2979 = vadd.f32 %v2569, %v2893
      %v2980 = vadd.f32 %v2570, %v2898
      %v2981 = vadd.f32 %v2571, %v2901
      %v2982 = vadd.f32 %v2572, %v2906
      %v2983 = vadd.f32 %v2573, %v2909
      %v2984 = vadd.f32 %v2574, %v2914
      %v2985 = vadd.f32 %v2575, %v2917
      %v2986 = vadd.f32 %v2576, %v2922
      %v2987 = vadd.f32 %v2577, %v2925
      %v2988 = vadd.f32 %v2578, %v2930
      %v2989 = vadd.f32 %v2579, %v2933
      %v2990 = vadd.f32 %v2580, %v2938
      %v2991 = vadd.f32 %v2581, %v2941
      %v2992 = vld [vmem:[%s204 + $0x31] sm:$0xff]
      %v2993 = vld [vmem:[%s204 + $0x39] sm:$0xff]
      %v2994 = vld [vmem:[%s204 + $0x41] sm:$0xff]
      %v2995 = vld [vmem:[%s204 + $0x49] sm:$0xff]
      %v2996 = vld [vmem:[%s204 + $0x51] sm:$0xff]
      %v2997 = vld [vmem:[%s204 + $0x59] sm:$0xff]
      %v2998 = vld [vmem:[%s204 + $0x61] sm:$0xff]
      %v2999 = vld [vmem:[%s204 + $0x69] sm:$0xff]
      %v3000 = vld [vmem:[%s204 + $0x71] sm:$0xff]
      %v3001 = vld [vmem:[%s204 + $0x79] sm:$0xff]
      %v3002 = vld [vmem:[%s204 + $0x81] sm:$0xff]
      %v3003 = vld [vmem:[%s204 + $0x89] sm:$0xff]
      %v3004 = vld [vmem:[%s204 + $0x91] sm:$0xff]
      %v3005 = vld [vmem:[%s204 + $0x99] sm:$0xff]
      %v3006 = vld [vmem:[%s204 + $0xa1] sm:$0xff]
      %v3007 = vld [vmem:[%s204 + $0xa9] sm:$0xff]
      %v3008 = vld [vmem:[%s204 + $0xb1] sm:$0xff]
      %v3009 = vld [vmem:[%s204 + $0xb9] sm:$0xff]
      %v3010 = vld [vmem:[%s204 + $0xc1] sm:$0xff]
      %v3011 = vld [vmem:[%s204 + $0xc9] sm:$0xff]
      %v3012 = vld [vmem:[%s204 + $0xd1] sm:$0xff]
      %v3013 = vld [vmem:[%s204 + $0xd9] sm:$0xff]
      %v3014 = vld [vmem:[%s204 + $0xe1] sm:$0xff]
      %v3015 = vld [vmem:[%s204 + $0xe9] sm:$0xff]
      %v3016 = vld [vmem:[%s204 + $0xf1] sm:$0xff]
      %v3017 = vld [vmem:[%s204 + $0xf9] sm:$0xff]
      %v3018 = vld [vmem:[%s204 + $0x101] sm:$0xff]
      %v3019 = vld [vmem:[%s204 + $0x109] sm:$0xff]
      %v3020 = vld [vmem:[%s204 + $0x111] sm:$0xff]
      %v3021 = vld [vmem:[%s204 + $0x119] sm:$0xff]
      %v3022 = vld [vmem:[%s204 + $0x121] sm:$0xff]
      %v3023 = vld [vmem:[%s204 + $0x129] sm:$0xff]
      %v3024 = vld [vmem:[%s204 + $0x131] sm:$0xff]
      %v3025 = vld [vmem:[%s204 + $0x139] sm:$0xff]
      %v3026 = vld [vmem:[%s204 + $0x141] sm:$0xff]
      %v3027 = vld [vmem:[%s204 + $0x149] sm:$0xff]
      %v3028 = vld [vmem:[%s204 + $0x151] sm:$0xff]
      %v3029 = vld [vmem:[%s204 + $0x159] sm:$0xff]
      %v3030 = vld [vmem:[%s204 + $0x161] sm:$0xff]
      %v3031 = vld [vmem:[%s204 + $0x169] sm:$0xff]
      %v3032 = vld [vmem:[%s204 + $0x171] sm:$0xff]
      %v3033 = vld [vmem:[%s204 + $0x179] sm:$0xff]
      %v3034 = vld [vmem:[%s204 + $0x181] sm:$0xff]
      %v3035 = vld [vmem:[%s204 + $0x189] sm:$0xff]
      %v3036 = vld [vmem:[%s204 + $0x191] sm:$0xff]
      %v3037 = vld [vmem:[%s204 + $0x199] sm:$0xff]
      %v3038 = vld [vmem:[%s204 + $0x1a1] sm:$0xff]
      %v3039 = vld [vmem:[%s204 + $0x1a9] sm:$0xff]
      %v3040 = vpack.c.bf16 %v2993, %v2992
      %v3041 = vpack.c.bf16 %v2995, %v2994
      %v3042 = vpack.c.bf16 %v2997, %v2996
      %v3043 = vpack.c.bf16 %v2999, %v2998
      %v3044 = vpack.c.bf16 %v3001, %v3000
      %v3045 = vpack.c.bf16 %v3003, %v3002
      %v3046 = vpack.c.bf16 %v3005, %v3004
      %v3047 = vpack.c.bf16 %v3007, %v3006
      %v3048 = vpack.c.bf16 %v3009, %v3008
      %v3049 = vpack.c.bf16 %v3011, %v3010
      %v3050 = vpack.c.bf16 %v3013, %v3012
      %v3051 = vpack.c.bf16 %v3015, %v3014
      %v3052 = vpack.c.bf16 %v3017, %v3016
      %v3053 = vpack.c.bf16 %v3019, %v3018
      %v3054 = vpack.c.bf16 %v3021, %v3020
      %v3055 = vpack.c.bf16 %v3023, %v3022
      %v3056 = vpack.c.bf16 %v3025, %v3024
      %v3057 = vpack.c.bf16 %v3027, %v3026
      %v3058 = vpack.c.bf16 %v3029, %v3028
      %v3059 = vpack.c.bf16 %v3031, %v3030
      %v3060 = vpack.c.bf16 %v3033, %v3032
      %v3061 = vpack.c.bf16 %v3035, %v3034
      %v3062 = vpack.c.bf16 %v3037, %v3036
      %v3063 = vpack.c.bf16 %v3039, %v3038
      %s3064 = scalar_lea.vmem %s208, 448
      %v3065 = vld [vmem:[%s3064] sm:$0xf]
      %v3066 = vld [vmem:[%s3064 + $0x4] sm:$0xf]
      %v3067 = vld [vmem:[%s3064 + $0x8] sm:$0xf]
      %v3068 = vld [vmem:[%s3064 + $0xc] sm:$0xf]
      %v3069 = vld [vmem:[%s3064 + $0x10] sm:$0xf]
      %v3070 = vld [vmem:[%s3064 + $0x14] sm:$0xf]
      %v3071 = vld [vmem:[%s3064 + $0x18] sm:$0xf]
      %v3072 = vld [vmem:[%s3064 + $0x1c] sm:$0xf]
      %v3073 = vld [vmem:[%s3064 + $0x20] sm:$0xf]
      %v3074 = vld [vmem:[%s3064 + $0x24] sm:$0xf]
      %v3075 = vld [vmem:[%s3064 + $0x28] sm:$0xf]
      %v3076 = vld [vmem:[%s3064 + $0x2c] sm:$0xf]
      %v3077 = vld [vmem:[%s3064 + $0x30] sm:$0xf]
      %v3078 = vld [vmem:[%s3064 + $0x34] sm:$0xf]
      %v3079 = vld [vmem:[%s3064 + $0x38] sm:$0xf]
      %v3080 = vld [vmem:[%s3064 + $0x3c] sm:$0xf]
      %v3097 = vunpack.c.l.b16 %v3065
      %v3098 = vunpack.c.l.b16 %v3066
      %v3099 = vunpack.c.l.b16 %v3067
      %v3100 = vunpack.c.l.b16 %v3068
      %v3101 = vunpack.c.l.b16 %v3069
      %v3102 = vunpack.c.l.b16 %v3070
      %v3103 = vunpack.c.l.b16 %v3071
      %v3104 = vunpack.c.l.b16 %v3072
      %v3105 = vunpack.c.l.b16 %v3073
      %v3106 = vunpack.c.l.b16 %v3074
      %v3107 = vunpack.c.l.b16 %v3075
      %v3108 = vunpack.c.l.b16 %v3076
      %v3109 = vunpack.c.l.b16 %v3077
      %v3110 = vunpack.c.l.b16 %v3078
      %v3111 = vunpack.c.l.b16 %v3079
      %v3112 = vunpack.c.l.b16 %v3080
      %v3113 = vpack.c.b16 %v3098, %v3097
      %v3114 = vpack.c.b16 %v3100, %v3099
      %v3115 = vpack.c.b16 %v3102, %v3101
      %v3116 = vpack.c.b16 %v3104, %v3103
      %v3117 = vpack.c.b16 %v3106, %v3105
      %v3118 = vpack.c.b16 %v3108, %v3107
      %v3119 = vpack.c.b16 %v3110, %v3109
      %v3120 = vpack.c.b16 %v3112, %v3111
      %3129 = vmatprep.subr.bf16.mxu0 0
      %3130 = vmatpush1.bf16.msra.mxu0 %v3113
      %3131 = vmatprep.subr.bf16.mxu0 0
      %3132 = vmatpush1.bf16.msra.mxu0 %v3114
      %3133 = vmatprep.subr.bf16.mxu0 0
      %3134 = vmatpush1.bf16.msra.mxu0 %v3115
      %3135 = vmatprep.subr.bf16.mxu0 0
      %3136 = vmatpush1.bf16.msra.mxu0 %v3116
      %3137 = vmatprep.subr.bf16.mxu0 0
      %3138 = vmatpush1.bf16.msra.mxu0 %v3117
      %3139 = vmatprep.subr.bf16.mxu0 0
      %3140 = vmatpush1.bf16.msra.mxu0 %v3118
      %3141 = vmatprep.subr.bf16.mxu0 0
      %3142 = vmatpush1.bf16.msra.mxu0 %v3119
      %3143 = vmatprep.subr.bf16.mxu0 0
      %3144 = vmatpush1.bf16.msra.mxu0 %v3120
      %3145 = vmatprep.subr.bf16.mxu0 0
      %3146 = vmatpush1.bf16.msra.mxu0 0
      %3147 = vmatprep.subr.bf16.mxu0 0
      %3148 = vmatpush1.bf16.msra.mxu0 0
      %3149 = vmatprep.subr.bf16.mxu0 0
      %3150 = vmatpush1.bf16.msra.mxu0 0
      %3151 = vmatprep.subr.bf16.mxu0 0
      %3152 = vmatpush1.bf16.msra.mxu0 0
      %3153 = vmatprep.subr.bf16.mxu0 0
      %3154 = vmatpush1.bf16.msra.mxu0 0
      %3155 = vmatprep.subr.bf16.mxu0 0
      %3156 = vmatpush1.bf16.msra.mxu0 0
      %3157 = vmatprep.subr.bf16.mxu0 0
      %3158 = vmatpush1.bf16.msra.mxu0 0
      %3159 = vmatprep.subr.bf16.mxu0 0
      %3160 = vmatpush1.bf16.msra.mxu0 0
      %3161 = vmatprep.mubr.bf16.mxu0 0
      %3162 = vmatmul.mubr.bf16.gmra.mrb[0].mxu0 %v3040
      %v3163 = vpop.f32.mrb[0].mxu0
      %v3164 = vadd.f32 0.0, %v3163
      %v3165 = vpop.f32.mrb[0].mxu0
      %v3166 = vpop.f32.mrb[0].mxu0
      %v3167 = vadd.f32 0.0, %v3166
      %v3168 = vpop.f32.mrb[0].mxu0
      %3169 = vmatprep.mubr.bf16.mxu0 0
      %3170 = vmatmul.mubr.bf16.gmra.mrb[0].mxu0 %v3041
      %v3171 = vpop.f32.mrb[0].mxu0
      %v3172 = vadd.f32 0.0, %v3171
      %v3173 = vpop.f32.mrb[0].mxu0
      %v3174 = vpop.f32.mrb[0].mxu0
      %v3175 = vadd.f32 0.0, %v3174
      %v3176 = vpop.f32.mrb[0].mxu0
      %3177 = vmatprep.mubr.bf16.mxu0 0
      %3178 = vmatmul.mubr.bf16.gmra.mrb[0].mxu0 %v3042
      %v3179 = vpop.f32.mrb[0].mxu0
      %v3180 = vadd.f32 0.0, %v3179
      %v3181 = vpop.f32.mrb[0].mxu0
      %v3182 = vpop.f32.mrb[0].mxu0
      %v3183 = vadd.f32 0.0, %v3182
      %v3184 = vpop.f32.mrb[0].mxu0
      %3185 = vmatprep.mubr.bf16.mxu0 0
      %3186 = vmatmul.mubr.bf16.gmra.mrb[0].mxu0 %v3043
      %v3187 = vpop.f32.mrb[0].mxu0
      %v3188 = vadd.f32 0.0, %v3187
      %v3189 = vpop.f32.mrb[0].mxu0
      %v3190 = vpop.f32.mrb[0].mxu0
      %v3191 = vadd.f32 0.0, %v3190
      %v3192 = vpop.f32.mrb[0].mxu0
      %3193 = vmatprep.mubr.bf16.mxu0 0
      %3194 = vmatmul.mubr.bf16.gmra.mrb[0].mxu0 %v3044
      %v3195 = vpop.f32.mrb[0].mxu0
      %v3196 = vadd.f32 0.0, %v3195
      %v3197 = vpop.f32.mrb[0].mxu0
      %v3198 = vpop.f32.mrb[0].mxu0
      %v3199 = vadd.f32 0.0, %v3198
      %v3200 = vpop.f32.mrb[0].mxu0
      %3201 = vmatprep.mubr.bf16.mxu0 0
      %3202 = vmatmul.mubr.bf16.gmra.mrb[0].mxu0 %v3045
      %v3203 = vpop.f32.mrb[0].mxu0
      %v3204 = vadd.f32 0.0, %v3203
      %v3205 = vpop.f32.mrb[0].mxu0
      %v3206 = vpop.f32.mrb[0].mxu0
      %v3207 = vadd.f32 0.0, %v3206
      %v3208 = vpop.f32.mrb[0].mxu0
      %3209 = vmatprep.mubr.bf16.mxu0 0
      %3210 = vmatmul.mubr.bf16.gmra.mrb[0].mxu0 %v3046
      %v3211 = vpop.f32.mrb[0].mxu0
      %v3212 = vadd.f32 0.0, %v3211
      %v3213 = vpop.f32.mrb[0].mxu0
      %v3214 = vpop.f32.mrb[0].mxu0
      %v3215 = vadd.f32 0.0, %v3214
      %v3216 = vpop.f32.mrb[0].mxu0
      %3217 = vmatprep.mubr.bf16.mxu0 0
      %3218 = vmatmul.mubr.bf16.gmra.mrb[0].mxu0 %v3047
      %v3219 = vpop.f32.mrb[0].mxu0
      %v3220 = vadd.f32 0.0, %v3219
      %v3221 = vpop.f32.mrb[0].mxu0
      %v3222 = vpop.f32.mrb[0].mxu0
      %v3223 = vadd.f32 0.0, %v3222
      %v3224 = vpop.f32.mrb[0].mxu0
      %3225 = vmatprep.mubr.bf16.mxu0 0
      %3226 = vmatmul.mubr.bf16.gmra.mrb[0].mxu0 %v3048
      %v3227 = vpop.f32.mrb[0].mxu0
      %v3228 = vadd.f32 0.0, %v3227
      %v3229 = vpop.f32.mrb[0].mxu0
      %v3230 = vpop.f32.mrb[0].mxu0
      %v3231 = vadd.f32 0.0, %v3230
      %v3232 = vpop.f32.mrb[0].mxu0
      %3233 = vmatprep.mubr.bf16.mxu0 0
      %3234 = vmatmul.mubr.bf16.gmra.mrb[0].mxu0 %v3049
      %v3235 = vpop.f32.mrb[0].mxu0
      %v3236 = vadd.f32 0.0, %v3235
      %v3237 = vpop.f32.mrb[0].mxu0
      %v3238 = vpop.f32.mrb[0].mxu0
      %v3239 = vadd.f32 0.0, %v3238
      %v3240 = vpop.f32.mrb[0].mxu0
      %3241 = vmatprep.mubr.bf16.mxu0 0
      %3242 = vmatmul.mubr.bf16.gmra.mrb[0].mxu0 %v3050
      %v3243 = vpop.f32.mrb[0].mxu0
      %v3244 = vadd.f32 0.0, %v3243
      %v3245 = vpop.f32.mrb[0].mxu0
      %v3246 = vpop.f32.mrb[0].mxu0
      %v3247 = vadd.f32 0.0, %v3246
      %v3248 = vpop.f32.mrb[0].mxu0
      %3249 = vmatprep.mubr.bf16.mxu0 0
      %3250 = vmatmul.mubr.bf16.gmra.mrb[0].mxu0 %v3051
      %v3251 = vpop.f32.mrb[0].mxu0
      %v3252 = vadd.f32 0.0, %v3251
      %v3253 = vpop.f32.mrb[0].mxu0
      %v3254 = vpop.f32.mrb[0].mxu0
      %v3255 = vadd.f32 0.0, %v3254
      %v3256 = vpop.f32.mrb[0].mxu0
      %3257 = vmatprep.mubr.bf16.mxu0 0
      %3258 = vmatmul.mubr.bf16.gmra.mrb[0].mxu0 %v3052
      %v3259 = vpop.f32.mrb[0].mxu0
      %v3260 = vadd.f32 0.0, %v3259
      %v3261 = vpop.f32.mrb[0].mxu0
      %v3262 = vpop.f32.mrb[0].mxu0
      %v3263 = vadd.f32 0.0, %v3262
      %v3264 = vpop.f32.mrb[0].mxu0
      %3265 = vmatprep.mubr.bf16.mxu0 0
      %3266 = vmatmul.mubr.bf16.gmra.mrb[0].mxu0 %v3053
      %v3267 = vpop.f32.mrb[0].mxu0
      %v3268 = vadd.f32 0.0, %v3267
      %v3269 = vpop.f32.mrb[0].mxu0
      %v3270 = vpop.f32.mrb[0].mxu0
      %v3271 = vadd.f32 0.0, %v3270
      %v3272 = vpop.f32.mrb[0].mxu0
      %3273 = vmatprep.mubr.bf16.mxu0 0
      %3274 = vmatmul.mubr.bf16.gmra.mrb[0].mxu0 %v3054
      %v3275 = vpop.f32.mrb[0].mxu0
      %v3276 = vadd.f32 0.0, %v3275
      %v3277 = vpop.f32.mrb[0].mxu0
      %v3278 = vpop.f32.mrb[0].mxu0
      %v3279 = vadd.f32 0.0, %v3278
      %v3280 = vpop.f32.mrb[0].mxu0
      %3281 = vmatprep.mubr.bf16.mxu0 0
      %3282 = vmatmul.mubr.bf16.gmra.mrb[0].mxu0 %v3055
      %v3283 = vpop.f32.mrb[0].mxu0
      %v3284 = vadd.f32 0.0, %v3283
      %v3285 = vpop.f32.mrb[0].mxu0
      %v3286 = vpop.f32.mrb[0].mxu0
      %v3287 = vadd.f32 0.0, %v3286
      %v3288 = vpop.f32.mrb[0].mxu0
      %3289 = vmatprep.mubr.bf16.mxu0 0
      %3290 = vmatmul.mubr.bf16.gmra.mrb[0].mxu0 %v3056
      %v3291 = vpop.f32.mrb[0].mxu0
      %v3292 = vadd.f32 0.0, %v3291
      %v3293 = vpop.f32.mrb[0].mxu0
      %v3294 = vpop.f32.mrb[0].mxu0
      %v3295 = vadd.f32 0.0, %v3294
      %v3296 = vpop.f32.mrb[0].mxu0
      %3297 = vmatprep.mubr.bf16.mxu0 0
      %3298 = vmatmul.mubr.bf16.gmra.mrb[0].mxu0 %v3057
      %v3299 = vpop.f32.mrb[0].mxu0
      %v3300 = vadd.f32 0.0, %v3299
      %v3301 = vpop.f32.mrb[0].mxu0
      %v3302 = vpop.f32.mrb[0].mxu0
      %v3303 = vadd.f32 0.0, %v3302
      %v3304 = vpop.f32.mrb[0].mxu0
      %3305 = vmatprep.mubr.bf16.mxu0 0
      %3306 = vmatmul.mubr.bf16.gmra.mrb[0].mxu0 %v3058
      %v3307 = vpop.f32.mrb[0].mxu0
      %v3308 = vadd.f32 0.0, %v3307
      %v3309 = vpop.f32.mrb[0].mxu0
      %v3310 = vpop.f32.mrb[0].mxu0
      %v3311 = vadd.f32 0.0, %v3310
      %v3312 = vpop.f32.mrb[0].mxu0
      %3313 = vmatprep.mubr.bf16.mxu0 0
      %3314 = vmatmul.mubr.bf16.gmra.mrb[0].mxu0 %v3059
      %v3315 = vpop.f32.mrb[0].mxu0
      %v3316 = vadd.f32 0.0, %v3315
      %v3317 = vpop.f32.mrb[0].mxu0
      %v3318 = vpop.f32.mrb[0].mxu0
      %v3319 = vadd.f32 0.0, %v3318
      %v3320 = vpop.f32.mrb[0].mxu0
      %3321 = vmatprep.mubr.bf16.mxu0 0
      %3322 = vmatmul.mubr.bf16.gmra.mrb[0].mxu0 %v3060
      %v3323 = vpop.f32.mrb[0].mxu0
      %v3324 = vadd.f32 0.0, %v3323
      %v3325 = vpop.f32.mrb[0].mxu0
      %v3326 = vpop.f32.mrb[0].mxu0
      %v3327 = vadd.f32 0.0, %v3326
      %v3328 = vpop.f32.mrb[0].mxu0
      %3329 = vmatprep.mubr.bf16.mxu0 0
      %3330 = vmatmul.mubr.bf16.gmra.mrb[0].mxu0 %v3061
      %v3331 = vpop.f32.mrb[0].mxu0
      %v3332 = vadd.f32 0.0, %v3331
      %v3333 = vpop.f32.mrb[0].mxu0
      %v3334 = vpop.f32.mrb[0].mxu0
      %v3335 = vadd.f32 0.0, %v3334
      %v3336 = vpop.f32.mrb[0].mxu0
      %3337 = vmatprep.mubr.bf16.mxu0 0
      %3338 = vmatmul.mubr.bf16.gmra.mrb[0].mxu0 %v3062
      %v3339 = vpop.f32.mrb[0].mxu0
      %v3340 = vadd.f32 0.0, %v3339
      %v3341 = vpop.f32.mrb[0].mxu0
      %v3342 = vpop.f32.mrb[0].mxu0
      %v3343 = vadd.f32 0.0, %v3342
      %v3344 = vpop.f32.mrb[0].mxu0
      %3345 = vmatprep.mubr.bf16.mxu0 0
      %3346 = vmatmul.mubr.bf16.gmra.mrb[0].mxu0 %v3063
      %v3347 = vpop.f32.mrb[0].mxu0
      %v3348 = vadd.f32 0.0, %v3347
      %v3349 = vpop.f32.mrb[0].mxu0
      %v3350 = vpop.f32.mrb[0].mxu0
      %v3351 = vadd.f32 0.0, %v3350
      %v3352 = vpop.f32.mrb[0].mxu0
      %3353 = vdwg.mxu0
      %v3354 = vadd.f32 %v2944, %v3164
      %v3355 = vadd.f32 %v2945, %v3167
      %v3356 = vadd.f32 %v2946, %v3172
      %v3357 = vadd.f32 %v2947, %v3175
      %v3358 = vadd.f32 %v2948, %v3180
      %v3359 = vadd.f32 %v2949, %v3183
      %v3360 = vadd.f32 %v2950, %v3188
      %v3361 = vadd.f32 %v2951, %v3191
      %v3362 = vadd.f32 %v2952, %v3196
      %v3363 = vadd.f32 %v2953, %v3199
      %v3364 = vadd.f32 %v2954, %v3204
      %v3365 = vadd.f32 %v2955, %v3207
      %v3366 = vadd.f32 %v2956, %v3212
      %v3367 = vadd.f32 %v2957, %v3215
      %v3368 = vadd.f32 %v2958, %v3220
      %v3369 = vadd.f32 %v2959, %v3223
      %v3370 = vadd.f32 %v2960, %v3228
      %v3371 = vadd.f32 %v2961, %v3231
      %v3372 = vadd.f32 %v2962, %v3236
      %v3373 = vadd.f32 %v2963, %v3239
      %v3374 = vadd.f32 %v2964, %v3244
      %v3375 = vadd.f32 %v2965, %v3247
      %v3376 = vadd.f32 %v2966, %v3252
      %v3377 = vadd.f32 %v2967, %v3255
      %v3378 = vadd.f32 %v2968, %v3260
      %v3379 = vadd.f32 %v2969, %v3263
      %v3380 = vadd.f32 %v2970, %v3268
      %v3381 = vadd.f32 %v2971, %v3271
      %v3382 = vadd.f32 %v2972, %v3276
      %v3383 = vadd.f32 %v2973, %v3279
      %v3384 = vadd.f32 %v2974, %v3284
      %v3385 = vadd.f32 %v2975, %v3287
      %v3386 = vadd.f32 %v2976, %v3292
      %v3387 = vadd.f32 %v2977, %v3295
      %v3388 = vadd.f32 %v2978, %v3300
      %v3389 = vadd.f32 %v2979, %v3303
      %v3390 = vadd.f32 %v2980, %v3308
      %v3391 = vadd.f32 %v2981, %v3311
      %v3392 = vadd.f32 %v2982, %v3316
      %v3393 = vadd.f32 %v2983, %v3319
      %v3394 = vadd.f32 %v2984, %v3324
      %v3395 = vadd.f32 %v2985, %v3327
      %v3396 = vadd.f32 %v2986, %v3332
      %v3397 = vadd.f32 %v2987, %v3335
      %v3398 = vadd.f32 %v2988, %v3340
      %v3399 = vadd.f32 %v2989, %v3343
      %v3400 = vadd.f32 %v2990, %v3348
      %v3401 = vadd.f32 %v2991, %v3351
      %v3402 = vld [vmem:[%s204 + $0x32] sm:$0xff]
      %v3403 = vld [vmem:[%s204 + $0x3a] sm:$0xff]
      %v3404 = vld [vmem:[%s204 + $0x42] sm:$0xff]
      %v3405 = vld [vmem:[%s204 + $0x4a] sm:$0xff]
      %v3406 = vld [vmem:[%s204 + $0x52] sm:$0xff]
      %v3407 = vld [vmem:[%s204 + $0x5a] sm:$0xff]
      %v3408 = vld [vmem:[%s204 + $0x62] sm:$0xff]
      %v3409 = vld [vmem:[%s204 + $0x6a] sm:$0xff]
      %v3410 = vld [vmem:[%s204 + $0x72] sm:$0xff]
      %v3411 = vld [vmem:[%s204 + $0x7a] sm:$0xff]
      %v3412 = vld [vmem:[%s204 + $0x82] sm:$0xff]
      %v3413 = vld [vmem:[%s204 + $0x8a] sm:$0xff]
      %v3414 = vld [vmem:[%s204 + $0x92] sm:$0xff]
      %v3415 = vld [vmem:[%s204 + $0x9a] sm:$0xff]
      %v3416 = vld [vmem:[%s204 + $0xa2] sm:$0xff]
      %v3417 = vld [vmem:[%s204 + $0xaa] sm:$0xff]
      %v3418 = vld [vmem:[%s204 + $0xb2] sm:$0xff]
      %v3419 = vld [vmem:[%s204 + $0xba] sm:$0xff]
      %v3420 = vld [vmem:[%s204 + $0xc2] sm:$0xff]
      %v3421 = vld [vmem:[%s204 + $0xca] sm:$0xff]
      %v3422 = vld [vmem:[%s204 + $0xd2] sm:$0xff]
      %v3423 = vld [vmem:[%s204 + $0xda] sm:$0xff]
      %v3424 = vld [vmem:[%s204 + $0xe2] sm:$0xff]
      %v3425 = vld [vmem:[%s204 + $0xea] sm:$0xff]
      %v3426 = vld [vmem:[%s204 + $0xf2] sm:$0xff]
      %v3427 = vld [vmem:[%s204 + $0xfa] sm:$0xff]
      %v3428 = vld [vmem:[%s204 + $0x102] sm:$0xff]
      %v3429 = vld [vmem:[%s204 + $0x10a] sm:$0xff]
      %v3430 = vld [vmem:[%s204 + $0x112] sm:$0xff]
      %v3431 = vld [vmem:[%s204 + $0x11a] sm:$0xff]
      %v3432 = vld [vmem:[%s204 + $0x122] sm:$0xff]
      %v3433 = vld [vmem:[%s204 + $0x12a] sm:$0xff]
      %v3434 = vld [vmem:[%s204 + $0x132] sm:$0xff]
      %v3435 = vld [vmem:[%s204 + $0x13a] sm:$0xff]
      %v3436 = vld [vmem:[%s204 + $0x142] sm:$0xff]
      %v3437 = vld [vmem:[%s204 + $0x14a] sm:$0xff]
      %v3438 = vld [vmem:[%s204 + $0x152] sm:$0xff]
      %v3439 = vld [vmem:[%s204 + $0x15a] sm:$0xff]
      %v3440 = vld [vmem:[%s204 + $0x162] sm:$0xff]
      %v3441 = vld [vmem:[%s204 + $0x16a] sm:$0xff]
      %v3442 = vld [vmem:[%s204 + $0x172] sm:$0xff]
      %v3443 = vld [vmem:[%s204 + $0x17a] sm:$0xff]
      %v3444 = vld [vmem:[%s204 + $0x182] sm:$0xff]
      %v3445 = vld [vmem:[%s204 + $0x18a] sm:$0xff]
      %v3446 = vld [vmem:[%s204 + $0x192] sm:$0xff]
      %v3447 = vld [vmem:[%s204 + $0x19a] sm:$0xff]
      %v3448 = vld [vmem:[%s204 + $0x1a2] sm:$0xff]
      %v3449 = vld [vmem:[%s204 + $0x1aa] sm:$0xff]
      %v3450 = vpack.c.bf16 %v3403, %v3402
      %v3451 = vpack.c.bf16 %v3405, %v3404
      %v3452 = vpack.c.bf16 %v3407, %v3406
      %v3453 = vpack.c.bf16 %v3409, %v3408
      %v3454 = vpack.c.bf16 %v3411, %v3410
      %v3455 = vpack.c.bf16 %v3413, %v3412
      %v3456 = vpack.c.bf16 %v3415, %v3414
      %v3457 = vpack.c.bf16 %v3417, %v3416
      %v3458 = vpack.c.bf16 %v3419, %v3418
      %v3459 = vpack.c.bf16 %v3421, %v3420
      %v3460 = vpack.c.bf16 %v3423, %v3422
      %v3461 = vpack.c.bf16 %v3425, %v3424
      %v3462 = vpack.c.bf16 %v3427, %v3426
      %v3463 = vpack.c.bf16 %v3429, %v3428
      %v3464 = vpack.c.bf16 %v3431, %v3430
      %v3465 = vpack.c.bf16 %v3433, %v3432
      %v3466 = vpack.c.bf16 %v3435, %v3434
      %v3467 = vpack.c.bf16 %v3437, %v3436
      %v3468 = vpack.c.bf16 %v3439, %v3438
      %v3469 = vpack.c.bf16 %v3441, %v3440
      %v3470 = vpack.c.bf16 %v3443, %v3442
      %v3471 = vpack.c.bf16 %v3445, %v3444
      %v3472 = vpack.c.bf16 %v3447, %v3446
      %v3473 = vpack.c.bf16 %v3449, %v3448
      %s3474 = scalar_lea.vmem %s208, 512
      %v3475 = vld [vmem:[%s3474] sm:$0xf]
      %v3476 = vld [vmem:[%s3474 + $0x4] sm:$0xf]
      %v3477 = vld [vmem:[%s3474 + $0x8] sm:$0xf]
      %v3478 = vld [vmem:[%s3474 + $0xc] sm:$0xf]
      %v3479 = vld [vmem:[%s3474 + $0x10] sm:$0xf]
      %v3480 = vld [vmem:[%s3474 + $0x14] sm:$0xf]
      %v3481 = vld [vmem:[%s3474 + $0x18] sm:$0xf]
      %v3482 = vld [vmem:[%s3474 + $0x1c] sm:$0xf]
      %v3483 = vld [vmem:[%s3474 + $0x20] sm:$0xf]
      %v3484 = vld [vmem:[%s3474 + $0x24] sm:$0xf]
      %v3485 = vld [vmem:[%s3474 + $0x28] sm:$0xf]
      %v3486 = vld [vmem:[%s3474 + $0x2c] sm:$0xf]
      %v3487 = vld [vmem:[%s3474 + $0x30] sm:$0xf]
      %v3488 = vld [vmem:[%s3474 + $0x34] sm:$0xf]
      %v3489 = vld [vmem:[%s3474 + $0x38] sm:$0xf]
      %v3490 = vld [vmem:[%s3474 + $0x3c] sm:$0xf]
      %v3507 = vunpack.c.l.b16 %v3475
      %v3508 = vunpack.c.l.b16 %v3476
      %v3509 = vunpack.c.l.b16 %v3477
      %v3510 = vunpack.c.l.b16 %v3478
      %v3511 = vunpack.c.l.b16 %v3479
      %v3512 = vunpack.c.l.b16 %v3480
      %v3513 = vunpack.c.l.b16 %v3481
      %v3514 = vunpack.c.l.b16 %v3482
      %v3515 = vunpack.c.l.b16 %v3483
      %v3516 = vunpack.c.l.b16 %v3484
      %v3517 = vunpack.c.l.b16 %v3485
      %v3518 = vunpack.c.l.b16 %v3486
      %v3519 = vunpack.c.l.b16 %v3487
      %v3520 = vunpack.c.l.b16 %v3488
      %v3521 = vunpack.c.l.b16 %v3489
      %v3522 = vunpack.c.l.b16 %v3490
      %v3523 = vpack.c.b16 %v3508, %v3507
      %v3524 = vpack.c.b16 %v3510, %v3509
      %v3525 = vpack.c.b16 %v3512, %v3511
      %v3526 = vpack.c.b16 %v3514, %v3513
      %v3527 = vpack.c.b16 %v3516, %v3515
      %v3528 = vpack.c.b16 %v3518, %v3517
      %v3529 = vpack.c.b16 %v3520, %v3519
      %v3530 = vpack.c.b16 %v3522, %v3521
      %3539 = vmatprep.subr.bf16.mxu0 0
      %3540 = vmatpush1.bf16.msra.mxu0 %v3523
      %3541 = vmatprep.subr.bf16.mxu0 0
      %3542 = vmatpush1.bf16.msra.mxu0 %v3524
      %3543 = vmatprep.subr.bf16.mxu0 0
      %3544 = vmatpush1.bf16.msra.mxu0 %v3525
      %3545 = vmatprep.subr.bf16.mxu0 0
      %3546 = vmatpush1.bf16.msra.mxu0 %v3526
      %3547 = vmatprep.subr.bf16.mxu0 0
      %3548 = vmatpush1.bf16.msra.mxu0 %v3527
      %3549 = vmatprep.subr.bf16.mxu0 0
      %3550 = vmatpush1.bf16.msra.mxu0 %v3528
      %3551 = vmatprep.subr.bf16.mxu0 0
      %3552 = vmatpush1.bf16.msra.mxu0 %v3529
      %3553 = vmatprep.subr.bf16.mxu0 0
      %3554 = vmatpush1.bf16.msra.mxu0 %v3530
      %3555 = vmatprep.subr.bf16.mxu0 0
      %3556 = vmatpush1.bf16.msra.mxu0 0
      %3557 = vmatprep.subr.bf16.mxu0 0
      %3558 = vmatpush1.bf16.msra.mxu0 0
      %3559 = vmatprep.subr.bf16.mxu0 0
      %3560 = vmatpush1.bf16.msra.mxu0 0
      %3561 = vmatprep.subr.bf16.mxu0 0
      %3562 = vmatpush1.bf16.msra.mxu0 0
      %3563 = vmatprep.subr.bf16.mxu0 0
      %3564 = vmatpush1.bf16.msra.mxu0 0
      %3565 = vmatprep.subr.bf16.mxu0 0
      %3566 = vmatpush1.bf16.msra.mxu0 0
      %3567 = vmatprep.subr.bf16.mxu0 0
      %3568 = vmatpush1.bf16.msra.mxu0 0
      %3569 = vmatprep.subr.bf16.mxu0 0
      %3570 = vmatpush1.bf16.msra.mxu0 0
      %3571 = vmatprep.mubr.bf16.mxu0 0
      %3572 = vmatmul.mubr.bf16.gmra.mrb[0].mxu0 %v3450
      %v3573 = vpop.f32.mrb[0].mxu0
      %v3574 = vadd.f32 0.0, %v3573
      %v3575 = vpop.f32.mrb[0].mxu0
      %v3576 = vpop.f32.mrb[0].mxu0
      %v3577 = vadd.f32 0.0, %v3576
      %v3578 = vpop.f32.mrb[0].mxu0
      %3579 = vmatprep.mubr.bf16.mxu0 0
      %3580 = vmatmul.mubr.bf16.gmra.mrb[0].mxu0 %v3451
      %v3581 = vpop.f32.mrb[0].mxu0
      %v3582 = vadd.f32 0.0, %v3581
      %v3583 = vpop.f32.mrb[0].mxu0
      %v3584 = vpop.f32.mrb[0].mxu0
      %v3585 = vadd.f32 0.0, %v3584
      %v3586 = vpop.f32.mrb[0].mxu0
      %3587 = vmatprep.mubr.bf16.mxu0 0
      %3588 = vmatmul.mubr.bf16.gmra.mrb[0].mxu0 %v3452
      %v3589 = vpop.f32.mrb[0].mxu0
      %v3590 = vadd.f32 0.0, %v3589
      %v3591 = vpop.f32.mrb[0].mxu0
      %v3592 = vpop.f32.mrb[0].mxu0
      %v3593 = vadd.f32 0.0, %v3592
      %v3594 = vpop.f32.mrb[0].mxu0
      %3595 = vmatprep.mubr.bf16.mxu0 0
      %3596 = vmatmul.mubr.bf16.gmra.mrb[0].mxu0 %v3453
      %v3597 = vpop.f32.mrb[0].mxu0
      %v3598 = vadd.f32 0.0, %v3597
      %v3599 = vpop.f32.mrb[0].mxu0
      %v3600 = vpop.f32.mrb[0].mxu0
      %v3601 = vadd.f32 0.0, %v3600
      %v3602 = vpop.f32.mrb[0].mxu0
      %3603 = vmatprep.mubr.bf16.mxu0 0
      %3604 = vmatmul.mubr.bf16.gmra.mrb[0].mxu0 %v3454
      %v3605 = vpop.f32.mrb[0].mxu0
      %v3606 = vadd.f32 0.0, %v3605
      %v3607 = vpop.f32.mrb[0].mxu0
      %v3608 = vpop.f32.mrb[0].mxu0
      %v3609 = vadd.f32 0.0, %v3608
      %v3610 = vpop.f32.mrb[0].mxu0
      %3611 = vmatprep.mubr.bf16.mxu0 0
      %3612 = vmatmul.mubr.bf16.gmra.mrb[0].mxu0 %v3455
      %v3613 = vpop.f32.mrb[0].mxu0
      %v3614 = vadd.f32 0.0, %v3613
      %v3615 = vpop.f32.mrb[0].mxu0
      %v3616 = vpop.f32.mrb[0].mxu0
      %v3617 = vadd.f32 0.0, %v3616
      %v3618 = vpop.f32.mrb[0].mxu0
      %3619 = vmatprep.mubr.bf16.mxu0 0
      %3620 = vmatmul.mubr.bf16.gmra.mrb[0].mxu0 %v3456
      %v3621 = vpop.f32.mrb[0].mxu0
      %v3622 = vadd.f32 0.0, %v3621
      %v3623 = vpop.f32.mrb[0].mxu0
      %v3624 = vpop.f32.mrb[0].mxu0
      %v3625 = vadd.f32 0.0, %v3624
      %v3626 = vpop.f32.mrb[0].mxu0
      %3627 = vmatprep.mubr.bf16.mxu0 0
      %3628 = vmatmul.mubr.bf16.gmra.mrb[0].mxu0 %v3457
      %v3629 = vpop.f32.mrb[0].mxu0
      %v3630 = vadd.f32 0.0, %v3629
      %v3631 = vpop.f32.mrb[0].mxu0
      %v3632 = vpop.f32.mrb[0].mxu0
      %v3633 = vadd.f32 0.0, %v3632
      %v3634 = vpop.f32.mrb[0].mxu0
      %3635 = vmatprep.mubr.bf16.mxu0 0
      %3636 = vmatmul.mubr.bf16.gmra.mrb[0].mxu0 %v3458
      %v3637 = vpop.f32.mrb[0].mxu0
      %v3638 = vadd.f32 0.0, %v3637
      %v3639 = vpop.f32.mrb[0].mxu0
      %v3640 = vpop.f32.mrb[0].mxu0
      %v3641 = vadd.f32 0.0, %v3640
      %v3642 = vpop.f32.mrb[0].mxu0
      %3643 = vmatprep.mubr.bf16.mxu0 0
      %3644 = vmatmul.mubr.bf16.gmra.mrb[0].mxu0 %v3459
      %v3645 = vpop.f32.mrb[0].mxu0
      %v3646 = vadd.f32 0.0, %v3645
      %v3647 = vpop.f32.mrb[0].mxu0
      %v3648 = vpop.f32.mrb[0].mxu0
      %v3649 = vadd.f32 0.0, %v3648
      %v3650 = vpop.f32.mrb[0].mxu0
      %3651 = vmatprep.mubr.bf16.mxu0 0
      %3652 = vmatmul.mubr.bf16.gmra.mrb[0].mxu0 %v3460
      %v3653 = vpop.f32.mrb[0].mxu0
      %v3654 = vadd.f32 0.0, %v3653
      %v3655 = vpop.f32.mrb[0].mxu0
      %v3656 = vpop.f32.mrb[0].mxu0
      %v3657 = vadd.f32 0.0, %v3656
      %v3658 = vpop.f32.mrb[0].mxu0
      %3659 = vmatprep.mubr.bf16.mxu0 0
      %3660 = vmatmul.mubr.bf16.gmra.mrb[0].mxu0 %v3461
      %v3661 = vpop.f32.mrb[0].mxu0
      %v3662 = vadd.f32 0.0, %v3661
      %v3663 = vpop.f32.mrb[0].mxu0
      %v3664 = vpop.f32.mrb[0].mxu0
      %v3665 = vadd.f32 0.0, %v3664
      %v3666 = vpop.f32.mrb[0].mxu0
      %3667 = vmatprep.mubr.bf16.mxu0 0
      %3668 = vmatmul.mubr.bf16.gmra.mrb[0].mxu0 %v3462
      %v3669 = vpop.f32.mrb[0].mxu0
      %v3670 = vadd.f32 0.0, %v3669
      %v3671 = vpop.f32.mrb[0].mxu0
      %v3672 = vpop.f32.mrb[0].mxu0
      %v3673 = vadd.f32 0.0, %v3672
      %v3674 = vpop.f32.mrb[0].mxu0
      %3675 = vmatprep.mubr.bf16.mxu0 0
      %3676 = vmatmul.mubr.bf16.gmra.mrb[0].mxu0 %v3463
      %v3677 = vpop.f32.mrb[0].mxu0
      %v3678 = vadd.f32 0.0, %v3677
      %v3679 = vpop.f32.mrb[0].mxu0
      %v3680 = vpop.f32.mrb[0].mxu0
      %v3681 = vadd.f32 0.0, %v3680
      %v3682 = vpop.f32.mrb[0].mxu0
      %3683 = vmatprep.mubr.bf16.mxu0 0
      %3684 = vmatmul.mubr.bf16.gmra.mrb[0].mxu0 %v3464
      %v3685 = vpop.f32.mrb[0].mxu0
      %v3686 = vadd.f32 0.0, %v3685
      %v3687 = vpop.f32.mrb[0].mxu0
      %v3688 = vpop.f32.mrb[0].mxu0
      %v3689 = vadd.f32 0.0, %v3688
      %v3690 = vpop.f32.mrb[0].mxu0
      %3691 = vmatprep.mubr.bf16.mxu0 0
      %3692 = vmatmul.mubr.bf16.gmra.mrb[0].mxu0 %v3465
      %v3693 = vpop.f32.mrb[0].mxu0
      %v3694 = vadd.f32 0.0, %v3693
      %v3695 = vpop.f32.mrb[0].mxu0
      %v3696 = vpop.f32.mrb[0].mxu0
      %v3697 = vadd.f32 0.0, %v3696
      %v3698 = vpop.f32.mrb[0].mxu0
      %3699 = vmatprep.mubr.bf16.mxu0 0
      %3700 = vmatmul.mubr.bf16.gmra.mrb[0].mxu0 %v3466
      %v3701 = vpop.f32.mrb[0].mxu0
      %v3702 = vadd.f32 0.0, %v3701
      %v3703 = vpop.f32.mrb[0].mxu0
      %v3704 = vpop.f32.mrb[0].mxu0
      %v3705 = vadd.f32 0.0, %v3704
      %v3706 = vpop.f32.mrb[0].mxu0
      %3707 = vmatprep.mubr.bf16.mxu0 0
      %3708 = vmatmul.mubr.bf16.gmra.mrb[0].mxu0 %v3467
      %v3709 = vpop.f32.mrb[0].mxu0
      %v3710 = vadd.f32 0.0, %v3709
      %v3711 = vpop.f32.mrb[0].mxu0
      %v3712 = vpop.f32.mrb[0].mxu0
      %v3713 = vadd.f32 0.0, %v3712
      %v3714 = vpop.f32.mrb[0].mxu0
      %3715 = vmatprep.mubr.bf16.mxu0 0
      %3716 = vmatmul.mubr.bf16.gmra.mrb[0].mxu0 %v3468
      %v3717 = vpop.f32.mrb[0].mxu0
      %v3718 = vadd.f32 0.0, %v3717
      %v3719 = vpop.f32.mrb[0].mxu0
      %v3720 = vpop.f32.mrb[0].mxu0
      %v3721 = vadd.f32 0.0, %v3720
      %v3722 = vpop.f32.mrb[0].mxu0
      %3723 = vmatprep.mubr.bf16.mxu0 0
      %3724 = vmatmul.mubr.bf16.gmra.mrb[0].mxu0 %v3469
      %v3725 = vpop.f32.mrb[0].mxu0
      %v3726 = vadd.f32 0.0, %v3725
      %v3727 = vpop.f32.mrb[0].mxu0
      %v3728 = vpop.f32.mrb[0].mxu0
      %v3729 = vadd.f32 0.0, %v3728
      %v3730 = vpop.f32.mrb[0].mxu0
      %3731 = vmatprep.mubr.bf16.mxu0 0
      %3732 = vmatmul.mubr.bf16.gmra.mrb[0].mxu0 %v3470
      %v3733 = vpop.f32.mrb[0].mxu0
      %v3734 = vadd.f32 0.0, %v3733
      %v3735 = vpop.f32.mrb[0].mxu0
      %v3736 = vpop.f32.mrb[0].mxu0
      %v3737 = vadd.f32 0.0, %v3736
      %v3738 = vpop.f32.mrb[0].mxu0
      %3739 = vmatprep.mubr.bf16.mxu0 0
      %3740 = vmatmul.mubr.bf16.gmra.mrb[0].mxu0 %v3471
      %v3741 = vpop.f32.mrb[0].mxu0
      %v3742 = vadd.f32 0.0, %v3741
      %v3743 = vpop.f32.mrb[0].mxu0
      %v3744 = vpop.f32.mrb[0].mxu0
      %v3745 = vadd.f32 0.0, %v3744
      %v3746 = vpop.f32.mrb[0].mxu0
      %3747 = vmatprep.mubr.bf16.mxu0 0
      %3748 = vmatmul.mubr.bf16.gmra.mrb[0].mxu0 %v3472
      %v3749 = vpop.f32.mrb[0].mxu0
      %v3750 = vadd.f32 0.0, %v3749
      %v3751 = vpop.f32.mrb[0].mxu0
      %v3752 = vpop.f32.mrb[0].mxu0
      %v3753 = vadd.f32 0.0, %v3752
      %v3754 = vpop.f32.mrb[0].mxu0
      %3755 = vmatprep.mubr.bf16.mxu0 0
      %3756 = vmatmul.mubr.bf16.gmra.mrb[0].mxu0 %v3473
      %v3757 = vpop.f32.mrb[0].mxu0
      %v3758 = vadd.f32 0.0, %v3757
      %v3759 = vpop.f32.mrb[0].mxu0
      %v3760 = vpop.f32.mrb[0].mxu0
      %v3761 = vadd.f32 0.0, %v3760
      %v3762 = vpop.f32.mrb[0].mxu0
      %3763 = vdwg.mxu0
      %v3764 = vadd.f32 %v3354, %v3574
      %v3765 = vadd.f32 %v3355, %v3577
      %v3766 = vadd.f32 %v3356, %v3582
      %v3767 = vadd.f32 %v3357, %v3585
      %v3768 = vadd.f32 %v3358, %v3590
      %v3769 = vadd.f32 %v3359, %v3593
      %v3770 = vadd.f32 %v3360, %v3598
      %v3771 = vadd.f32 %v3361, %v3601
      %v3772 = vadd.f32 %v3362, %v3606
      %v3773 = vadd.f32 %v3363, %v3609
      %v3774 = vadd.f32 %v3364, %v3614
      %v3775 = vadd.f32 %v3365, %v3617
      %v3776 = vadd.f32 %v3366, %v3622
      %v3777 = vadd.f32 %v3367, %v3625
      %v3778 = vadd.f32 %v3368, %v3630
      %v3779 = vadd.f32 %v3369, %v3633
      %v3780 = vadd.f32 %v3370, %v3638
      %v3781 = vadd.f32 %v3371, %v3641
      %v3782 = vadd.f32 %v3372, %v3646
      %v3783 = vadd.f32 %v3373, %v3649
      %v3784 = vadd.f32 %v3374, %v3654
      %v3785 = vadd.f32 %v3375, %v3657
      %v3786 = vadd.f32 %v3376, %v3662
      %v3787 = vadd.f32 %v3377, %v3665
      %v3788 = vadd.f32 %v3378, %v3670
      %v3789 = vadd.f32 %v3379, %v3673
      %v3790 = vadd.f32 %v3380, %v3678
      %v3791 = vadd.f32 %v3381, %v3681
      %v3792 = vadd.f32 %v3382, %v3686
      %v3793 = vadd.f32 %v3383, %v3689
      %v3794 = vadd.f32 %v3384, %v3694
      %v3795 = vadd.f32 %v3385, %v3697
      %v3796 = vadd.f32 %v3386, %v3702
      %v3797 = vadd.f32 %v3387, %v3705
      %v3798 = vadd.f32 %v3388, %v3710
      %v3799 = vadd.f32 %v3389, %v3713
      %v3800 = vadd.f32 %v3390, %v3718
      %v3801 = vadd.f32 %v3391, %v3721
      %v3802 = vadd.f32 %v3392, %v3726
      %v3803 = vadd.f32 %v3393, %v3729
      %v3804 = vadd.f32 %v3394, %v3734
      %v3805 = vadd.f32 %v3395, %v3737
      %v3806 = vadd.f32 %v3396, %v3742
      %v3807 = vadd.f32 %v3397, %v3745
      %v3808 = vadd.f32 %v3398, %v3750
      %v3809 = vadd.f32 %v3399, %v3753
      %v3810 = vadd.f32 %v3400, %v3758
      %v3811 = vadd.f32 %v3401, %v3761
      %v3812 = vld [vmem:[%s211] sm:$0x1]
      %v3814 = vlaneseq
      %v3815 = vshrl.u32 %v3814, 7
      %v3816 = vsub.s32 0, %v3815
      %v3817 = vrot.slane %v3812, %v3816
      %v3819 = vadd.f32 %v3764, %v3817
      %v3820 = vadd.f32 %v3765, %v3817
      %v3821 = vadd.f32 %v3766, %v3817
      %v3822 = vadd.f32 %v3767, %v3817
      %v3823 = vadd.f32 %v3768, %v3817
      %v3824 = vadd.f32 %v3769, %v3817
      %v3825 = vadd.f32 %v3770, %v3817
      %v3826 = vadd.f32 %v3771, %v3817
      %v3827 = vadd.f32 %v3772, %v3817
      %v3828 = vadd.f32 %v3773, %v3817
      %v3829 = vadd.f32 %v3774, %v3817
      %v3830 = vadd.f32 %v3775, %v3817
      %v3831 = vadd.f32 %v3776, %v3817
      %v3832 = vadd.f32 %v3777, %v3817
      %v3833 = vadd.f32 %v3778, %v3817
      %v3834 = vadd.f32 %v3779, %v3817
      %v3835 = vadd.f32 %v3780, %v3817
      %v3836 = vadd.f32 %v3781, %v3817
      %v3837 = vadd.f32 %v3782, %v3817
      %v3838 = vadd.f32 %v3783, %v3817
      %v3839 = vadd.f32 %v3784, %v3817
      %v3840 = vadd.f32 %v3785, %v3817
      %v3841 = vadd.f32 %v3786, %v3817
      %v3842 = vadd.f32 %v3787, %v3817
      %v3843 = vadd.f32 %v3788, %v3817
      %v3844 = vadd.f32 %v3789, %v3817
      %v3845 = vadd.f32 %v3790, %v3817
      %v3846 = vadd.f32 %v3791, %v3817
      %v3847 = vadd.f32 %v3792, %v3817
      %v3848 = vadd.f32 %v3793, %v3817
      %v3849 = vadd.f32 %v3794, %v3817
      %v3850 = vadd.f32 %v3795, %v3817
      %v3851 = vadd.f32 %v3796, %v3817
      %v3852 = vadd.f32 %v3797, %v3817
      %v3853 = vadd.f32 %v3798, %v3817
      %v3854 = vadd.f32 %v3799, %v3817
      %v3855 = vadd.f32 %v3800, %v3817
      %v3856 = vadd.f32 %v3801, %v3817
      %v3857 = vadd.f32 %v3802, %v3817
      %v3858 = vadd.f32 %v3803, %v3817
      %v3859 = vadd.f32 %v3804, %v3817
      %v3860 = vadd.f32 %v3805, %v3817
      %v3861 = vadd.f32 %v3806, %v3817
      %v3862 = vadd.f32 %v3807, %v3817
      %v3863 = vadd.f32 %v3808, %v3817
      %v3864 = vadd.f32 %v3809, %v3817
      %v3865 = vadd.f32 %v3810, %v3817
      %v3866 = vadd.f32 %v3811, %v3817
      %v3867 = vmax.f32 %v3819, 0.0
      %v3868 = vmax.f32 %v3820, 0.0
      %v3869 = vmax.f32 %v3821, 0.0
      %v3870 = vmax.f32 %v3822, 0.0
      %v3871 = vmax.f32 %v3823, 0.0
      %v3872 = vmax.f32 %v3824, 0.0
      %v3873 = vmax.f32 %v3825, 0.0
      %v3874 = vmax.f32 %v3826, 0.0
      %v3875 = vmax.f32 %v3827, 0.0
      %v3876 = vmax.f32 %v3828, 0.0
      %v3877 = vmax.f32 %v3829, 0.0
      %v3878 = vmax.f32 %v3830, 0.0
      %v3879 = vmax.f32 %v3831, 0.0
      %v3880 = vmax.f32 %v3832, 0.0
      %v3881 = vmax.f32 %v3833, 0.0
      %v3882 = vmax.f32 %v3834, 0.0
      %v3883 = vmax.f32 %v3835, 0.0
      %v3884 = vmax.f32 %v3836, 0.0
      %v3885 = vmax.f32 %v3837, 0.0
      %v3886 = vmax.f32 %v3838, 0.0
      %v3887 = vmax.f32 %v3839, 0.0
      %v3888 = vmax.f32 %v3840, 0.0
      %v3889 = vmax.f32 %v3841, 0.0
      %v3890 = vmax.f32 %v3842, 0.0
      %v3891 = vmax.f32 %v3843, 0.0
      %v3892 = vmax.f32 %v3844, 0.0
      %v3893 = vmax.f32 %v3845, 0.0
      %v3894 = vmax.f32 %v3846, 0.0
      %v3895 = vmax.f32 %v3847, 0.0
      %v3896 = vmax.f32 %v3848, 0.0
      %v3897 = vmax.f32 %v3849, 0.0
      %v3898 = vmax.f32 %v3850, 0.0
      %v3899 = vmax.f32 %v3851, 0.0
      %v3900 = vmax.f32 %v3852, 0.0
      %v3901 = vmax.f32 %v3853, 0.0
      %v3902 = vmax.f32 %v3854, 0.0
      %v3903 = vmax.f32 %v3855, 0.0
      %v3904 = vmax.f32 %v3856, 0.0
      %v3905 = vmax.f32 %v3857, 0.0
      %v3906 = vmax.f32 %v3858, 0.0
      %v3907 = vmax.f32 %v3859, 0.0
      %v3908 = vmax.f32 %v3860, 0.0
      %v3909 = vmax.f32 %v3861, 0.0
      %v3910 = vmax.f32 %v3862, 0.0
      %v3911 = vmax.f32 %v3863, 0.0
      %v3912 = vmax.f32 %v3864, 0.0
      %v3913 = vmax.f32 %v3865, 0.0
      %v3914 = vmax.f32 %v3866, 0.0
      %v3915 = vlaneseq
      %v3916 = vshrl.u32 %v3915, 7
      %v3917 = vadd.s32 %v3916, 8
      %v3918 = vadd.s32 %v3916, 16
      %v3919 = vadd.s32 %v3916, 24
      %v3920 = vadd.s32 %v3916, 32
      %v3921 = vadd.s32 %v3916, 40
      %v3922 = vadd.s32 %v3916, 48
      %v3923 = vadd.s32 %v3916, 56
      %v3924 = vadd.s32 %v3916, 64
      %v3925 = vadd.s32 %v3916, 72
      %v3926 = vadd.s32 %v3916, 80
      %v3927 = vadd.s32 %v3916, 88
      %v3928 = vadd.s32 %v3916, 96
      %v3929 = vadd.s32 %v3916, 104
      %v3930 = vadd.s32 %v3916, 112
      %v3931 = vadd.s32 %v3916, 120
      %v3932 = vadd.s32 %v3916, 128
      %v3933 = vadd.s32 %v3916, 136
      %v3934 = vadd.s32 %v3916, 144
      %v3935 = vadd.s32 %v3916, 152
      %v3936 = vadd.s32 %v3916, 160
      %v3937 = vadd.s32 %v3916, 168
      %v3938 = vadd.s32 %v3916, 176
      %v3939 = vadd.s32 %v3916, 184
      %v3940 = vadd.s32 %v3916, 192
      %v3941 = vadd.s32 %v3916, 200
      %v3942 = vadd.s32 %v3916, 208
      %v3943 = vadd.s32 %v3916, 216
      %v3944 = vadd.s32 %v3916, 224
      %v3945 = vadd.s32 %v3916, 232
      %v3946 = vadd.s32 %v3916, 240
      %v3947 = vadd.s32 %v3916, 248
      %v3948 = vadd.s32 %v3916, 256
      %v3949 = vadd.s32 %v3916, 264
      %v3950 = vadd.s32 %v3916, 272
      %v3951 = vadd.s32 %v3916, 280
      %v3952 = vadd.s32 %v3916, 288
      %v3953 = vadd.s32 %v3916, 296
      %v3954 = vadd.s32 %v3916, 304
      %v3955 = vadd.s32 %v3916, 312
      %v3956 = vadd.s32 %v3916, 320
      %v3957 = vadd.s32 %v3916, 328
      %v3958 = vadd.s32 %v3916, 336
      %v3959 = vadd.s32 %v3916, 344
      %v3960 = vadd.s32 %v3916, 352
      %v3961 = vadd.s32 %v3916, 360
      %v3962 = vadd.s32 %v3916, 368
      %v3963 = vadd.s32 %v3916, 376
      %vm3964 = vcmp.lt.s32.totalorder %v3916, 0
      %v3965 = vsub.s32 0, %v3916
      %v3966 = vsel %vm3964, %v3965, %v3916
      %v3967 = vmul.u32.u64.compose %v3966, 2863311531
      %v3968 = vextract.low.u32 %v3967
      %v3969 = vextract.high.u32 %v3967
      %v3970 = vshrl.u32 %v3969, 4
      %v3971 = vmul.u32 %v3970, 24
      %v3972 = vsub.s32 %v3966, %v3971
      %v3973 = vsub.s32 0, %v3972
      %v3974 = vsel %vm3964, %v3973, %v3972
      %vm3975 = vcmp.lt.s32.totalorder %v3917, 0
      %v3976 = vsub.s32 0, %v3917
      %v3977 = vsel %vm3975, %v3976, %v3917
      %v3978 = vmul.u32.u64.compose %v3977, 2863311531
      %v3979 = vextract.low.u32 %v3978
      %v3980 = vextract.high.u32 %v3978
      %v3981 = vshrl.u32 %v3980, 4
      %v3982 = vmul.u32 %v3981, 24
      %v3983 = vsub.s32 %v3977, %v3982
      %v3984 = vsub.s32 0, %v3983
      %v3985 = vsel %vm3975, %v3984, %v3983
      %vm3986 = vcmp.lt.s32.totalorder %v3918, 0
      %v3987 = vsub.s32 0, %v3918
      %v3988 = vsel %vm3986, %v3987, %v3918
      %v3989 = vmul.u32.u64.compose %v3988, 2863311531
      %v3990 = vextract.low.u32 %v3989
      %v3991 = vextract.high.u32 %v3989
      %v3992 = vshrl.u32 %v3991, 4
      %v3993 = vmul.u32 %v3992, 24
      %v3994 = vsub.s32 %v3988, %v3993
      %v3995 = vsub.s32 0, %v3994
      %v3996 = vsel %vm3986, %v3995, %v3994
      %vm3997 = vcmp.lt.s32.totalorder %v3919, 0
      %v3998 = vsub.s32 0, %v3919
      %v3999 = vsel %vm3997, %v3998, %v3919
      %v4000 = vmul.u32.u64.compose %v3999, 2863311531
      %v4001 = vextract.low.u32 %v4000
      %v4002 = vextract.high.u32 %v4000
      %v4003 = vshrl.u32 %v4002, 4
      %v4004 = vmul.u32 %v4003, 24
      %v4005 = vsub.s32 %v3999, %v4004
      %v4006 = vsub.s32 0, %v4005
      %v4007 = vsel %vm3997, %v4006, %v4005
      %vm4008 = vcmp.lt.s32.totalorder %v3920, 0
      %v4009 = vsub.s32 0, %v3920
      %v4010 = vsel %vm4008, %v4009, %v3920
      %v4011 = vmul.u32.u64.compose %v4010, 2863311531
      %v4012 = vextract.low.u32 %v4011
      %v4013 = vextract.high.u32 %v4011
      %v4014 = vshrl.u32 %v4013, 4
      %v4015 = vmul.u32 %v4014, 24
      %v4016 = vsub.s32 %v4010, %v4015
      %v4017 = vsub.s32 0, %v4016
      %v4018 = vsel %vm4008, %v4017, %v4016
      %vm4019 = vcmp.lt.s32.totalorder %v3921, 0
      %v4020 = vsub.s32 0, %v3921
      %v4021 = vsel %vm4019, %v4020, %v3921
      %v4022 = vmul.u32.u64.compose %v4021, 2863311531
      %v4023 = vextract.low.u32 %v4022
      %v4024 = vextract.high.u32 %v4022
      %v4025 = vshrl.u32 %v4024, 4
      %v4026 = vmul.u32 %v4025, 24
      %v4027 = vsub.s32 %v4021, %v4026
      %v4028 = vsub.s32 0, %v4027
      %v4029 = vsel %vm4019, %v4028, %v4027
      %vm4030 = vcmp.lt.s32.totalorder %v3922, 0
      %v4031 = vsub.s32 0, %v3922
      %v4032 = vsel %vm4030, %v4031, %v3922
      %v4033 = vmul.u32.u64.compose %v4032, 2863311531
      %v4034 = vextract.low.u32 %v4033
      %v4035 = vextract.high.u32 %v4033
      %v4036 = vshrl.u32 %v4035, 4
      %v4037 = vmul.u32 %v4036, 24
      %v4038 = vsub.s32 %v4032, %v4037
      %v4039 = vsub.s32 0, %v4038
      %v4040 = vsel %vm4030, %v4039, %v4038
      %vm4041 = vcmp.lt.s32.totalorder %v3923, 0
      %v4042 = vsub.s32 0, %v3923
      %v4043 = vsel %vm4041, %v4042, %v3923
      %v4044 = vmul.u32.u64.compose %v4043, 2863311531
      %v4045 = vextract.low.u32 %v4044
      %v4046 = vextract.high.u32 %v4044
      %v4047 = vshrl.u32 %v4046, 4
      %v4048 = vmul.u32 %v4047, 24
      %v4049 = vsub.s32 %v4043, %v4048
      %v4050 = vsub.s32 0, %v4049
      %v4051 = vsel %vm4041, %v4050, %v4049
      %vm4052 = vcmp.lt.s32.totalorder %v3924, 0
      %v4053 = vsub.s32 0, %v3924
      %v4054 = vsel %vm4052, %v4053, %v3924
      %v4055 = vmul.u32.u64.compose %v4054, 2863311531
      %v4056 = vextract.low.u32 %v4055
      %v4057 = vextract.high.u32 %v4055
      %v4058 = vshrl.u32 %v4057, 4
      %v4059 = vmul.u32 %v4058, 24
      %v4060 = vsub.s32 %v4054, %v4059
      %v4061 = vsub.s32 0, %v4060
      %v4062 = vsel %vm4052, %v4061, %v4060
      %vm4063 = vcmp.lt.s32.totalorder %v3925, 0
      %v4064 = vsub.s32 0, %v3925
      %v4065 = vsel %vm4063, %v4064, %v3925
      %v4066 = vmul.u32.u64.compose %v4065, 2863311531
      %v4067 = vextract.low.u32 %v4066
      %v4068 = vextract.high.u32 %v4066
      %v4069 = vshrl.u32 %v4068, 4
      %v4070 = vmul.u32 %v4069, 24
      %v4071 = vsub.s32 %v4065, %v4070
      %v4072 = vsub.s32 0, %v4071
      %v4073 = vsel %vm4063, %v4072, %v4071
      %vm4074 = vcmp.lt.s32.totalorder %v3926, 0
      %v4075 = vsub.s32 0, %v3926
      %v4076 = vsel %vm4074, %v4075, %v3926
      %v4077 = vmul.u32.u64.compose %v4076, 2863311531
      %v4078 = vextract.low.u32 %v4077
      %v4079 = vextract.high.u32 %v4077
      %v4080 = vshrl.u32 %v4079, 4
      %v4081 = vmul.u32 %v4080, 24
      %v4082 = vsub.s32 %v4076, %v4081
      %v4083 = vsub.s32 0, %v4082
      %v4084 = vsel %vm4074, %v4083, %v4082
      %vm4085 = vcmp.lt.s32.totalorder %v3927, 0
      %v4086 = vsub.s32 0, %v3927
      %v4087 = vsel %vm4085, %v4086, %v3927
      %v4088 = vmul.u32.u64.compose %v4087, 2863311531
      %v4089 = vextract.low.u32 %v4088
      %v4090 = vextract.high.u32 %v4088
      %v4091 = vshrl.u32 %v4090, 4
      %v4092 = vmul.u32 %v4091, 24
      %v4093 = vsub.s32 %v4087, %v4092
      %v4094 = vsub.s32 0, %v4093
      %v4095 = vsel %vm4085, %v4094, %v4093
      %vm4096 = vcmp.lt.s32.totalorder %v3928, 0
      %v4097 = vsub.s32 0, %v3928
      %v4098 = vsel %vm4096, %v4097, %v3928
      %v4099 = vmul.u32.u64.compose %v4098, 2863311531
      %v4100 = vextract.low.u32 %v4099
      %v4101 = vextract.high.u32 %v4099
      %v4102 = vshrl.u32 %v4101, 4
      %v4103 = vmul.u32 %v4102, 24
      %v4104 = vsub.s32 %v4098, %v4103
      %v4105 = vsub.s32 0, %v4104
      %v4106 = vsel %vm4096, %v4105, %v4104
      %vm4107 = vcmp.lt.s32.totalorder %v3929, 0
      %v4108 = vsub.s32 0, %v3929
      %v4109 = vsel %vm4107, %v4108, %v3929
      %v4110 = vmul.u32.u64.compose %v4109, 2863311531
      %v4111 = vextract.low.u32 %v4110
      %v4112 = vextract.high.u32 %v4110
      %v4113 = vshrl.u32 %v4112, 4
      %v4114 = vmul.u32 %v4113, 24
      %v4115 = vsub.s32 %v4109, %v4114
      %v4116 = vsub.s32 0, %v4115
      %v4117 = vsel %vm4107, %v4116, %v4115
      %vm4118 = vcmp.lt.s32.totalorder %v3930, 0
      %v4119 = vsub.s32 0, %v3930
      %v4120 = vsel %vm4118, %v4119, %v3930
      %v4121 = vmul.u32.u64.compose %v4120, 2863311531
      %v4122 = vextract.low.u32 %v4121
      %v4123 = vextract.high.u32 %v4121
      %v4124 = vshrl.u32 %v4123, 4
      %v4125 = vmul.u32 %v4124, 24
      %v4126 = vsub.s32 %v4120, %v4125
      %v4127 = vsub.s32 0, %v4126
      %v4128 = vsel %vm4118, %v4127, %v4126
      %vm4129 = vcmp.lt.s32.totalorder %v3931, 0
      %v4130 = vsub.s32 0, %v3931
      %v4131 = vsel %vm4129, %v4130, %v3931
      %v4132 = vmul.u32.u64.compose %v4131, 2863311531
      %v4133 = vextract.low.u32 %v4132
      %v4134 = vextract.high.u32 %v4132
      %v4135 = vshrl.u32 %v4134, 4
      %v4136 = vmul.u32 %v4135, 24
      %v4137 = vsub.s32 %v4131, %v4136
      %v4138 = vsub.s32 0, %v4137
      %v4139 = vsel %vm4129, %v4138, %v4137
      %vm4140 = vcmp.lt.s32.totalorder %v3932, 0
      %v4141 = vsub.s32 0, %v3932
      %v4142 = vsel %vm4140, %v4141, %v3932
      %v4143 = vmul.u32.u64.compose %v4142, 2863311531
      %v4144 = vextract.low.u32 %v4143
      %v4145 = vextract.high.u32 %v4143
      %v4146 = vshrl.u32 %v4145, 4
      %v4147 = vmul.u32 %v4146, 24
      %v4148 = vsub.s32 %v4142, %v4147
      %v4149 = vsub.s32 0, %v4148
      %v4150 = vsel %vm4140, %v4149, %v4148
      %vm4151 = vcmp.lt.s32.totalorder %v3933, 0
      %v4152 = vsub.s32 0, %v3933
      %v4153 = vsel %vm4151, %v4152, %v3933
      %v4154 = vmul.u32.u64.compose %v4153, 2863311531
      %v4155 = vextract.low.u32 %v4154
      %v4156 = vextract.high.u32 %v4154
      %v4157 = vshrl.u32 %v4156, 4
      %v4158 = vmul.u32 %v4157, 24
      %v4159 = vsub.s32 %v4153, %v4158
      %v4160 = vsub.s32 0, %v4159
      %v4161 = vsel %vm4151, %v4160, %v4159
      %vm4162 = vcmp.lt.s32.totalorder %v3934, 0
      %v4163 = vsub.s32 0, %v3934
      %v4164 = vsel %vm4162, %v4163, %v3934
      %v4165 = vmul.u32.u64.compose %v4164, 2863311531
      %v4166 = vextract.low.u32 %v4165
      %v4167 = vextract.high.u32 %v4165
      %v4168 = vshrl.u32 %v4167, 4
      %v4169 = vmul.u32 %v4168, 24
      %v4170 = vsub.s32 %v4164, %v4169
      %v4171 = vsub.s32 0, %v4170
      %v4172 = vsel %vm4162, %v4171, %v4170
      %vm4173 = vcmp.lt.s32.totalorder %v3935, 0
      %v4174 = vsub.s32 0, %v3935
      %v4175 = vsel %vm4173, %v4174, %v3935
      %v4176 = vmul.u32.u64.compose %v4175, 2863311531
      %v4177 = vextract.low.u32 %v4176
      %v4178 = vextract.high.u32 %v4176
      %v4179 = vshrl.u32 %v4178, 4
      %v4180 = vmul.u32 %v4179, 24
      %v4181 = vsub.s32 %v4175, %v4180
      %v4182 = vsub.s32 0, %v4181
      %v4183 = vsel %vm4173, %v4182, %v4181
      %vm4184 = vcmp.lt.s32.totalorder %v3936, 0
      %v4185 = vsub.s32 0, %v3936
      %v4186 = vsel %vm4184, %v4185, %v3936
      %v4187 = vmul.u32.u64.compose %v4186, 2863311531
      %v4188 = vextract.low.u32 %v4187
      %v4189 = vextract.high.u32 %v4187
      %v4190 = vshrl.u32 %v4189, 4
      %v4191 = vmul.u32 %v4190, 24
      %v4192 = vsub.s32 %v4186, %v4191
      %v4193 = vsub.s32 0, %v4192
      %v4194 = vsel %vm4184, %v4193, %v4192
      %vm4195 = vcmp.lt.s32.totalorder %v3937, 0
      %v4196 = vsub.s32 0, %v3937
      %v4197 = vsel %vm4195, %v4196, %v3937
      %v4198 = vmul.u32.u64.compose %v4197, 2863311531
      %v4199 = vextract.low.u32 %v4198
      %v4200 = vextract.high.u32 %v4198
      %v4201 = vshrl.u32 %v4200, 4
      %v4202 = vmul.u32 %v4201, 24
      %v4203 = vsub.s32 %v4197, %v4202
      %v4204 = vsub.s32 0, %v4203
      %v4205 = vsel %vm4195, %v4204, %v4203
      %vm4206 = vcmp.lt.s32.totalorder %v3938, 0
      %v4207 = vsub.s32 0, %v3938
      %v4208 = vsel %vm4206, %v4207, %v3938
      %v4209 = vmul.u32.u64.compose %v4208, 2863311531
      %v4210 = vextract.low.u32 %v4209
      %v4211 = vextract.high.u32 %v4209
      %v4212 = vshrl.u32 %v4211, 4
      %v4213 = vmul.u32 %v4212, 24
      %v4214 = vsub.s32 %v4208, %v4213
      %v4215 = vsub.s32 0, %v4214
      %v4216 = vsel %vm4206, %v4215, %v4214
      %vm4217 = vcmp.lt.s32.totalorder %v3939, 0
      %v4218 = vsub.s32 0, %v3939
      %v4219 = vsel %vm4217, %v4218, %v3939
      %v4220 = vmul.u32.u64.compose %v4219, 2863311531
      %v4221 = vextract.low.u32 %v4220
      %v4222 = vextract.high.u32 %v4220
      %v4223 = vshrl.u32 %v4222, 4
      %v4224 = vmul.u32 %v4223, 24
      %v4225 = vsub.s32 %v4219, %v4224
      %v4226 = vsub.s32 0, %v4225
      %v4227 = vsel %vm4217, %v4226, %v4225
      %vm4228 = vcmp.lt.s32.totalorder %v3940, 0
      %v4229 = vsub.s32 0, %v3940
      %v4230 = vsel %vm4228, %v4229, %v3940
      %v4231 = vmul.u32.u64.compose %v4230, 2863311531
      %v4232 = vextract.low.u32 %v4231
      %v4233 = vextract.high.u32 %v4231
      %v4234 = vshrl.u32 %v4233, 4
      %v4235 = vmul.u32 %v4234, 24
      %v4236 = vsub.s32 %v4230, %v4235
      %v4237 = vsub.s32 0, %v4236
      %v4238 = vsel %vm4228, %v4237, %v4236
      %vm4239 = vcmp.lt.s32.totalorder %v3941, 0
      %v4240 = vsub.s32 0, %v3941
      %v4241 = vsel %vm4239, %v4240, %v3941
      %v4242 = vmul.u32.u64.compose %v4241, 2863311531
      %v4243 = vextract.low.u32 %v4242
      %v4244 = vextract.high.u32 %v4242
      %v4245 = vshrl.u32 %v4244, 4
      %v4246 = vmul.u32 %v4245, 24
      %v4247 = vsub.s32 %v4241, %v4246
      %v4248 = vsub.s32 0, %v4247
      %v4249 = vsel %vm4239, %v4248, %v4247
      %vm4250 = vcmp.lt.s32.totalorder %v3942, 0
      %v4251 = vsub.s32 0, %v3942
      %v4252 = vsel %vm4250, %v4251, %v3942
      %v4253 = vmul.u32.u64.compose %v4252, 2863311531
      %v4254 = vextract.low.u32 %v4253
      %v4255 = vextract.high.u32 %v4253
      %v4256 = vshrl.u32 %v4255, 4
      %v4257 = vmul.u32 %v4256, 24
      %v4258 = vsub.s32 %v4252, %v4257
      %v4259 = vsub.s32 0, %v4258
      %v4260 = vsel %vm4250, %v4259, %v4258
      %vm4261 = vcmp.lt.s32.totalorder %v3943, 0
      %v4262 = vsub.s32 0, %v3943
      %v4263 = vsel %vm4261, %v4262, %v3943
      %v4264 = vmul.u32.u64.compose %v4263, 2863311531
      %v4265 = vextract.low.u32 %v4264
      %v4266 = vextract.high.u32 %v4264
      %v4267 = vshrl.u32 %v4266, 4
      %v4268 = vmul.u32 %v4267, 24
      %v4269 = vsub.s32 %v4263, %v4268
      %v4270 = vsub.s32 0, %v4269
      %v4271 = vsel %vm4261, %v4270, %v4269
      %vm4272 = vcmp.lt.s32.totalorder %v3944, 0
      %v4273 = vsub.s32 0, %v3944
      %v4274 = vsel %vm4272, %v4273, %v3944
      %v4275 = vmul.u32.u64.compose %v4274, 2863311531
      %v4276 = vextract.low.u32 %v4275
      %v4277 = vextract.high.u32 %v4275
      %v4278 = vshrl.u32 %v4277, 4
      %v4279 = vmul.u32 %v4278, 24
      %v4280 = vsub.s32 %v4274, %v4279
      %v4281 = vsub.s32 0, %v4280
      %v4282 = vsel %vm4272, %v4281, %v4280
      %vm4283 = vcmp.lt.s32.totalorder %v3945, 0
      %v4284 = vsub.s32 0, %v3945
      %v4285 = vsel %vm4283, %v4284, %v3945
      %v4286 = vmul.u32.u64.compose %v4285, 2863311531
      %v4287 = vextract.low.u32 %v4286
      %v4288 = vextract.high.u32 %v4286
      %v4289 = vshrl.u32 %v4288, 4
      %v4290 = vmul.u32 %v4289, 24
      %v4291 = vsub.s32 %v4285, %v4290
      %v4292 = vsub.s32 0, %v4291
      %v4293 = vsel %vm4283, %v4292, %v4291
      %vm4294 = vcmp.lt.s32.totalorder %v3946, 0
      %v4295 = vsub.s32 0, %v3946
      %v4296 = vsel %vm4294, %v4295, %v3946
      %v4297 = vmul.u32.u64.compose %v4296, 2863311531
      %v4298 = vextract.low.u32 %v4297
      %v4299 = vextract.high.u32 %v4297
      %v4300 = vshrl.u32 %v4299, 4
      %v4301 = vmul.u32 %v4300, 24
      %v4302 = vsub.s32 %v4296, %v4301
      %v4303 = vsub.s32 0, %v4302
      %v4304 = vsel %vm4294, %v4303, %v4302
      %vm4305 = vcmp.lt.s32.totalorder %v3947, 0
      %v4306 = vsub.s32 0, %v3947
      %v4307 = vsel %vm4305, %v4306, %v3947
      %v4308 = vmul.u32.u64.compose %v4307, 2863311531
      %v4309 = vextract.low.u32 %v4308
      %v4310 = vextract.high.u32 %v4308
      %v4311 = vshrl.u32 %v4310, 4
      %v4312 = vmul.u32 %v4311, 24
      %v4313 = vsub.s32 %v4307, %v4312
      %v4314 = vsub.s32 0, %v4313
      %v4315 = vsel %vm4305, %v4314, %v4313
      %vm4316 = vcmp.lt.s32.totalorder %v3948, 0
      %v4317 = vsub.s32 0, %v3948
      %v4318 = vsel %vm4316, %v4317, %v3948
      %v4319 = vmul.u32.u64.compose %v4318, 2863311531
      %v4320 = vextract.low.u32 %v4319
      %v4321 = vextract.high.u32 %v4319
      %v4322 = vshrl.u32 %v4321, 4
      %v4323 = vmul.u32 %v4322, 24
      %v4324 = vsub.s32 %v4318, %v4323
      %v4325 = vsub.s32 0, %v4324
      %v4326 = vsel %vm4316, %v4325, %v4324
      %vm4327 = vcmp.lt.s32.totalorder %v3949, 0
      %v4328 = vsub.s32 0, %v3949
      %v4329 = vsel %vm4327, %v4328, %v3949
      %v4330 = vmul.u32.u64.compose %v4329, 2863311531
      %v4331 = vextract.low.u32 %v4330
      %v4332 = vextract.high.u32 %v4330
      %v4333 = vshrl.u32 %v4332, 4
      %v4334 = vmul.u32 %v4333, 24
      %v4335 = vsub.s32 %v4329, %v4334
      %v4336 = vsub.s32 0, %v4335
      %v4337 = vsel %vm4327, %v4336, %v4335
      %vm4338 = vcmp.lt.s32.totalorder %v3950, 0
      %v4339 = vsub.s32 0, %v3950
      %v4340 = vsel %vm4338, %v4339, %v3950
      %v4341 = vmul.u32.u64.compose %v4340, 2863311531
      %v4342 = vextract.low.u32 %v4341
      %v4343 = vextract.high.u32 %v4341
      %v4344 = vshrl.u32 %v4343, 4
      %v4345 = vmul.u32 %v4344, 24
      %v4346 = vsub.s32 %v4340, %v4345
      %v4347 = vsub.s32 0, %v4346
      %v4348 = vsel %vm4338, %v4347, %v4346
      %vm4349 = vcmp.lt.s32.totalorder %v3951, 0
      %v4350 = vsub.s32 0, %v3951
      %v4351 = vsel %vm4349, %v4350, %v3951
      %v4352 = vmul.u32.u64.compose %v4351, 2863311531
      %v4353 = vextract.low.u32 %v4352
      %v4354 = vextract.high.u32 %v4352
      %v4355 = vshrl.u32 %v4354, 4
      %v4356 = vmul.u32 %v4355, 24
      %v4357 = vsub.s32 %v4351, %v4356
      %v4358 = vsub.s32 0, %v4357
      %v4359 = vsel %vm4349, %v4358, %v4357
      %vm4360 = vcmp.lt.s32.totalorder %v3952, 0
      %v4361 = vsub.s32 0, %v3952
      %v4362 = vsel %vm4360, %v4361, %v3952
      %v4363 = vmul.u32.u64.compose %v4362, 2863311531
      %v4364 = vextract.low.u32 %v4363
      %v4365 = vextract.high.u32 %v4363
      %v4366 = vshrl.u32 %v4365, 4
      %v4367 = vmul.u32 %v4366, 24
      %v4368 = vsub.s32 %v4362, %v4367
      %v4369 = vsub.s32 0, %v4368
      %v4370 = vsel %vm4360, %v4369, %v4368
      %vm4371 = vcmp.lt.s32.totalorder %v3953, 0
      %v4372 = vsub.s32 0, %v3953
      %v4373 = vsel %vm4371, %v4372, %v3953
      %v4374 = vmul.u32.u64.compose %v4373, 2863311531
      %v4375 = vextract.low.u32 %v4374
      %v4376 = vextract.high.u32 %v4374
      %v4377 = vshrl.u32 %v4376, 4
      %v4378 = vmul.u32 %v4377, 24
      %v4379 = vsub.s32 %v4373, %v4378
      %v4380 = vsub.s32 0, %v4379
      %v4381 = vsel %vm4371, %v4380, %v4379
      %vm4382 = vcmp.lt.s32.totalorder %v3954, 0
      %v4383 = vsub.s32 0, %v3954
      %v4384 = vsel %vm4382, %v4383, %v3954
      %v4385 = vmul.u32.u64.compose %v4384, 2863311531
      %v4386 = vextract.low.u32 %v4385
      %v4387 = vextract.high.u32 %v4385
      %v4388 = vshrl.u32 %v4387, 4
      %v4389 = vmul.u32 %v4388, 24
      %v4390 = vsub.s32 %v4384, %v4389
      %v4391 = vsub.s32 0, %v4390
      %v4392 = vsel %vm4382, %v4391, %v4390
      %vm4393 = vcmp.lt.s32.totalorder %v3955, 0
      %v4394 = vsub.s32 0, %v3955
      %v4395 = vsel %vm4393, %v4394, %v3955
      %v4396 = vmul.u32.u64.compose %v4395, 2863311531
      %v4397 = vextract.low.u32 %v4396
      %v4398 = vextract.high.u32 %v4396
      %v4399 = vshrl.u32 %v4398, 4
      %v4400 = vmul.u32 %v4399, 24
      %v4401 = vsub.s32 %v4395, %v4400
      %v4402 = vsub.s32 0, %v4401
      %v4403 = vsel %vm4393, %v4402, %v4401
      %vm4404 = vcmp.lt.s32.totalorder %v3956, 0
      %v4405 = vsub.s32 0, %v3956
      %v4406 = vsel %vm4404, %v4405, %v3956
      %v4407 = vmul.u32.u64.compose %v4406, 2863311531
      %v4408 = vextract.low.u32 %v4407
      %v4409 = vextract.high.u32 %v4407
      %v4410 = vshrl.u32 %v4409, 4
      %v4411 = vmul.u32 %v4410, 24
      %v4412 = vsub.s32 %v4406, %v4411
      %v4413 = vsub.s32 0, %v4412
      %v4414 = vsel %vm4404, %v4413, %v4412
      %vm4415 = vcmp.lt.s32.totalorder %v3957, 0
      %v4416 = vsub.s32 0, %v3957
      %v4417 = vsel %vm4415, %v4416, %v3957
      %v4418 = vmul.u32.u64.compose %v4417, 2863311531
      %v4419 = vextract.low.u32 %v4418
      %v4420 = vextract.high.u32 %v4418
      %v4421 = vshrl.u32 %v4420, 4
      %v4422 = vmul.u32 %v4421, 24
      %v4423 = vsub.s32 %v4417, %v4422
      %v4424 = vsub.s32 0, %v4423
      %v4425 = vsel %vm4415, %v4424, %v4423
      %vm4426 = vcmp.lt.s32.totalorder %v3958, 0
      %v4427 = vsub.s32 0, %v3958
      %v4428 = vsel %vm4426, %v4427, %v3958
      %v4429 = vmul.u32.u64.compose %v4428, 2863311531
      %v4430 = vextract.low.u32 %v4429
      %v4431 = vextract.high.u32 %v4429
      %v4432 = vshrl.u32 %v4431, 4
      %v4433 = vmul.u32 %v4432, 24
      %v4434 = vsub.s32 %v4428, %v4433
      %v4435 = vsub.s32 0, %v4434
      %v4436 = vsel %vm4426, %v4435, %v4434
      %vm4437 = vcmp.lt.s32.totalorder %v3959, 0
      %v4438 = vsub.s32 0, %v3959
      %v4439 = vsel %vm4437, %v4438, %v3959
      %v4440 = vmul.u32.u64.compose %v4439, 2863311531
      %v4441 = vextract.low.u32 %v4440
      %v4442 = vextract.high.u32 %v4440
      %v4443 = vshrl.u32 %v4442, 4
      %v4444 = vmul.u32 %v4443, 24
      %v4445 = vsub.s32 %v4439, %v4444
      %v4446 = vsub.s32 0, %v4445
      %v4447 = vsel %vm4437, %v4446, %v4445
      %vm4448 = vcmp.lt.s32.totalorder %v3960, 0
      %v4449 = vsub.s32 0, %v3960
      %v4450 = vsel %vm4448, %v4449, %v3960
      %v4451 = vmul.u32.u64.compose %v4450, 2863311531
      %v4452 = vextract.low.u32 %v4451
      %v4453 = vextract.high.u32 %v4451
      %v4454 = vshrl.u32 %v4453, 4
      %v4455 = vmul.u32 %v4454, 24
      %v4456 = vsub.s32 %v4450, %v4455
      %v4457 = vsub.s32 0, %v4456
      %v4458 = vsel %vm4448, %v4457, %v4456
      %vm4459 = vcmp.lt.s32.totalorder %v3961, 0
      %v4460 = vsub.s32 0, %v3961
      %v4461 = vsel %vm4459, %v4460, %v3961
      %v4462 = vmul.u32.u64.compose %v4461, 2863311531
      %v4463 = vextract.low.u32 %v4462
      %v4464 = vextract.high.u32 %v4462
      %v4465 = vshrl.u32 %v4464, 4
      %v4466 = vmul.u32 %v4465, 24
      %v4467 = vsub.s32 %v4461, %v4466
      %v4468 = vsub.s32 0, %v4467
      %v4469 = vsel %vm4459, %v4468, %v4467
      %vm4470 = vcmp.lt.s32.totalorder %v3962, 0
      %v4471 = vsub.s32 0, %v3962
      %v4472 = vsel %vm4470, %v4471, %v3962
      %v4473 = vmul.u32.u64.compose %v4472, 2863311531
      %v4474 = vextract.low.u32 %v4473
      %v4475 = vextract.high.u32 %v4473
      %v4476 = vshrl.u32 %v4475, 4
      %v4477 = vmul.u32 %v4476, 24
      %v4478 = vsub.s32 %v4472, %v4477
      %v4479 = vsub.s32 0, %v4478
      %v4480 = vsel %vm4470, %v4479, %v4478
      %vm4481 = vcmp.lt.s32.totalorder %v3963, 0
      %v4482 = vsub.s32 0, %v3963
      %v4483 = vsel %vm4481, %v4482, %v3963
      %v4484 = vmul.u32.u64.compose %v4483, 2863311531
      %v4485 = vextract.low.u32 %v4484
      %v4486 = vextract.high.u32 %v4484
      %v4487 = vshrl.u32 %v4486, 4
      %v4488 = vmul.u32 %v4487, 24
      %v4489 = vsub.s32 %v4483, %v4488
      %v4490 = vsub.s32 0, %v4489
      %v4491 = vsel %vm4481, %v4490, %v4489
      %vm4492 = vcmp.ne.s32.totalorder %v3974, 0
      %vm4493 = vcmp.ne.s32.totalorder %v3985, 0
      %vm4494 = vcmp.ne.s32.totalorder %v3996, 0
      %vm4495 = vcmp.ne.s32.totalorder %v4007, 0
      %vm4496 = vcmp.ne.s32.totalorder %v4018, 0
      %vm4497 = vcmp.ne.s32.totalorder %v4029, 0
      %vm4498 = vcmp.ne.s32.totalorder %v4040, 0
      %vm4499 = vcmp.ne.s32.totalorder %v4051, 0
      %vm4500 = vcmp.ne.s32.totalorder %v4062, 0
      %vm4501 = vcmp.ne.s32.totalorder %v4073, 0
      %vm4502 = vcmp.ne.s32.totalorder %v4084, 0
      %vm4503 = vcmp.ne.s32.totalorder %v4095, 0
      %vm4504 = vcmp.ne.s32.totalorder %v4106, 0
      %vm4505 = vcmp.ne.s32.totalorder %v4117, 0
      %vm4506 = vcmp.ne.s32.totalorder %v4128, 0
      %vm4507 = vcmp.ne.s32.totalorder %v4139, 0
      %vm4508 = vcmp.ne.s32.totalorder %v4150, 0
      %vm4509 = vcmp.ne.s32.totalorder %v4161, 0
      %vm4510 = vcmp.ne.s32.totalorder %v4172, 0
      %vm4511 = vcmp.ne.s32.totalorder %v4183, 0
      %vm4512 = vcmp.ne.s32.totalorder %v4194, 0
      %vm4513 = vcmp.ne.s32.totalorder %v4205, 0
      %vm4514 = vcmp.ne.s32.totalorder %v4216, 0
      %vm4515 = vcmp.ne.s32.totalorder %v4227, 0
      %vm4516 = vcmp.ne.s32.totalorder %v4238, 0
      %vm4517 = vcmp.ne.s32.totalorder %v4249, 0
      %vm4518 = vcmp.ne.s32.totalorder %v4260, 0
      %vm4519 = vcmp.ne.s32.totalorder %v4271, 0
      %vm4520 = vcmp.ne.s32.totalorder %v4282, 0
      %vm4521 = vcmp.ne.s32.totalorder %v4293, 0
      %vm4522 = vcmp.ne.s32.totalorder %v4304, 0
      %vm4523 = vcmp.ne.s32.totalorder %v4315, 0
      %vm4524 = vcmp.ne.s32.totalorder %v4326, 0
      %vm4525 = vcmp.ne.s32.totalorder %v4337, 0
      %vm4526 = vcmp.ne.s32.totalorder %v4348, 0
      %vm4527 = vcmp.ne.s32.totalorder %v4359, 0
      %vm4528 = vcmp.ne.s32.totalorder %v4370, 0
      %vm4529 = vcmp.ne.s32.totalorder %v4381, 0
      %vm4530 = vcmp.ne.s32.totalorder %v4392, 0
      %vm4531 = vcmp.ne.s32.totalorder %v4403, 0
      %vm4532 = vcmp.ne.s32.totalorder %v4414, 0
      %vm4533 = vcmp.ne.s32.totalorder %v4425, 0
      %vm4534 = vcmp.ne.s32.totalorder %v4436, 0
      %vm4535 = vcmp.ne.s32.totalorder %v4447, 0
      %vm4536 = vcmp.ne.s32.totalorder %v4458, 0
      %vm4537 = vcmp.ne.s32.totalorder %v4469, 0
      %vm4538 = vcmp.ne.s32.totalorder %v4480, 0
      %vm4539 = vcmp.ne.s32.totalorder %v4491, 0
      %vm4540 = vcmp.lt.s32.totalorder %v3974, 0
      %vm4541 = vcmp.lt.s32.totalorder %v3985, 0
      %vm4542 = vcmp.lt.s32.totalorder %v3996, 0
      %vm4543 = vcmp.lt.s32.totalorder %v4007, 0
      %vm4544 = vcmp.lt.s32.totalorder %v4018, 0
      %vm4545 = vcmp.lt.s32.totalorder %v4029, 0
      %vm4546 = vcmp.lt.s32.totalorder %v4040, 0
      %vm4547 = vcmp.lt.s32.totalorder %v4051, 0
      %vm4548 = vcmp.lt.s32.totalorder %v4062, 0
      %vm4549 = vcmp.lt.s32.totalorder %v4073, 0
      %vm4550 = vcmp.lt.s32.totalorder %v4084, 0
      %vm4551 = vcmp.lt.s32.totalorder %v4095, 0
      %vm4552 = vcmp.lt.s32.totalorder %v4106, 0
      %vm4553 = vcmp.lt.s32.totalorder %v4117, 0
      %vm4554 = vcmp.lt.s32.totalorder %v4128, 0
      %vm4555 = vcmp.lt.s32.totalorder %v4139, 0
      %vm4556 = vcmp.lt.s32.totalorder %v4150, 0
      %vm4557 = vcmp.lt.s32.totalorder %v4161, 0
      %vm4558 = vcmp.lt.s32.totalorder %v4172, 0
      %vm4559 = vcmp.lt.s32.totalorder %v4183, 0
      %vm4560 = vcmp.lt.s32.totalorder %v4194, 0
      %vm4561 = vcmp.lt.s32.totalorder %v4205, 0
      %vm4562 = vcmp.lt.s32.totalorder %v4216, 0
      %vm4563 = vcmp.lt.s32.totalorder %v4227, 0
      %vm4564 = vcmp.lt.s32.totalorder %v4238, 0
      %vm4565 = vcmp.lt.s32.totalorder %v4249, 0
      %vm4566 = vcmp.lt.s32.totalorder %v4260, 0
      %vm4567 = vcmp.lt.s32.totalorder %v4271, 0
      %vm4568 = vcmp.lt.s32.totalorder %v4282, 0
      %vm4569 = vcmp.lt.s32.totalorder %v4293, 0
      %vm4570 = vcmp.lt.s32.totalorder %v4304, 0
      %vm4571 = vcmp.lt.s32.totalorder %v4315, 0
      %vm4572 = vcmp.lt.s32.totalorder %v4326, 0
      %vm4573 = vcmp.lt.s32.totalorder %v4337, 0
      %vm4574 = vcmp.lt.s32.totalorder %v4348, 0
      %vm4575 = vcmp.lt.s32.totalorder %v4359, 0
      %vm4576 = vcmp.lt.s32.totalorder %v4370, 0
      %vm4577 = vcmp.lt.s32.totalorder %v4381, 0
      %vm4578 = vcmp.lt.s32.totalorder %v4392, 0
      %vm4579 = vcmp.lt.s32.totalorder %v4403, 0
      %vm4580 = vcmp.lt.s32.totalorder %v4414, 0
      %vm4581 = vcmp.lt.s32.totalorder %v4425, 0
      %vm4582 = vcmp.lt.s32.totalorder %v4436, 0
      %vm4583 = vcmp.lt.s32.totalorder %v4447, 0
      %vm4584 = vcmp.lt.s32.totalorder %v4458, 0
      %vm4585 = vcmp.lt.s32.totalorder %v4469, 0
      %vm4586 = vcmp.lt.s32.totalorder %v4480, 0
      %vm4587 = vcmp.lt.s32.totalorder %v4491, 0
      %vm4588 = vmand %vm4540, %vm4492
      %vm4589 = vmand %vm4541, %vm4493
      %vm4590 = vmand %vm4542, %vm4494
      %vm4591 = vmand %vm4543, %vm4495
      %vm4592 = vmand %vm4544, %vm4496
      %vm4593 = vmand %vm4545, %vm4497
      %vm4594 = vmand %vm4546, %vm4498
      %vm4595 = vmand %vm4547, %vm4499
      %vm4596 = vmand %vm4548, %vm4500
      %vm4597 = vmand %vm4549, %vm4501
      %vm4598 = vmand %vm4550, %vm4502
      %vm4599 = vmand %vm4551, %vm4503
      %vm4600 = vmand %vm4552, %vm4504
      %vm4601 = vmand %vm4553, %vm4505
      %vm4602 = vmand %vm4554, %vm4506
      %vm4603 = vmand %vm4555, %vm4507
      %vm4604 = vmand %vm4556, %vm4508
      %vm4605 = vmand %vm4557, %vm4509
      %vm4606 = vmand %vm4558, %vm4510
      %vm4607 = vmand %vm4559, %vm4511
      %vm4608 = vmand %vm4560, %vm4512
      %vm4609 = vmand %vm4561, %vm4513
      %vm4610 = vmand %vm4562, %vm4514
      %vm4611 = vmand %vm4563, %vm4515
      %vm4612 = vmand %vm4564, %vm4516
      %vm4613 = vmand %vm4565, %vm4517
      %vm4614 = vmand %vm4566, %vm4518
      %vm4615 = vmand %vm4567, %vm4519
      %vm4616 = vmand %vm4568, %vm4520
      %vm4617 = vmand %vm4569, %vm4521
      %vm4618 = vmand %vm4570, %vm4522
      %vm4619 = vmand %vm4571, %vm4523
      %vm4620 = vmand %vm4572, %vm4524
      %vm4621 = vmand %vm4573, %vm4525
      %vm4622 = vmand %vm4574, %vm4526
      %vm4623 = vmand %vm4575, %vm4527
      %vm4624 = vmand %vm4576, %vm4528
      %vm4625 = vmand %vm4577, %vm4529
      %vm4626 = vmand %vm4578, %vm4530
      %vm4627 = vmand %vm4579, %vm4531
      %vm4628 = vmand %vm4580, %vm4532
      %vm4629 = vmand %vm4581, %vm4533
      %vm4630 = vmand %vm4582, %vm4534
      %vm4631 = vmand %vm4583, %vm4535
      %vm4632 = vmand %vm4584, %vm4536
      %vm4633 = vmand %vm4585, %vm4537
      %vm4634 = vmand %vm4586, %vm4538
      %vm4635 = vmand %vm4587, %vm4539
      %v4636 = vadd.s32 %v3974, 24
      %v4637 = vadd.s32 %v3985, 24
      %v4638 = vadd.s32 %v3996, 24
      %v4639 = vadd.s32 %v4007, 24
      %v4640 = vadd.s32 %v4018, 24
      %v4641 = vadd.s32 %v4029, 24
      %v4642 = vadd.s32 %v4040, 24
      %v4643 = vadd.s32 %v4051, 24
      %v4644 = vadd.s32 %v4062, 24
      %v4645 = vadd.s32 %v4073, 24
      %v4646 = vadd.s32 %v4084, 24
      %v4647 = vadd.s32 %v4095, 24
      %v4648 = vadd.s32 %v4106, 24
      %v4649 = vadd.s32 %v4117, 24
      %v4650 = vadd.s32 %v4128, 24
      %v4651 = vadd.s32 %v4139, 24
      %v4652 = vadd.s32 %v4150, 24
      %v4653 = vadd.s32 %v4161, 24
      %v4654 = vadd.s32 %v4172, 24
      %v4655 = vadd.s32 %v4183, 24
      %v4656 = vadd.s32 %v4194, 24
      %v4657 = vadd.s32 %v4205, 24
      %v4658 = vadd.s32 %v4216, 24
      %v4659 = vadd.s32 %v4227, 24
      %v4660 = vadd.s32 %v4238, 24
      %v4661 = vadd.s32 %v4249, 24
      %v4662 = vadd.s32 %v4260, 24
      %v4663 = vadd.s32 %v4271, 24
      %v4664 = vadd.s32 %v4282, 24
      %v4665 = vadd.s32 %v4293, 24
      %v4666 = vadd.s32 %v4304, 24
      %v4667 = vadd.s32 %v4315, 24
      %v4668 = vadd.s32 %v4326, 24
      %v4669 = vadd.s32 %v4337, 24
      %v4670 = vadd.s32 %v4348, 24
      %v4671 = vadd.s32 %v4359, 24
      %v4672 = vadd.s32 %v4370, 24
      %v4673 = vadd.s32 %v4381, 24
      %v4674 = vadd.s32 %v4392, 24
      %v4675 = vadd.s32 %v4403, 24
      %v4676 = vadd.s32 %v4414, 24
      %v4677 = vadd.s32 %v4425, 24
      %v4678 = vadd.s32 %v4436, 24
      %v4679 = vadd.s32 %v4447, 24
      %v4680 = vadd.s32 %v4458, 24
      %v4681 = vadd.s32 %v4469, 24
      %v4682 = vadd.s32 %v4480, 24
      %v4683 = vadd.s32 %v4491, 24
      %v4684 = vsel %vm4588, %v4636, %v3974
      %v4685 = vsel %vm4589, %v4637, %v3985
      %v4686 = vsel %vm4590, %v4638, %v3996
      %v4687 = vsel %vm4591, %v4639, %v4007
      %v4688 = vsel %vm4592, %v4640, %v4018
      %v4689 = vsel %vm4593, %v4641, %v4029
      %v4690 = vsel %vm4594, %v4642, %v4040
      %v4691 = vsel %vm4595, %v4643, %v4051
      %v4692 = vsel %vm4596, %v4644, %v4062
      %v4693 = vsel %vm4597, %v4645, %v4073
      %v4694 = vsel %vm4598, %v4646, %v4084
      %v4695 = vsel %vm4599, %v4647, %v4095
      %v4696 = vsel %vm4600, %v4648, %v4106
      %v4697 = vsel %vm4601, %v4649, %v4117
      %v4698 = vsel %vm4602, %v4650, %v4128
      %v4699 = vsel %vm4603, %v4651, %v4139
      %v4700 = vsel %vm4604, %v4652, %v4150
      %v4701 = vsel %vm4605, %v4653, %v4161
      %v4702 = vsel %vm4606, %v4654, %v4172
      %v4703 = vsel %vm4607, %v4655, %v4183
      %v4704 = vsel %vm4608, %v4656, %v4194
      %v4705 = vsel %vm4609, %v4657, %v4205
      %v4706 = vsel %vm4610, %v4658, %v4216
      %v4707 = vsel %vm4611, %v4659, %v4227
      %v4708 = vsel %vm4612, %v4660, %v4238
      %v4709 = vsel %vm4613, %v4661, %v4249
      %v4710 = vsel %vm4614, %v4662, %v4260
      %v4711 = vsel %vm4615, %v4663, %v4271
      %v4712 = vsel %vm4616, %v4664, %v4282
      %v4713 = vsel %vm4617, %v4665, %v4293
      %v4714 = vsel %vm4618, %v4666, %v4304
      %v4715 = vsel %vm4619, %v4667, %v4315
      %v4716 = vsel %vm4620, %v4668, %v4326
      %v4717 = vsel %vm4621, %v4669, %v4337
      %v4718 = vsel %vm4622, %v4670, %v4348
      %v4719 = vsel %vm4623, %v4671, %v4359
      %v4720 = vsel %vm4624, %v4672, %v4370
      %v4721 = vsel %vm4625, %v4673, %v4381
      %v4722 = vsel %vm4626, %v4674, %v4392
      %v4723 = vsel %vm4627, %v4675, %v4403
      %v4724 = vsel %vm4628, %v4676, %v4414
      %v4725 = vsel %vm4629, %v4677, %v4425
      %v4726 = vsel %vm4630, %v4678, %v4436
      %v4727 = vsel %vm4631, %v4679, %v4447
      %v4728 = vsel %vm4632, %v4680, %v4458
      %v4729 = vsel %vm4633, %v4681, %v4469
      %v4730 = vsel %vm4634, %v4682, %v4480
      %v4731 = vsel %vm4635, %v4683, %v4491
      %vm4732 = vcmp.lt.s32.totalorder %v4684, 16
      %vm4733 = vcmp.lt.s32.totalorder %v4685, 16
      %vm4734 = vcmp.lt.s32.totalorder %v4686, 16
      %vm4735 = vcmp.lt.s32.totalorder %v4687, 16
      %vm4736 = vcmp.lt.s32.totalorder %v4688, 16
      %vm4737 = vcmp.lt.s32.totalorder %v4689, 16
      %vm4738 = vcmp.lt.s32.totalorder %v4690, 16
      %vm4739 = vcmp.lt.s32.totalorder %v4691, 16
      %vm4740 = vcmp.lt.s32.totalorder %v4692, 16
      %vm4741 = vcmp.lt.s32.totalorder %v4693, 16
      %vm4742 = vcmp.lt.s32.totalorder %v4694, 16
      %vm4743 = vcmp.lt.s32.totalorder %v4695, 16
      %vm4744 = vcmp.lt.s32.totalorder %v4696, 16
      %vm4745 = vcmp.lt.s32.totalorder %v4697, 16
      %vm4746 = vcmp.lt.s32.totalorder %v4698, 16
      %vm4747 = vcmp.lt.s32.totalorder %v4699, 16
      %vm4748 = vcmp.lt.s32.totalorder %v4700, 16
      %vm4749 = vcmp.lt.s32.totalorder %v4701, 16
      %vm4750 = vcmp.lt.s32.totalorder %v4702, 16
      %vm4751 = vcmp.lt.s32.totalorder %v4703, 16
      %vm4752 = vcmp.lt.s32.totalorder %v4704, 16
      %vm4753 = vcmp.lt.s32.totalorder %v4705, 16
      %vm4754 = vcmp.lt.s32.totalorder %v4706, 16
      %vm4755 = vcmp.lt.s32.totalorder %v4707, 16
      %vm4756 = vcmp.lt.s32.totalorder %v4708, 16
      %vm4757 = vcmp.lt.s32.totalorder %v4709, 16
      %vm4758 = vcmp.lt.s32.totalorder %v4710, 16
      %vm4759 = vcmp.lt.s32.totalorder %v4711, 16
      %vm4760 = vcmp.lt.s32.totalorder %v4712, 16
      %vm4761 = vcmp.lt.s32.totalorder %v4713, 16
      %vm4762 = vcmp.lt.s32.totalorder %v4714, 16
      %vm4763 = vcmp.lt.s32.totalorder %v4715, 16
      %vm4764 = vcmp.lt.s32.totalorder %v4716, 16
      %vm4765 = vcmp.lt.s32.totalorder %v4717, 16
      %vm4766 = vcmp.lt.s32.totalorder %v4718, 16
      %vm4767 = vcmp.lt.s32.totalorder %v4719, 16
      %vm4768 = vcmp.lt.s32.totalorder %v4720, 16
      %vm4769 = vcmp.lt.s32.totalorder %v4721, 16
      %vm4770 = vcmp.lt.s32.totalorder %v4722, 16
      %vm4771 = vcmp.lt.s32.totalorder %v4723, 16
      %vm4772 = vcmp.lt.s32.totalorder %v4724, 16
      %vm4773 = vcmp.lt.s32.totalorder %v4725, 16
      %vm4774 = vcmp.lt.s32.totalorder %v4726, 16
      %vm4775 = vcmp.lt.s32.totalorder %v4727, 16
      %vm4776 = vcmp.lt.s32.totalorder %v4728, 16
      %vm4777 = vcmp.lt.s32.totalorder %v4729, 16
      %vm4778 = vcmp.lt.s32.totalorder %v4730, 16
      %vm4779 = vcmp.lt.s32.totalorder %v4731, 16
      %v4780 = vsel %vm4732, 1, 0
      %v4781 = vsel %vm4733, 1, 0
      %v4782 = vsel %vm4734, 1, 0
      %v4783 = vsel %vm4735, 1, 0
      %v4784 = vsel %vm4736, 1, 0
      %v4785 = vsel %vm4737, 1, 0
      %v4786 = vsel %vm4738, 1, 0
      %v4787 = vsel %vm4739, 1, 0
      %v4788 = vsel %vm4740, 1, 0
      %v4789 = vsel %vm4741, 1, 0
      %v4790 = vsel %vm4742, 1, 0
      %v4791 = vsel %vm4743, 1, 0
      %v4792 = vsel %vm4744, 1, 0
      %v4793 = vsel %vm4745, 1, 0
      %v4794 = vsel %vm4746, 1, 0
      %v4795 = vsel %vm4747, 1, 0
      %v4796 = vsel %vm4748, 1, 0
      %v4797 = vsel %vm4749, 1, 0
      %v4798 = vsel %vm4750, 1, 0
      %v4799 = vsel %vm4751, 1, 0
      %v4800 = vsel %vm4752, 1, 0
      %v4801 = vsel %vm4753, 1, 0
      %v4802 = vsel %vm4754, 1, 0
      %v4803 = vsel %vm4755, 1, 0
      %v4804 = vsel %vm4756, 1, 0
      %v4805 = vsel %vm4757, 1, 0
      %v4806 = vsel %vm4758, 1, 0
      %v4807 = vsel %vm4759, 1, 0
      %v4808 = vsel %vm4760, 1, 0
      %v4809 = vsel %vm4761, 1, 0
      %v4810 = vsel %vm4762, 1, 0
      %v4811 = vsel %vm4763, 1, 0
      %v4812 = vsel %vm4764, 1, 0
      %v4813 = vsel %vm4765, 1, 0
      %v4814 = vsel %vm4766, 1, 0
      %v4815 = vsel %vm4767, 1, 0
      %v4816 = vsel %vm4768, 1, 0
      %v4817 = vsel %vm4769, 1, 0
      %v4818 = vsel %vm4770, 1, 0
      %v4819 = vsel %vm4771, 1, 0
      %v4820 = vsel %vm4772, 1, 0
      %v4821 = vsel %vm4773, 1, 0
      %v4822 = vsel %vm4774, 1, 0
      %v4823 = vsel %vm4775, 1, 0
      %v4824 = vsel %vm4776, 1, 0
      %v4825 = vsel %vm4777, 1, 0
      %v4826 = vsel %vm4778, 1, 0
      %v4827 = vsel %vm4779, 1, 0
      %vm4828 = vcmp.eq.s32.totalorder %v4780, 1
      %vm4829 = vcmp.eq.s32.totalorder %v4781, 1
      %vm4830 = vcmp.eq.s32.totalorder %v4782, 1
      %vm4831 = vcmp.eq.s32.totalorder %v4783, 1
      %vm4832 = vcmp.eq.s32.totalorder %v4784, 1
      %vm4833 = vcmp.eq.s32.totalorder %v4785, 1
      %vm4834 = vcmp.eq.s32.totalorder %v4786, 1
      %vm4835 = vcmp.eq.s32.totalorder %v4787, 1
      %vm4836 = vcmp.eq.s32.totalorder %v4788, 1
      %vm4837 = vcmp.eq.s32.totalorder %v4789, 1
      %vm4838 = vcmp.eq.s32.totalorder %v4790, 1
      %vm4839 = vcmp.eq.s32.totalorder %v4791, 1
      %vm4840 = vcmp.eq.s32.totalorder %v4792, 1
      %vm4841 = vcmp.eq.s32.totalorder %v4793, 1
      %vm4842 = vcmp.eq.s32.totalorder %v4794, 1
      %vm4843 = vcmp.eq.s32.totalorder %v4795, 1
      %vm4844 = vcmp.eq.s32.totalorder %v4796, 1
      %vm4845 = vcmp.eq.s32.totalorder %v4797, 1
      %vm4846 = vcmp.eq.s32.totalorder %v4798, 1
      %vm4847 = vcmp.eq.s32.totalorder %v4799, 1
      %vm4848 = vcmp.eq.s32.totalorder %v4800, 1
      %vm4849 = vcmp.eq.s32.totalorder %v4801, 1
      %vm4850 = vcmp.eq.s32.totalorder %v4802, 1
      %vm4851 = vcmp.eq.s32.totalorder %v4803, 1
      %vm4852 = vcmp.eq.s32.totalorder %v4804, 1
      %vm4853 = vcmp.eq.s32.totalorder %v4805, 1
      %vm4854 = vcmp.eq.s32.totalorder %v4806, 1
      %vm4855 = vcmp.eq.s32.totalorder %v4807, 1
      %vm4856 = vcmp.eq.s32.totalorder %v4808, 1
      %vm4857 = vcmp.eq.s32.totalorder %v4809, 1
      %vm4858 = vcmp.eq.s32.totalorder %v4810, 1
      %vm4859 = vcmp.eq.s32.totalorder %v4811, 1
      %vm4860 = vcmp.eq.s32.totalorder %v4812, 1
      %vm4861 = vcmp.eq.s32.totalorder %v4813, 1
      %vm4862 = vcmp.eq.s32.totalorder %v4814, 1
      %vm4863 = vcmp.eq.s32.totalorder %v4815, 1
      %vm4864 = vcmp.eq.s32.totalorder %v4816, 1
      %vm4865 = vcmp.eq.s32.totalorder %v4817, 1
      %vm4866 = vcmp.eq.s32.totalorder %v4818, 1
      %vm4867 = vcmp.eq.s32.totalorder %v4819, 1
      %vm4868 = vcmp.eq.s32.totalorder %v4820, 1
      %vm4869 = vcmp.eq.s32.totalorder %v4821, 1
      %vm4870 = vcmp.eq.s32.totalorder %v4822, 1
      %vm4871 = vcmp.eq.s32.totalorder %v4823, 1
      %vm4872 = vcmp.eq.s32.totalorder %v4824, 1
      %vm4873 = vcmp.eq.s32.totalorder %v4825, 1
      %vm4874 = vcmp.eq.s32.totalorder %v4826, 1
      %vm4875 = vcmp.eq.s32.totalorder %v4827, 1
      %v4876 = vsel %vm4828, %v3867, 0.0
      %v4877 = vsel %vm4829, %v3868, 0.0
      %v4878 = vsel %vm4830, %v3869, 0.0
      %v4879 = vsel %vm4831, %v3870, 0.0
      %v4880 = vsel %vm4832, %v3871, 0.0
      %v4881 = vsel %vm4833, %v3872, 0.0
      %v4882 = vsel %vm4834, %v3873, 0.0
      %v4883 = vsel %vm4835, %v3874, 0.0
      %v4884 = vsel %vm4836, %v3875, 0.0
      %v4885 = vsel %vm4837, %v3876, 0.0
      %v4886 = vsel %vm4838, %v3877, 0.0
      %v4887 = vsel %vm4839, %v3878, 0.0
      %v4888 = vsel %vm4840, %v3879, 0.0
      %v4889 = vsel %vm4841, %v3880, 0.0
      %v4890 = vsel %vm4842, %v3881, 0.0
      %v4891 = vsel %vm4843, %v3882, 0.0
      %v4892 = vsel %vm4844, %v3883, 0.0
      %v4893 = vsel %vm4845, %v3884, 0.0
      %v4894 = vsel %vm4846, %v3885, 0.0
      %v4895 = vsel %vm4847, %v3886, 0.0
      %v4896 = vsel %vm4848, %v3887, 0.0
      %v4897 = vsel %vm4849, %v3888, 0.0
      %v4898 = vsel %vm4850, %v3889, 0.0
      %v4899 = vsel %vm4851, %v3890, 0.0
      %v4900 = vsel %vm4852, %v3891, 0.0
      %v4901 = vsel %vm4853, %v3892, 0.0
      %v4902 = vsel %vm4854, %v3893, 0.0
      %v4903 = vsel %vm4855, %v3894, 0.0
      %v4904 = vsel %vm4856, %v3895, 0.0
      %v4905 = vsel %vm4857, %v3896, 0.0
      %v4906 = vsel %vm4858, %v3897, 0.0
      %v4907 = vsel %vm4859, %v3898, 0.0
      %v4908 = vsel %vm4860, %v3899, 0.0
      %v4909 = vsel %vm4861, %v3900, 0.0
      %v4910 = vsel %vm4862, %v3901, 0.0
      %v4911 = vsel %vm4863, %v3902, 0.0
      %v4912 = vsel %vm4864, %v3903, 0.0
      %v4913 = vsel %vm4865, %v3904, 0.0
      %v4914 = vsel %vm4866, %v3905, 0.0
      %v4915 = vsel %vm4867, %v3906, 0.0
      %v4916 = vsel %vm4868, %v3907, 0.0
      %v4917 = vsel %vm4869, %v3908, 0.0
      %v4918 = vsel %vm4870, %v3909, 0.0
      %v4919 = vsel %vm4871, %v3910, 0.0
      %v4920 = vsel %vm4872, %v3911, 0.0
      %v4921 = vsel %vm4873, %v3912, 0.0
      %v4922 = vsel %vm4874, %v3913, 0.0
      %v4923 = vsel %vm4875, %v3914, 0.0
      %v4924 = vadd.f32 %v4876, %v4877
      %v4925 = vadd.f32 %v4924, %v4878
      %v4926 = vadd.f32 %v4925, %v4879
      %v4927 = vadd.f32 %v4926, %v4880
      %v4928 = vadd.f32 %v4927, %v4881
      %v4929 = vadd.f32 %v4928, %v4882
      %v4930 = vadd.f32 %v4929, %v4883
      %v4931 = vadd.f32 %v4930, %v4884
      %v4932 = vadd.f32 %v4931, %v4885
      %v4933 = vadd.f32 %v4932, %v4886
      %v4934 = vadd.f32 %v4933, %v4887
      %v4935 = vadd.f32 %v4934, %v4888
      %v4936 = vadd.f32 %v4935, %v4889
      %v4937 = vadd.f32 %v4936, %v4890
      %v4938 = vadd.f32 %v4937, %v4891
      %v4939 = vadd.f32 %v4938, %v4892
      %v4940 = vadd.f32 %v4939, %v4893
      %v4941 = vadd.f32 %v4940, %v4894
      %v4942 = vadd.f32 %v4941, %v4895
      %v4943 = vadd.f32 %v4942, %v4896
      %v4944 = vadd.f32 %v4943, %v4897
      %v4945 = vadd.f32 %v4944, %v4898
      %v4946 = vadd.f32 %v4945, %v4899
      %v4947 = vadd.f32 %v4946, %v4900
      %v4948 = vadd.f32 %v4947, %v4901
      %v4949 = vadd.f32 %v4948, %v4902
      %v4950 = vadd.f32 %v4949, %v4903
      %v4951 = vadd.f32 %v4950, %v4904
      %v4952 = vadd.f32 %v4951, %v4905
      %v4953 = vadd.f32 %v4952, %v4906
      %v4954 = vadd.f32 %v4953, %v4907
      %v4955 = vadd.f32 %v4954, %v4908
      %v4956 = vadd.f32 %v4955, %v4909
      %v4957 = vadd.f32 %v4956, %v4910
      %v4958 = vadd.f32 %v4957, %v4911
      %v4959 = vadd.f32 %v4958, %v4912
      %v4960 = vadd.f32 %v4959, %v4913
      %v4961 = vadd.f32 %v4960, %v4914
      %v4962 = vadd.f32 %v4961, %v4915
      %v4963 = vadd.f32 %v4962, %v4916
      %v4964 = vadd.f32 %v4963, %v4917
      %v4965 = vadd.f32 %v4964, %v4918
      %v4966 = vadd.f32 %v4965, %v4919
      %v4967 = vadd.f32 %v4966, %v4920
      %v4968 = vadd.f32 %v4967, %v4921
      %v4969 = vadd.f32 %v4968, %v4922
      %v4970 = vadd.f32 %v4969, %v4923
      %v4971 = vrot.slane %v4970, 4
      %v4972 = vadd.f32 %v4970, %v4971
      %v4973 = vrot.slane %v4972, 2
      %v4974 = vadd.f32 %v4972, %v4973
      %v4975 = vrot.slane %v4974, 1
      %v4976 = vadd.f32 %v4974, %v4975
      %v4977 = vmul.f32 %v4976, 0.00390625
      %4978 = vst [vmem:[%s217] sm:$0x1] %v4977
      %p4979 = scmp.lt.s32.totalorder %s18, 1
      %s4980 = scalar_select %p4979, %s18, 1
      %p4981 = scmp.lt.s32.totalorder %s19, 0
      %s4982 = scalar_select %p4981, %s19, 0
      %s4983 = sadd.s32 %s4982, %s4980
      %s4984 = scalar_lea.vmem %s3, %s4983
      // Predicated region
      $region33: #{face_recog_forward.4} parent=31 // pred_check
        %p4985 = pneg %p124
      $region34: #{face_recog_forward.4} parent=31 // pred_check_branch
        %4987 = sbr.rel (%p4985) target = $region36
      $region35: #{face_recog_forward.4} parent=31 // pred_region
        _
      $region36: #{face_recog_forward.4} parent=31 // pred_fallthru
        _
    $region32: #{face_recog_forward.4} parent=5 // pred_fallthru
      _
    %p4988 = scmp.le.s32.totalorder 2, %s9
    // Predicated region
    $region37: #{face_recog_forward.4} parent=5 // pred_check
      %p4989 = pneg %p4988
    $region38: #{face_recog_forward.4} parent=5 // pred_check_branch
      %4991 = sbr.rel (%p4989) target = $region40
    $region39: #{face_recog_forward.4} parent=5 // pred_region
      %s4992 = ssub.s32 %s9, 2
      // Predicated region
      $region41: #{face_recog_forward.4} parent=39 // pred_check
        %p4993 = pneg %p130
      $region42: #{face_recog_forward.4} parent=39 // pred_check_branch
        %4995 = sbr.rel (%p4993) target = $region44
      $region43: #{face_recog_forward.4} parent=39 // pred_region
        %p4996 = scmp.lt.s32.totalorder %s20, 1
        %s4997 = scalar_select %p4996, %s20, 1
        %p4998 = scmp.lt.s32.totalorder %s21, 0
        %s4999 = scalar_select %p4998, %s21, 0
        %s5000 = sadd.s32 %s4999, %s4997
        %s5001 = scalar_lea.vmem %s3, %s5000
      $region44: #{face_recog_forward.4} parent=39 // pred_fallthru
        _
    $region40: #{face_recog_forward.4} parent=5 // pred_fallthru
      _
  $region6: #{face_recog_forward.4} parent=0 // loop_footer
    %s13 = sadd.s32 1, %s9
  $region7: #{face_recog_forward.4} parent=0 // loop_footer_branch
    %8 = sbr.rel target = $region3
  $region8: #{face_recog_forward.4} parent=0 // loop_exit
    _

</llo_original>
